<compile_context>
chip_gen: v6e
topology: v6e:2x2x1
jax: 0.10.0
libtpu: 0.0.40
codegen_flags: <defaults>
</compile_context>

<pallas_src>
import jax
import jax.numpy as jnp
import numpy as np
from jax import lax
from jax.experimental import pallas as pl
from jax.experimental.pallas import tpu as pltpu

# Problem sizes (multiplyer=1, kernel_size=5 branch of ConvBlock).
N, H, W = 2, 16, 16          # batch, spatial
CIN, C1, C2 = 1, 32, 32      # in channels, conv1 out, conv2 out
K, P = 5, 2                  # kernel size / "same" padding
HW = H * W                   # 256 pixels per image
M = N * HW                   # 512 pixel rows (batch fused into one step)
KK = K * K                   # 25 taps
KK_PAD1 = 32                 # conv1 contraction padded 25 -> 32 (zero rows/cols)
TAPS_PAD = 28                # conv2 taps padded 25 -> 28  (28*32 = 896 = 7*128)
K2 = TAPS_PAD * C1           # conv2 contraction size (896)
HP = H + 2 * P               # per-image H-padded height (20)
HPW = HP * W                 # rows per padded image (320)
MPAD = N * HPW               # rows of the per-image H-padded buffer (640)
GUARD = 8                    # aligned zero guard so the +-2-row kw slices stay in range


def conv_block_kernel(cols1_ref, w1_ref, b1_ref, w2_ref, b2_ref, out_ref,
                      cols2_ref):
    """Whole batch in one step.

    cols1_ref : (M, KK_PAD1)   conv1 im2col of the CIN=1 input (zero pad cols)
    w1_ref    : (KK_PAD1, C1)  conv1 weights (zero rows for the pad)
    b1_ref    : (1, C1)
    w2_ref    : (K2, C2)       conv2 weights, (tap, cin)-major; zero pad rows
    b2_ref    : (1, C2)
    out_ref   : (N*(H//2), (W//2)*C2)  lane-dense pooled output
    cols2_ref : (M, K2)        VMEM scratch: conv2 im2col columns
    """
    # ---------- conv1 + bias + ReLU: one MXU matmul (contraction 32) ----------
    h1 = jnp.dot(cols1_ref[...], w1_ref[...], preferred_element_type=jnp.float32)
    h1 = jnp.maximum(h1 + b1_ref[...], 0.0)                    # (M, C1)

    # ---------- per-image H zero-padding (all concat offsets are x8-aligned) ----------
    zpad = jnp.zeros((P * W, C1), jnp.float32)                 # 32 zero rows
    pieces = []
    for n in range(N):
        pieces += [zpad, h1[n * HW:(n + 1) * HW, :], zpad]
    guard = jnp.zeros((GUARD, C1), jnp.float32)
    h1g = jnp.concatenate([guard] + pieces + [guard], axis=0)  # (MPAD+2*GUARD, C1)

    # ---------- the 5 kw shifts: ONE misaligned slice + ONE hoisted mask each ----------
    # j index of every padded row (W divides HPW, so rp % W == j).
    jg = lax.broadcasted_iota(jnp.int32, (MPAD, 1), 0) % W
    shifted = {}
    for dw in range(-P, P + 1):
        s = h1g[GUARD + dw:GUARD + dw + MPAD, :]               # (MPAD, C1)
        if dw > 0:
            s = jnp.where(jg < W - dw, s, 0.0)
        elif dw < 0:
            s = jnp.where(jg >= -dw, s, 0.0)
        shifted[dw] = s

    # ---------- assemble cols2: 4 taps per 128-lane chunk, unmasked stores ----------
    def tap(t):
        """(M, C1) conv2 im2col block for tap t (zero block for the 3 pad taps)."""
        if t >= KK:
            return jnp.zeros((M, C1), jnp.float32)
        kh, kw = t // K, t % K
        s = shifted[kw - P]
        # Per image: rows [n*HPW + kh*W, n*HPW + kh*W + HW) -- starts are
        # multiples of 16, so these slices and the concat are tile-aligned.
        return jnp.concatenate(
            [s[n * HPW + kh * W:n * HPW + kh * W + HW, :] for n in range(N)],
            axis=0)

    for g in range(TAPS_PAD // 4):
        grp = jnp.concatenate([tap(4 * g + k) for k in range(4)], axis=-1)
        cols2_ref[:, g * 128:(g + 1) * 128] = grp              # (M,128), 128-aligned

    # ---------- conv2 + bias + ReLU: one MXU matmul (contraction 896) ----------
    h2 = jnp.dot(cols2_ref[...], w2_ref[...],
                 preferred_element_type=jnp.float32)
    h2 = jnp.maximum(h2 + b2_ref[...], 0.0)                    # (M, C2)

    # ---------- MaxPool2d(2) + single lane-dense store ----------
    hH = jnp.max(h2.reshape(N * (H // 2), 2, W, C2), axis=1)   # (N*H/2, W, C2)
    blocks = [jnp.maximum(hH[:, 2 * j, :], hH[:, 2 * j + 1, :])
              for j in range(W // 2)]
    out_ref[...] = jnp.concatenate(blocks, axis=-1)            # (N*H/2, (W/2)*C2)

    # TODO(synk): Dropout(p=0.25) is identity in eval/inference mode; a
    # training-mode variant would use pltpu.prng_seed + pltpu.prng_random_bits.


def conv_block(x_nchw, w1_oihw, b1, w2_oihw, b2):
    """Wrapper: NCHW in / NCHW out, parameters in PyTorch (OIHW / (O,)) layout."""
    assert x_nchw.shape == (N, CIN, H, W)

    # ---- layout plumbing only (no FLOPs): conv1 im2col + weight reshapes ----
    x2 = x_nchw[:, 0, :, :].astype(jnp.float32)                      # CIN == 1
    xpad = jnp.pad(x2, ((0, 0), (P, P), (P, P)))                     # (N, H+2P, W+2P)
    taps = [xpad[:, kh:kh + H, kw:kw + W].reshape(N, HW)
            for kh in range(K) for kw in range(K)]
    cols1 = jnp.stack(taps, axis=-1).reshape(M, KK)                  # (M, 25)
    cols1 = jnp.pad(cols1, ((0, 0), (0, KK_PAD1 - KK)))              # (M, 32)

    # (out, in, kh, kw) -> (kh, kw, in, out), contraction-major; zero pad rows.
    w1k = jnp.transpose(w1_oihw, (2, 3, 1, 0)).reshape(KK, C1)
    w1k = jnp.pad(w1k, ((0, KK_PAD1 - KK), (0, 0))).astype(jnp.float32)
    w2k = jnp.transpose(w2_oihw, (2, 3, 1, 0)).reshape(KK * C1, C2)
    w2k = jnp.pad(w2k, ((0, (TAPS_PAD - KK) * C1), (0, 0))).astype(jnp.float32)
    b1k = b1.reshape(1, C1).astype(jnp.float32)
    b2k = b2.reshape(1, C2).astype(jnp.float32)

    out = pl.pallas_call(
        conv_block_kernel,
        out_shape=jax.ShapeDtypeStruct((N * (H // 2), (W // 2) * C2),
                                       jnp.float32),
        grid=(1,),
        in_specs=[
            pl.BlockSpec((M, KK_PAD1), lambda n: (0, 0)),
            pl.BlockSpec((KK_PAD1, C1), lambda n: (0, 0)),
            pl.BlockSpec((1, C1), lambda n: (0, 0)),
            pl.BlockSpec((K2, C2), lambda n: (0, 0)),
            pl.BlockSpec((1, C2), lambda n: (0, 0)),
        ],
        out_specs=pl.BlockSpec((N * (H // 2), (W // 2) * C2), lambda n: (0, 0)),
        scratch_shapes=[pltpu.VMEM((M, K2), jnp.float32)],
        compiler_params=pltpu.CompilerParams(
            dimension_semantics=("arbitrary",)),
    )(cols1, w1k, b1k, w2k, b2k)

    out = out.reshape(N, H // 2, W // 2, C2)                  # un-merge (W//2, C2)
    return jnp.transpose(out, (0, 3, 1, 2))                   # back to NCHW


def conv_block_reference(x, w1, b1, w2, b2):
    """Pure-JAX reference (mirrors the PyTorch forward, eval mode)."""
    dn = ("NCHW", "OIHW", "NCHW")
    h = lax.conv_general_dilated(x, w1, (1, 1), [(P, P), (P, P)],
                                 dimension_numbers=dn)
    h = jnp.maximum(h + b1[None, :, None, None], 0.0)
    h = lax.conv_general_dilated(h, w2, (1, 1), [(P, P), (P, P)],
                                 dimension_numbers=dn)
    h = jnp.maximum(h + b2[None, :, None, None], 0.0)
    nb, nc, hh, ww = h.shape
    h = h.reshape(nb, nc, hh // 2, 2, ww // 2, 2).max(axis=(3, 5))
    return h  # dropout == identity in eval mode


if __name__ == "__main__":
    key = jax.random.PRNGKey(0)
    kx, k1, k2, k3, k4 = jax.random.split(key, 5)

    # Deterministic synthetic parameters (PyTorch layouts).
    x = jax.random.normal(kx, (N, CIN, H, W), jnp.float32)
    w1 = jax.random.normal(k1, (C1, CIN, K, K), jnp.float32) * 0.10
    b1 = jax.random.normal(k2, (C1,), jnp.float32) * 0.10
    w2 = jax.random.normal(k3, (C2, C1, K, K), jnp.float32) * 0.05
    b2 = jax.random.normal(k4, (C2,), jnp.float32) * 0.05

    out = conv_block(x, w1, b1, w2, b2)
    out = jax.block_until_ready(out)

    assert out.shape == (N, C2, H // 2, W // 2), out.shape

    ref = jax.block_until_ready(conv_block_reference(x, w1, b1, w2, b2))
    np.testing.assert_allclose(np.asarray(out), np.asarray(ref),
                               rtol=1e-4, atol=1e-4)

    print("KERNEL_OK")
</pallas_src>

<mosaic_0001>
module attributes {stable_mosaic.version = 11 : i64} {
  func.func @conv_block_kernel(%arg0: i32, %arg1: memref<512x32xf32, #tpu.memory_space<vmem>>, %arg2: memref<32x32xf32, #tpu.memory_space<vmem>>, %arg3: memref<1x32xf32, #tpu.memory_space<vmem>>, %arg4: memref<896x32xf32, #tpu.memory_space<vmem>>, %arg5: memref<1x32xf32, #tpu.memory_space<vmem>>, %arg6: memref<16x256xf32, #tpu.memory_space<vmem>>, %arg7: memref<512x896xf32, #tpu.memory_space<vmem>>) attributes {dimension_semantics = [#tpu.dimension_semantics<arbitrary>], iteration_bounds = array<i64: 1>, scalar_prefetch = 0 : i64, scratch_operands = 1 : i64, tpu.core_type = #tpu.core_type<tc>, window_params = [{pipeline_mode = #tpu.pipeline_mode<synchronous>, transform_indices = @transform_0, window_bounds = array<i64: 512, 32>}, {pipeline_mode = #tpu.pipeline_mode<synchronous>, transform_indices = @transform_1, window_bounds = array<i64: 32, 32>}, {pipeline_mode = #tpu.pipeline_mode<synchronous>, transform_indices = @transform_2, window_bounds = array<i64: 1, 32>}, {pipeline_mode = #tpu.pipeline_mode<synchronous>, transform_indices = @transform_3, window_bounds = array<i64: 896, 32>}, {pipeline_mode = #tpu.pipeline_mode<synchronous>, transform_indices = @transform_4, window_bounds = array<i64: 1, 32>}, {pipeline_mode = #tpu.pipeline_mode<synchronous>, transform_indices = @transform_5, window_bounds = array<i64: 16, 256>}]} {
    %c0 = arith.constant 0 : index
    %c0_0 = arith.constant 0 : index
    %0 = vector.load %arg1[%c0, %c0_0] : memref<512x32xf32, #tpu.memory_space<vmem>>, vector<512x32xf32>
    %c0_1 = arith.constant 0 : index
    %c0_2 = arith.constant 0 : index
    %1 = vector.load %arg2[%c0_1, %c0_2] : memref<32x32xf32, #tpu.memory_space<vmem>>, vector<32x32xf32>
    %cst = arith.constant dense<0.000000e+00> : vector<512x32xf32>
    %2 = tpu.matmul %0, %1, %cst {dimension_numbers = #tpu.dot_dimension_numbers<[1], [0], [0], [1], [0, 0, 1, 1], [], []>} : vector<512x32xf32>, vector<32x32xf32>, vector<512x32xf32> -> vector<512x32xf32>
    %c0_3 = arith.constant 0 : index
    %c0_4 = arith.constant 0 : index
    %3 = vector.load %arg3[%c0_3, %c0_4] : memref<1x32xf32, #tpu.memory_space<vmem>>, vector<1x32xf32>
    %4 = vector.broadcast %3 : vector<1x32xf32> to vector<512x32xf32>
    %5 = arith.addf %2, %4 : vector<512x32xf32>
    %cst_5 = arith.constant 0.000000e+00 : f32
    %6 = vector.broadcast %cst_5 : f32 to vector<512x32xf32>
    %7 = arith.maximumf %5, %6 : vector<512x32xf32>
    %cst_6 = arith.constant 0.000000e+00 : f32
    %8 = vector.broadcast %cst_6 : f32 to vector<32x32xf32>
    %9 = vector.extract_strided_slice %7 {offsets = [0, 0], sizes = [256, 32], strides = [1, 1]} : vector<512x32xf32> to vector<256x32xf32>
    %10 = vector.extract_strided_slice %7 {offsets = [256, 0], sizes = [256, 32], strides = [1, 1]} : vector<512x32xf32> to vector<256x32xf32>
    %cst_7 = arith.constant 0.000000e+00 : f32
    %11 = vector.broadcast %cst_7 : f32 to vector<8x32xf32>
    %12 = tpu.concatenate %11, %8, %9, %8, %8, %10, %8, %11 in 0 : vector<8x32xf32>, vector<32x32xf32>, vector<256x32xf32>, vector<32x32xf32>, vector<32x32xf32>, vector<256x32xf32>, vector<32x32xf32>, vector<8x32xf32> -> vector<656x32xf32>
    %13 = tpu.iota {dimensions = array<i32: 0>} : vector<640x1xi32>
    %c16_i32 = arith.constant 16 : i32
    %c0_i32 = arith.constant 0 : i32
    %14 = arith.cmpi eq, %c16_i32, %c0_i32 : i32
    %c1_i32 = arith.constant 1 : i32
    %15 = arith.select %14, %c1_i32, %c16_i32 : i32
    %16 = vector.broadcast %15 : i32 to vector<640x1xi32>
    %17 = arith.remsi %13, %16 : vector<640x1xi32>
    %c0_i32_8 = arith.constant 0 : i32
    %18 = vector.broadcast %c0_i32_8 : i32 to vector<640x1xi32>
    %19 = arith.cmpi ne, %17, %18 : vector<640x1xi32>
    %c0_i32_9 = arith.constant 0 : i32
    %20 = vector.broadcast %c0_i32_9 : i32 to vector<640x1xi32>
    %21 = arith.cmpi slt, %17, %20 : vector<640x1xi32>
    %c0_i32_10 = arith.constant 0 : i32
    %22 = arith.cmpi slt, %15, %c0_i32_10 : i32
    %23 = vector.broadcast %22 : i1 to vector<640x1xi1>
    %24 = vector.broadcast %23 : vector<640x1xi1> to vector<640x1xi1>
    %25 = arith.xori %21, %24 : vector<640x1xi1>
    %26 = arith.andi %25, %19 : vector<640x1xi1>
    %27 = vector.broadcast %15 : i32 to vector<640x1xi32>
    %28 = arith.addi %17, %27 : vector<640x1xi32>
    %29 = arith.select %26, %28, %17 : vector<640x1xi1>, vector<640x1xi32>
    %30 = vector.extract_strided_slice %12 {offsets = [6, 0], sizes = [640, 32], strides = [1, 1]} : vector<656x32xf32> to vector<640x32xf32>
    %c2_i32 = arith.constant 2 : i32
    %31 = vector.broadcast %c2_i32 : i32 to vector<640x1xi32>
    %32 = arith.cmpi sge, %29, %31 : vector<640x1xi32>
    %cst_11 = arith.constant 0.000000e+00 : f32
    %33 = vector.shape_cast %32 : vector<640x1xi1> to vector<640x1xi1>
    %34 = vector.broadcast %33 : vector<640x1xi1> to vector<640x32xi1>
    %35 = vector.broadcast %cst_11 : f32 to vector<640x32xf32>
    %36 = arith.select %34, %30, %35 : vector<640x32xi1>, vector<640x32xf32>
    %37 = vector.extract_strided_slice %12 {offsets = [7, 0], sizes = [640, 32], strides = [1, 1]} : vector<656x32xf32> to vector<640x32xf32>
    %c1_i32_12 = arith.constant 1 : i32
    %38 = vector.broadcast %c1_i32_12 : i32 to vector<640x1xi32>
    %39 = arith.cmpi sge, %29, %38 : vector<640x1xi32>
    %cst_13 = arith.constant 0.000000e+00 : f32
    %40 = vector.shape_cast %39 : vector<640x1xi1> to vector<640x1xi1>
    %41 = vector.broadcast %40 : vector<640x1xi1> to vector<640x32xi1>
    %42 = vector.broadcast %cst_13 : f32 to vector<640x32xf32>
    %43 = arith.select %41, %37, %42 : vector<640x32xi1>, vector<640x32xf32>
    %44 = vector.extract_strided_slice %12 {offsets = [8, 0], sizes = [640, 32], strides = [1, 1]} : vector<656x32xf32> to vector<640x32xf32>
    %45 = vector.extract_strided_slice %12 {offsets = [9, 0], sizes = [640, 32], strides = [1, 1]} : vector<656x32xf32> to vector<640x32xf32>
    %c15_i32 = arith.constant 15 : i32
    %46 = vector.broadcast %c15_i32 : i32 to vector<640x1xi32>
    %47 = arith.cmpi slt, %29, %46 : vector<640x1xi32>
    %cst_14 = arith.constant 0.000000e+00 : f32
    %48 = vector.shape_cast %47 : vector<640x1xi1> to vector<640x1xi1>
    %49 = vector.broadcast %48 : vector<640x1xi1> to vector<640x32xi1>
    %50 = vector.broadcast %cst_14 : f32 to vector<640x32xf32>
    %51 = arith.select %49, %45, %50 : vector<640x32xi1>, vector<640x32xf32>
    %52 = vector.extract_strided_slice %12 {offsets = [10, 0], sizes = [640, 32], strides = [1, 1]} : vector<656x32xf32> to vector<640x32xf32>
    %c14_i32 = arith.constant 14 : i32
    %53 = vector.broadcast %c14_i32 : i32 to vector<640x1xi32>
    %54 = arith.cmpi slt, %29, %53 : vector<640x1xi32>
    %cst_15 = arith.constant 0.000000e+00 : f32
    %55 = vector.shape_cast %54 : vector<640x1xi1> to vector<640x1xi1>
    %56 = vector.broadcast %55 : vector<640x1xi1> to vector<640x32xi1>
    %57 = vector.broadcast %cst_15 : f32 to vector<640x32xf32>
    %58 = arith.select %56, %52, %57 : vector<640x32xi1>, vector<640x32xf32>
    %59 = vector.extract_strided_slice %36 {offsets = [0, 0], sizes = [256, 32], strides = [1, 1]} : vector<640x32xf32> to vector<256x32xf32>
    %60 = vector.extract_strided_slice %36 {offsets = [320, 0], sizes = [256, 32], strides = [1, 1]} : vector<640x32xf32> to vector<256x32xf32>
    %61 = tpu.concatenate %59, %60 in 0 : vector<256x32xf32>, vector<256x32xf32> -> vector<512x32xf32>
    %62 = vector.extract_strided_slice %43 {offsets = [0, 0], sizes = [256, 32], strides = [1, 1]} : vector<640x32xf32> to vector<256x32xf32>
    %63 = vector.extract_strided_slice %43 {offsets = [320, 0], sizes = [256, 32], strides = [1, 1]} : vector<640x32xf32> to vector<256x32xf32>
    %64 = tpu.concatenate %62, %63 in 0 : vector<256x32xf32>, vector<256x32xf32> -> vector<512x32xf32>
    %65 = vector.extract_strided_slice %44 {offsets = [0, 0], sizes = [256, 32], strides = [1, 1]} : vector<640x32xf32> to vector<256x32xf32>
    %66 = vector.extract_strided_slice %44 {offsets = [320, 0], sizes = [256, 32], strides = [1, 1]} : vector<640x32xf32> to vector<256x32xf32>
    %67 = tpu.concatenate %65, %66 in 0 : vector<256x32xf32>, vector<256x32xf32> -> vector<512x32xf32>
    %68 = vector.extract_strided_slice %51 {offsets = [0, 0], sizes = [256, 32], strides = [1, 1]} : vector<640x32xf32> to vector<256x32xf32>
    %69 = vector.extract_strided_slice %51 {offsets = [320, 0], sizes = [256, 32], strides = [1, 1]} : vector<640x32xf32> to vector<256x32xf32>
    %70 = tpu.concatenate %68, %69 in 0 : vector<256x32xf32>, vector<256x32xf32> -> vector<512x32xf32>
    %71 = tpu.concatenate %61, %64, %67, %70 in 1 : vector<512x32xf32>, vector<512x32xf32>, vector<512x32xf32>, vector<512x32xf32> -> vector<512x128xf32>
    %c0_16 = arith.constant 0 : index
    %c0_17 = arith.constant 0 : index
    %72 = vector.load %arg7[%c0_16, %c0_17] : memref<512x896xf32, #tpu.memory_space<vmem>>, vector<512x128xf32>
    tpu.vector_store %arg7[%c0_16, %c0_17], %71 {strides = array<i32>} : memref<512x896xf32, #tpu.memory_space<vmem>>, vector<512x128xf32>,
    %73 = vector.extract_strided_slice %58 {offsets = [0, 0], sizes = [256, 32], strides = [1, 1]} : vector<640x32xf32> to vector<256x32xf32>
    %74 = vector.extract_strided_slice %58 {offsets = [320, 0], sizes = [256, 32], strides = [1, 1]} : vector<640x32xf32> to vector<256x32xf32>
    %75 = tpu.concatenate %73, %74 in 0 : vector<256x32xf32>, vector<256x32xf32> -> vector<512x32xf32>
    %76 = vector.extract_strided_slice %36 {offsets = [16, 0], sizes = [256, 32], strides = [1, 1]} : vector<640x32xf32> to vector<256x32xf32>
    %77 = vector.extract_strided_slice %36 {offsets = [336, 0], sizes = [256, 32], strides = [1, 1]} : vector<640x32xf32> to vector<256x32xf32>
    %78 = tpu.concatenate %76, %77 in 0 : vector<256x32xf32>, vector<256x32xf32> -> vector<512x32xf32>
    %79 = vector.extract_strided_slice %43 {offsets = [16, 0], sizes = [256, 32], strides = [1, 1]} : vector<640x32xf32> to vector<256x32xf32>
    %80 = vector.extract_strided_slice %43 {offsets = [336, 0], sizes = [256, 32], strides = [1, 1]} : vector<640x32xf32> to vector<256x32xf32>
    %81 = tpu.concatenate %79, %80 in 0 : vector<256x32xf32>, vector<256x32xf32> -> vector<512x32xf32>
    %82 = vector.extract_strided_slice %44 {offsets = [16, 0], sizes = [256, 32], strides = [1, 1]} : vector<640x32xf32> to vector<256x32xf32>
    %83 = vector.extract_strided_slice %44 {offsets = [336, 0], sizes = [256, 32], strides = [1, 1]} : vector<640x32xf32> to vector<256x32xf32>
    %84 = tpu.concatenate %82, %83 in 0 : vector<256x32xf32>, vector<256x32xf32> -> vector<512x32xf32>
    %85 = tpu.concatenate %75, %78, %81, %84 in 1 : vector<512x32xf32>, vector<512x32xf32>, vector<512x32xf32>, vector<512x32xf32> -> vector<512x128xf32>
    %c0_18 = arith.constant 0 : index
    %c128 = arith.constant 128 : index
    %86 = vector.load %arg7[%c0_18, %c128] : memref<512x896xf32, #tpu.memory_space<vmem>>, vector<512x128xf32>
    tpu.vector_store %arg7[%c0_18, %c128], %85 {strides = array<i32>} : memref<512x896xf32, #tpu.memory_space<vmem>>, vector<512x128xf32>,
    %87 = vector.extract_strided_slice %51 {offsets = [16, 0], sizes = [256, 32], strides = [1, 1]} : vector<640x32xf32> to vector<256x32xf32>
    %88 = vector.extract_strided_slice %51 {offsets = [336, 0], sizes = [256, 32], strides = [1, 1]} : vector<640x32xf32> to vector<256x32xf32>
    %89 = tpu.concatenate %87, %88 in 0 : vector<256x32xf32>, vector<256x32xf32> -> vector<512x32xf32>
    %90 = vector.extract_strided_slice %58 {offsets = [16, 0], sizes = [256, 32], strides = [1, 1]} : vector<640x32xf32> to vector<256x32xf32>
    %91 = vector.extract_strided_slice %58 {offsets = [336, 0], sizes = [256, 32], strides = [1, 1]} : vector<640x32xf32> to vector<256x32xf32>
    %92 = tpu.concatenate %90, %91 in 0 : vector<256x32xf32>, vector<256x32xf32> -> vector<512x32xf32>
    %93 = vector.extract_strided_slice %36 {offsets = [32, 0], sizes = [256, 32], strides = [1, 1]} : vector<640x32xf32> to vector<256x32xf32>
    %94 = vector.extract_strided_slice %36 {offsets = [352, 0], sizes = [256, 32], strides = [1, 1]} : vector<640x32xf32> to vector<256x32xf32>
    %95 = tpu.concatenate %93, %94 in 0 : vector<256x32xf32>, vector<256x32xf32> -> vector<512x32xf32>
    %96 = vector.extract_strided_slice %43 {offsets = [32, 0], sizes = [256, 32], strides = [1, 1]} : vector<640x32xf32> to vector<256x32xf32>
    %97 = vector.extract_strided_slice %43 {offsets = [352, 0], sizes = [256, 32], strides = [1, 1]} : vector<640x32xf32> to vector<256x32xf32>
    %98 = tpu.concatenate %96, %97 in 0 : vector<256x32xf32>, vector<256x32xf32> -> vector<512x32xf32>
    %99 = tpu.concatenate %89, %92, %95, %98 in 1 : vector<512x32xf32>, vector<512x32xf32>, vector<512x32xf32>, vector<512x32xf32> -> vector<512x128xf32>
    %c0_19 = arith.constant 0 : index
    %c256 = arith.constant 256 : index
    %100 = vector.load %arg7[%c0_19, %c256] : memref<512x896xf32, #tpu.memory_space<vmem>>, vector<512x128xf32>
    tpu.vector_store %arg7[%c0_19, %c256], %99 {strides = array<i32>} : memref<512x896xf32, #tpu.memory_space<vmem>>, vector<512x128xf32>,
    %101 = vector.extract_strided_slice %44 {offsets = [32, 0], sizes = [256, 32], strides = [1, 1]} : vector<640x32xf32> to vector<256x32xf32>
    %102 = vector.extract_strided_slice %44 {offsets = [352, 0], sizes = [256, 32], strides = [1, 1]} : vector<640x32xf32> to vector<256x32xf32>
    %103 = tpu.concatenate %101, %102 in 0 : vector<256x32xf32>, vector<256x32xf32> -> vector<512x32xf32>
    %104 = vector.extract_strided_slice %51 {offsets = [32, 0], sizes = [256, 32], strides = [1, 1]} : vector<640x32xf32> to vector<256x32xf32>
    %105 = vector.extract_strided_slice %51 {offsets = [352, 0], sizes = [256, 32], strides = [1, 1]} : vector<640x32xf32> to vector<256x32xf32>
    %106 = tpu.concatenate %104, %105 in 0 : vector<256x32xf32>, vector<256x32xf32> -> vector<512x32xf32>
    %107 = vector.extract_strided_slice %58 {offsets = [32, 0], sizes = [256, 32], strides = [1, 1]} : vector<640x32xf32> to vector<256x32xf32>
    %108 = vector.extract_strided_slice %58 {offsets = [352, 0], sizes = [256, 32], strides = [1, 1]} : vector<640x32xf32> to vector<256x32xf32>
    %109 = tpu.concatenate %107, %108 in 0 : vector<256x32xf32>, vector<256x32xf32> -> vector<512x32xf32>
    %110 = vector.extract_strided_slice %36 {offsets = [48, 0], sizes = [256, 32], strides = [1, 1]} : vector<640x32xf32> to vector<256x32xf32>
    %111 = vector.extract_strided_slice %36 {offsets = [368, 0], sizes = [256, 32], strides = [1, 1]} : vector<640x32xf32> to vector<256x32xf32>
    %112 = tpu.concatenate %110, %111 in 0 : vector<256x32xf32>, vector<256x32xf32> -> vector<512x32xf32>
    %113 = tpu.concatenate %103, %106, %109, %112 in 1 : vector<512x32xf32>, vector<512x32xf32>, vector<512x32xf32>, vector<512x32xf32> -> vector<512x128xf32>
    %c0_20 = arith.constant 0 : index
    %c384 = arith.constant 384 : index
    %114 = vector.load %arg7[%c0_20, %c384] : memref<512x896xf32, #tpu.memory_space<vmem>>, vector<512x128xf32>
    tpu.vector_store %arg7[%c0_20, %c384], %113 {strides = array<i32>} : memref<512x896xf32, #tpu.memory_space<vmem>>, vector<512x128xf32>,
    %115 = vector.extract_strided_slice %43 {offsets = [48, 0], sizes = [256, 32], strides = [1, 1]} : vector<640x32xf32> to vector<256x32xf32>
    %116 = vector.extract_strided_slice %43 {offsets = [368, 0], sizes = [256, 32], strides = [1, 1]} : vector<640x32xf32> to vector<256x32xf32>
    %117 = tpu.concatenate %115, %116 in 0 : vector<256x32xf32>, vector<256x32xf32> -> vector<512x32xf32>
    %118 = vector.extract_strided_slice %44 {offsets = [48, 0], sizes = [256, 32], strides = [1, 1]} : vector<640x32xf32> to vector<256x32xf32>
    %119 = vector.extract_strided_slice %44 {offsets = [368, 0], sizes = [256, 32], strides = [1, 1]} : vector<640x32xf32> to vector<256x32xf32>
    %120 = tpu.concatenate %118, %119 in 0 : vector<256x32xf32>, vector<256x32xf32> -> vector<512x32xf32>
    %121 = vector.extract_strided_slice %51 {offsets = [48, 0], sizes = [256, 32], strides = [1, 1]} : vector<640x32xf32> to vector<256x32xf32>
    %122 = vector.extract_strided_slice %51 {offsets = [368, 0], sizes = [256, 32], strides = [1, 1]} : vector<640x32xf32> to vector<256x32xf32>
    %123 = tpu.concatenate %121, %122 in 0 : vector<256x32xf32>, vector<256x32xf32> -> vector<512x32xf32>
    %124 = vector.extract_strided_slice %58 {offsets = [48, 0], sizes = [256, 32], strides = [1, 1]} : vector<640x32xf32> to vector<256x32xf32>
    %125 = vector.extract_strided_slice %58 {offsets = [368, 0], sizes = [256, 32], strides = [1, 1]} : vector<640x32xf32> to vector<256x32xf32>
    %126 = tpu.concatenate %124, %125 in 0 : vector<256x32xf32>, vector<256x32xf32> -> vector<512x32xf32>
    %127 = tpu.concatenate %117, %120, %123, %126 in 1 : vector<512x32xf32>, vector<512x32xf32>, vector<512x32xf32>, vector<512x32xf32> -> vector<512x128xf32>
    %c0_21 = arith.constant 0 : index
    %c512 = arith.constant 512 : index
    %128 = vector.load %arg7[%c0_21, %c512] : memref<512x896xf32, #tpu.memory_space<vmem>>, vector<512x128xf32>
    tpu.vector_store %arg7[%c0_21, %c512], %127 {strides = array<i32>} : memref<512x896xf32, #tpu.memory_space<vmem>>, vector<512x128xf32>,
    %129 = vector.extract_strided_slice %36 {offsets = [64, 0], sizes = [256, 32], strides = [1, 1]} : vector<640x32xf32> to vector<256x32xf32>
    %130 = vector.extract_strided_slice %36 {offsets = [384, 0], sizes = [256, 32], strides = [1, 1]} : vector<640x32xf32> to vector<256x32xf32>
    %131 = tpu.concatenate %129, %130 in 0 : vector<256x32xf32>, vector<256x32xf32> -> vector<512x32xf32>
    %132 = vector.extract_strided_slice %43 {offsets = [64, 0], sizes = [256, 32], strides = [1, 1]} : vector<640x32xf32> to vector<256x32xf32>
    %133 = vector.extract_strided_slice %43 {offsets = [384, 0], sizes = [256, 32], strides = [1, 1]} : vector<640x32xf32> to vector<256x32xf32>
    %134 = tpu.concatenate %132, %133 in 0 : vector<256x32xf32>, vector<256x32xf32> -> vector<512x32xf32>
    %135 = vector.extract_strided_slice %44 {offsets = [64, 0], sizes = [256, 32], strides = [1, 1]} : vector<640x32xf32> to vector<256x32xf32>
    %136 = vector.extract_strided_slice %44 {offsets = [384, 0], sizes = [256, 32], strides = [1, 1]} : vector<640x32xf32> to vector<256x32xf32>
    %137 = tpu.concatenate %135, %136 in 0 : vector<256x32xf32>, vector<256x32xf32> -> vector<512x32xf32>
    %138 = vector.extract_strided_slice %51 {offsets = [64, 0], sizes = [256, 32], strides = [1, 1]} : vector<640x32xf32> to vector<256x32xf32>
    %139 = vector.extract_strided_slice %51 {offsets = [384, 0], sizes = [256, 32], strides = [1, 1]} : vector<640x32xf32> to vector<256x32xf32>
    %140 = tpu.concatenate %138, %139 in 0 : vector<256x32xf32>, vector<256x32xf32> -> vector<512x32xf32>
    %141 = tpu.concatenate %131, %134, %137, %140 in 1 : vector<512x32xf32>, vector<512x32xf32>, vector<512x32xf32>, vector<512x32xf32> -> vector<512x128xf32>
    %c0_22 = arith.constant 0 : index
    %c640 = arith.constant 640 : index
    %142 = vector.load %arg7[%c0_22, %c640] : memref<512x896xf32, #tpu.memory_space<vmem>>, vector<512x128xf32>
    tpu.vector_store %arg7[%c0_22, %c640], %141 {strides = array<i32>} : memref<512x896xf32, #tpu.memory_space<vmem>>, vector<512x128xf32>,
    %143 = vector.extract_strided_slice %58 {offsets = [64, 0], sizes = [256, 32], strides = [1, 1]} : vector<640x32xf32> to vector<256x32xf32>
    %144 = vector.extract_strided_slice %58 {offsets = [384, 0], sizes = [256, 32], strides = [1, 1]} : vector<640x32xf32> to vector<256x32xf32>
    %145 = tpu.concatenate %143, %144 in 0 : vector<256x32xf32>, vector<256x32xf32> -> vector<512x32xf32>
    %cst_23 = arith.constant 0.000000e+00 : f32
    %146 = vector.broadcast %cst_23 : f32 to vector<512x32xf32>
    %cst_24 = arith.constant 0.000000e+00 : f32
    %147 = vector.broadcast %cst_24 : f32 to vector<512x32xf32>
    %cst_25 = arith.constant 0.000000e+00 : f32
    %148 = vector.broadcast %cst_25 : f32 to vector<512x32xf32>
    %149 = tpu.concatenate %145, %146, %147, %148 in 1 : vector<512x32xf32>, vector<512x32xf32>, vector<512x32xf32>, vector<512x32xf32> -> vector<512x128xf32>
    %c0_26 = arith.constant 0 : index
    %c768 = arith.constant 768 : index
    %150 = vector.load %arg7[%c0_26, %c768] : memref<512x896xf32, #tpu.memory_space<vmem>>, vector<512x128xf32>
    tpu.vector_store %arg7[%c0_26, %c768], %149 {strides = array<i32>} : memref<512x896xf32, #tpu.memory_space<vmem>>, vector<512x128xf32>,
    %c0_27 = arith.constant 0 : index
    %c0_28 = arith.constant 0 : index
    %151 = vector.load %arg7[%c0_27, %c0_28] : memref<512x896xf32, #tpu.memory_space<vmem>>, vector<512x896xf32>
    %c0_29 = arith.constant 0 : index
    %c0_30 = arith.constant 0 : index
    %152 = vector.load %arg4[%c0_29, %c0_30] : memref<896x32xf32, #tpu.memory_space<vmem>>, vector<896x32xf32>
    %cst_31 = arith.constant dense<0.000000e+00> : vector<512x32xf32>
    %153 = tpu.matmul %151, %152, %cst_31 {dimension_numbers = #tpu.dot_dimension_numbers<[1], [0], [0], [1], [0, 0, 1, 1], [], []>} : vector<512x896xf32>, vector<896x32xf32>, vector<512x32xf32> -> vector<512x32xf32>
    %c0_32 = arith.constant 0 : index
    %c0_33 = arith.constant 0 : index
    %154 = vector.load %arg5[%c0_32, %c0_33] : memref<1x32xf32, #tpu.memory_space<vmem>>, vector<1x32xf32>
    %155 = vector.broadcast %154 : vector<1x32xf32> to vector<512x32xf32>
    %156 = arith.addf %153, %155 : vector<512x32xf32>
    %cst_34 = arith.constant 0.000000e+00 : f32
    %157 = vector.broadcast %cst_34 : f32 to vector<512x32xf32>
    %158 = arith.maximumf %156, %157 : vector<512x32xf32>
    %159 = vector.shape_cast %158 : vector<512x32xf32> to vector<16x2x16x32xf32>
    %cst_35 = arith.constant dense<0xFF800000> : vector<16x16x32xf32>
    %160 = vector.multi_reduction <maximumf>, %159, %cst_35 [1] : vector<16x2x16x32xf32> to vector<16x16x32xf32>
    %161 = vector.extract_strided_slice %160 {offsets = [0, 0, 0], sizes = [16, 1, 32], strides = [1, 1, 1]} : vector<16x16x32xf32> to vector<16x1x32xf32>
    %162 = vector.shape_cast %161 : vector<16x1x32xf32> to vector<16x32xf32>
    %163 = vector.extract_strided_slice %160 {offsets = [0, 1, 0], sizes = [16, 1, 32], strides = [1, 1, 1]} : vector<16x16x32xf32> to vector<16x1x32xf32>
    %164 = vector.shape_cast %163 : vector<16x1x32xf32> to vector<16x32xf32>
    %165 = arith.maximumf %162, %164 : vector<16x32xf32>
    %166 = vector.extract_strided_slice %160 {offsets = [0, 2, 0], sizes = [16, 1, 32], strides = [1, 1, 1]} : vector<16x16x32xf32> to vector<16x1x32xf32>
    %167 = vector.shape_cast %166 : vector<16x1x32xf32> to vector<16x32xf32>
    %168 = vector.extract_strided_slice %160 {offsets = [0, 3, 0], sizes = [16, 1, 32], strides = [1, 1, 1]} : vector<16x16x32xf32> to vector<16x1x32xf32>
    %169 = vector.shape_cast %168 : vector<16x1x32xf32> to vector<16x32xf32>
    %170 = arith.maximumf %167, %169 : vector<16x32xf32>
    %171 = vector.extract_strided_slice %160 {offsets = [0, 4, 0], sizes = [16, 1, 32], strides = [1, 1, 1]} : vector<16x16x32xf32> to vector<16x1x32xf32>
    %172 = vector.shape_cast %171 : vector<16x1x32xf32> to vector<16x32xf32>
    %173 = vector.extract_strided_slice %160 {offsets = [0, 5, 0], sizes = [16, 1, 32], strides = [1, 1, 1]} : vector<16x16x32xf32> to vector<16x1x32xf32>
    %174 = vector.shape_cast %173 : vector<16x1x32xf32> to vector<16x32xf32>
    %175 = arith.maximumf %172, %174 : vector<16x32xf32>
    %176 = vector.extract_strided_slice %160 {offsets = [0, 6, 0], sizes = [16, 1, 32], strides = [1, 1, 1]} : vector<16x16x32xf32> to vector<16x1x32xf32>
    %177 = vector.shape_cast %176 : vector<16x1x32xf32> to vector<16x32xf32>
    %178 = vector.extract_strided_slice %160 {offsets = [0, 7, 0], sizes = [16, 1, 32], strides = [1, 1, 1]} : vector<16x16x32xf32> to vector<16x1x32xf32>
    %179 = vector.shape_cast %178 : vector<16x1x32xf32> to vector<16x32xf32>
    %180 = arith.maximumf %177, %179 : vector<16x32xf32>
    %181 = vector.extract_strided_slice %160 {offsets = [0, 8, 0], sizes = [16, 1, 32], strides = [1, 1, 1]} : vector<16x16x32xf32> to vector<16x1x32xf32>
    %182 = vector.shape_cast %181 : vector<16x1x32xf32> to vector<16x32xf32>
    %183 = vector.extract_strided_slice %160 {offsets = [0, 9, 0], sizes = [16, 1, 32], strides = [1, 1, 1]} : vector<16x16x32xf32> to vector<16x1x32xf32>
    %184 = vector.shape_cast %183 : vector<16x1x32xf32> to vector<16x32xf32>
    %185 = arith.maximumf %182, %184 : vector<16x32xf32>
    %186 = vector.extract_strided_slice %160 {offsets = [0, 10, 0], sizes = [16, 1, 32], strides = [1, 1, 1]} : vector<16x16x32xf32> to vector<16x1x32xf32>
    %187 = vector.shape_cast %186 : vector<16x1x32xf32> to vector<16x32xf32>
    %188 = vector.extract_strided_slice %160 {offsets = [0, 11, 0], sizes = [16, 1, 32], strides = [1, 1, 1]} : vector<16x16x32xf32> to vector<16x1x32xf32>
    %189 = vector.shape_cast %188 : vector<16x1x32xf32> to vector<16x32xf32>
    %190 = arith.maximumf %187, %189 : vector<16x32xf32>
    %191 = vector.extract_strided_slice %160 {offsets = [0, 12, 0], sizes = [16, 1, 32], strides = [1, 1, 1]} : vector<16x16x32xf32> to vector<16x1x32xf32>
    %192 = vector.shape_cast %191 : vector<16x1x32xf32> to vector<16x32xf32>
    %193 = vector.extract_strided_slice %160 {offsets = [0, 13, 0], sizes = [16, 1, 32], strides = [1, 1, 1]} : vector<16x16x32xf32> to vector<16x1x32xf32>
    %194 = vector.shape_cast %193 : vector<16x1x32xf32> to vector<16x32xf32>
    %195 = arith.maximumf %192, %194 : vector<16x32xf32>
    %196 = vector.extract_strided_slice %160 {offsets = [0, 14, 0], sizes = [16, 1, 32], strides = [1, 1, 1]} : vector<16x16x32xf32> to vector<16x1x32xf32>
    %197 = vector.shape_cast %196 : vector<16x1x32xf32> to vector<16x32xf32>
    %198 = vector.extract_strided_slice %160 {offsets = [0, 15, 0], sizes = [16, 1, 32], strides = [1, 1, 1]} : vector<16x16x32xf32> to vector<16x1x32xf32>
    %199 = vector.shape_cast %198 : vector<16x1x32xf32> to vector<16x32xf32>
    %200 = arith.maximumf %197, %199 : vector<16x32xf32>
    %201 = tpu.concatenate %165, %170, %175, %180, %185, %190, %195, %200 in 1 : vector<16x32xf32>, vector<16x32xf32>, vector<16x32xf32>, vector<16x32xf32>, vector<16x32xf32>, vector<16x32xf32>, vector<16x32xf32>, vector<16x32xf32> -> vector<16x256xf32>
    %c0_36 = arith.constant 0 : index
    %c0_37 = arith.constant 0 : index
    %202 = vector.load %arg6[%c0_36, %c0_37] : memref<16x256xf32, #tpu.memory_space<vmem>>, vector<16x256xf32>
    tpu.vector_store %arg6[%c0_36, %c0_37], %201 {strides = array<i32>} : memref<16x256xf32, #tpu.memory_space<vmem>>, vector<16x256xf32>,
    return
  }
  func.func @transform_0(%arg0: i32) -> (i32, i32) {
    %c0_i32 = arith.constant 0 : i32
    %c0_i32_0 = arith.constant 0 : i32
    %c0_i32_1 = arith.constant 0 : i32
    return %c0_i32, %c0_i32_0 : i32, i32
  }
  func.func @transform_1(%arg0: i32) -> (i32, i32) {
    %c0_i32 = arith.constant 0 : i32
    %c0_i32_0 = arith.constant 0 : i32
    %c0_i32_1 = arith.constant 0 : i32
    return %c0_i32, %c0_i32_0 : i32, i32
  }
  func.func @transform_2(%arg0: i32) -> (i32, i32) {
    %c0_i32 = arith.constant 0 : i32
    %c0_i32_0 = arith.constant 0 : i32
    %c0_i32_1 = arith.constant 0 : i32
    return %c0_i32, %c0_i32_0 : i32, i32
  }
  func.func @transform_3(%arg0: i32) -> (i32, i32) {
    %c0_i32 = arith.constant 0 : i32
    %c0_i32_0 = arith.constant 0 : i32
    %c0_i32_1 = arith.constant 0 : i32
    return %c0_i32, %c0_i32_0 : i32, i32
  }
  func.func @transform_4(%arg0: i32) -> (i32, i32) {
    %c0_i32 = arith.constant 0 : i32
    %c0_i32_0 = arith.constant 0 : i32
    %c0_i32_1 = arith.constant 0 : i32
    return %c0_i32, %c0_i32_0 : i32, i32
  }
  func.func @transform_5(%arg0: i32) -> (i32, i32) {
    %c0_i32 = arith.constant 0 : i32
    %c0_i32_0 = arith.constant 0 : i32
    %c0_i32_1 = arith.constant 0 : i32
    return %c0_i32, %c0_i32_0 : i32, i32
  }
}

</mosaic_0001>

<llo_original>
// kernel: tpu_custom_call.1
$region0: #{tpu_custom_call.1}
  #allocation0 [shape = 'u32[]', space=smem, size = 0x4, offset = 0x4, fixed_abs, tag = 'smem constant byte address 0x4 - core index']
  #allocation1 [shape = 'u32[144,128]{1,0:T(1,128)}', space=vmem, size = 0x12000, scoped, tag = 'internal scratch']
  #allocation2 [shape = 'f32[512,896]{1,0:T(8,128)}', space=vmem, size = 0x1c0000, scoped, tag = 'scratch operand']
  %s0 = inlined_call_operand.vmem [shape: f32[512,32], index: 0, kind: input, shape index: {}]
  %s1 = inlined_call_operand.vmem [shape: f32[32,32], index: 1, kind: input, shape index: {}]
  %s2 = inlined_call_operand.vmem [shape: f32[1,32], index: 2, kind: input, shape index: {}]
  %s3 = inlined_call_operand.vmem [shape: f32[896,32], index: 3, kind: input, shape index: {}]
  %s4 = inlined_call_operand.vmem [shape: f32[1,32], index: 4, kind: input, shape index: {}]
  %s5 = inlined_call_operand.hbm [shape: f32[16,256], index: 5, kind: output, shape index: {}]
  %s6 = sld [smem:[#allocation0]]
  $region30: #{tpu_custom_call.1} parent=0
    _
  %s8 = ssub.s32 1, %s6
  %s9 = scalar_select 0, %s8, %s6
  $region1: #{tpu_custom_call.1} parent=0
    #allocation3 [shape = 'u8[16384]{0}', space=vmem, size = 0x4000, scoped, tag = 'output window, operand 0, single buffered']
    #allocation4 [shape = 's32[1]{0}', space=sflag, size = 0x4, scoped, tag = 'scoped memory for tpu_custom_call.1']
    %10 = vsyncpa [#allocation4], 0
    // Predicated region
    $region2: #{tpu_custom_call.1} parent=1 // pred_check
      _
    $region3: #{tpu_custom_call.1} parent=1 // pred_check_branch
      %12 = sbr.rel (0) target = $region5
    $region4: #{tpu_custom_call.1} parent=1 // pred_region
      _
    $region5: #{tpu_custom_call.1} parent=1 // pred_fallthru
      _
    // Predicated region
    $region6: #{tpu_custom_call.1} parent=1 // pred_check
      _
    $region7: #{tpu_custom_call.1} parent=1 // pred_check_branch
      %14 = sbr.rel (0) target = $region9
    $region8: #{tpu_custom_call.1} parent=1 // pred_region
      _
    $region9: #{tpu_custom_call.1} parent=1 // pred_fallthru
      _
    // Predicated region
    $region10: #{tpu_custom_call.1} parent=1 // pred_check
      _
    $region11: #{tpu_custom_call.1} parent=1 // pred_check_branch
      %16 = sbr.rel (0) target = $region13
    $region12: #{tpu_custom_call.1} parent=1 // pred_region
      _
    $region13: #{tpu_custom_call.1} parent=1 // pred_fallthru
      _
    // Predicated region
    $region14: #{tpu_custom_call.1} parent=1 // pred_check
      _
    $region15: #{tpu_custom_call.1} parent=1 // pred_check_branch
      %18 = sbr.rel (0) target = $region17
    $region16: #{tpu_custom_call.1} parent=1 // pred_region
      _
    $region17: #{tpu_custom_call.1} parent=1 // pred_fallthru
      _
    // Predicated region
    $region18: #{tpu_custom_call.1} parent=1 // pred_check
      _
    $region19: #{tpu_custom_call.1} parent=1 // pred_check_branch
      %20 = sbr.rel (0) target = $region21
    $region20: #{tpu_custom_call.1} parent=1 // pred_region
      _
    $region21: #{tpu_custom_call.1} parent=1 // pred_fallthru
      _
    %v21 = vld [vmem:[%s0] sm:$0xff]
    %v22 = vld [vmem:[%s0 + $0x8] sm:$0xff]
    %v23 = vld [vmem:[%s0 + $0x10] sm:$0xff]
    %v24 = vld [vmem:[%s0 + $0x18] sm:$0xff]
    %v25 = vld [vmem:[%s0 + $0x20] sm:$0xff]
    %v26 = vld [vmem:[%s0 + $0x28] sm:$0xff]
    %v27 = vld [vmem:[%s0 + $0x30] sm:$0xff]
    %v28 = vld [vmem:[%s0 + $0x38] sm:$0xff]
    %v29 = vld [vmem:[%s0 + $0x40] sm:$0xff]
    %v30 = vld [vmem:[%s0 + $0x48] sm:$0xff]
    %v31 = vld [vmem:[%s0 + $0x50] sm:$0xff]
    %v32 = vld [vmem:[%s0 + $0x58] sm:$0xff]
    %v33 = vld [vmem:[%s0 + $0x60] sm:$0xff]
    %v34 = vld [vmem:[%s0 + $0x68] sm:$0xff]
    %v35 = vld [vmem:[%s0 + $0x70] sm:$0xff]
    %v36 = vld [vmem:[%s0 + $0x78] sm:$0xff]
    %v37 = vld [vmem:[%s0 + $0x80] sm:$0xff]
    %v38 = vld [vmem:[%s0 + $0x88] sm:$0xff]
    %v39 = vld [vmem:[%s0 + $0x90] sm:$0xff]
    %v40 = vld [vmem:[%s0 + $0x98] sm:$0xff]
    %v41 = vld [vmem:[%s0 + $0xa0] sm:$0xff]
    %v42 = vld [vmem:[%s0 + $0xa8] sm:$0xff]
    %v43 = vld [vmem:[%s0 + $0xb0] sm:$0xff]
    %v44 = vld [vmem:[%s0 + $0xb8] sm:$0xff]
    %v45 = vld [vmem:[%s0 + $0xc0] sm:$0xff]
    %v46 = vld [vmem:[%s0 + $0xc8] sm:$0xff]
    %v47 = vld [vmem:[%s0 + $0xd0] sm:$0xff]
    %v48 = vld [vmem:[%s0 + $0xd8] sm:$0xff]
    %v49 = vld [vmem:[%s0 + $0xe0] sm:$0xff]
    %v50 = vld [vmem:[%s0 + $0xe8] sm:$0xff]
    %v51 = vld [vmem:[%s0 + $0xf0] sm:$0xff]
    %v52 = vld [vmem:[%s0 + $0xf8] sm:$0xff]
    %v53 = vld [vmem:[%s0 + $0x100] sm:$0xff]
    %v54 = vld [vmem:[%s0 + $0x108] sm:$0xff]
    %v55 = vld [vmem:[%s0 + $0x110] sm:$0xff]
    %v56 = vld [vmem:[%s0 + $0x118] sm:$0xff]
    %v57 = vld [vmem:[%s0 + $0x120] sm:$0xff]
    %v58 = vld [vmem:[%s0 + $0x128] sm:$0xff]
    %v59 = vld [vmem:[%s0 + $0x130] sm:$0xff]
    %v60 = vld [vmem:[%s0 + $0x138] sm:$0xff]
    %v61 = vld [vmem:[%s0 + $0x140] sm:$0xff]
    %v62 = vld [vmem:[%s0 + $0x148] sm:$0xff]
    %v63 = vld [vmem:[%s0 + $0x150] sm:$0xff]
    %v64 = vld [vmem:[%s0 + $0x158] sm:$0xff]
    %v65 = vld [vmem:[%s0 + $0x160] sm:$0xff]
    %v66 = vld [vmem:[%s0 + $0x168] sm:$0xff]
    %v67 = vld [vmem:[%s0 + $0x170] sm:$0xff]
    %v68 = vld [vmem:[%s0 + $0x178] sm:$0xff]
    %v69 = vld [vmem:[%s0 + $0x180] sm:$0xff]
    %v70 = vld [vmem:[%s0 + $0x188] sm:$0xff]
    %v71 = vld [vmem:[%s0 + $0x190] sm:$0xff]
    %v72 = vld [vmem:[%s0 + $0x198] sm:$0xff]
    %v73 = vld [vmem:[%s0 + $0x1a0] sm:$0xff]
    %v74 = vld [vmem:[%s0 + $0x1a8] sm:$0xff]
    %v75 = vld [vmem:[%s0 + $0x1b0] sm:$0xff]
    %v76 = vld [vmem:[%s0 + $0x1b8] sm:$0xff]
    %v77 = vld [vmem:[%s0 + $0x1c0] sm:$0xff]
    %v78 = vld [vmem:[%s0 + $0x1c8] sm:$0xff]
    %v79 = vld [vmem:[%s0 + $0x1d0] sm:$0xff]
    %v80 = vld [vmem:[%s0 + $0x1d8] sm:$0xff]
    %v81 = vld [vmem:[%s0 + $0x1e0] sm:$0xff]
    %v82 = vld [vmem:[%s0 + $0x1e8] sm:$0xff]
    %v83 = vld [vmem:[%s0 + $0x1f0] sm:$0xff]
    %v84 = vld [vmem:[%s0 + $0x1f8] sm:$0xff]
    %v85 = vld [vmem:[%s1] sm:$0xff]
    %v86 = vld [vmem:[%s1 + $0x8] sm:$0xff]
    %v87 = vld [vmem:[%s1 + $0x10] sm:$0xff]
    %v88 = vld [vmem:[%s1 + $0x18] sm:$0xff]
    %v89 = vld [vmem:[%s2] sm:$0x1]
    %v91 = vlaneseq
    %v92 = vshrl.u32 %v91, 7
    %v93 = vsub.s32 0, %v92
    %v94 = vrot.slane %v89, %v93
    %vm96 = vcmask 261120
    %v98 = vsel %vm96, %v21, 0
    %v101 = vsel %vm96, %v22, 0
    %v104 = vsel %vm96, %v23, 0
    %v107 = vsel %vm96, %v24, 0
    %v110 = vsel %vm96, %v25, 0
    %v113 = vsel %vm96, %v26, 0
    %v116 = vsel %vm96, %v27, 0
    %v119 = vsel %vm96, %v28, 0
    %v122 = vsel %vm96, %v29, 0
    %v125 = vsel %vm96, %v30, 0
    %v128 = vsel %vm96, %v31, 0
    %v131 = vsel %vm96, %v32, 0
    %v134 = vsel %vm96, %v33, 0
    %v137 = vsel %vm96, %v34, 0
    %v140 = vsel %vm96, %v35, 0
    %v143 = vsel %vm96, %v36, 0
    %v146 = vsel %vm96, %v37, 0
    %v149 = vsel %vm96, %v38, 0
    %v152 = vsel %vm96, %v39, 0
    %v155 = vsel %vm96, %v40, 0
    %v158 = vsel %vm96, %v41, 0
    %v161 = vsel %vm96, %v42, 0
    %v164 = vsel %vm96, %v43, 0
    %v167 = vsel %vm96, %v44, 0
    %v170 = vsel %vm96, %v45, 0
    %v173 = vsel %vm96, %v46, 0
    %v176 = vsel %vm96, %v47, 0
    %v179 = vsel %vm96, %v48, 0
    %v182 = vsel %vm96, %v49, 0
    %v185 = vsel %vm96, %v50, 0
    %v188 = vsel %vm96, %v51, 0
    %v191 = vsel %vm96, %v52, 0
    %v194 = vsel %vm96, %v53, 0
    %v197 = vsel %vm96, %v54, 0
    %v200 = vsel %vm96, %v55, 0
    %v203 = vsel %vm96, %v56, 0
    %v206 = vsel %vm96, %v57, 0
    %v209 = vsel %vm96, %v58, 0
    %v212 = vsel %vm96, %v59, 0
    %v215 = vsel %vm96, %v60, 0
    %v218 = vsel %vm96, %v61, 0
    %v221 = vsel %vm96, %v62, 0
    %v224 = vsel %vm96, %v63, 0
    %v227 = vsel %vm96, %v64, 0
    %v230 = vsel %vm96, %v65, 0
    %v233 = vsel %vm96, %v66, 0
    %v236 = vsel %vm96, %v67, 0
    %v239 = vsel %vm96, %v68, 0
    %v242 = vsel %vm96, %v69, 0
    %v245 = vsel %vm96, %v70, 0
    %v248 = vsel %vm96, %v71, 0
    %v251 = vsel %vm96, %v72, 0
    %v254 = vsel %vm96, %v73, 0
    %v257 = vsel %vm96, %v74, 0
    %v260 = vsel %vm96, %v75, 0
    %v263 = vsel %vm96, %v76, 0
    %v266 = vsel %vm96, %v77, 0
    %v269 = vsel %vm96, %v78, 0
    %v272 = vsel %vm96, %v79, 0
    %v275 = vsel %vm96, %v80, 0
    %v278 = vsel %vm96, %v81, 0
    %v281 = vsel %vm96, %v82, 0
    %v284 = vsel %vm96, %v83, 0
    %v287 = vsel %vm96, %v84, 0
    %289 = vmatprep.subr.mxu0 0.0
    %290 = vmatpush1.msra.mxu0 0.0
    %291 = vmatprep.subr.mxu0 0.0
    %292 = vmatpush1.msra.mxu0 0.0
    %293 = vmatprep.subr.mxu0 0.0
    %294 = vmatpush1.msra.mxu0 0.0
    %295 = vmatprep.subr.mxu0 0.0
    %296 = vmatpush1.msra.mxu0 0.0
    %297 = vmatprep.subr.mxu0 0.0
    %298 = vmatpush1.msra.mxu0 0.0
    %299 = vmatprep.subr.mxu0 0.0
    %300 = vmatpush1.msra.mxu0 0.0
    %301 = vmatprep.subr.mxu0 0.0
    %302 = vmatpush1.msra.mxu0 0.0
    %303 = vmatprep.subr.mxu0 0.0
    %304 = vmatpush1.msra.mxu0 0.0
    %305 = vmatprep.subr.mxu0 0.0
    %306 = vmatpush1.msra.mxu0 0.0
    %307 = vmatprep.subr.mxu0 0.0
    %308 = vmatpush1.msra.mxu0 0.0
    %309 = vmatprep.subr.mxu0 0.0
    %310 = vmatpush1.msra.mxu0 0.0
    %311 = vmatprep.subr.mxu0 0.0
    %312 = vmatpush1.msra.mxu0 0.0
    %313 = vmatprep.subr.mxu0 0.0
    %314 = vmatpush1.msra.mxu0 %v88
    %315 = vmatprep.subr.mxu0 0.0
    %316 = vmatpush1.msra.mxu0 %v87
    %317 = vmatprep.subr.mxu0 0.0
    %318 = vmatpush1.msra.mxu0 %v86
    %319 = vmatprep.subr.mxu0 0.0
    %320 = vmatpush1.msra.mxu0 %v85
    %321 = vmatprep.subr.mxu0 0.0
    %322 = vmatpush2.msra.mxu0 0.0
    %323 = vmatprep.subr.mxu0 0.0
    %324 = vmatpush2.msra.mxu0 0.0
    %325 = vmatprep.subr.mxu0 0.0
    %326 = vmatpush2.msra.mxu0 0.0
    %327 = vmatprep.subr.mxu0 0.0
    %328 = vmatpush2.msra.mxu0 0.0
    %329 = vmatprep.subr.mxu0 0.0
    %330 = vmatpush2.msra.mxu0 0.0
    %331 = vmatprep.subr.mxu0 0.0
    %332 = vmatpush2.msra.mxu0 0.0
    %333 = vmatprep.subr.mxu0 0.0
    %334 = vmatpush2.msra.mxu0 0.0
    %335 = vmatprep.subr.mxu0 0.0
    %336 = vmatpush2.msra.mxu0 0.0
    %337 = vmatprep.subr.mxu0 0.0
    %338 = vmatpush2.msra.mxu0 0.0
    %339 = vmatprep.subr.mxu0 0.0
    %340 = vmatpush2.msra.mxu0 0.0
    %341 = vmatprep.subr.mxu0 0.0
    %342 = vmatpush2.msra.mxu0 0.0
    %343 = vmatprep.subr.mxu0 0.0
    %344 = vmatpush2.msra.mxu0 0.0
    %345 = vmatprep.subr.mxu0 0.0
    %346 = vmatpush2.msra.mxu0 0.0
    %347 = vmatprep.subr.mxu0 0.0
    %348 = vmatpush2.msra.mxu0 0.0
    %349 = vmatprep.subr.mxu0 0.0
    %350 = vmatpush2.msra.mxu0 0.0
    %351 = vmatprep.subr.mxu0 0.0
    %352 = vmatpush2.msra.mxu0 0.0
    %353 = vmatprep.mubr.f32.mxu0 0.0
    %354 = vmatmul.mubr.f32.gmra.mxu0 %v98
    %v355 = vpop.f32.mrf.mxu0
    %v356 = vadd.f32 %v94, %v355
    %v357 = vpop.f32.mrf.mxu0
    %358 = vmatprep.mubr.f32.mxu0 0.0
    %359 = vmatmul.mubr.f32.gmra.mxu0 %v101
    %v360 = vpop.f32.mrf.mxu0
    %v361 = vadd.f32 %v94, %v360
    %v362 = vpop.f32.mrf.mxu0
    %363 = vmatprep.mubr.f32.mxu0 0.0
    %364 = vmatmul.mubr.f32.gmra.mxu0 %v104
    %v365 = vpop.f32.mrf.mxu0
    %v366 = vadd.f32 %v94, %v365
    %v367 = vpop.f32.mrf.mxu0
    %368 = vmatprep.mubr.f32.mxu0 0.0
    %369 = vmatmul.mubr.f32.gmra.mxu0 %v107
    %v370 = vpop.f32.mrf.mxu0
    %v371 = vadd.f32 %v94, %v370
    %v372 = vpop.f32.mrf.mxu0
    %373 = vmatprep.mubr.f32.mxu0 0.0
    %374 = vmatmul.mubr.f32.gmra.mxu0 %v110
    %v375 = vpop.f32.mrf.mxu0
    %v376 = vadd.f32 %v94, %v375
    %v377 = vpop.f32.mrf.mxu0
    %378 = vmatprep.mubr.f32.mxu0 0.0
    %379 = vmatmul.mubr.f32.gmra.mxu0 %v113
    %v380 = vpop.f32.mrf.mxu0
    %v381 = vadd.f32 %v94, %v380
    %v382 = vpop.f32.mrf.mxu0
    %383 = vmatprep.mubr.f32.mxu0 0.0
    %384 = vmatmul.mubr.f32.gmra.mxu0 %v116
    %v385 = vpop.f32.mrf.mxu0
    %v386 = vadd.f32 %v94, %v385
    %v387 = vpop.f32.mrf.mxu0
    %388 = vmatprep.mubr.f32.mxu0 0.0
    %389 = vmatmul.mubr.f32.gmra.mxu0 %v119
    %v390 = vpop.f32.mrf.mxu0
    %v391 = vadd.f32 %v94, %v390
    %v392 = vpop.f32.mrf.mxu0
    %393 = vmatprep.mubr.f32.mxu0 0.0
    %394 = vmatmul.mubr.f32.gmra.mxu0 %v122
    %v395 = vpop.f32.mrf.mxu0
    %v396 = vadd.f32 %v94, %v395
    %v397 = vpop.f32.mrf.mxu0
    %398 = vmatprep.mubr.f32.mxu0 0.0
    %399 = vmatmul.mubr.f32.gmra.mxu0 %v125
    %v400 = vpop.f32.mrf.mxu0
    %v401 = vadd.f32 %v94, %v400
    %v402 = vpop.f32.mrf.mxu0
    %403 = vmatprep.mubr.f32.mxu0 0.0
    %404 = vmatmul.mubr.f32.gmra.mxu0 %v128
    %v405 = vpop.f32.mrf.mxu0
    %v406 = vadd.f32 %v94, %v405
    %v407 = vpop.f32.mrf.mxu0
    %408 = vmatprep.mubr.f32.mxu0 0.0
    %409 = vmatmul.mubr.f32.gmra.mxu0 %v131
    %v410 = vpop.f32.mrf.mxu0
    %v411 = vadd.f32 %v94, %v410
    %v412 = vpop.f32.mrf.mxu0
    %413 = vmatprep.mubr.f32.mxu0 0.0
    %414 = vmatmul.mubr.f32.gmra.mxu0 %v134
    %v415 = vpop.f32.mrf.mxu0
    %v416 = vadd.f32 %v94, %v415
    %v417 = vpop.f32.mrf.mxu0
    %418 = vmatprep.mubr.f32.mxu0 0.0
    %419 = vmatmul.mubr.f32.gmra.mxu0 %v137
    %v420 = vpop.f32.mrf.mxu0
    %v421 = vadd.f32 %v94, %v420
    %v422 = vpop.f32.mrf.mxu0
    %423 = vmatprep.mubr.f32.mxu0 0.0
    %424 = vmatmul.mubr.f32.gmra.mxu0 %v140
    %v425 = vpop.f32.mrf.mxu0
    %v426 = vadd.f32 %v94, %v425
    %v427 = vpop.f32.mrf.mxu0
    %428 = vmatprep.mubr.f32.mxu0 0.0
    %429 = vmatmul.mubr.f32.gmra.mxu0 %v143
    %v430 = vpop.f32.mrf.mxu0
    %v431 = vadd.f32 %v94, %v430
    %v432 = vpop.f32.mrf.mxu0
    %433 = vmatprep.mubr.f32.mxu0 0.0
    %434 = vmatmul.mubr.f32.gmra.mxu0 %v146
    %v435 = vpop.f32.mrf.mxu0
    %v436 = vadd.f32 %v94, %v435
    %v437 = vpop.f32.mrf.mxu0
    %438 = vmatprep.mubr.f32.mxu0 0.0
    %439 = vmatmul.mubr.f32.gmra.mxu0 %v149
    %v440 = vpop.f32.mrf.mxu0
    %v441 = vadd.f32 %v94, %v440
    %v442 = vpop.f32.mrf.mxu0
    %443 = vmatprep.mubr.f32.mxu0 0.0
    %444 = vmatmul.mubr.f32.gmra.mxu0 %v152
    %v445 = vpop.f32.mrf.mxu0
    %v446 = vadd.f32 %v94, %v445
    %v447 = vpop.f32.mrf.mxu0
    %448 = vmatprep.mubr.f32.mxu0 0.0
    %449 = vmatmul.mubr.f32.gmra.mxu0 %v155
    %v450 = vpop.f32.mrf.mxu0
    %v451 = vadd.f32 %v94, %v450
    %v452 = vpop.f32.mrf.mxu0
    %453 = vmatprep.mubr.f32.mxu0 0.0
    %454 = vmatmul.mubr.f32.gmra.mxu0 %v158
    %v455 = vpop.f32.mrf.mxu0
    %v456 = vadd.f32 %v94, %v455
    %v457 = vpop.f32.mrf.mxu0
    %458 = vmatprep.mubr.f32.mxu0 0.0
    %459 = vmatmul.mubr.f32.gmra.mxu0 %v161
    %v460 = vpop.f32.mrf.mxu0
    %v461 = vadd.f32 %v94, %v460
    %v462 = vpop.f32.mrf.mxu0
    %463 = vmatprep.mubr.f32.mxu0 0.0
    %464 = vmatmul.mubr.f32.gmra.mxu0 %v164
    %v465 = vpop.f32.mrf.mxu0
    %v466 = vadd.f32 %v94, %v465
    %v467 = vpop.f32.mrf.mxu0
    %468 = vmatprep.mubr.f32.mxu0 0.0
    %469 = vmatmul.mubr.f32.gmra.mxu0 %v167
    %v470 = vpop.f32.mrf.mxu0
    %v471 = vadd.f32 %v94, %v470
    %v472 = vpop.f32.mrf.mxu0
    %473 = vmatprep.mubr.f32.mxu0 0.0
    %474 = vmatmul.mubr.f32.gmra.mxu0 %v170
    %v475 = vpop.f32.mrf.mxu0
    %v476 = vadd.f32 %v94, %v475
    %v477 = vpop.f32.mrf.mxu0
    %478 = vmatprep.mubr.f32.mxu0 0.0
    %479 = vmatmul.mubr.f32.gmra.mxu0 %v173
    %v480 = vpop.f32.mrf.mxu0
    %v481 = vadd.f32 %v94, %v480
    %v482 = vpop.f32.mrf.mxu0
    %483 = vmatprep.mubr.f32.mxu0 0.0
    %484 = vmatmul.mubr.f32.gmra.mxu0 %v176
    %v485 = vpop.f32.mrf.mxu0
    %v486 = vadd.f32 %v94, %v485
    %v487 = vpop.f32.mrf.mxu0
    %488 = vmatprep.mubr.f32.mxu0 0.0
    %489 = vmatmul.mubr.f32.gmra.mxu0 %v179
    %v490 = vpop.f32.mrf.mxu0
    %v491 = vadd.f32 %v94, %v490
    %v492 = vpop.f32.mrf.mxu0
    %493 = vmatprep.mubr.f32.mxu0 0.0
    %494 = vmatmul.mubr.f32.gmra.mxu0 %v182
    %v495 = vpop.f32.mrf.mxu0
    %v496 = vadd.f32 %v94, %v495
    %v497 = vpop.f32.mrf.mxu0
    %498 = vmatprep.mubr.f32.mxu0 0.0
    %499 = vmatmul.mubr.f32.gmra.mxu0 %v185
    %v500 = vpop.f32.mrf.mxu0
    %v501 = vadd.f32 %v94, %v500
    %v502 = vpop.f32.mrf.mxu0
    %503 = vmatprep.mubr.f32.mxu0 0.0
    %504 = vmatmul.mubr.f32.gmra.mxu0 %v188
    %v505 = vpop.f32.mrf.mxu0
    %v506 = vadd.f32 %v94, %v505
    %v507 = vpop.f32.mrf.mxu0
    %508 = vmatprep.mubr.f32.mxu0 0.0
    %509 = vmatmul.mubr.f32.gmra.mxu0 %v191
    %v510 = vpop.f32.mrf.mxu0
    %v511 = vadd.f32 %v94, %v510
    %v512 = vpop.f32.mrf.mxu0
    %513 = vmatprep.mubr.f32.mxu0 0.0
    %514 = vmatmul.mubr.f32.gmra.mxu0 %v194
    %v515 = vpop.f32.mrf.mxu0
    %v516 = vadd.f32 %v94, %v515
    %v517 = vpop.f32.mrf.mxu0
    %518 = vmatprep.mubr.f32.mxu0 0.0
    %519 = vmatmul.mubr.f32.gmra.mxu0 %v197
    %v520 = vpop.f32.mrf.mxu0
    %v521 = vadd.f32 %v94, %v520
    %v522 = vpop.f32.mrf.mxu0
    %523 = vmatprep.mubr.f32.mxu0 0.0
    %524 = vmatmul.mubr.f32.gmra.mxu0 %v200
    %v525 = vpop.f32.mrf.mxu0
    %v526 = vadd.f32 %v94, %v525
    %v527 = vpop.f32.mrf.mxu0
    %528 = vmatprep.mubr.f32.mxu0 0.0
    %529 = vmatmul.mubr.f32.gmra.mxu0 %v203
    %v530 = vpop.f32.mrf.mxu0
    %v531 = vadd.f32 %v94, %v530
    %v532 = vpop.f32.mrf.mxu0
    %533 = vmatprep.mubr.f32.mxu0 0.0
    %534 = vmatmul.mubr.f32.gmra.mxu0 %v206
    %v535 = vpop.f32.mrf.mxu0
    %v536 = vadd.f32 %v94, %v535
    %v537 = vpop.f32.mrf.mxu0
    %538 = vmatprep.mubr.f32.mxu0 0.0
    %539 = vmatmul.mubr.f32.gmra.mxu0 %v209
    %v540 = vpop.f32.mrf.mxu0
    %v541 = vadd.f32 %v94, %v540
    %v542 = vpop.f32.mrf.mxu0
    %543 = vmatprep.mubr.f32.mxu0 0.0
    %544 = vmatmul.mubr.f32.gmra.mxu0 %v212
    %v545 = vpop.f32.mrf.mxu0
    %v546 = vadd.f32 %v94, %v545
    %v547 = vpop.f32.mrf.mxu0
    %548 = vmatprep.mubr.f32.mxu0 0.0
    %549 = vmatmul.mubr.f32.gmra.mxu0 %v215
    %v550 = vpop.f32.mrf.mxu0
    %v551 = vadd.f32 %v94, %v550
    %v552 = vpop.f32.mrf.mxu0
    %553 = vmatprep.mubr.f32.mxu0 0.0
    %554 = vmatmul.mubr.f32.gmra.mxu0 %v218
    %v555 = vpop.f32.mrf.mxu0
    %v556 = vadd.f32 %v94, %v555
    %v557 = vpop.f32.mrf.mxu0
    %558 = vmatprep.mubr.f32.mxu0 0.0
    %559 = vmatmul.mubr.f32.gmra.mxu0 %v221
    %v560 = vpop.f32.mrf.mxu0
    %v561 = vadd.f32 %v94, %v560
    %v562 = vpop.f32.mrf.mxu0
    %563 = vmatprep.mubr.f32.mxu0 0.0
    %564 = vmatmul.mubr.f32.gmra.mxu0 %v224
    %v565 = vpop.f32.mrf.mxu0
    %v566 = vadd.f32 %v94, %v565
    %v567 = vpop.f32.mrf.mxu0
    %568 = vmatprep.mubr.f32.mxu0 0.0
    %569 = vmatmul.mubr.f32.gmra.mxu0 %v227
    %v570 = vpop.f32.mrf.mxu0
    %v571 = vadd.f32 %v94, %v570
    %v572 = vpop.f32.mrf.mxu0
    %573 = vmatprep.mubr.f32.mxu0 0.0
    %574 = vmatmul.mubr.f32.gmra.mxu0 %v230
    %v575 = vpop.f32.mrf.mxu0
    %v576 = vadd.f32 %v94, %v575
    %v577 = vpop.f32.mrf.mxu0
    %578 = vmatprep.mubr.f32.mxu0 0.0
    %579 = vmatmul.mubr.f32.gmra.mxu0 %v233
    %v580 = vpop.f32.mrf.mxu0
    %v581 = vadd.f32 %v94, %v580
    %v582 = vpop.f32.mrf.mxu0
    %583 = vmatprep.mubr.f32.mxu0 0.0
    %584 = vmatmul.mubr.f32.gmra.mxu0 %v236
    %v585 = vpop.f32.mrf.mxu0
    %v586 = vadd.f32 %v94, %v585
    %v587 = vpop.f32.mrf.mxu0
    %588 = vmatprep.mubr.f32.mxu0 0.0
    %589 = vmatmul.mubr.f32.gmra.mxu0 %v239
    %v590 = vpop.f32.mrf.mxu0
    %v591 = vadd.f32 %v94, %v590
    %v592 = vpop.f32.mrf.mxu0
    %593 = vmatprep.mubr.f32.mxu0 0.0
    %594 = vmatmul.mubr.f32.gmra.mxu0 %v242
    %v595 = vpop.f32.mrf.mxu0
    %v596 = vadd.f32 %v94, %v595
    %v597 = vpop.f32.mrf.mxu0
    %598 = vmatprep.mubr.f32.mxu0 0.0
    %599 = vmatmul.mubr.f32.gmra.mxu0 %v245
    %v600 = vpop.f32.mrf.mxu0
    %v601 = vadd.f32 %v94, %v600
    %v602 = vpop.f32.mrf.mxu0
    %603 = vmatprep.mubr.f32.mxu0 0.0
    %604 = vmatmul.mubr.f32.gmra.mxu0 %v248
    %v605 = vpop.f32.mrf.mxu0
    %v606 = vadd.f32 %v94, %v605
    %v607 = vpop.f32.mrf.mxu0
    %608 = vmatprep.mubr.f32.mxu0 0.0
    %609 = vmatmul.mubr.f32.gmra.mxu0 %v251
    %v610 = vpop.f32.mrf.mxu0
    %v611 = vadd.f32 %v94, %v610
    %v612 = vpop.f32.mrf.mxu0
    %613 = vmatprep.mubr.f32.mxu0 0.0
    %614 = vmatmul.mubr.f32.gmra.mxu0 %v254
    %v615 = vpop.f32.mrf.mxu0
    %v616 = vadd.f32 %v94, %v615
    %v617 = vpop.f32.mrf.mxu0
    %618 = vmatprep.mubr.f32.mxu0 0.0
    %619 = vmatmul.mubr.f32.gmra.mxu0 %v257
    %v620 = vpop.f32.mrf.mxu0
    %v621 = vadd.f32 %v94, %v620
    %v622 = vpop.f32.mrf.mxu0
    %623 = vmatprep.mubr.f32.mxu0 0.0
    %624 = vmatmul.mubr.f32.gmra.mxu0 %v260
    %v625 = vpop.f32.mrf.mxu0
    %v626 = vadd.f32 %v94, %v625
    %v627 = vpop.f32.mrf.mxu0
    %628 = vmatprep.mubr.f32.mxu0 0.0
    %629 = vmatmul.mubr.f32.gmra.mxu0 %v263
    %v630 = vpop.f32.mrf.mxu0
    %v631 = vadd.f32 %v94, %v630
    %v632 = vpop.f32.mrf.mxu0
    %633 = vmatprep.mubr.f32.mxu0 0.0
    %634 = vmatmul.mubr.f32.gmra.mxu0 %v266
    %v635 = vpop.f32.mrf.mxu0
    %v636 = vadd.f32 %v94, %v635
    %v637 = vpop.f32.mrf.mxu0
    %638 = vmatprep.mubr.f32.mxu0 0.0
    %639 = vmatmul.mubr.f32.gmra.mxu0 %v269
    %v640 = vpop.f32.mrf.mxu0
    %v641 = vadd.f32 %v94, %v640
    %v642 = vpop.f32.mrf.mxu0
    %643 = vmatprep.mubr.f32.mxu0 0.0
    %644 = vmatmul.mubr.f32.gmra.mxu0 %v272
    %v645 = vpop.f32.mrf.mxu0
    %v646 = vadd.f32 %v94, %v645
    %v647 = vpop.f32.mrf.mxu0
    %648 = vmatprep.mubr.f32.mxu0 0.0
    %649 = vmatmul.mubr.f32.gmra.mxu0 %v275
    %v650 = vpop.f32.mrf.mxu0
    %v651 = vadd.f32 %v94, %v650
    %v652 = vpop.f32.mrf.mxu0
    %653 = vmatprep.mubr.f32.mxu0 0.0
    %654 = vmatmul.mubr.f32.gmra.mxu0 %v278
    %v655 = vpop.f32.mrf.mxu0
    %v656 = vadd.f32 %v94, %v655
    %v657 = vpop.f32.mrf.mxu0
    %658 = vmatprep.mubr.f32.mxu0 0.0
    %659 = vmatmul.mubr.f32.gmra.mxu0 %v281
    %v660 = vpop.f32.mrf.mxu0
    %v661 = vadd.f32 %v94, %v660
    %v662 = vpop.f32.mrf.mxu0
    %663 = vmatprep.mubr.f32.mxu0 0.0
    %664 = vmatmul.mubr.f32.gmra.mxu0 %v284
    %v665 = vpop.f32.mrf.mxu0
    %v666 = vadd.f32 %v94, %v665
    %v667 = vpop.f32.mrf.mxu0
    %668 = vmatprep.mubr.f32.mxu0 0.0
    %669 = vmatmul.mubr.f32.gmra.mxu0 %v287
    %v670 = vpop.f32.mrf.mxu0
    %v671 = vadd.f32 %v94, %v670
    %v672 = vpop.f32.mrf.mxu0
    %673 = vdwg.mxu0
    %v674 = vmax.f32 %v356, 0.0
    %v675 = vmax.f32 %v361, 0.0
    %v676 = vmax.f32 %v366, 0.0
    %v677 = vmax.f32 %v371, 0.0
    %v678 = vmax.f32 %v376, 0.0
    %v679 = vmax.f32 %v381, 0.0
    %v680 = vmax.f32 %v386, 0.0
    %v681 = vmax.f32 %v391, 0.0
    %v682 = vmax.f32 %v396, 0.0
    %v683 = vmax.f32 %v401, 0.0
    %v684 = vmax.f32 %v406, 0.0
    %v685 = vmax.f32 %v411, 0.0
    %v686 = vmax.f32 %v416, 0.0
    %v687 = vmax.f32 %v421, 0.0
    %v688 = vmax.f32 %v426, 0.0
    %v689 = vmax.f32 %v431, 0.0
    %v690 = vmax.f32 %v436, 0.0
    %v691 = vmax.f32 %v441, 0.0
    %v692 = vmax.f32 %v446, 0.0
    %v693 = vmax.f32 %v451, 0.0
    %v694 = vmax.f32 %v456, 0.0
    %v695 = vmax.f32 %v461, 0.0
    %v696 = vmax.f32 %v466, 0.0
    %v697 = vmax.f32 %v471, 0.0
    %v698 = vmax.f32 %v476, 0.0
    %v699 = vmax.f32 %v481, 0.0
    %v700 = vmax.f32 %v486, 0.0
    %v701 = vmax.f32 %v491, 0.0
    %v702 = vmax.f32 %v496, 0.0
    %v703 = vmax.f32 %v501, 0.0
    %v704 = vmax.f32 %v506, 0.0
    %v705 = vmax.f32 %v511, 0.0
    %v706 = vmax.f32 %v516, 0.0
    %v707 = vmax.f32 %v521, 0.0
    %v708 = vmax.f32 %v526, 0.0
    %v709 = vmax.f32 %v531, 0.0
    %v710 = vmax.f32 %v536, 0.0
    %v711 = vmax.f32 %v541, 0.0
    %v712 = vmax.f32 %v546, 0.0
    %v713 = vmax.f32 %v551, 0.0
    %v714 = vmax.f32 %v556, 0.0
    %v715 = vmax.f32 %v561, 0.0
    %v716 = vmax.f32 %v566, 0.0
    %v717 = vmax.f32 %v571, 0.0
    %v718 = vmax.f32 %v576, 0.0
    %v719 = vmax.f32 %v581, 0.0
    %v720 = vmax.f32 %v586, 0.0
    %v721 = vmax.f32 %v591, 0.0
    %v722 = vmax.f32 %v596, 0.0
    %v723 = vmax.f32 %v601, 0.0
    %v724 = vmax.f32 %v606, 0.0
    %v725 = vmax.f32 %v611, 0.0
    %v726 = vmax.f32 %v616, 0.0
    %v727 = vmax.f32 %v621, 0.0
    %v728 = vmax.f32 %v626, 0.0
    %v729 = vmax.f32 %v631, 0.0
    %v730 = vmax.f32 %v636, 0.0
    %v731 = vmax.f32 %v641, 0.0
    %v732 = vmax.f32 %v646, 0.0
    %v733 = vmax.f32 %v651, 0.0
    %v734 = vmax.f32 %v656, 0.0
    %v735 = vmax.f32 %v661, 0.0
    %v736 = vmax.f32 %v666, 0.0
    %v737 = vmax.f32 %v671, 0.0
    %v738 = vlaneseq
    %v739 = vshrl.u32 %v738, 7
    %v740 = vadd.s32 %v739, 8
    %v741 = vadd.s32 %v739, 16
    %v742 = vadd.s32 %v739, 24
    %v743 = vadd.s32 %v739, 32
    %v744 = vadd.s32 %v739, 40
    %v745 = vadd.s32 %v739, 48
    %v746 = vadd.s32 %v739, 56
    %v747 = vadd.s32 %v739, 64
    %v748 = vadd.s32 %v739, 72
    %v749 = vadd.s32 %v739, 80
    %v750 = vadd.s32 %v739, 88
    %v751 = vadd.s32 %v739, 96
    %v752 = vadd.s32 %v739, 104
    %v753 = vadd.s32 %v739, 112
    %v754 = vadd.s32 %v739, 120
    %v755 = vadd.s32 %v739, 128
    %v756 = vadd.s32 %v739, 136
    %v757 = vadd.s32 %v739, 144
    %v758 = vadd.s32 %v739, 152
    %v759 = vadd.s32 %v739, 160
    %v760 = vadd.s32 %v739, 168
    %v761 = vadd.s32 %v739, 176
    %v762 = vadd.s32 %v739, 184
    %v763 = vadd.s32 %v739, 192
    %v764 = vadd.s32 %v739, 200
    %v765 = vadd.s32 %v739, 208
    %v766 = vadd.s32 %v739, 216
    %v767 = vadd.s32 %v739, 224
    %v768 = vadd.s32 %v739, 232
    %v769 = vadd.s32 %v739, 240
    %v770 = vadd.s32 %v739, 248
    %v771 = vadd.s32 %v739, 256
    %v772 = vadd.s32 %v739, 264
    %v773 = vadd.s32 %v739, 272
    %v774 = vadd.s32 %v739, 280
    %v775 = vadd.s32 %v739, 288
    %v776 = vadd.s32 %v739, 296
    %v777 = vadd.s32 %v739, 304
    %v778 = vadd.s32 %v739, 312
    %v779 = vadd.s32 %v739, 320
    %v780 = vadd.s32 %v739, 328
    %v781 = vadd.s32 %v739, 336
    %v782 = vadd.s32 %v739, 344
    %v783 = vadd.s32 %v739, 352
    %v784 = vadd.s32 %v739, 360
    %v785 = vadd.s32 %v739, 368
    %v786 = vadd.s32 %v739, 376
    %v787 = vadd.s32 %v739, 384
    %v788 = vadd.s32 %v739, 392
    %v789 = vadd.s32 %v739, 400
    %v790 = vadd.s32 %v739, 408
    %v791 = vadd.s32 %v739, 416
    %v792 = vadd.s32 %v739, 424
    %v793 = vadd.s32 %v739, 432
    %v794 = vadd.s32 %v739, 440
    %v795 = vadd.s32 %v739, 448
    %v796 = vadd.s32 %v739, 456
    %v797 = vadd.s32 %v739, 464
    %v798 = vadd.s32 %v739, 472
    %v799 = vadd.s32 %v739, 480
    %v800 = vadd.s32 %v739, 488
    %v801 = vadd.s32 %v739, 496
    %v802 = vadd.s32 %v739, 504
    %v803 = vadd.s32 %v739, 512
    %v804 = vadd.s32 %v739, 520
    %v805 = vadd.s32 %v739, 528
    %v806 = vadd.s32 %v739, 536
    %v807 = vadd.s32 %v739, 544
    %v808 = vadd.s32 %v739, 552
    %v809 = vadd.s32 %v739, 560
    %v810 = vadd.s32 %v739, 568
    %v811 = vadd.s32 %v739, 576
    %v812 = vadd.s32 %v739, 584
    %v813 = vadd.s32 %v739, 592
    %v814 = vadd.s32 %v739, 600
    %v815 = vadd.s32 %v739, 608
    %v816 = vadd.s32 %v739, 616
    %v817 = vadd.s32 %v739, 624
    %v818 = vadd.s32 %v739, 632
    %vm819 = vcmp.lt.s32.totalorder %v739, 0
    %v820 = vsub.s32 0, %v739
    %v821 = vsel %vm819, %v820, %v739
    %v822 = vshrl.u32 %v821, 4
    %v823 = vand.u32 %v821, 15
    %v824 = vsub.s32 0, %v823
    %v825 = vsel %vm819, %v824, %v823
    %vm826 = vcmp.lt.s32.totalorder %v740, 0
    %v827 = vsub.s32 0, %v740
    %v828 = vsel %vm826, %v827, %v740
    %v829 = vshrl.u32 %v828, 4
    %v830 = vand.u32 %v828, 15
    %v831 = vsub.s32 0, %v830
    %v832 = vsel %vm826, %v831, %v830
    %vm833 = vcmp.lt.s32.totalorder %v741, 0
    %v834 = vsub.s32 0, %v741
    %v835 = vsel %vm833, %v834, %v741
    %v836 = vshrl.u32 %v835, 4
    %v837 = vand.u32 %v835, 15
    %v838 = vsub.s32 0, %v837
    %v839 = vsel %vm833, %v838, %v837
    %vm840 = vcmp.lt.s32.totalorder %v742, 0
    %v841 = vsub.s32 0, %v742
    %v842 = vsel %vm840, %v841, %v742
    %v843 = vshrl.u32 %v842, 4
    %v844 = vand.u32 %v842, 15
    %v845 = vsub.s32 0, %v844
    %v846 = vsel %vm840, %v845, %v844
    %vm847 = vcmp.lt.s32.totalorder %v743, 0
    %v848 = vsub.s32 0, %v743
    %v849 = vsel %vm847, %v848, %v743
    %v850 = vshrl.u32 %v849, 4
    %v851 = vand.u32 %v849, 15
    %v852 = vsub.s32 0, %v851
    %v853 = vsel %vm847, %v852, %v851
    %vm854 = vcmp.lt.s32.totalorder %v744, 0
    %v855 = vsub.s32 0, %v744
    %v856 = vsel %vm854, %v855, %v744
    %v857 = vshrl.u32 %v856, 4
    %v858 = vand.u32 %v856, 15
    %v859 = vsub.s32 0, %v858
    %v860 = vsel %vm854, %v859, %v858
    %vm861 = vcmp.lt.s32.totalorder %v745, 0
    %v862 = vsub.s32 0, %v745
    %v863 = vsel %vm861, %v862, %v745
    %v864 = vshrl.u32 %v863, 4
    %v865 = vand.u32 %v863, 15
    %v866 = vsub.s32 0, %v865
    %v867 = vsel %vm861, %v866, %v865
    %vm868 = vcmp.lt.s32.totalorder %v746, 0
    %v869 = vsub.s32 0, %v746
    %v870 = vsel %vm868, %v869, %v746
    %v871 = vshrl.u32 %v870, 4
    %v872 = vand.u32 %v870, 15
    %v873 = vsub.s32 0, %v872
    %v874 = vsel %vm868, %v873, %v872
    %vm875 = vcmp.lt.s32.totalorder %v747, 0
    %v876 = vsub.s32 0, %v747
    %v877 = vsel %vm875, %v876, %v747
    %v878 = vshrl.u32 %v877, 4
    %v879 = vand.u32 %v877, 15
    %v880 = vsub.s32 0, %v879
    %v881 = vsel %vm875, %v880, %v879
    %vm882 = vcmp.lt.s32.totalorder %v748, 0
    %v883 = vsub.s32 0, %v748
    %v884 = vsel %vm882, %v883, %v748
    %v885 = vshrl.u32 %v884, 4
    %v886 = vand.u32 %v884, 15
    %v887 = vsub.s32 0, %v886
    %v888 = vsel %vm882, %v887, %v886
    %vm889 = vcmp.lt.s32.totalorder %v749, 0
    %v890 = vsub.s32 0, %v749
    %v891 = vsel %vm889, %v890, %v749
    %v892 = vshrl.u32 %v891, 4
    %v893 = vand.u32 %v891, 15
    %v894 = vsub.s32 0, %v893
    %v895 = vsel %vm889, %v894, %v893
    %vm896 = vcmp.lt.s32.totalorder %v750, 0
    %v897 = vsub.s32 0, %v750
    %v898 = vsel %vm896, %v897, %v750
    %v899 = vshrl.u32 %v898, 4
    %v900 = vand.u32 %v898, 15
    %v901 = vsub.s32 0, %v900
    %v902 = vsel %vm896, %v901, %v900
    %vm903 = vcmp.lt.s32.totalorder %v751, 0
    %v904 = vsub.s32 0, %v751
    %v905 = vsel %vm903, %v904, %v751
    %v906 = vshrl.u32 %v905, 4
    %v907 = vand.u32 %v905, 15
    %v908 = vsub.s32 0, %v907
    %v909 = vsel %vm903, %v908, %v907
    %vm910 = vcmp.lt.s32.totalorder %v752, 0
    %v911 = vsub.s32 0, %v752
    %v912 = vsel %vm910, %v911, %v752
    %v913 = vshrl.u32 %v912, 4
    %v914 = vand.u32 %v912, 15
    %v915 = vsub.s32 0, %v914
    %v916 = vsel %vm910, %v915, %v914
    %vm917 = vcmp.lt.s32.totalorder %v753, 0
    %v918 = vsub.s32 0, %v753
    %v919 = vsel %vm917, %v918, %v753
    %v920 = vshrl.u32 %v919, 4
    %v921 = vand.u32 %v919, 15
    %v922 = vsub.s32 0, %v921
    %v923 = vsel %vm917, %v922, %v921
    %vm924 = vcmp.lt.s32.totalorder %v754, 0
    %v925 = vsub.s32 0, %v754
    %v926 = vsel %vm924, %v925, %v754
    %v927 = vshrl.u32 %v926, 4
    %v928 = vand.u32 %v926, 15
    %v929 = vsub.s32 0, %v928
    %v930 = vsel %vm924, %v929, %v928
    %vm931 = vcmp.lt.s32.totalorder %v755, 0
    %v932 = vsub.s32 0, %v755
    %v933 = vsel %vm931, %v932, %v755
    %v934 = vshrl.u32 %v933, 4
    %v935 = vand.u32 %v933, 15
    %v936 = vsub.s32 0, %v935
    %v937 = vsel %vm931, %v936, %v935
    %vm938 = vcmp.lt.s32.totalorder %v756, 0
    %v939 = vsub.s32 0, %v756
    %v940 = vsel %vm938, %v939, %v756
    %v941 = vshrl.u32 %v940, 4
    %v942 = vand.u32 %v940, 15
    %v943 = vsub.s32 0, %v942
    %v944 = vsel %vm938, %v943, %v942
    %vm945 = vcmp.lt.s32.totalorder %v757, 0
    %v946 = vsub.s32 0, %v757
    %v947 = vsel %vm945, %v946, %v757
    %v948 = vshrl.u32 %v947, 4
    %v949 = vand.u32 %v947, 15
    %v950 = vsub.s32 0, %v949
    %v951 = vsel %vm945, %v950, %v949
    %vm952 = vcmp.lt.s32.totalorder %v758, 0
    %v953 = vsub.s32 0, %v758
    %v954 = vsel %vm952, %v953, %v758
    %v955 = vshrl.u32 %v954, 4
    %v956 = vand.u32 %v954, 15
    %v957 = vsub.s32 0, %v956
    %v958 = vsel %vm952, %v957, %v956
    %vm959 = vcmp.lt.s32.totalorder %v759, 0
    %v960 = vsub.s32 0, %v759
    %v961 = vsel %vm959, %v960, %v759
    %v962 = vshrl.u32 %v961, 4
    %v963 = vand.u32 %v961, 15
    %v964 = vsub.s32 0, %v963
    %v965 = vsel %vm959, %v964, %v963
    %vm966 = vcmp.lt.s32.totalorder %v760, 0
    %v967 = vsub.s32 0, %v760
    %v968 = vsel %vm966, %v967, %v760
    %v969 = vshrl.u32 %v968, 4
    %v970 = vand.u32 %v968, 15
    %v971 = vsub.s32 0, %v970
    %v972 = vsel %vm966, %v971, %v970
    %vm973 = vcmp.lt.s32.totalorder %v761, 0
    %v974 = vsub.s32 0, %v761
    %v975 = vsel %vm973, %v974, %v761
    %v976 = vshrl.u32 %v975, 4
    %v977 = vand.u32 %v975, 15
    %v978 = vsub.s32 0, %v977
    %v979 = vsel %vm973, %v978, %v977
    %vm980 = vcmp.lt.s32.totalorder %v762, 0
    %v981 = vsub.s32 0, %v762
    %v982 = vsel %vm980, %v981, %v762
    %v983 = vshrl.u32 %v982, 4
    %v984 = vand.u32 %v982, 15
    %v985 = vsub.s32 0, %v984
    %v986 = vsel %vm980, %v985, %v984
    %vm987 = vcmp.lt.s32.totalorder %v763, 0
    %v988 = vsub.s32 0, %v763
    %v989 = vsel %vm987, %v988, %v763
    %v990 = vshrl.u32 %v989, 4
    %v991 = vand.u32 %v989, 15
    %v992 = vsub.s32 0, %v991
    %v993 = vsel %vm987, %v992, %v991
    %vm994 = vcmp.lt.s32.totalorder %v764, 0
    %v995 = vsub.s32 0, %v764
    %v996 = vsel %vm994, %v995, %v764
    %v997 = vshrl.u32 %v996, 4
    %v998 = vand.u32 %v996, 15
    %v999 = vsub.s32 0, %v998
    %v1000 = vsel %vm994, %v999, %v998
    %vm1001 = vcmp.lt.s32.totalorder %v765, 0
    %v1002 = vsub.s32 0, %v765
    %v1003 = vsel %vm1001, %v1002, %v765
    %v1004 = vshrl.u32 %v1003, 4
    %v1005 = vand.u32 %v1003, 15
    %v1006 = vsub.s32 0, %v1005
    %v1007 = vsel %vm1001, %v1006, %v1005
    %vm1008 = vcmp.lt.s32.totalorder %v766, 0
    %v1009 = vsub.s32 0, %v766
    %v1010 = vsel %vm1008, %v1009, %v766
    %v1011 = vshrl.u32 %v1010, 4
    %v1012 = vand.u32 %v1010, 15
    %v1013 = vsub.s32 0, %v1012
    %v1014 = vsel %vm1008, %v1013, %v1012
    %vm1015 = vcmp.lt.s32.totalorder %v767, 0
    %v1016 = vsub.s32 0, %v767
    %v1017 = vsel %vm1015, %v1016, %v767
    %v1018 = vshrl.u32 %v1017, 4
    %v1019 = vand.u32 %v1017, 15
    %v1020 = vsub.s32 0, %v1019
    %v1021 = vsel %vm1015, %v1020, %v1019
    %vm1022 = vcmp.lt.s32.totalorder %v768, 0
    %v1023 = vsub.s32 0, %v768
    %v1024 = vsel %vm1022, %v1023, %v768
    %v1025 = vshrl.u32 %v1024, 4
    %v1026 = vand.u32 %v1024, 15
    %v1027 = vsub.s32 0, %v1026
    %v1028 = vsel %vm1022, %v1027, %v1026
    %vm1029 = vcmp.lt.s32.totalorder %v769, 0
    %v1030 = vsub.s32 0, %v769
    %v1031 = vsel %vm1029, %v1030, %v769
    %v1032 = vshrl.u32 %v1031, 4
    %v1033 = vand.u32 %v1031, 15
    %v1034 = vsub.s32 0, %v1033
    %v1035 = vsel %vm1029, %v1034, %v1033
    %vm1036 = vcmp.lt.s32.totalorder %v770, 0
    %v1037 = vsub.s32 0, %v770
    %v1038 = vsel %vm1036, %v1037, %v770
    %v1039 = vshrl.u32 %v1038, 4
    %v1040 = vand.u32 %v1038, 15
    %v1041 = vsub.s32 0, %v1040
    %v1042 = vsel %vm1036, %v1041, %v1040
    %vm1043 = vcmp.lt.s32.totalorder %v771, 0
    %v1044 = vsub.s32 0, %v771
    %v1045 = vsel %vm1043, %v1044, %v771
    %v1046 = vshrl.u32 %v1045, 4
    %v1047 = vand.u32 %v1045, 15
    %v1048 = vsub.s32 0, %v1047
    %v1049 = vsel %vm1043, %v1048, %v1047
    %vm1050 = vcmp.lt.s32.totalorder %v772, 0
    %v1051 = vsub.s32 0, %v772
    %v1052 = vsel %vm1050, %v1051, %v772
    %v1053 = vshrl.u32 %v1052, 4
    %v1054 = vand.u32 %v1052, 15
    %v1055 = vsub.s32 0, %v1054
    %v1056 = vsel %vm1050, %v1055, %v1054
    %vm1057 = vcmp.lt.s32.totalorder %v773, 0
    %v1058 = vsub.s32 0, %v773
    %v1059 = vsel %vm1057, %v1058, %v773
    %v1060 = vshrl.u32 %v1059, 4
    %v1061 = vand.u32 %v1059, 15
    %v1062 = vsub.s32 0, %v1061
    %v1063 = vsel %vm1057, %v1062, %v1061
    %vm1064 = vcmp.lt.s32.totalorder %v774, 0
    %v1065 = vsub.s32 0, %v774
    %v1066 = vsel %vm1064, %v1065, %v774
    %v1067 = vshrl.u32 %v1066, 4
    %v1068 = vand.u32 %v1066, 15
    %v1069 = vsub.s32 0, %v1068
    %v1070 = vsel %vm1064, %v1069, %v1068
    %vm1071 = vcmp.lt.s32.totalorder %v775, 0
    %v1072 = vsub.s32 0, %v775
    %v1073 = vsel %vm1071, %v1072, %v775
    %v1074 = vshrl.u32 %v1073, 4
    %v1075 = vand.u32 %v1073, 15
    %v1076 = vsub.s32 0, %v1075
    %v1077 = vsel %vm1071, %v1076, %v1075
    %vm1078 = vcmp.lt.s32.totalorder %v776, 0
    %v1079 = vsub.s32 0, %v776
    %v1080 = vsel %vm1078, %v1079, %v776
    %v1081 = vshrl.u32 %v1080, 4
    %v1082 = vand.u32 %v1080, 15
    %v1083 = vsub.s32 0, %v1082
    %v1084 = vsel %vm1078, %v1083, %v1082
    %vm1085 = vcmp.lt.s32.totalorder %v777, 0
    %v1086 = vsub.s32 0, %v777
    %v1087 = vsel %vm1085, %v1086, %v777
    %v1088 = vshrl.u32 %v1087, 4
    %v1089 = vand.u32 %v1087, 15
    %v1090 = vsub.s32 0, %v1089
    %v1091 = vsel %vm1085, %v1090, %v1089
    %vm1092 = vcmp.lt.s32.totalorder %v778, 0
    %v1093 = vsub.s32 0, %v778
    %v1094 = vsel %vm1092, %v1093, %v778
    %v1095 = vshrl.u32 %v1094, 4
    %v1096 = vand.u32 %v1094, 15
    %v1097 = vsub.s32 0, %v1096
    %v1098 = vsel %vm1092, %v1097, %v1096
    %vm1099 = vcmp.lt.s32.totalorder %v779, 0
    %v1100 = vsub.s32 0, %v779
    %v1101 = vsel %vm1099, %v1100, %v779
    %v1102 = vshrl.u32 %v1101, 4
    %v1103 = vand.u32 %v1101, 15
    %v1104 = vsub.s32 0, %v1103
    %v1105 = vsel %vm1099, %v1104, %v1103
    %vm1106 = vcmp.lt.s32.totalorder %v780, 0
    %v1107 = vsub.s32 0, %v780
    %v1108 = vsel %vm1106, %v1107, %v780
    %v1109 = vshrl.u32 %v1108, 4
    %v1110 = vand.u32 %v1108, 15
    %v1111 = vsub.s32 0, %v1110
    %v1112 = vsel %vm1106, %v1111, %v1110
    %vm1113 = vcmp.lt.s32.totalorder %v781, 0
    %v1114 = vsub.s32 0, %v781
    %v1115 = vsel %vm1113, %v1114, %v781
    %v1116 = vshrl.u32 %v1115, 4
    %v1117 = vand.u32 %v1115, 15
    %v1118 = vsub.s32 0, %v1117
    %v1119 = vsel %vm1113, %v1118, %v1117
    %vm1120 = vcmp.lt.s32.totalorder %v782, 0
    %v1121 = vsub.s32 0, %v782
    %v1122 = vsel %vm1120, %v1121, %v782
    %v1123 = vshrl.u32 %v1122, 4
    %v1124 = vand.u32 %v1122, 15
    %v1125 = vsub.s32 0, %v1124
    %v1126 = vsel %vm1120, %v1125, %v1124
    %vm1127 = vcmp.lt.s32.totalorder %v783, 0
    %v1128 = vsub.s32 0, %v783
    %v1129 = vsel %vm1127, %v1128, %v783
    %v1130 = vshrl.u32 %v1129, 4
    %v1131 = vand.u32 %v1129, 15
    %v1132 = vsub.s32 0, %v1131
    %v1133 = vsel %vm1127, %v1132, %v1131
    %vm1134 = vcmp.lt.s32.totalorder %v784, 0
    %v1135 = vsub.s32 0, %v784
    %v1136 = vsel %vm1134, %v1135, %v784
    %v1137 = vshrl.u32 %v1136, 4
    %v1138 = vand.u32 %v1136, 15
    %v1139 = vsub.s32 0, %v1138
    %v1140 = vsel %vm1134, %v1139, %v1138
    %vm1141 = vcmp.lt.s32.totalorder %v785, 0
    %v1142 = vsub.s32 0, %v785
    %v1143 = vsel %vm1141, %v1142, %v785
    %v1144 = vshrl.u32 %v1143, 4
    %v1145 = vand.u32 %v1143, 15
    %v1146 = vsub.s32 0, %v1145
    %v1147 = vsel %vm1141, %v1146, %v1145
    %vm1148 = vcmp.lt.s32.totalorder %v786, 0
    %v1149 = vsub.s32 0, %v786
    %v1150 = vsel %vm1148, %v1149, %v786
    %v1151 = vshrl.u32 %v1150, 4
    %v1152 = vand.u32 %v1150, 15
    %v1153 = vsub.s32 0, %v1152
    %v1154 = vsel %vm1148, %v1153, %v1152
    %vm1155 = vcmp.lt.s32.totalorder %v787, 0
    %v1156 = vsub.s32 0, %v787
    %v1157 = vsel %vm1155, %v1156, %v787
    %v1158 = vshrl.u32 %v1157, 4
    %v1159 = vand.u32 %v1157, 15
    %v1160 = vsub.s32 0, %v1159
    %v1161 = vsel %vm1155, %v1160, %v1159
    %vm1162 = vcmp.lt.s32.totalorder %v788, 0
    %v1163 = vsub.s32 0, %v788
    %v1164 = vsel %vm1162, %v1163, %v788
    %v1165 = vshrl.u32 %v1164, 4
    %v1166 = vand.u32 %v1164, 15
    %v1167 = vsub.s32 0, %v1166
    %v1168 = vsel %vm1162, %v1167, %v1166
    %vm1169 = vcmp.lt.s32.totalorder %v789, 0
    %v1170 = vsub.s32 0, %v789
    %v1171 = vsel %vm1169, %v1170, %v789
    %v1172 = vshrl.u32 %v1171, 4
    %v1173 = vand.u32 %v1171, 15
    %v1174 = vsub.s32 0, %v1173
    %v1175 = vsel %vm1169, %v1174, %v1173
    %vm1176 = vcmp.lt.s32.totalorder %v790, 0
    %v1177 = vsub.s32 0, %v790
    %v1178 = vsel %vm1176, %v1177, %v790
    %v1179 = vshrl.u32 %v1178, 4
    %v1180 = vand.u32 %v1178, 15
    %v1181 = vsub.s32 0, %v1180
    %v1182 = vsel %vm1176, %v1181, %v1180
    %vm1183 = vcmp.lt.s32.totalorder %v791, 0
    %v1184 = vsub.s32 0, %v791
    %v1185 = vsel %vm1183, %v1184, %v791
    %v1186 = vshrl.u32 %v1185, 4
    %v1187 = vand.u32 %v1185, 15
    %v1188 = vsub.s32 0, %v1187
    %v1189 = vsel %vm1183, %v1188, %v1187
    %vm1190 = vcmp.lt.s32.totalorder %v792, 0
    %v1191 = vsub.s32 0, %v792
    %v1192 = vsel %vm1190, %v1191, %v792
    %v1193 = vshrl.u32 %v1192, 4
    %v1194 = vand.u32 %v1192, 15
    %v1195 = vsub.s32 0, %v1194
    %v1196 = vsel %vm1190, %v1195, %v1194
    %vm1197 = vcmp.lt.s32.totalorder %v793, 0
    %v1198 = vsub.s32 0, %v793
    %v1199 = vsel %vm1197, %v1198, %v793
    %v1200 = vshrl.u32 %v1199, 4
    %v1201 = vand.u32 %v1199, 15
    %v1202 = vsub.s32 0, %v1201
    %v1203 = vsel %vm1197, %v1202, %v1201
    %vm1204 = vcmp.lt.s32.totalorder %v794, 0
    %v1205 = vsub.s32 0, %v794
    %v1206 = vsel %vm1204, %v1205, %v794
    %v1207 = vshrl.u32 %v1206, 4
    %v1208 = vand.u32 %v1206, 15
    %v1209 = vsub.s32 0, %v1208
    %v1210 = vsel %vm1204, %v1209, %v1208
    %vm1211 = vcmp.lt.s32.totalorder %v795, 0
    %v1212 = vsub.s32 0, %v795
    %v1213 = vsel %vm1211, %v1212, %v795
    %v1214 = vshrl.u32 %v1213, 4
    %v1215 = vand.u32 %v1213, 15
    %v1216 = vsub.s32 0, %v1215
    %v1217 = vsel %vm1211, %v1216, %v1215
    %vm1218 = vcmp.lt.s32.totalorder %v796, 0
    %v1219 = vsub.s32 0, %v796
    %v1220 = vsel %vm1218, %v1219, %v796
    %v1221 = vshrl.u32 %v1220, 4
    %v1222 = vand.u32 %v1220, 15
    %v1223 = vsub.s32 0, %v1222
    %v1224 = vsel %vm1218, %v1223, %v1222
    %vm1225 = vcmp.lt.s32.totalorder %v797, 0
    %v1226 = vsub.s32 0, %v797
    %v1227 = vsel %vm1225, %v1226, %v797
    %v1228 = vshrl.u32 %v1227, 4
    %v1229 = vand.u32 %v1227, 15
    %v1230 = vsub.s32 0, %v1229
    %v1231 = vsel %vm1225, %v1230, %v1229
    %vm1232 = vcmp.lt.s32.totalorder %v798, 0
    %v1233 = vsub.s32 0, %v798
    %v1234 = vsel %vm1232, %v1233, %v798
    %v1235 = vshrl.u32 %v1234, 4
    %v1236 = vand.u32 %v1234, 15
    %v1237 = vsub.s32 0, %v1236
    %v1238 = vsel %vm1232, %v1237, %v1236
    %vm1239 = vcmp.lt.s32.totalorder %v799, 0
    %v1240 = vsub.s32 0, %v799
    %v1241 = vsel %vm1239, %v1240, %v799
    %v1242 = vshrl.u32 %v1241, 4
    %v1243 = vand.u32 %v1241, 15
    %v1244 = vsub.s32 0, %v1243
    %v1245 = vsel %vm1239, %v1244, %v1243
    %vm1246 = vcmp.lt.s32.totalorder %v800, 0
    %v1247 = vsub.s32 0, %v800
    %v1248 = vsel %vm1246, %v1247, %v800
    %v1249 = vshrl.u32 %v1248, 4
    %v1250 = vand.u32 %v1248, 15
    %v1251 = vsub.s32 0, %v1250
    %v1252 = vsel %vm1246, %v1251, %v1250
    %vm1253 = vcmp.lt.s32.totalorder %v801, 0
    %v1254 = vsub.s32 0, %v801
    %v1255 = vsel %vm1253, %v1254, %v801
    %v1256 = vshrl.u32 %v1255, 4
    %v1257 = vand.u32 %v1255, 15
    %v1258 = vsub.s32 0, %v1257
    %v1259 = vsel %vm1253, %v1258, %v1257
    %vm1260 = vcmp.lt.s32.totalorder %v802, 0
    %v1261 = vsub.s32 0, %v802
    %v1262 = vsel %vm1260, %v1261, %v802
    %v1263 = vshrl.u32 %v1262, 4
    %v1264 = vand.u32 %v1262, 15
    %v1265 = vsub.s32 0, %v1264
    %v1266 = vsel %vm1260, %v1265, %v1264
    %vm1267 = vcmp.lt.s32.totalorder %v803, 0
    %v1268 = vsub.s32 0, %v803
    %v1269 = vsel %vm1267, %v1268, %v803
    %v1270 = vshrl.u32 %v1269, 4
    %v1271 = vand.u32 %v1269, 15
    %v1272 = vsub.s32 0, %v1271
    %v1273 = vsel %vm1267, %v1272, %v1271
    %vm1274 = vcmp.lt.s32.totalorder %v804, 0
    %v1275 = vsub.s32 0, %v804
    %v1276 = vsel %vm1274, %v1275, %v804
    %v1277 = vshrl.u32 %v1276, 4
    %v1278 = vand.u32 %v1276, 15
    %v1279 = vsub.s32 0, %v1278
    %v1280 = vsel %vm1274, %v1279, %v1278
    %vm1281 = vcmp.lt.s32.totalorder %v805, 0
    %v1282 = vsub.s32 0, %v805
    %v1283 = vsel %vm1281, %v1282, %v805
    %v1284 = vshrl.u32 %v1283, 4
    %v1285 = vand.u32 %v1283, 15
    %v1286 = vsub.s32 0, %v1285
    %v1287 = vsel %vm1281, %v1286, %v1285
    %vm1288 = vcmp.lt.s32.totalorder %v806, 0
    %v1289 = vsub.s32 0, %v806
    %v1290 = vsel %vm1288, %v1289, %v806
    %v1291 = vshrl.u32 %v1290, 4
    %v1292 = vand.u32 %v1290, 15
    %v1293 = vsub.s32 0, %v1292
    %v1294 = vsel %vm1288, %v1293, %v1292
    %vm1295 = vcmp.lt.s32.totalorder %v807, 0
    %v1296 = vsub.s32 0, %v807
    %v1297 = vsel %vm1295, %v1296, %v807
    %v1298 = vshrl.u32 %v1297, 4
    %v1299 = vand.u32 %v1297, 15
    %v1300 = vsub.s32 0, %v1299
    %v1301 = vsel %vm1295, %v1300, %v1299
    %vm1302 = vcmp.lt.s32.totalorder %v808, 0
    %v1303 = vsub.s32 0, %v808
    %v1304 = vsel %vm1302, %v1303, %v808
    %v1305 = vshrl.u32 %v1304, 4
    %v1306 = vand.u32 %v1304, 15
    %v1307 = vsub.s32 0, %v1306
    %v1308 = vsel %vm1302, %v1307, %v1306
    %vm1309 = vcmp.lt.s32.totalorder %v809, 0
    %v1310 = vsub.s32 0, %v809
    %v1311 = vsel %vm1309, %v1310, %v809
    %v1312 = vshrl.u32 %v1311, 4
    %v1313 = vand.u32 %v1311, 15
    %v1314 = vsub.s32 0, %v1313
    %v1315 = vsel %vm1309, %v1314, %v1313
    %vm1316 = vcmp.lt.s32.totalorder %v810, 0
    %v1317 = vsub.s32 0, %v810
    %v1318 = vsel %vm1316, %v1317, %v810
    %v1319 = vshrl.u32 %v1318, 4
    %v1320 = vand.u32 %v1318, 15
    %v1321 = vsub.s32 0, %v1320
    %v1322 = vsel %vm1316, %v1321, %v1320
    %vm1323 = vcmp.lt.s32.totalorder %v811, 0
    %v1324 = vsub.s32 0, %v811
    %v1325 = vsel %vm1323, %v1324, %v811
    %v1326 = vshrl.u32 %v1325, 4
    %v1327 = vand.u32 %v1325, 15
    %v1328 = vsub.s32 0, %v1327
    %v1329 = vsel %vm1323, %v1328, %v1327
    %vm1330 = vcmp.lt.s32.totalorder %v812, 0
    %v1331 = vsub.s32 0, %v812
    %v1332 = vsel %vm1330, %v1331, %v812
    %v1333 = vshrl.u32 %v1332, 4
    %v1334 = vand.u32 %v1332, 15
    %v1335 = vsub.s32 0, %v1334
    %v1336 = vsel %vm1330, %v1335, %v1334
    %vm1337 = vcmp.lt.s32.totalorder %v813, 0
    %v1338 = vsub.s32 0, %v813
    %v1339 = vsel %vm1337, %v1338, %v813
    %v1340 = vshrl.u32 %v1339, 4
    %v1341 = vand.u32 %v1339, 15
    %v1342 = vsub.s32 0, %v1341
    %v1343 = vsel %vm1337, %v1342, %v1341
    %vm1344 = vcmp.lt.s32.totalorder %v814, 0
    %v1345 = vsub.s32 0, %v814
    %v1346 = vsel %vm1344, %v1345, %v814
    %v1347 = vshrl.u32 %v1346, 4
    %v1348 = vand.u32 %v1346, 15
    %v1349 = vsub.s32 0, %v1348
    %v1350 = vsel %vm1344, %v1349, %v1348
    %vm1351 = vcmp.lt.s32.totalorder %v815, 0
    %v1352 = vsub.s32 0, %v815
    %v1353 = vsel %vm1351, %v1352, %v815
    %v1354 = vshrl.u32 %v1353, 4
    %v1355 = vand.u32 %v1353, 15
    %v1356 = vsub.s32 0, %v1355
    %v1357 = vsel %vm1351, %v1356, %v1355
    %vm1358 = vcmp.lt.s32.totalorder %v816, 0
    %v1359 = vsub.s32 0, %v816
    %v1360 = vsel %vm1358, %v1359, %v816
    %v1361 = vshrl.u32 %v1360, 4
    %v1362 = vand.u32 %v1360, 15
    %v1363 = vsub.s32 0, %v1362
    %v1364 = vsel %vm1358, %v1363, %v1362
    %vm1365 = vcmp.lt.s32.totalorder %v817, 0
    %v1366 = vsub.s32 0, %v817
    %v1367 = vsel %vm1365, %v1366, %v817
    %v1368 = vshrl.u32 %v1367, 4
    %v1369 = vand.u32 %v1367, 15
    %v1370 = vsub.s32 0, %v1369
    %v1371 = vsel %vm1365, %v1370, %v1369
    %vm1372 = vcmp.lt.s32.totalorder %v818, 0
    %v1373 = vsub.s32 0, %v818
    %v1374 = vsel %vm1372, %v1373, %v818
    %v1375 = vshrl.u32 %v1374, 4
    %v1376 = vand.u32 %v1374, 15
    %v1377 = vsub.s32 0, %v1376
    %v1378 = vsel %vm1372, %v1377, %v1376
    %vm1379 = vcmp.ne.s32.totalorder %v825, 0
    %vm1380 = vcmp.ne.s32.totalorder %v832, 0
    %vm1381 = vcmp.ne.s32.totalorder %v839, 0
    %vm1382 = vcmp.ne.s32.totalorder %v846, 0
    %vm1383 = vcmp.ne.s32.totalorder %v853, 0
    %vm1384 = vcmp.ne.s32.totalorder %v860, 0
    %vm1385 = vcmp.ne.s32.totalorder %v867, 0
    %vm1386 = vcmp.ne.s32.totalorder %v874, 0
    %vm1387 = vcmp.ne.s32.totalorder %v881, 0
    %vm1388 = vcmp.ne.s32.totalorder %v888, 0
    %vm1389 = vcmp.ne.s32.totalorder %v895, 0
    %vm1390 = vcmp.ne.s32.totalorder %v902, 0
    %vm1391 = vcmp.ne.s32.totalorder %v909, 0
    %vm1392 = vcmp.ne.s32.totalorder %v916, 0
    %vm1393 = vcmp.ne.s32.totalorder %v923, 0
    %vm1394 = vcmp.ne.s32.totalorder %v930, 0
    %vm1395 = vcmp.ne.s32.totalorder %v937, 0
    %vm1396 = vcmp.ne.s32.totalorder %v944, 0
    %vm1397 = vcmp.ne.s32.totalorder %v951, 0
    %vm1398 = vcmp.ne.s32.totalorder %v958, 0
    %vm1399 = vcmp.ne.s32.totalorder %v965, 0
    %vm1400 = vcmp.ne.s32.totalorder %v972, 0
    %vm1401 = vcmp.ne.s32.totalorder %v979, 0
    %vm1402 = vcmp.ne.s32.totalorder %v986, 0
    %vm1403 = vcmp.ne.s32.totalorder %v993, 0
    %vm1404 = vcmp.ne.s32.totalorder %v1000, 0
    %vm1405 = vcmp.ne.s32.totalorder %v1007, 0
    %vm1406 = vcmp.ne.s32.totalorder %v1014, 0
    %vm1407 = vcmp.ne.s32.totalorder %v1021, 0
    %vm1408 = vcmp.ne.s32.totalorder %v1028, 0
    %vm1409 = vcmp.ne.s32.totalorder %v1035, 0
    %vm1410 = vcmp.ne.s32.totalorder %v1042, 0
    %vm1411 = vcmp.ne.s32.totalorder %v1049, 0
    %vm1412 = vcmp.ne.s32.totalorder %v1056, 0
    %vm1413 = vcmp.ne.s32.totalorder %v1063, 0
    %vm1414 = vcmp.ne.s32.totalorder %v1070, 0
    %vm1415 = vcmp.ne.s32.totalorder %v1077, 0
    %vm1416 = vcmp.ne.s32.totalorder %v1084, 0
    %vm1417 = vcmp.ne.s32.totalorder %v1091, 0
    %vm1418 = vcmp.ne.s32.totalorder %v1098, 0
    %vm1419 = vcmp.ne.s32.totalorder %v1105, 0
    %vm1420 = vcmp.ne.s32.totalorder %v1112, 0
    %vm1421 = vcmp.ne.s32.totalorder %v1119, 0
    %vm1422 = vcmp.ne.s32.totalorder %v1126, 0
    %vm1423 = vcmp.ne.s32.totalorder %v1133, 0
    %vm1424 = vcmp.ne.s32.totalorder %v1140, 0
    %vm1425 = vcmp.ne.s32.totalorder %v1147, 0
    %vm1426 = vcmp.ne.s32.totalorder %v1154, 0
    %vm1427 = vcmp.ne.s32.totalorder %v1161, 0
    %vm1428 = vcmp.ne.s32.totalorder %v1168, 0
    %vm1429 = vcmp.ne.s32.totalorder %v1175, 0
    %vm1430 = vcmp.ne.s32.totalorder %v1182, 0
    %vm1431 = vcmp.ne.s32.totalorder %v1189, 0
    %vm1432 = vcmp.ne.s32.totalorder %v1196, 0
    %vm1433 = vcmp.ne.s32.totalorder %v1203, 0
    %vm1434 = vcmp.ne.s32.totalorder %v1210, 0
    %vm1435 = vcmp.ne.s32.totalorder %v1217, 0
    %vm1436 = vcmp.ne.s32.totalorder %v1224, 0
    %vm1437 = vcmp.ne.s32.totalorder %v1231, 0
    %vm1438 = vcmp.ne.s32.totalorder %v1238, 0
    %vm1439 = vcmp.ne.s32.totalorder %v1245, 0
    %vm1440 = vcmp.ne.s32.totalorder %v1252, 0
    %vm1441 = vcmp.ne.s32.totalorder %v1259, 0
    %vm1442 = vcmp.ne.s32.totalorder %v1266, 0
    %vm1443 = vcmp.ne.s32.totalorder %v1273, 0
    %vm1444 = vcmp.ne.s32.totalorder %v1280, 0
    %vm1445 = vcmp.ne.s32.totalorder %v1287, 0
    %vm1446 = vcmp.ne.s32.totalorder %v1294, 0
    %vm1447 = vcmp.ne.s32.totalorder %v1301, 0
    %vm1448 = vcmp.ne.s32.totalorder %v1308, 0
    %vm1449 = vcmp.ne.s32.totalorder %v1315, 0
    %vm1450 = vcmp.ne.s32.totalorder %v1322, 0
    %vm1451 = vcmp.ne.s32.totalorder %v1329, 0
    %vm1452 = vcmp.ne.s32.totalorder %v1336, 0
    %vm1453 = vcmp.ne.s32.totalorder %v1343, 0
    %vm1454 = vcmp.ne.s32.totalorder %v1350, 0
    %vm1455 = vcmp.ne.s32.totalorder %v1357, 0
    %vm1456 = vcmp.ne.s32.totalorder %v1364, 0
    %vm1457 = vcmp.ne.s32.totalorder %v1371, 0
    %vm1458 = vcmp.ne.s32.totalorder %v1378, 0
    %vm1459 = vcmp.lt.s32.totalorder %v825, 0
    %vm1460 = vcmp.lt.s32.totalorder %v832, 0
    %vm1461 = vcmp.lt.s32.totalorder %v839, 0
    %vm1462 = vcmp.lt.s32.totalorder %v846, 0
    %vm1463 = vcmp.lt.s32.totalorder %v853, 0
    %vm1464 = vcmp.lt.s32.totalorder %v860, 0
    %vm1465 = vcmp.lt.s32.totalorder %v867, 0
    %vm1466 = vcmp.lt.s32.totalorder %v874, 0
    %vm1467 = vcmp.lt.s32.totalorder %v881, 0
    %vm1468 = vcmp.lt.s32.totalorder %v888, 0
    %vm1469 = vcmp.lt.s32.totalorder %v895, 0
    %vm1470 = vcmp.lt.s32.totalorder %v902, 0
    %vm1471 = vcmp.lt.s32.totalorder %v909, 0
    %vm1472 = vcmp.lt.s32.totalorder %v916, 0
    %vm1473 = vcmp.lt.s32.totalorder %v923, 0
    %vm1474 = vcmp.lt.s32.totalorder %v930, 0
    %vm1475 = vcmp.lt.s32.totalorder %v937, 0
    %vm1476 = vcmp.lt.s32.totalorder %v944, 0
    %vm1477 = vcmp.lt.s32.totalorder %v951, 0
    %vm1478 = vcmp.lt.s32.totalorder %v958, 0
    %vm1479 = vcmp.lt.s32.totalorder %v965, 0
    %vm1480 = vcmp.lt.s32.totalorder %v972, 0
    %vm1481 = vcmp.lt.s32.totalorder %v979, 0
    %vm1482 = vcmp.lt.s32.totalorder %v986, 0
    %vm1483 = vcmp.lt.s32.totalorder %v993, 0
    %vm1484 = vcmp.lt.s32.totalorder %v1000, 0
    %vm1485 = vcmp.lt.s32.totalorder %v1007, 0
    %vm1486 = vcmp.lt.s32.totalorder %v1014, 0
    %vm1487 = vcmp.lt.s32.totalorder %v1021, 0
    %vm1488 = vcmp.lt.s32.totalorder %v1028, 0
    %vm1489 = vcmp.lt.s32.totalorder %v1035, 0
    %vm1490 = vcmp.lt.s32.totalorder %v1042, 0
    %vm1491 = vcmp.lt.s32.totalorder %v1049, 0
    %vm1492 = vcmp.lt.s32.totalorder %v1056, 0
    %vm1493 = vcmp.lt.s32.totalorder %v1063, 0
    %vm1494 = vcmp.lt.s32.totalorder %v1070, 0
    %vm1495 = vcmp.lt.s32.totalorder %v1077, 0
    %vm1496 = vcmp.lt.s32.totalorder %v1084, 0
    %vm1497 = vcmp.lt.s32.totalorder %v1091, 0
    %vm1498 = vcmp.lt.s32.totalorder %v1098, 0
    %vm1499 = vcmp.lt.s32.totalorder %v1105, 0
    %vm1500 = vcmp.lt.s32.totalorder %v1112, 0
    %vm1501 = vcmp.lt.s32.totalorder %v1119, 0
    %vm1502 = vcmp.lt.s32.totalorder %v1126, 0
    %vm1503 = vcmp.lt.s32.totalorder %v1133, 0
    %vm1504 = vcmp.lt.s32.totalorder %v1140, 0
    %vm1505 = vcmp.lt.s32.totalorder %v1147, 0
    %vm1506 = vcmp.lt.s32.totalorder %v1154, 0
    %vm1507 = vcmp.lt.s32.totalorder %v1161, 0
    %vm1508 = vcmp.lt.s32.totalorder %v1168, 0
    %vm1509 = vcmp.lt.s32.totalorder %v1175, 0
    %vm1510 = vcmp.lt.s32.totalorder %v1182, 0
    %vm1511 = vcmp.lt.s32.totalorder %v1189, 0
    %vm1512 = vcmp.lt.s32.totalorder %v1196, 0
    %vm1513 = vcmp.lt.s32.totalorder %v1203, 0
    %vm1514 = vcmp.lt.s32.totalorder %v1210, 0
    %vm1515 = vcmp.lt.s32.totalorder %v1217, 0
    %vm1516 = vcmp.lt.s32.totalorder %v1224, 0
    %vm1517 = vcmp.lt.s32.totalorder %v1231, 0
    %vm1518 = vcmp.lt.s32.totalorder %v1238, 0
    %vm1519 = vcmp.lt.s32.totalorder %v1245, 0
    %vm1520 = vcmp.lt.s32.totalorder %v1252, 0
    %vm1521 = vcmp.lt.s32.totalorder %v1259, 0
    %vm1522 = vcmp.lt.s32.totalorder %v1266, 0
    %vm1523 = vcmp.lt.s32.totalorder %v1273, 0
    %vm1524 = vcmp.lt.s32.totalorder %v1280, 0
    %vm1525 = vcmp.lt.s32.totalorder %v1287, 0
    %vm1526 = vcmp.lt.s32.totalorder %v1294, 0
    %vm1527 = vcmp.lt.s32.totalorder %v1301, 0
    %vm1528 = vcmp.lt.s32.totalorder %v1308, 0
    %vm1529 = vcmp.lt.s32.totalorder %v1315, 0
    %vm1530 = vcmp.lt.s32.totalorder %v1322, 0
    %vm1531 = vcmp.lt.s32.totalorder %v1329, 0
    %vm1532 = vcmp.lt.s32.totalorder %v1336, 0
    %vm1533 = vcmp.lt.s32.totalorder %v1343, 0
    %vm1534 = vcmp.lt.s32.totalorder %v1350, 0
    %vm1535 = vcmp.lt.s32.totalorder %v1357, 0
    %vm1536 = vcmp.lt.s32.totalorder %v1364, 0
    %vm1537 = vcmp.lt.s32.totalorder %v1371, 0
    %vm1538 = vcmp.lt.s32.totalorder %v1378, 0
    %vm1539 = vmand %vm1459, %vm1379
    %vm1540 = vmand %vm1460, %vm1380
    %vm1541 = vmand %vm1461, %vm1381
    %vm1542 = vmand %vm1462, %vm1382
    %vm1543 = vmand %vm1463, %vm1383
    %vm1544 = vmand %vm1464, %vm1384
    %vm1545 = vmand %vm1465, %vm1385
    %vm1546 = vmand %vm1466, %vm1386
    %vm1547 = vmand %vm1467, %vm1387
    %vm1548 = vmand %vm1468, %vm1388
    %vm1549 = vmand %vm1469, %vm1389
    %vm1550 = vmand %vm1470, %vm1390
    %vm1551 = vmand %vm1471, %vm1391
    %vm1552 = vmand %vm1472, %vm1392
    %vm1553 = vmand %vm1473, %vm1393
    %vm1554 = vmand %vm1474, %vm1394
    %vm1555 = vmand %vm1475, %vm1395
    %vm1556 = vmand %vm1476, %vm1396
    %vm1557 = vmand %vm1477, %vm1397
    %vm1558 = vmand %vm1478, %vm1398
    %vm1559 = vmand %vm1479, %vm1399
    %vm1560 = vmand %vm1480, %vm1400
    %vm1561 = vmand %vm1481, %vm1401
    %vm1562 = vmand %vm1482, %vm1402
    %vm1563 = vmand %vm1483, %vm1403
    %vm1564 = vmand %vm1484, %vm1404
    %vm1565 = vmand %vm1485, %vm1405
    %vm1566 = vmand %vm1486, %vm1406
    %vm1567 = vmand %vm1487, %vm1407
    %vm1568 = vmand %vm1488, %vm1408
    %vm1569 = vmand %vm1489, %vm1409
    %vm1570 = vmand %vm1490, %vm1410
    %vm1571 = vmand %vm1491, %vm1411
    %vm1572 = vmand %vm1492, %vm1412
    %vm1573 = vmand %vm1493, %vm1413
    %vm1574 = vmand %vm1494, %vm1414
    %vm1575 = vmand %vm1495, %vm1415
    %vm1576 = vmand %vm1496, %vm1416
    %vm1577 = vmand %vm1497, %vm1417
    %vm1578 = vmand %vm1498, %vm1418
    %vm1579 = vmand %vm1499, %vm1419
    %vm1580 = vmand %vm1500, %vm1420
    %vm1581 = vmand %vm1501, %vm1421
    %vm1582 = vmand %vm1502, %vm1422
    %vm1583 = vmand %vm1503, %vm1423
    %vm1584 = vmand %vm1504, %vm1424
    %vm1585 = vmand %vm1505, %vm1425
    %vm1586 = vmand %vm1506, %vm1426
    %vm1587 = vmand %vm1507, %vm1427
    %vm1588 = vmand %vm1508, %vm1428
    %vm1589 = vmand %vm1509, %vm1429
    %vm1590 = vmand %vm1510, %vm1430
    %vm1591 = vmand %vm1511, %vm1431
    %vm1592 = vmand %vm1512, %vm1432
    %vm1593 = vmand %vm1513, %vm1433
    %vm1594 = vmand %vm1514, %vm1434
    %vm1595 = vmand %vm1515, %vm1435
    %vm1596 = vmand %vm1516, %vm1436
    %vm1597 = vmand %vm1517, %vm1437
    %vm1598 = vmand %vm1518, %vm1438
    %vm1599 = vmand %vm1519, %vm1439
    %vm1600 = vmand %vm1520, %vm1440
    %vm1601 = vmand %vm1521, %vm1441
    %vm1602 = vmand %vm1522, %vm1442
    %vm1603 = vmand %vm1523, %vm1443
    %vm1604 = vmand %vm1524, %vm1444
    %vm1605 = vmand %vm1525, %vm1445
    %vm1606 = vmand %vm1526, %vm1446
    %vm1607 = vmand %vm1527, %vm1447
    %vm1608 = vmand %vm1528, %vm1448
    %vm1609 = vmand %vm1529, %vm1449
    %vm1610 = vmand %vm1530, %vm1450
    %vm1611 = vmand %vm1531, %vm1451
    %vm1612 = vmand %vm1532, %vm1452
    %vm1613 = vmand %vm1533, %vm1453
    %vm1614 = vmand %vm1534, %vm1454
    %vm1615 = vmand %vm1535, %vm1455
    %vm1616 = vmand %vm1536, %vm1456
    %vm1617 = vmand %vm1537, %vm1457
    %vm1618 = vmand %vm1538, %vm1458
    %v1619 = vadd.s32 %v825, 16
    %v1620 = vadd.s32 %v832, 16
    %v1621 = vadd.s32 %v839, 16
    %v1622 = vadd.s32 %v846, 16
    %v1623 = vadd.s32 %v853, 16
    %v1624 = vadd.s32 %v860, 16
    %v1625 = vadd.s32 %v867, 16
    %v1626 = vadd.s32 %v874, 16
    %v1627 = vadd.s32 %v881, 16
    %v1628 = vadd.s32 %v888, 16
    %v1629 = vadd.s32 %v895, 16
    %v1630 = vadd.s32 %v902, 16
    %v1631 = vadd.s32 %v909, 16
    %v1632 = vadd.s32 %v916, 16
    %v1633 = vadd.s32 %v923, 16
    %v1634 = vadd.s32 %v930, 16
    %v1635 = vadd.s32 %v937, 16
    %v1636 = vadd.s32 %v944, 16
    %v1637 = vadd.s32 %v951, 16
    %v1638 = vadd.s32 %v958, 16
    %v1639 = vadd.s32 %v965, 16
    %v1640 = vadd.s32 %v972, 16
    %v1641 = vadd.s32 %v979, 16
    %v1642 = vadd.s32 %v986, 16
    %v1643 = vadd.s32 %v993, 16
    %v1644 = vadd.s32 %v1000, 16
    %v1645 = vadd.s32 %v1007, 16
    %v1646 = vadd.s32 %v1014, 16
    %v1647 = vadd.s32 %v1021, 16
    %v1648 = vadd.s32 %v1028, 16
    %v1649 = vadd.s32 %v1035, 16
    %v1650 = vadd.s32 %v1042, 16
    %v1651 = vadd.s32 %v1049, 16
    %v1652 = vadd.s32 %v1056, 16
    %v1653 = vadd.s32 %v1063, 16
    %v1654 = vadd.s32 %v1070, 16
    %v1655 = vadd.s32 %v1077, 16
    %v1656 = vadd.s32 %v1084, 16
    %v1657 = vadd.s32 %v1091, 16
    %v1658 = vadd.s32 %v1098, 16
    %v1659 = vadd.s32 %v1105, 16
    %v1660 = vadd.s32 %v1112, 16
    %v1661 = vadd.s32 %v1119, 16
    %v1662 = vadd.s32 %v1126, 16
    %v1663 = vadd.s32 %v1133, 16
    %v1664 = vadd.s32 %v1140, 16
    %v1665 = vadd.s32 %v1147, 16
    %v1666 = vadd.s32 %v1154, 16
    %v1667 = vadd.s32 %v1161, 16
    %v1668 = vadd.s32 %v1168, 16
    %v1669 = vadd.s32 %v1175, 16
    %v1670 = vadd.s32 %v1182, 16
    %v1671 = vadd.s32 %v1189, 16
    %v1672 = vadd.s32 %v1196, 16
    %v1673 = vadd.s32 %v1203, 16
    %v1674 = vadd.s32 %v1210, 16
    %v1675 = vadd.s32 %v1217, 16
    %v1676 = vadd.s32 %v1224, 16
    %v1677 = vadd.s32 %v1231, 16
    %v1678 = vadd.s32 %v1238, 16
    %v1679 = vadd.s32 %v1245, 16
    %v1680 = vadd.s32 %v1252, 16
    %v1681 = vadd.s32 %v1259, 16
    %v1682 = vadd.s32 %v1266, 16
    %v1683 = vadd.s32 %v1273, 16
    %v1684 = vadd.s32 %v1280, 16
    %v1685 = vadd.s32 %v1287, 16
    %v1686 = vadd.s32 %v1294, 16
    %v1687 = vadd.s32 %v1301, 16
    %v1688 = vadd.s32 %v1308, 16
    %v1689 = vadd.s32 %v1315, 16
    %v1690 = vadd.s32 %v1322, 16
    %v1691 = vadd.s32 %v1329, 16
    %v1692 = vadd.s32 %v1336, 16
    %v1693 = vadd.s32 %v1343, 16
    %v1694 = vadd.s32 %v1350, 16
    %v1695 = vadd.s32 %v1357, 16
    %v1696 = vadd.s32 %v1364, 16
    %v1697 = vadd.s32 %v1371, 16
    %v1698 = vadd.s32 %v1378, 16
    %v1699 = vsel %vm1539, %v1619, %v825
    %v1700 = vsel %vm1540, %v1620, %v832
    %v1701 = vsel %vm1541, %v1621, %v839
    %v1702 = vsel %vm1542, %v1622, %v846
    %v1703 = vsel %vm1543, %v1623, %v853
    %v1704 = vsel %vm1544, %v1624, %v860
    %v1705 = vsel %vm1545, %v1625, %v867
    %v1706 = vsel %vm1546, %v1626, %v874
    %v1707 = vsel %vm1547, %v1627, %v881
    %v1708 = vsel %vm1548, %v1628, %v888
    %v1709 = vsel %vm1549, %v1629, %v895
    %v1710 = vsel %vm1550, %v1630, %v902
    %v1711 = vsel %vm1551, %v1631, %v909
    %v1712 = vsel %vm1552, %v1632, %v916
    %v1713 = vsel %vm1553, %v1633, %v923
    %v1714 = vsel %vm1554, %v1634, %v930
    %v1715 = vsel %vm1555, %v1635, %v937
    %v1716 = vsel %vm1556, %v1636, %v944
    %v1717 = vsel %vm1557, %v1637, %v951
    %v1718 = vsel %vm1558, %v1638, %v958
    %v1719 = vsel %vm1559, %v1639, %v965
    %v1720 = vsel %vm1560, %v1640, %v972
    %v1721 = vsel %vm1561, %v1641, %v979
    %v1722 = vsel %vm1562, %v1642, %v986
    %v1723 = vsel %vm1563, %v1643, %v993
    %v1724 = vsel %vm1564, %v1644, %v1000
    %v1725 = vsel %vm1565, %v1645, %v1007
    %v1726 = vsel %vm1566, %v1646, %v1014
    %v1727 = vsel %vm1567, %v1647, %v1021
    %v1728 = vsel %vm1568, %v1648, %v1028
    %v1729 = vsel %vm1569, %v1649, %v1035
    %v1730 = vsel %vm1570, %v1650, %v1042
    %v1731 = vsel %vm1571, %v1651, %v1049
    %v1732 = vsel %vm1572, %v1652, %v1056
    %v1733 = vsel %vm1573, %v1653, %v1063
    %v1734 = vsel %vm1574, %v1654, %v1070
    %v1735 = vsel %vm1575, %v1655, %v1077
    %v1736 = vsel %vm1576, %v1656, %v1084
    %v1737 = vsel %vm1577, %v1657, %v1091
    %v1738 = vsel %vm1578, %v1658, %v1098
    %v1739 = vsel %vm1579, %v1659, %v1105
    %v1740 = vsel %vm1580, %v1660, %v1112
    %v1741 = vsel %vm1581, %v1661, %v1119
    %v1742 = vsel %vm1582, %v1662, %v1126
    %v1743 = vsel %vm1583, %v1663, %v1133
    %v1744 = vsel %vm1584, %v1664, %v1140
    %v1745 = vsel %vm1585, %v1665, %v1147
    %v1746 = vsel %vm1586, %v1666, %v1154
    %v1747 = vsel %vm1587, %v1667, %v1161
    %v1748 = vsel %vm1588, %v1668, %v1168
    %v1749 = vsel %vm1589, %v1669, %v1175
    %v1750 = vsel %vm1590, %v1670, %v1182
    %v1751 = vsel %vm1591, %v1671, %v1189
    %v1752 = vsel %vm1592, %v1672, %v1196
    %v1753 = vsel %vm1593, %v1673, %v1203
    %v1754 = vsel %vm1594, %v1674, %v1210
    %v1755 = vsel %vm1595, %v1675, %v1217
    %v1756 = vsel %vm1596, %v1676, %v1224
    %v1757 = vsel %vm1597, %v1677, %v1231
    %v1758 = vsel %vm1598, %v1678, %v1238
    %v1759 = vsel %vm1599, %v1679, %v1245
    %v1760 = vsel %vm1600, %v1680, %v1252
    %v1761 = vsel %vm1601, %v1681, %v1259
    %v1762 = vsel %vm1602, %v1682, %v1266
    %v1763 = vsel %vm1603, %v1683, %v1273
    %v1764 = vsel %vm1604, %v1684, %v1280
    %v1765 = vsel %vm1605, %v1685, %v1287
    %v1766 = vsel %vm1606, %v1686, %v1294
    %v1767 = vsel %vm1607, %v1687, %v1301
    %v1768 = vsel %vm1608, %v1688, %v1308
    %v1769 = vsel %vm1609, %v1689, %v1315
    %v1770 = vsel %vm1610, %v1690, %v1322
    %v1771 = vsel %vm1611, %v1691, %v1329
    %v1772 = vsel %vm1612, %v1692, %v1336
    %v1773 = vsel %vm1613, %v1693, %v1343
    %v1774 = vsel %vm1614, %v1694, %v1350
    %v1775 = vsel %vm1615, %v1695, %v1357
    %v1776 = vsel %vm1616, %v1696, %v1364
    %v1777 = vsel %vm1617, %v1697, %v1371
    %v1778 = vsel %vm1618, %v1698, %v1378
    %vm1779 = vcmp.ge.s32.totalorder %v1699, 2
    %vm1780 = vcmp.ge.s32.totalorder %v1700, 2
    %vm1781 = vcmp.ge.s32.totalorder %v1701, 2
    %vm1782 = vcmp.ge.s32.totalorder %v1702, 2
    %vm1783 = vcmp.ge.s32.totalorder %v1703, 2
    %vm1784 = vcmp.ge.s32.totalorder %v1704, 2
    %vm1785 = vcmp.ge.s32.totalorder %v1705, 2
    %vm1786 = vcmp.ge.s32.totalorder %v1706, 2
    %vm1787 = vcmp.ge.s32.totalorder %v1707, 2
    %vm1788 = vcmp.ge.s32.totalorder %v1708, 2
    %vm1789 = vcmp.ge.s32.totalorder %v1709, 2
    %vm1790 = vcmp.ge.s32.totalorder %v1710, 2
    %vm1791 = vcmp.ge.s32.totalorder %v1711, 2
    %vm1792 = vcmp.ge.s32.totalorder %v1712, 2
    %vm1793 = vcmp.ge.s32.totalorder %v1713, 2
    %vm1794 = vcmp.ge.s32.totalorder %v1714, 2
    %vm1795 = vcmp.ge.s32.totalorder %v1715, 2
    %vm1796 = vcmp.ge.s32.totalorder %v1716, 2
    %vm1797 = vcmp.ge.s32.totalorder %v1717, 2
    %vm1798 = vcmp.ge.s32.totalorder %v1718, 2
    %vm1799 = vcmp.ge.s32.totalorder %v1719, 2
    %vm1800 = vcmp.ge.s32.totalorder %v1720, 2
    %vm1801 = vcmp.ge.s32.totalorder %v1721, 2
    %vm1802 = vcmp.ge.s32.totalorder %v1722, 2
    %vm1803 = vcmp.ge.s32.totalorder %v1723, 2
    %vm1804 = vcmp.ge.s32.totalorder %v1724, 2
    %vm1805 = vcmp.ge.s32.totalorder %v1725, 2
    %vm1806 = vcmp.ge.s32.totalorder %v1726, 2
    %vm1807 = vcmp.ge.s32.totalorder %v1727, 2
    %vm1808 = vcmp.ge.s32.totalorder %v1728, 2
    %vm1809 = vcmp.ge.s32.totalorder %v1729, 2
    %vm1810 = vcmp.ge.s32.totalorder %v1730, 2
    %vm1811 = vcmp.ge.s32.totalorder %v1731, 2
    %vm1812 = vcmp.ge.s32.totalorder %v1732, 2
    %vm1813 = vcmp.ge.s32.totalorder %v1733, 2
    %vm1814 = vcmp.ge.s32.totalorder %v1734, 2
    %vm1815 = vcmp.ge.s32.totalorder %v1735, 2
    %vm1816 = vcmp.ge.s32.totalorder %v1736, 2
    %vm1817 = vcmp.ge.s32.totalorder %v1737, 2
    %vm1818 = vcmp.ge.s32.totalorder %v1738, 2
    %vm1819 = vcmp.ge.s32.totalorder %v1739, 2
    %vm1820 = vcmp.ge.s32.totalorder %v1740, 2
    %vm1821 = vcmp.ge.s32.totalorder %v1741, 2
    %vm1822 = vcmp.ge.s32.totalorder %v1742, 2
    %vm1823 = vcmp.ge.s32.totalorder %v1743, 2
    %vm1824 = vcmp.ge.s32.totalorder %v1744, 2
    %vm1825 = vcmp.ge.s32.totalorder %v1745, 2
    %vm1826 = vcmp.ge.s32.totalorder %v1746, 2
    %vm1827 = vcmp.ge.s32.totalorder %v1747, 2
    %vm1828 = vcmp.ge.s32.totalorder %v1748, 2
    %vm1829 = vcmp.ge.s32.totalorder %v1749, 2
    %vm1830 = vcmp.ge.s32.totalorder %v1750, 2
    %vm1831 = vcmp.ge.s32.totalorder %v1751, 2
    %vm1832 = vcmp.ge.s32.totalorder %v1752, 2
    %vm1833 = vcmp.ge.s32.totalorder %v1753, 2
    %vm1834 = vcmp.ge.s32.totalorder %v1754, 2
    %vm1835 = vcmp.ge.s32.totalorder %v1755, 2
    %vm1836 = vcmp.ge.s32.totalorder %v1756, 2
    %vm1837 = vcmp.ge.s32.totalorder %v1757, 2
    %vm1838 = vcmp.ge.s32.totalorder %v1758, 2
    %vm1839 = vcmp.ge.s32.totalorder %v1759, 2
    %vm1840 = vcmp.ge.s32.totalorder %v1760, 2
    %vm1841 = vcmp.ge.s32.totalorder %v1761, 2
    %vm1842 = vcmp.ge.s32.totalorder %v1762, 2
    %vm1843 = vcmp.ge.s32.totalorder %v1763, 2
    %vm1844 = vcmp.ge.s32.totalorder %v1764, 2
    %vm1845 = vcmp.ge.s32.totalorder %v1765, 2
    %vm1846 = vcmp.ge.s32.totalorder %v1766, 2
    %vm1847 = vcmp.ge.s32.totalorder %v1767, 2
    %vm1848 = vcmp.ge.s32.totalorder %v1768, 2
    %vm1849 = vcmp.ge.s32.totalorder %v1769, 2
    %vm1850 = vcmp.ge.s32.totalorder %v1770, 2
    %vm1851 = vcmp.ge.s32.totalorder %v1771, 2
    %vm1852 = vcmp.ge.s32.totalorder %v1772, 2
    %vm1853 = vcmp.ge.s32.totalorder %v1773, 2
    %vm1854 = vcmp.ge.s32.totalorder %v1774, 2
    %vm1855 = vcmp.ge.s32.totalorder %v1775, 2
    %vm1856 = vcmp.ge.s32.totalorder %v1776, 2
    %vm1857 = vcmp.ge.s32.totalorder %v1777, 2
    %vm1858 = vcmp.ge.s32.totalorder %v1778, 2
    %v1859 = vsel %vm1779, 1, 0
    %v1860 = vsel %vm1780, 1, 0
    %v1861 = vsel %vm1781, 1, 0
    %v1862 = vsel %vm1782, 1, 0
    %v1863 = vsel %vm1783, 1, 0
    %v1864 = vsel %vm1784, 1, 0
    %v1865 = vsel %vm1785, 1, 0
    %v1866 = vsel %vm1786, 1, 0
    %v1867 = vsel %vm1787, 1, 0
    %v1868 = vsel %vm1788, 1, 0
    %v1869 = vsel %vm1789, 1, 0
    %v1870 = vsel %vm1790, 1, 0
    %v1871 = vsel %vm1791, 1, 0
    %v1872 = vsel %vm1792, 1, 0
    %v1873 = vsel %vm1793, 1, 0
    %v1874 = vsel %vm1794, 1, 0
    %v1875 = vsel %vm1795, 1, 0
    %v1876 = vsel %vm1796, 1, 0
    %v1877 = vsel %vm1797, 1, 0
    %v1878 = vsel %vm1798, 1, 0
    %v1879 = vsel %vm1799, 1, 0
    %v1880 = vsel %vm1800, 1, 0
    %v1881 = vsel %vm1801, 1, 0
    %v1882 = vsel %vm1802, 1, 0
    %v1883 = vsel %vm1803, 1, 0
    %v1884 = vsel %vm1804, 1, 0
    %v1885 = vsel %vm1805, 1, 0
    %v1886 = vsel %vm1806, 1, 0
    %v1887 = vsel %vm1807, 1, 0
    %v1888 = vsel %vm1808, 1, 0
    %v1889 = vsel %vm1809, 1, 0
    %v1890 = vsel %vm1810, 1, 0
    %v1891 = vsel %vm1811, 1, 0
    %v1892 = vsel %vm1812, 1, 0
    %v1893 = vsel %vm1813, 1, 0
    %v1894 = vsel %vm1814, 1, 0
    %v1895 = vsel %vm1815, 1, 0
    %v1896 = vsel %vm1816, 1, 0
    %v1897 = vsel %vm1817, 1, 0
    %v1898 = vsel %vm1818, 1, 0
    %v1899 = vsel %vm1819, 1, 0
    %v1900 = vsel %vm1820, 1, 0
    %v1901 = vsel %vm1821, 1, 0
    %v1902 = vsel %vm1822, 1, 0
    %v1903 = vsel %vm1823, 1, 0
    %v1904 = vsel %vm1824, 1, 0
    %v1905 = vsel %vm1825, 1, 0
    %v1906 = vsel %vm1826, 1, 0
    %v1907 = vsel %vm1827, 1, 0
    %v1908 = vsel %vm1828, 1, 0
    %v1909 = vsel %vm1829, 1, 0
    %v1910 = vsel %vm1830, 1, 0
    %v1911 = vsel %vm1831, 1, 0
    %v1912 = vsel %vm1832, 1, 0
    %v1913 = vsel %vm1833, 1, 0
    %v1914 = vsel %vm1834, 1, 0
    %v1915 = vsel %vm1835, 1, 0
    %v1916 = vsel %vm1836, 1, 0
    %v1917 = vsel %vm1837, 1, 0
    %v1918 = vsel %vm1838, 1, 0
    %v1919 = vsel %vm1839, 1, 0
    %v1920 = vsel %vm1840, 1, 0
    %v1921 = vsel %vm1841, 1, 0
    %v1922 = vsel %vm1842, 1, 0
    %v1923 = vsel %vm1843, 1, 0
    %v1924 = vsel %vm1844, 1, 0
    %v1925 = vsel %vm1845, 1, 0
    %v1926 = vsel %vm1846, 1, 0
    %v1927 = vsel %vm1847, 1, 0
    %v1928 = vsel %vm1848, 1, 0
    %v1929 = vsel %vm1849, 1, 0
    %v1930 = vsel %vm1850, 1, 0
    %v1931 = vsel %vm1851, 1, 0
    %v1932 = vsel %vm1852, 1, 0
    %v1933 = vsel %vm1853, 1, 0
    %v1934 = vsel %vm1854, 1, 0
    %v1935 = vsel %vm1855, 1, 0
    %v1936 = vsel %vm1856, 1, 0
    %v1937 = vsel %vm1857, 1, 0
    %v1938 = vsel %vm1858, 1, 0
    %vm1939 = vcmp.eq.s32.totalorder %v1859, 1
    %vm1940 = vcmp.eq.s32.totalorder %v1860, 1
    %vm1941 = vcmp.eq.s32.totalorder %v1861, 1
    %vm1942 = vcmp.eq.s32.totalorder %v1862, 1
    %vm1943 = vcmp.eq.s32.totalorder %v1863, 1
    %vm1944 = vcmp.eq.s32.totalorder %v1864, 1
    %vm1945 = vcmp.eq.s32.totalorder %v1865, 1
    %vm1946 = vcmp.eq.s32.totalorder %v1866, 1
    %vm1947 = vcmp.eq.s32.totalorder %v1867, 1
    %vm1948 = vcmp.eq.s32.totalorder %v1868, 1
    %vm1949 = vcmp.eq.s32.totalorder %v1869, 1
    %vm1950 = vcmp.eq.s32.totalorder %v1870, 1
    %vm1951 = vcmp.eq.s32.totalorder %v1871, 1
    %vm1952 = vcmp.eq.s32.totalorder %v1872, 1
    %vm1953 = vcmp.eq.s32.totalorder %v1873, 1
    %vm1954 = vcmp.eq.s32.totalorder %v1874, 1
    %vm1955 = vcmp.eq.s32.totalorder %v1875, 1
    %vm1956 = vcmp.eq.s32.totalorder %v1876, 1
    %vm1957 = vcmp.eq.s32.totalorder %v1877, 1
    %vm1958 = vcmp.eq.s32.totalorder %v1878, 1
    %vm1959 = vcmp.eq.s32.totalorder %v1879, 1
    %vm1960 = vcmp.eq.s32.totalorder %v1880, 1
    %vm1961 = vcmp.eq.s32.totalorder %v1881, 1
    %vm1962 = vcmp.eq.s32.totalorder %v1882, 1
    %vm1963 = vcmp.eq.s32.totalorder %v1883, 1
    %vm1964 = vcmp.eq.s32.totalorder %v1884, 1
    %vm1965 = vcmp.eq.s32.totalorder %v1885, 1
    %vm1966 = vcmp.eq.s32.totalorder %v1886, 1
    %vm1967 = vcmp.eq.s32.totalorder %v1887, 1
    %vm1968 = vcmp.eq.s32.totalorder %v1888, 1
    %vm1969 = vcmp.eq.s32.totalorder %v1889, 1
    %vm1970 = vcmp.eq.s32.totalorder %v1890, 1
    %vm1971 = vcmp.eq.s32.totalorder %v1891, 1
    %vm1972 = vcmp.eq.s32.totalorder %v1892, 1
    %vm1973 = vcmp.eq.s32.totalorder %v1893, 1
    %vm1974 = vcmp.eq.s32.totalorder %v1894, 1
    %vm1975 = vcmp.eq.s32.totalorder %v1895, 1
    %vm1976 = vcmp.eq.s32.totalorder %v1896, 1
    %vm1977 = vcmp.eq.s32.totalorder %v1897, 1
    %vm1978 = vcmp.eq.s32.totalorder %v1898, 1
    %vm1979 = vcmp.eq.s32.totalorder %v1899, 1
    %vm1980 = vcmp.eq.s32.totalorder %v1900, 1
    %vm1981 = vcmp.eq.s32.totalorder %v1901, 1
    %vm1982 = vcmp.eq.s32.totalorder %v1902, 1
    %vm1983 = vcmp.eq.s32.totalorder %v1903, 1
    %vm1984 = vcmp.eq.s32.totalorder %v1904, 1
    %vm1985 = vcmp.eq.s32.totalorder %v1905, 1
    %vm1986 = vcmp.eq.s32.totalorder %v1906, 1
    %vm1987 = vcmp.eq.s32.totalorder %v1907, 1
    %vm1988 = vcmp.eq.s32.totalorder %v1908, 1
    %vm1989 = vcmp.eq.s32.totalorder %v1909, 1
    %vm1990 = vcmp.eq.s32.totalorder %v1910, 1
    %vm1991 = vcmp.eq.s32.totalorder %v1911, 1
    %vm1992 = vcmp.eq.s32.totalorder %v1912, 1
    %vm1993 = vcmp.eq.s32.totalorder %v1913, 1
    %vm1994 = vcmp.eq.s32.totalorder %v1914, 1
    %vm1995 = vcmp.eq.s32.totalorder %v1915, 1
    %vm1996 = vcmp.eq.s32.totalorder %v1916, 1
    %vm1997 = vcmp.eq.s32.totalorder %v1917, 1
    %vm1998 = vcmp.eq.s32.totalorder %v1918, 1
    %vm1999 = vcmp.eq.s32.totalorder %v1919, 1
    %vm2000 = vcmp.eq.s32.totalorder %v1920, 1
    %vm2001 = vcmp.eq.s32.totalorder %v1921, 1
    %vm2002 = vcmp.eq.s32.totalorder %v1922, 1
    %vm2003 = vcmp.eq.s32.totalorder %v1923, 1
    %vm2004 = vcmp.eq.s32.totalorder %v1924, 1
    %vm2005 = vcmp.eq.s32.totalorder %v1925, 1
    %vm2006 = vcmp.eq.s32.totalorder %v1926, 1
    %vm2007 = vcmp.eq.s32.totalorder %v1927, 1
    %vm2008 = vcmp.eq.s32.totalorder %v1928, 1
    %vm2009 = vcmp.eq.s32.totalorder %v1929, 1
    %vm2010 = vcmp.eq.s32.totalorder %v1930, 1
    %vm2011 = vcmp.eq.s32.totalorder %v1931, 1
    %vm2012 = vcmp.eq.s32.totalorder %v1932, 1
    %vm2013 = vcmp.eq.s32.totalorder %v1933, 1
    %vm2014 = vcmp.eq.s32.totalorder %v1934, 1
    %vm2015 = vcmp.eq.s32.totalorder %v1935, 1
    %vm2016 = vcmp.eq.s32.totalorder %v1936, 1
    %vm2017 = vcmp.eq.s32.totalorder %v1937, 1
    %vm2018 = vcmp.eq.s32.totalorder %v1938, 1
    %vm2084 = vcmask 1041408
    %v2085 = vrot.slane 0.0, 6
    %v2086 = vsel %vm2084, %v2085, %v2085
    %v2087 = vrot.slane %v674, 6
    %v2088 = vsel %vm2084, %v2085, %v2087
    %v2089 = vrot.slane %v675, 6
    %v2090 = vsel %vm2084, %v2087, %v2089
    %v2091 = vrot.slane %v676, 6
    %v2092 = vsel %vm2084, %v2089, %v2091
    %v2093 = vrot.slane %v677, 6
    %v2094 = vsel %vm2084, %v2091, %v2093
    %v2095 = vrot.slane %v678, 6
    %v2096 = vsel %vm2084, %v2093, %v2095
    %v2097 = vrot.slane %v679, 6
    %v2098 = vsel %vm2084, %v2095, %v2097
    %v2099 = vrot.slane %v680, 6
    %v2100 = vsel %vm2084, %v2097, %v2099
    %v2101 = vrot.slane %v681, 6
    %v2102 = vsel %vm2084, %v2099, %v2101
    %v2103 = vrot.slane %v682, 6
    %v2104 = vsel %vm2084, %v2101, %v2103
    %v2105 = vrot.slane %v683, 6
    %v2106 = vsel %vm2084, %v2103, %v2105
    %v2107 = vrot.slane %v684, 6
    %v2108 = vsel %vm2084, %v2105, %v2107
    %v2109 = vrot.slane %v685, 6
    %v2110 = vsel %vm2084, %v2107, %v2109
    %v2111 = vrot.slane %v686, 6
    %v2112 = vsel %vm2084, %v2109, %v2111
    %v2113 = vrot.slane %v687, 6
    %v2114 = vsel %vm2084, %v2111, %v2113
    %v2115 = vrot.slane %v688, 6
    %v2116 = vsel %vm2084, %v2113, %v2115
    %v2117 = vrot.slane %v689, 6
    %v2118 = vsel %vm2084, %v2115, %v2117
    %v2119 = vrot.slane %v690, 6
    %v2120 = vsel %vm2084, %v2117, %v2119
    %v2121 = vrot.slane %v691, 6
    %v2122 = vsel %vm2084, %v2119, %v2121
    %v2123 = vrot.slane %v692, 6
    %v2124 = vsel %vm2084, %v2121, %v2123
    %v2125 = vrot.slane %v693, 6
    %v2126 = vsel %vm2084, %v2123, %v2125
    %v2127 = vrot.slane %v694, 6
    %v2128 = vsel %vm2084, %v2125, %v2127
    %v2129 = vrot.slane %v695, 6
    %v2130 = vsel %vm2084, %v2127, %v2129
    %v2131 = vrot.slane %v696, 6
    %v2132 = vsel %vm2084, %v2129, %v2131
    %v2133 = vrot.slane %v697, 6
    %v2134 = vsel %vm2084, %v2131, %v2133
    %v2135 = vrot.slane %v698, 6
    %v2136 = vsel %vm2084, %v2133, %v2135
    %v2137 = vrot.slane %v699, 6
    %v2138 = vsel %vm2084, %v2135, %v2137
    %v2139 = vrot.slane %v700, 6
    %v2140 = vsel %vm2084, %v2137, %v2139
    %v2141 = vrot.slane %v701, 6
    %v2142 = vsel %vm2084, %v2139, %v2141
    %v2143 = vrot.slane %v702, 6
    %v2144 = vsel %vm2084, %v2141, %v2143
    %v2145 = vrot.slane %v703, 6
    %v2146 = vsel %vm2084, %v2143, %v2145
    %v2147 = vrot.slane %v704, 6
    %v2148 = vsel %vm2084, %v2145, %v2147
    %v2149 = vrot.slane %v705, 6
    %v2150 = vsel %vm2084, %v2147, %v2149
    %v2151 = vsel %vm2084, %v2149, %v2085
    %v2152 = vrot.slane %v706, 6
    %v2153 = vsel %vm2084, %v2085, %v2152
    %v2154 = vrot.slane %v707, 6
    %v2155 = vsel %vm2084, %v2152, %v2154
    %v2156 = vrot.slane %v708, 6
    %v2157 = vsel %vm2084, %v2154, %v2156
    %v2158 = vrot.slane %v709, 6
    %v2159 = vsel %vm2084, %v2156, %v2158
    %v2160 = vrot.slane %v710, 6
    %v2161 = vsel %vm2084, %v2158, %v2160
    %v2162 = vrot.slane %v711, 6
    %v2163 = vsel %vm2084, %v2160, %v2162
    %v2164 = vrot.slane %v712, 6
    %v2165 = vsel %vm2084, %v2162, %v2164
    %v2166 = vrot.slane %v713, 6
    %v2167 = vsel %vm2084, %v2164, %v2166
    %v2168 = vrot.slane %v714, 6
    %v2169 = vsel %vm2084, %v2166, %v2168
    %v2170 = vrot.slane %v715, 6
    %v2171 = vsel %vm2084, %v2168, %v2170
    %v2172 = vrot.slane %v716, 6
    %v2173 = vsel %vm2084, %v2170, %v2172
    %v2174 = vrot.slane %v717, 6
    %v2175 = vsel %vm2084, %v2172, %v2174
    %v2176 = vrot.slane %v718, 6
    %v2177 = vsel %vm2084, %v2174, %v2176
    %v2178 = vrot.slane %v719, 6
    %v2179 = vsel %vm2084, %v2176, %v2178
    %v2180 = vrot.slane %v720, 6
    %v2181 = vsel %vm2084, %v2178, %v2180
    %v2182 = vrot.slane %v721, 6
    %v2183 = vsel %vm2084, %v2180, %v2182
    %v2184 = vrot.slane %v722, 6
    %v2185 = vsel %vm2084, %v2182, %v2184
    %v2186 = vrot.slane %v723, 6
    %v2187 = vsel %vm2084, %v2184, %v2186
    %v2188 = vrot.slane %v724, 6
    %v2189 = vsel %vm2084, %v2186, %v2188
    %v2190 = vrot.slane %v725, 6
    %v2191 = vsel %vm2084, %v2188, %v2190
    %v2192 = vrot.slane %v726, 6
    %v2193 = vsel %vm2084, %v2190, %v2192
    %v2194 = vrot.slane %v727, 6
    %v2195 = vsel %vm2084, %v2192, %v2194
    %v2196 = vrot.slane %v728, 6
    %v2197 = vsel %vm2084, %v2194, %v2196
    %v2198 = vrot.slane %v729, 6
    %v2199 = vsel %vm2084, %v2196, %v2198
    %v2200 = vrot.slane %v730, 6
    %v2201 = vsel %vm2084, %v2198, %v2200
    %v2202 = vrot.slane %v731, 6
    %v2203 = vsel %vm2084, %v2200, %v2202
    %v2204 = vrot.slane %v732, 6
    %v2205 = vsel %vm2084, %v2202, %v2204
    %v2206 = vrot.slane %v733, 6
    %v2207 = vsel %vm2084, %v2204, %v2206
    %v2208 = vrot.slane %v734, 6
    %v2209 = vsel %vm2084, %v2206, %v2208
    %v2210 = vrot.slane %v735, 6
    %v2211 = vsel %vm2084, %v2208, %v2210
    %v2212 = vrot.slane %v736, 6
    %v2213 = vsel %vm2084, %v2210, %v2212
    %v2214 = vrot.slane %v737, 6
    %v2215 = vsel %vm2084, %v2212, %v2214
    %v2216 = vsel %vm2084, %v2214, %v2085
    %v2284 = vsel %vm1939, %v2086, 0.0
    %v2285 = vsel %vm1940, %v2086, 0.0
    %v2286 = vsel %vm1941, %v2086, 0.0
    %v2287 = vsel %vm1942, %v2086, 0.0
    %v2288 = vsel %vm1943, %v2088, 0.0
    %v2289 = vsel %vm1944, %v2090, 0.0
    %v2290 = vsel %vm1945, %v2092, 0.0
    %v2291 = vsel %vm1946, %v2094, 0.0
    %v2292 = vsel %vm1947, %v2096, 0.0
    %v2293 = vsel %vm1948, %v2098, 0.0
    %v2294 = vsel %vm1949, %v2100, 0.0
    %v2295 = vsel %vm1950, %v2102, 0.0
    %v2296 = vsel %vm1951, %v2104, 0.0
    %v2297 = vsel %vm1952, %v2106, 0.0
    %v2298 = vsel %vm1953, %v2108, 0.0
    %v2299 = vsel %vm1954, %v2110, 0.0
    %v2300 = vsel %vm1955, %v2112, 0.0
    %v2301 = vsel %vm1956, %v2114, 0.0
    %v2302 = vsel %vm1957, %v2116, 0.0
    %v2303 = vsel %vm1958, %v2118, 0.0
    %v2304 = vsel %vm1959, %v2120, 0.0
    %v2305 = vsel %vm1960, %v2122, 0.0
    %v2306 = vsel %vm1961, %v2124, 0.0
    %v2307 = vsel %vm1962, %v2126, 0.0
    %v2308 = vsel %vm1963, %v2128, 0.0
    %v2309 = vsel %vm1964, %v2130, 0.0
    %v2310 = vsel %vm1965, %v2132, 0.0
    %v2311 = vsel %vm1966, %v2134, 0.0
    %v2312 = vsel %vm1967, %v2136, 0.0
    %v2313 = vsel %vm1968, %v2138, 0.0
    %v2314 = vsel %vm1969, %v2140, 0.0
    %v2315 = vsel %vm1970, %v2142, 0.0
    %v2316 = vsel %vm1971, %v2144, 0.0
    %v2317 = vsel %vm1972, %v2146, 0.0
    %v2318 = vsel %vm1973, %v2148, 0.0
    %v2319 = vsel %vm1974, %v2150, 0.0
    %v2320 = vsel %vm1975, %v2151, 0.0
    %v2321 = vsel %vm1976, %v2086, 0.0
    %v2322 = vsel %vm1977, %v2086, 0.0
    %v2323 = vsel %vm1978, %v2086, 0.0
    %v2324 = vsel %vm1979, %v2086, 0.0
    %v2325 = vsel %vm1980, %v2086, 0.0
    %v2326 = vsel %vm1981, %v2086, 0.0
    %v2327 = vsel %vm1982, %v2086, 0.0
    %v2328 = vsel %vm1983, %v2153, 0.0
    %v2329 = vsel %vm1984, %v2155, 0.0
    %v2330 = vsel %vm1985, %v2157, 0.0
    %v2331 = vsel %vm1986, %v2159, 0.0
    %v2332 = vsel %vm1987, %v2161, 0.0
    %v2333 = vsel %vm1988, %v2163, 0.0
    %v2334 = vsel %vm1989, %v2165, 0.0
    %v2335 = vsel %vm1990, %v2167, 0.0
    %v2336 = vsel %vm1991, %v2169, 0.0
    %v2337 = vsel %vm1992, %v2171, 0.0
    %v2338 = vsel %vm1993, %v2173, 0.0
    %v2339 = vsel %vm1994, %v2175, 0.0
    %v2340 = vsel %vm1995, %v2177, 0.0
    %v2341 = vsel %vm1996, %v2179, 0.0
    %v2342 = vsel %vm1997, %v2181, 0.0
    %v2343 = vsel %vm1998, %v2183, 0.0
    %v2344 = vsel %vm1999, %v2185, 0.0
    %v2345 = vsel %vm2000, %v2187, 0.0
    %v2346 = vsel %vm2001, %v2189, 0.0
    %v2347 = vsel %vm2002, %v2191, 0.0
    %v2348 = vsel %vm2003, %v2193, 0.0
    %v2349 = vsel %vm2004, %v2195, 0.0
    %v2350 = vsel %vm2005, %v2197, 0.0
    %v2351 = vsel %vm2006, %v2199, 0.0
    %v2352 = vsel %vm2007, %v2201, 0.0
    %v2353 = vsel %vm2008, %v2203, 0.0
    %v2354 = vsel %vm2009, %v2205, 0.0
    %v2355 = vsel %vm2010, %v2207, 0.0
    %v2356 = vsel %vm2011, %v2209, 0.0
    %v2357 = vsel %vm2012, %v2211, 0.0
    %v2358 = vsel %vm2013, %v2213, 0.0
    %v2359 = vsel %vm2014, %v2215, 0.0
    %v2360 = vsel %vm2015, %v2216, 0.0
    %v2361 = vsel %vm2016, %v2086, 0.0
    %v2362 = vsel %vm2017, %v2086, 0.0
    %v2363 = vsel %vm2018, %v2086, 0.0
    %vm2364 = vcmp.ge.s32.totalorder %v1699, 1
    %vm2365 = vcmp.ge.s32.totalorder %v1700, 1
    %vm2366 = vcmp.ge.s32.totalorder %v1701, 1
    %vm2367 = vcmp.ge.s32.totalorder %v1702, 1
    %vm2368 = vcmp.ge.s32.totalorder %v1703, 1
    %vm2369 = vcmp.ge.s32.totalorder %v1704, 1
    %vm2370 = vcmp.ge.s32.totalorder %v1705, 1
    %vm2371 = vcmp.ge.s32.totalorder %v1706, 1
    %vm2372 = vcmp.ge.s32.totalorder %v1707, 1
    %vm2373 = vcmp.ge.s32.totalorder %v1708, 1
    %vm2374 = vcmp.ge.s32.totalorder %v1709, 1
    %vm2375 = vcmp.ge.s32.totalorder %v1710, 1
    %vm2376 = vcmp.ge.s32.totalorder %v1711, 1
    %vm2377 = vcmp.ge.s32.totalorder %v1712, 1
    %vm2378 = vcmp.ge.s32.totalorder %v1713, 1
    %vm2379 = vcmp.ge.s32.totalorder %v1714, 1
    %vm2380 = vcmp.ge.s32.totalorder %v1715, 1
    %vm2381 = vcmp.ge.s32.totalorder %v1716, 1
    %vm2382 = vcmp.ge.s32.totalorder %v1717, 1
    %vm2383 = vcmp.ge.s32.totalorder %v1718, 1
    %vm2384 = vcmp.ge.s32.totalorder %v1719, 1
    %vm2385 = vcmp.ge.s32.totalorder %v1720, 1
    %vm2386 = vcmp.ge.s32.totalorder %v1721, 1
    %vm2387 = vcmp.ge.s32.totalorder %v1722, 1
    %vm2388 = vcmp.ge.s32.totalorder %v1723, 1
    %vm2389 = vcmp.ge.s32.totalorder %v1724, 1
    %vm2390 = vcmp.ge.s32.totalorder %v1725, 1
    %vm2391 = vcmp.ge.s32.totalorder %v1726, 1
    %vm2392 = vcmp.ge.s32.totalorder %v1727, 1
    %vm2393 = vcmp.ge.s32.totalorder %v1728, 1
    %vm2394 = vcmp.ge.s32.totalorder %v1729, 1
    %vm2395 = vcmp.ge.s32.totalorder %v1730, 1
    %vm2396 = vcmp.ge.s32.totalorder %v1731, 1
    %vm2397 = vcmp.ge.s32.totalorder %v1732, 1
    %vm2398 = vcmp.ge.s32.totalorder %v1733, 1
    %vm2399 = vcmp.ge.s32.totalorder %v1734, 1
    %vm2400 = vcmp.ge.s32.totalorder %v1735, 1
    %vm2401 = vcmp.ge.s32.totalorder %v1736, 1
    %vm2402 = vcmp.ge.s32.totalorder %v1737, 1
    %vm2403 = vcmp.ge.s32.totalorder %v1738, 1
    %vm2404 = vcmp.ge.s32.totalorder %v1739, 1
    %vm2405 = vcmp.ge.s32.totalorder %v1740, 1
    %vm2406 = vcmp.ge.s32.totalorder %v1741, 1
    %vm2407 = vcmp.ge.s32.totalorder %v1742, 1
    %vm2408 = vcmp.ge.s32.totalorder %v1743, 1
    %vm2409 = vcmp.ge.s32.totalorder %v1744, 1
    %vm2410 = vcmp.ge.s32.totalorder %v1745, 1
    %vm2411 = vcmp.ge.s32.totalorder %v1746, 1
    %vm2412 = vcmp.ge.s32.totalorder %v1747, 1
    %vm2413 = vcmp.ge.s32.totalorder %v1748, 1
    %vm2414 = vcmp.ge.s32.totalorder %v1749, 1
    %vm2415 = vcmp.ge.s32.totalorder %v1750, 1
    %vm2416 = vcmp.ge.s32.totalorder %v1751, 1
    %vm2417 = vcmp.ge.s32.totalorder %v1752, 1
    %vm2418 = vcmp.ge.s32.totalorder %v1753, 1
    %vm2419 = vcmp.ge.s32.totalorder %v1754, 1
    %vm2420 = vcmp.ge.s32.totalorder %v1755, 1
    %vm2421 = vcmp.ge.s32.totalorder %v1756, 1
    %vm2422 = vcmp.ge.s32.totalorder %v1757, 1
    %vm2423 = vcmp.ge.s32.totalorder %v1758, 1
    %vm2424 = vcmp.ge.s32.totalorder %v1759, 1
    %vm2425 = vcmp.ge.s32.totalorder %v1760, 1
    %vm2426 = vcmp.ge.s32.totalorder %v1761, 1
    %vm2427 = vcmp.ge.s32.totalorder %v1762, 1
    %vm2428 = vcmp.ge.s32.totalorder %v1763, 1
    %vm2429 = vcmp.ge.s32.totalorder %v1764, 1
    %vm2430 = vcmp.ge.s32.totalorder %v1765, 1
    %vm2431 = vcmp.ge.s32.totalorder %v1766, 1
    %vm2432 = vcmp.ge.s32.totalorder %v1767, 1
    %vm2433 = vcmp.ge.s32.totalorder %v1768, 1
    %vm2434 = vcmp.ge.s32.totalorder %v1769, 1
    %vm2435 = vcmp.ge.s32.totalorder %v1770, 1
    %vm2436 = vcmp.ge.s32.totalorder %v1771, 1
    %vm2437 = vcmp.ge.s32.totalorder %v1772, 1
    %vm2438 = vcmp.ge.s32.totalorder %v1773, 1
    %vm2439 = vcmp.ge.s32.totalorder %v1774, 1
    %vm2440 = vcmp.ge.s32.totalorder %v1775, 1
    %vm2441 = vcmp.ge.s32.totalorder %v1776, 1
    %vm2442 = vcmp.ge.s32.totalorder %v1777, 1
    %vm2443 = vcmp.ge.s32.totalorder %v1778, 1
    %v2444 = vsel %vm2364, 1, 0
    %v2445 = vsel %vm2365, 1, 0
    %v2446 = vsel %vm2366, 1, 0
    %v2447 = vsel %vm2367, 1, 0
    %v2448 = vsel %vm2368, 1, 0
    %v2449 = vsel %vm2369, 1, 0
    %v2450 = vsel %vm2370, 1, 0
    %v2451 = vsel %vm2371, 1, 0
    %v2452 = vsel %vm2372, 1, 0
    %v2453 = vsel %vm2373, 1, 0
    %v2454 = vsel %vm2374, 1, 0
    %v2455 = vsel %vm2375, 1, 0
    %v2456 = vsel %vm2376, 1, 0
    %v2457 = vsel %vm2377, 1, 0
    %v2458 = vsel %vm2378, 1, 0
    %v2459 = vsel %vm2379, 1, 0
    %v2460 = vsel %vm2380, 1, 0
    %v2461 = vsel %vm2381, 1, 0
    %v2462 = vsel %vm2382, 1, 0
    %v2463 = vsel %vm2383, 1, 0
    %v2464 = vsel %vm2384, 1, 0
    %v2465 = vsel %vm2385, 1, 0
    %v2466 = vsel %vm2386, 1, 0
    %v2467 = vsel %vm2387, 1, 0
    %v2468 = vsel %vm2388, 1, 0
    %v2469 = vsel %vm2389, 1, 0
    %v2470 = vsel %vm2390, 1, 0
    %v2471 = vsel %vm2391, 1, 0
    %v2472 = vsel %vm2392, 1, 0
    %v2473 = vsel %vm2393, 1, 0
    %v2474 = vsel %vm2394, 1, 0
    %v2475 = vsel %vm2395, 1, 0
    %v2476 = vsel %vm2396, 1, 0
    %v2477 = vsel %vm2397, 1, 0
    %v2478 = vsel %vm2398, 1, 0
    %v2479 = vsel %vm2399, 1, 0
    %v2480 = vsel %vm2400, 1, 0
    %v2481 = vsel %vm2401, 1, 0
    %v2482 = vsel %vm2402, 1, 0
    %v2483 = vsel %vm2403, 1, 0
    %v2484 = vsel %vm2404, 1, 0
    %v2485 = vsel %vm2405, 1, 0
    %v2486 = vsel %vm2406, 1, 0
    %v2487 = vsel %vm2407, 1, 0
    %v2488 = vsel %vm2408, 1, 0
    %v2489 = vsel %vm2409, 1, 0
    %v2490 = vsel %vm2410, 1, 0
    %v2491 = vsel %vm2411, 1, 0
    %v2492 = vsel %vm2412, 1, 0
    %v2493 = vsel %vm2413, 1, 0
    %v2494 = vsel %vm2414, 1, 0
    %v2495 = vsel %vm2415, 1, 0
    %v2496 = vsel %vm2416, 1, 0
    %v2497 = vsel %vm2417, 1, 0
    %v2498 = vsel %vm2418, 1, 0
    %v2499 = vsel %vm2419, 1, 0
    %v2500 = vsel %vm2420, 1, 0
    %v2501 = vsel %vm2421, 1, 0
    %v2502 = vsel %vm2422, 1, 0
    %v2503 = vsel %vm2423, 1, 0
    %v2504 = vsel %vm2424, 1, 0
    %v2505 = vsel %vm2425, 1, 0
    %v2506 = vsel %vm2426, 1, 0
    %v2507 = vsel %vm2427, 1, 0
    %v2508 = vsel %vm2428, 1, 0
    %v2509 = vsel %vm2429, 1, 0
    %v2510 = vsel %vm2430, 1, 0
    %v2511 = vsel %vm2431, 1, 0
    %v2512 = vsel %vm2432, 1, 0
    %v2513 = vsel %vm2433, 1, 0
    %v2514 = vsel %vm2434, 1, 0
    %v2515 = vsel %vm2435, 1, 0
    %v2516 = vsel %vm2436, 1, 0
    %v2517 = vsel %vm2437, 1, 0
    %v2518 = vsel %vm2438, 1, 0
    %v2519 = vsel %vm2439, 1, 0
    %v2520 = vsel %vm2440, 1, 0
    %v2521 = vsel %vm2441, 1, 0
    %v2522 = vsel %vm2442, 1, 0
    %v2523 = vsel %vm2443, 1, 0
    %vm2524 = vcmp.eq.s32.totalorder %v2444, 1
    %vm2525 = vcmp.eq.s32.totalorder %v2445, 1
    %vm2526 = vcmp.eq.s32.totalorder %v2446, 1
    %vm2527 = vcmp.eq.s32.totalorder %v2447, 1
    %vm2528 = vcmp.eq.s32.totalorder %v2448, 1
    %vm2529 = vcmp.eq.s32.totalorder %v2449, 1
    %vm2530 = vcmp.eq.s32.totalorder %v2450, 1
    %vm2531 = vcmp.eq.s32.totalorder %v2451, 1
    %vm2532 = vcmp.eq.s32.totalorder %v2452, 1
    %vm2533 = vcmp.eq.s32.totalorder %v2453, 1
    %vm2534 = vcmp.eq.s32.totalorder %v2454, 1
    %vm2535 = vcmp.eq.s32.totalorder %v2455, 1
    %vm2536 = vcmp.eq.s32.totalorder %v2456, 1
    %vm2537 = vcmp.eq.s32.totalorder %v2457, 1
    %vm2538 = vcmp.eq.s32.totalorder %v2458, 1
    %vm2539 = vcmp.eq.s32.totalorder %v2459, 1
    %vm2540 = vcmp.eq.s32.totalorder %v2460, 1
    %vm2541 = vcmp.eq.s32.totalorder %v2461, 1
    %vm2542 = vcmp.eq.s32.totalorder %v2462, 1
    %vm2543 = vcmp.eq.s32.totalorder %v2463, 1
    %vm2544 = vcmp.eq.s32.totalorder %v2464, 1
    %vm2545 = vcmp.eq.s32.totalorder %v2465, 1
    %vm2546 = vcmp.eq.s32.totalorder %v2466, 1
    %vm2547 = vcmp.eq.s32.totalorder %v2467, 1
    %vm2548 = vcmp.eq.s32.totalorder %v2468, 1
    %vm2549 = vcmp.eq.s32.totalorder %v2469, 1
    %vm2550 = vcmp.eq.s32.totalorder %v2470, 1
    %vm2551 = vcmp.eq.s32.totalorder %v2471, 1
    %vm2552 = vcmp.eq.s32.totalorder %v2472, 1
    %vm2553 = vcmp.eq.s32.totalorder %v2473, 1
    %vm2554 = vcmp.eq.s32.totalorder %v2474, 1
    %vm2555 = vcmp.eq.s32.totalorder %v2475, 1
    %vm2556 = vcmp.eq.s32.totalorder %v2476, 1
    %vm2557 = vcmp.eq.s32.totalorder %v2477, 1
    %vm2558 = vcmp.eq.s32.totalorder %v2478, 1
    %vm2559 = vcmp.eq.s32.totalorder %v2479, 1
    %vm2560 = vcmp.eq.s32.totalorder %v2480, 1
    %vm2561 = vcmp.eq.s32.totalorder %v2481, 1
    %vm2562 = vcmp.eq.s32.totalorder %v2482, 1
    %vm2563 = vcmp.eq.s32.totalorder %v2483, 1
    %vm2564 = vcmp.eq.s32.totalorder %v2484, 1
    %vm2565 = vcmp.eq.s32.totalorder %v2485, 1
    %vm2566 = vcmp.eq.s32.totalorder %v2486, 1
    %vm2567 = vcmp.eq.s32.totalorder %v2487, 1
    %vm2568 = vcmp.eq.s32.totalorder %v2488, 1
    %vm2569 = vcmp.eq.s32.totalorder %v2489, 1
    %vm2570 = vcmp.eq.s32.totalorder %v2490, 1
    %vm2571 = vcmp.eq.s32.totalorder %v2491, 1
    %vm2572 = vcmp.eq.s32.totalorder %v2492, 1
    %vm2573 = vcmp.eq.s32.totalorder %v2493, 1
    %vm2574 = vcmp.eq.s32.totalorder %v2494, 1
    %vm2575 = vcmp.eq.s32.totalorder %v2495, 1
    %vm2576 = vcmp.eq.s32.totalorder %v2496, 1
    %vm2577 = vcmp.eq.s32.totalorder %v2497, 1
    %vm2578 = vcmp.eq.s32.totalorder %v2498, 1
    %vm2579 = vcmp.eq.s32.totalorder %v2499, 1
    %vm2580 = vcmp.eq.s32.totalorder %v2500, 1
    %vm2581 = vcmp.eq.s32.totalorder %v2501, 1
    %vm2582 = vcmp.eq.s32.totalorder %v2502, 1
    %vm2583 = vcmp.eq.s32.totalorder %v2503, 1
    %vm2584 = vcmp.eq.s32.totalorder %v2504, 1
    %vm2585 = vcmp.eq.s32.totalorder %v2505, 1
    %vm2586 = vcmp.eq.s32.totalorder %v2506, 1
    %vm2587 = vcmp.eq.s32.totalorder %v2507, 1
    %vm2588 = vcmp.eq.s32.totalorder %v2508, 1
    %vm2589 = vcmp.eq.s32.totalorder %v2509, 1
    %vm2590 = vcmp.eq.s32.totalorder %v2510, 1
    %vm2591 = vcmp.eq.s32.totalorder %v2511, 1
    %vm2592 = vcmp.eq.s32.totalorder %v2512, 1
    %vm2593 = vcmp.eq.s32.totalorder %v2513, 1
    %vm2594 = vcmp.eq.s32.totalorder %v2514, 1
    %vm2595 = vcmp.eq.s32.totalorder %v2515, 1
    %vm2596 = vcmp.eq.s32.totalorder %v2516, 1
    %vm2597 = vcmp.eq.s32.totalorder %v2517, 1
    %vm2598 = vcmp.eq.s32.totalorder %v2518, 1
    %vm2599 = vcmp.eq.s32.totalorder %v2519, 1
    %vm2600 = vcmp.eq.s32.totalorder %v2520, 1
    %vm2601 = vcmp.eq.s32.totalorder %v2521, 1
    %vm2602 = vcmp.eq.s32.totalorder %v2522, 1
    %vm2603 = vcmp.eq.s32.totalorder %v2523, 1
    %vm2604 = vcmask 1040384
    %v2605 = vrot.slane 0.0, 7
    %v2606 = vsel %vm2604, %v2605, %v2605
    %v2607 = vrot.slane %v674, 7
    %v2608 = vsel %vm2604, %v2605, %v2607
    %v2609 = vrot.slane %v675, 7
    %v2610 = vsel %vm2604, %v2607, %v2609
    %v2611 = vrot.slane %v676, 7
    %v2612 = vsel %vm2604, %v2609, %v2611
    %v2613 = vrot.slane %v677, 7
    %v2614 = vsel %vm2604, %v2611, %v2613
    %v2615 = vrot.slane %v678, 7
    %v2616 = vsel %vm2604, %v2613, %v2615
    %v2617 = vrot.slane %v679, 7
    %v2618 = vsel %vm2604, %v2615, %v2617
    %v2619 = vrot.slane %v680, 7
    %v2620 = vsel %vm2604, %v2617, %v2619
    %v2621 = vrot.slane %v681, 7
    %v2622 = vsel %vm2604, %v2619, %v2621
    %v2623 = vrot.slane %v682, 7
    %v2624 = vsel %vm2604, %v2621, %v2623
    %v2625 = vrot.slane %v683, 7
    %v2626 = vsel %vm2604, %v2623, %v2625
    %v2627 = vrot.slane %v684, 7
    %v2628 = vsel %vm2604, %v2625, %v2627
    %v2629 = vrot.slane %v685, 7
    %v2630 = vsel %vm2604, %v2627, %v2629
    %v2631 = vrot.slane %v686, 7
    %v2632 = vsel %vm2604, %v2629, %v2631
    %v2633 = vrot.slane %v687, 7
    %v2634 = vsel %vm2604, %v2631, %v2633
    %v2635 = vrot.slane %v688, 7
    %v2636 = vsel %vm2604, %v2633, %v2635
    %v2637 = vrot.slane %v689, 7
    %v2638 = vsel %vm2604, %v2635, %v2637
    %v2639 = vrot.slane %v690, 7
    %v2640 = vsel %vm2604, %v2637, %v2639
    %v2641 = vrot.slane %v691, 7
    %v2642 = vsel %vm2604, %v2639, %v2641
    %v2643 = vrot.slane %v692, 7
    %v2644 = vsel %vm2604, %v2641, %v2643
    %v2645 = vrot.slane %v693, 7
    %v2646 = vsel %vm2604, %v2643, %v2645
    %v2647 = vrot.slane %v694, 7
    %v2648 = vsel %vm2604, %v2645, %v2647
    %v2649 = vrot.slane %v695, 7
    %v2650 = vsel %vm2604, %v2647, %v2649
    %v2651 = vrot.slane %v696, 7
    %v2652 = vsel %vm2604, %v2649, %v2651
    %v2653 = vrot.slane %v697, 7
    %v2654 = vsel %vm2604, %v2651, %v2653
    %v2655 = vrot.slane %v698, 7
    %v2656 = vsel %vm2604, %v2653, %v2655
    %v2657 = vrot.slane %v699, 7
    %v2658 = vsel %vm2604, %v2655, %v2657
    %v2659 = vrot.slane %v700, 7
    %v2660 = vsel %vm2604, %v2657, %v2659
    %v2661 = vrot.slane %v701, 7
    %v2662 = vsel %vm2604, %v2659, %v2661
    %v2663 = vrot.slane %v702, 7
    %v2664 = vsel %vm2604, %v2661, %v2663
    %v2665 = vrot.slane %v703, 7
    %v2666 = vsel %vm2604, %v2663, %v2665
    %v2667 = vrot.slane %v704, 7
    %v2668 = vsel %vm2604, %v2665, %v2667
    %v2669 = vrot.slane %v705, 7
    %v2670 = vsel %vm2604, %v2667, %v2669
    %v2671 = vsel %vm2604, %v2669, %v2605
    %v2672 = vrot.slane %v706, 7
    %v2673 = vsel %vm2604, %v2605, %v2672
    %v2674 = vrot.slane %v707, 7
    %v2675 = vsel %vm2604, %v2672, %v2674
    %v2676 = vrot.slane %v708, 7
    %v2677 = vsel %vm2604, %v2674, %v2676
    %v2678 = vrot.slane %v709, 7
    %v2679 = vsel %vm2604, %v2676, %v2678
    %v2680 = vrot.slane %v710, 7
    %v2681 = vsel %vm2604, %v2678, %v2680
    %v2682 = vrot.slane %v711, 7
    %v2683 = vsel %vm2604, %v2680, %v2682
    %v2684 = vrot.slane %v712, 7
    %v2685 = vsel %vm2604, %v2682, %v2684
    %v2686 = vrot.slane %v713, 7
    %v2687 = vsel %vm2604, %v2684, %v2686
    %v2688 = vrot.slane %v714, 7
    %v2689 = vsel %vm2604, %v2686, %v2688
    %v2690 = vrot.slane %v715, 7
    %v2691 = vsel %vm2604, %v2688, %v2690
    %v2692 = vrot.slane %v716, 7
    %v2693 = vsel %vm2604, %v2690, %v2692
    %v2694 = vrot.slane %v717, 7
    %v2695 = vsel %vm2604, %v2692, %v2694
    %v2696 = vrot.slane %v718, 7
    %v2697 = vsel %vm2604, %v2694, %v2696
    %v2698 = vrot.slane %v719, 7
    %v2699 = vsel %vm2604, %v2696, %v2698
    %v2700 = vrot.slane %v720, 7
    %v2701 = vsel %vm2604, %v2698, %v2700
    %v2702 = vrot.slane %v721, 7
    %v2703 = vsel %vm2604, %v2700, %v2702
    %v2704 = vrot.slane %v722, 7
    %v2705 = vsel %vm2604, %v2702, %v2704
    %v2706 = vrot.slane %v723, 7
    %v2707 = vsel %vm2604, %v2704, %v2706
    %v2708 = vrot.slane %v724, 7
    %v2709 = vsel %vm2604, %v2706, %v2708
    %v2710 = vrot.slane %v725, 7
    %v2711 = vsel %vm2604, %v2708, %v2710
    %v2712 = vrot.slane %v726, 7
    %v2713 = vsel %vm2604, %v2710, %v2712
    %v2714 = vrot.slane %v727, 7
    %v2715 = vsel %vm2604, %v2712, %v2714
    %v2716 = vrot.slane %v728, 7
    %v2717 = vsel %vm2604, %v2714, %v2716
    %v2718 = vrot.slane %v729, 7
    %v2719 = vsel %vm2604, %v2716, %v2718
    %v2720 = vrot.slane %v730, 7
    %v2721 = vsel %vm2604, %v2718, %v2720
    %v2722 = vrot.slane %v731, 7
    %v2723 = vsel %vm2604, %v2720, %v2722
    %v2724 = vrot.slane %v732, 7
    %v2725 = vsel %vm2604, %v2722, %v2724
    %v2726 = vrot.slane %v733, 7
    %v2727 = vsel %vm2604, %v2724, %v2726
    %v2728 = vrot.slane %v734, 7
    %v2729 = vsel %vm2604, %v2726, %v2728
    %v2730 = vrot.slane %v735, 7
    %v2731 = vsel %vm2604, %v2728, %v2730
    %v2732 = vrot.slane %v736, 7
    %v2733 = vsel %vm2604, %v2730, %v2732
    %v2734 = vrot.slane %v737, 7
    %v2735 = vsel %vm2604, %v2732, %v2734
    %v2736 = vsel %vm2604, %v2734, %v2605
    %v2804 = vsel %vm2524, %v2606, 0.0
    %v2805 = vsel %vm2525, %v2606, 0.0
    %v2806 = vsel %vm2526, %v2606, 0.0
    %v2807 = vsel %vm2527, %v2606, 0.0
    %v2808 = vsel %vm2528, %v2608, 0.0
    %v2809 = vsel %vm2529, %v2610, 0.0
    %v2810 = vsel %vm2530, %v2612, 0.0
    %v2811 = vsel %vm2531, %v2614, 0.0
    %v2812 = vsel %vm2532, %v2616, 0.0
    %v2813 = vsel %vm2533, %v2618, 0.0
    %v2814 = vsel %vm2534, %v2620, 0.0
    %v2815 = vsel %vm2535, %v2622, 0.0
    %v2816 = vsel %vm2536, %v2624, 0.0
    %v2817 = vsel %vm2537, %v2626, 0.0
    %v2818 = vsel %vm2538, %v2628, 0.0
    %v2819 = vsel %vm2539, %v2630, 0.0
    %v2820 = vsel %vm2540, %v2632, 0.0
    %v2821 = vsel %vm2541, %v2634, 0.0
    %v2822 = vsel %vm2542, %v2636, 0.0
    %v2823 = vsel %vm2543, %v2638, 0.0
    %v2824 = vsel %vm2544, %v2640, 0.0
    %v2825 = vsel %vm2545, %v2642, 0.0
    %v2826 = vsel %vm2546, %v2644, 0.0
    %v2827 = vsel %vm2547, %v2646, 0.0
    %v2828 = vsel %vm2548, %v2648, 0.0
    %v2829 = vsel %vm2549, %v2650, 0.0
    %v2830 = vsel %vm2550, %v2652, 0.0
    %v2831 = vsel %vm2551, %v2654, 0.0
    %v2832 = vsel %vm2552, %v2656, 0.0
    %v2833 = vsel %vm2553, %v2658, 0.0
    %v2834 = vsel %vm2554, %v2660, 0.0
    %v2835 = vsel %vm2555, %v2662, 0.0
    %v2836 = vsel %vm2556, %v2664, 0.0
    %v2837 = vsel %vm2557, %v2666, 0.0
    %v2838 = vsel %vm2558, %v2668, 0.0
    %v2839 = vsel %vm2559, %v2670, 0.0
    %v2840 = vsel %vm2560, %v2671, 0.0
    %v2841 = vsel %vm2561, %v2606, 0.0
    %v2842 = vsel %vm2562, %v2606, 0.0
    %v2843 = vsel %vm2563, %v2606, 0.0
    %v2844 = vsel %vm2564, %v2606, 0.0
    %v2845 = vsel %vm2565, %v2606, 0.0
    %v2846 = vsel %vm2566, %v2606, 0.0
    %v2847 = vsel %vm2567, %v2606, 0.0
    %v2848 = vsel %vm2568, %v2673, 0.0
    %v2849 = vsel %vm2569, %v2675, 0.0
    %v2850 = vsel %vm2570, %v2677, 0.0
    %v2851 = vsel %vm2571, %v2679, 0.0
    %v2852 = vsel %vm2572, %v2681, 0.0
    %v2853 = vsel %vm2573, %v2683, 0.0
    %v2854 = vsel %vm2574, %v2685, 0.0
    %v2855 = vsel %vm2575, %v2687, 0.0
    %v2856 = vsel %vm2576, %v2689, 0.0
    %v2857 = vsel %vm2577, %v2691, 0.0
    %v2858 = vsel %vm2578, %v2693, 0.0
    %v2859 = vsel %vm2579, %v2695, 0.0
    %v2860 = vsel %vm2580, %v2697, 0.0
    %v2861 = vsel %vm2581, %v2699, 0.0
    %v2862 = vsel %vm2582, %v2701, 0.0
    %v2863 = vsel %vm2583, %v2703, 0.0
    %v2864 = vsel %vm2584, %v2705, 0.0
    %v2865 = vsel %vm2585, %v2707, 0.0
    %v2866 = vsel %vm2586, %v2709, 0.0
    %v2867 = vsel %vm2587, %v2711, 0.0
    %v2868 = vsel %vm2588, %v2713, 0.0
    %v2869 = vsel %vm2589, %v2715, 0.0
    %v2870 = vsel %vm2590, %v2717, 0.0
    %v2871 = vsel %vm2591, %v2719, 0.0
    %v2872 = vsel %vm2592, %v2721, 0.0
    %v2873 = vsel %vm2593, %v2723, 0.0
    %v2874 = vsel %vm2594, %v2725, 0.0
    %v2875 = vsel %vm2595, %v2727, 0.0
    %v2876 = vsel %vm2596, %v2729, 0.0
    %v2877 = vsel %vm2597, %v2731, 0.0
    %v2878 = vsel %vm2598, %v2733, 0.0
    %v2879 = vsel %vm2599, %v2735, 0.0
    %v2880 = vsel %vm2600, %v2736, 0.0
    %v2881 = vsel %vm2601, %v2606, 0.0
    %v2882 = vsel %vm2602, %v2606, 0.0
    %v2883 = vsel %vm2603, %v2606, 0.0
    %vm2884 = vcmp.lt.s32.totalorder %v1699, 15
    %vm2885 = vcmp.lt.s32.totalorder %v1700, 15
    %vm2886 = vcmp.lt.s32.totalorder %v1701, 15
    %vm2887 = vcmp.lt.s32.totalorder %v1702, 15
    %vm2888 = vcmp.lt.s32.totalorder %v1703, 15
    %vm2889 = vcmp.lt.s32.totalorder %v1704, 15
    %vm2890 = vcmp.lt.s32.totalorder %v1705, 15
    %vm2891 = vcmp.lt.s32.totalorder %v1706, 15
    %vm2892 = vcmp.lt.s32.totalorder %v1707, 15
    %vm2893 = vcmp.lt.s32.totalorder %v1708, 15
    %vm2894 = vcmp.lt.s32.totalorder %v1709, 15
    %vm2895 = vcmp.lt.s32.totalorder %v1710, 15
    %vm2896 = vcmp.lt.s32.totalorder %v1711, 15
    %vm2897 = vcmp.lt.s32.totalorder %v1712, 15
    %vm2898 = vcmp.lt.s32.totalorder %v1713, 15
    %vm2899 = vcmp.lt.s32.totalorder %v1714, 15
    %vm2900 = vcmp.lt.s32.totalorder %v1715, 15
    %vm2901 = vcmp.lt.s32.totalorder %v1716, 15
    %vm2902 = vcmp.lt.s32.totalorder %v1717, 15
    %vm2903 = vcmp.lt.s32.totalorder %v1718, 15
    %vm2904 = vcmp.lt.s32.totalorder %v1719, 15
    %vm2905 = vcmp.lt.s32.totalorder %v1720, 15
    %vm2906 = vcmp.lt.s32.totalorder %v1721, 15
    %vm2907 = vcmp.lt.s32.totalorder %v1722, 15
    %vm2908 = vcmp.lt.s32.totalorder %v1723, 15
    %vm2909 = vcmp.lt.s32.totalorder %v1724, 15
    %vm2910 = vcmp.lt.s32.totalorder %v1725, 15
    %vm2911 = vcmp.lt.s32.totalorder %v1726, 15
    %vm2912 = vcmp.lt.s32.totalorder %v1727, 15
    %vm2913 = vcmp.lt.s32.totalorder %v1728, 15
    %vm2914 = vcmp.lt.s32.totalorder %v1729, 15
    %vm2915 = vcmp.lt.s32.totalorder %v1730, 15
    %vm2916 = vcmp.lt.s32.totalorder %v1731, 15
    %vm2917 = vcmp.lt.s32.totalorder %v1732, 15
    %vm2918 = vcmp.lt.s32.totalorder %v1733, 15
    %vm2919 = vcmp.lt.s32.totalorder %v1734, 15
    %vm2920 = vcmp.lt.s32.totalorder %v1735, 15
    %vm2921 = vcmp.lt.s32.totalorder %v1736, 15
    %vm2922 = vcmp.lt.s32.totalorder %v1737, 15
    %vm2923 = vcmp.lt.s32.totalorder %v1738, 15
    %vm2924 = vcmp.lt.s32.totalorder %v1739, 15
    %vm2925 = vcmp.lt.s32.totalorder %v1740, 15
    %vm2926 = vcmp.lt.s32.totalorder %v1741, 15
    %vm2927 = vcmp.lt.s32.totalorder %v1742, 15
    %vm2928 = vcmp.lt.s32.totalorder %v1743, 15
    %vm2929 = vcmp.lt.s32.totalorder %v1744, 15
    %vm2930 = vcmp.lt.s32.totalorder %v1745, 15
    %vm2931 = vcmp.lt.s32.totalorder %v1746, 15
    %vm2932 = vcmp.lt.s32.totalorder %v1747, 15
    %vm2933 = vcmp.lt.s32.totalorder %v1748, 15
    %vm2934 = vcmp.lt.s32.totalorder %v1749, 15
    %vm2935 = vcmp.lt.s32.totalorder %v1750, 15
    %vm2936 = vcmp.lt.s32.totalorder %v1751, 15
    %vm2937 = vcmp.lt.s32.totalorder %v1752, 15
    %vm2938 = vcmp.lt.s32.totalorder %v1753, 15
    %vm2939 = vcmp.lt.s32.totalorder %v1754, 15
    %vm2940 = vcmp.lt.s32.totalorder %v1755, 15
    %vm2941 = vcmp.lt.s32.totalorder %v1756, 15
    %vm2942 = vcmp.lt.s32.totalorder %v1757, 15
    %vm2943 = vcmp.lt.s32.totalorder %v1758, 15
    %vm2944 = vcmp.lt.s32.totalorder %v1759, 15
    %vm2945 = vcmp.lt.s32.totalorder %v1760, 15
    %vm2946 = vcmp.lt.s32.totalorder %v1761, 15
    %vm2947 = vcmp.lt.s32.totalorder %v1762, 15
    %vm2948 = vcmp.lt.s32.totalorder %v1763, 15
    %vm2949 = vcmp.lt.s32.totalorder %v1764, 15
    %vm2950 = vcmp.lt.s32.totalorder %v1765, 15
    %vm2951 = vcmp.lt.s32.totalorder %v1766, 15
    %vm2952 = vcmp.lt.s32.totalorder %v1767, 15
    %vm2953 = vcmp.lt.s32.totalorder %v1768, 15
    %vm2954 = vcmp.lt.s32.totalorder %v1769, 15
    %vm2955 = vcmp.lt.s32.totalorder %v1770, 15
    %vm2956 = vcmp.lt.s32.totalorder %v1771, 15
    %vm2957 = vcmp.lt.s32.totalorder %v1772, 15
    %vm2958 = vcmp.lt.s32.totalorder %v1773, 15
    %vm2959 = vcmp.lt.s32.totalorder %v1774, 15
    %vm2960 = vcmp.lt.s32.totalorder %v1775, 15
    %vm2961 = vcmp.lt.s32.totalorder %v1776, 15
    %vm2962 = vcmp.lt.s32.totalorder %v1777, 15
    %vm2963 = vcmp.lt.s32.totalorder %v1778, 15
    %v2964 = vsel %vm2884, 1, 0
    %v2965 = vsel %vm2885, 1, 0
    %v2966 = vsel %vm2886, 1, 0
    %v2967 = vsel %vm2887, 1, 0
    %v2968 = vsel %vm2888, 1, 0
    %v2969 = vsel %vm2889, 1, 0
    %v2970 = vsel %vm2890, 1, 0
    %v2971 = vsel %vm2891, 1, 0
    %v2972 = vsel %vm2892, 1, 0
    %v2973 = vsel %vm2893, 1, 0
    %v2974 = vsel %vm2894, 1, 0
    %v2975 = vsel %vm2895, 1, 0
    %v2976 = vsel %vm2896, 1, 0
    %v2977 = vsel %vm2897, 1, 0
    %v2978 = vsel %vm2898, 1, 0
    %v2979 = vsel %vm2899, 1, 0
    %v2980 = vsel %vm2900, 1, 0
    %v2981 = vsel %vm2901, 1, 0
    %v2982 = vsel %vm2902, 1, 0
    %v2983 = vsel %vm2903, 1, 0
    %v2984 = vsel %vm2904, 1, 0
    %v2985 = vsel %vm2905, 1, 0
    %v2986 = vsel %vm2906, 1, 0
    %v2987 = vsel %vm2907, 1, 0
    %v2988 = vsel %vm2908, 1, 0
    %v2989 = vsel %vm2909, 1, 0
    %v2990 = vsel %vm2910, 1, 0
    %v2991 = vsel %vm2911, 1, 0
    %v2992 = vsel %vm2912, 1, 0
    %v2993 = vsel %vm2913, 1, 0
    %v2994 = vsel %vm2914, 1, 0
    %v2995 = vsel %vm2915, 1, 0
    %v2996 = vsel %vm2916, 1, 0
    %v2997 = vsel %vm2917, 1, 0
    %v2998 = vsel %vm2918, 1, 0
    %v2999 = vsel %vm2919, 1, 0
    %v3000 = vsel %vm2920, 1, 0
    %v3001 = vsel %vm2921, 1, 0
    %v3002 = vsel %vm2922, 1, 0
    %v3003 = vsel %vm2923, 1, 0
    %v3004 = vsel %vm2924, 1, 0
    %v3005 = vsel %vm2925, 1, 0
    %v3006 = vsel %vm2926, 1, 0
    %v3007 = vsel %vm2927, 1, 0
    %v3008 = vsel %vm2928, 1, 0
    %v3009 = vsel %vm2929, 1, 0
    %v3010 = vsel %vm2930, 1, 0
    %v3011 = vsel %vm2931, 1, 0
    %v3012 = vsel %vm2932, 1, 0
    %v3013 = vsel %vm2933, 1, 0
    %v3014 = vsel %vm2934, 1, 0
    %v3015 = vsel %vm2935, 1, 0
    %v3016 = vsel %vm2936, 1, 0
    %v3017 = vsel %vm2937, 1, 0
    %v3018 = vsel %vm2938, 1, 0
    %v3019 = vsel %vm2939, 1, 0
    %v3020 = vsel %vm2940, 1, 0
    %v3021 = vsel %vm2941, 1, 0
    %v3022 = vsel %vm2942, 1, 0
    %v3023 = vsel %vm2943, 1, 0
    %v3024 = vsel %vm2944, 1, 0
    %v3025 = vsel %vm2945, 1, 0
    %v3026 = vsel %vm2946, 1, 0
    %v3027 = vsel %vm2947, 1, 0
    %v3028 = vsel %vm2948, 1, 0
    %v3029 = vsel %vm2949, 1, 0
    %v3030 = vsel %vm2950, 1, 0
    %v3031 = vsel %vm2951, 1, 0
    %v3032 = vsel %vm2952, 1, 0
    %v3033 = vsel %vm2953, 1, 0
    %v3034 = vsel %vm2954, 1, 0
    %v3035 = vsel %vm2955, 1, 0
    %v3036 = vsel %vm2956, 1, 0
    %v3037 = vsel %vm2957, 1, 0
    %v3038 = vsel %vm2958, 1, 0
    %v3039 = vsel %vm2959, 1, 0
    %v3040 = vsel %vm2960, 1, 0
    %v3041 = vsel %vm2961, 1, 0
    %v3042 = vsel %vm2962, 1, 0
    %v3043 = vsel %vm2963, 1, 0
    %vm3044 = vcmp.eq.s32.totalorder %v2964, 1
    %vm3045 = vcmp.eq.s32.totalorder %v2965, 1
    %vm3046 = vcmp.eq.s32.totalorder %v2966, 1
    %vm3047 = vcmp.eq.s32.totalorder %v2967, 1
    %vm3048 = vcmp.eq.s32.totalorder %v2968, 1
    %vm3049 = vcmp.eq.s32.totalorder %v2969, 1
    %vm3050 = vcmp.eq.s32.totalorder %v2970, 1
    %vm3051 = vcmp.eq.s32.totalorder %v2971, 1
    %vm3052 = vcmp.eq.s32.totalorder %v2972, 1
    %vm3053 = vcmp.eq.s32.totalorder %v2973, 1
    %vm3054 = vcmp.eq.s32.totalorder %v2974, 1
    %vm3055 = vcmp.eq.s32.totalorder %v2975, 1
    %vm3056 = vcmp.eq.s32.totalorder %v2976, 1
    %vm3057 = vcmp.eq.s32.totalorder %v2977, 1
    %vm3058 = vcmp.eq.s32.totalorder %v2978, 1
    %vm3059 = vcmp.eq.s32.totalorder %v2979, 1
    %vm3060 = vcmp.eq.s32.totalorder %v2980, 1
    %vm3061 = vcmp.eq.s32.totalorder %v2981, 1
    %vm3062 = vcmp.eq.s32.totalorder %v2982, 1
    %vm3063 = vcmp.eq.s32.totalorder %v2983, 1
    %vm3064 = vcmp.eq.s32.totalorder %v2984, 1
    %vm3065 = vcmp.eq.s32.totalorder %v2985, 1
    %vm3066 = vcmp.eq.s32.totalorder %v2986, 1
    %vm3067 = vcmp.eq.s32.totalorder %v2987, 1
    %vm3068 = vcmp.eq.s32.totalorder %v2988, 1
    %vm3069 = vcmp.eq.s32.totalorder %v2989, 1
    %vm3070 = vcmp.eq.s32.totalorder %v2990, 1
    %vm3071 = vcmp.eq.s32.totalorder %v2991, 1
    %vm3072 = vcmp.eq.s32.totalorder %v2992, 1
    %vm3073 = vcmp.eq.s32.totalorder %v2993, 1
    %vm3074 = vcmp.eq.s32.totalorder %v2994, 1
    %vm3075 = vcmp.eq.s32.totalorder %v2995, 1
    %vm3076 = vcmp.eq.s32.totalorder %v2996, 1
    %vm3077 = vcmp.eq.s32.totalorder %v2997, 1
    %vm3078 = vcmp.eq.s32.totalorder %v2998, 1
    %vm3079 = vcmp.eq.s32.totalorder %v2999, 1
    %vm3080 = vcmp.eq.s32.totalorder %v3000, 1
    %vm3081 = vcmp.eq.s32.totalorder %v3001, 1
    %vm3082 = vcmp.eq.s32.totalorder %v3002, 1
    %vm3083 = vcmp.eq.s32.totalorder %v3003, 1
    %vm3084 = vcmp.eq.s32.totalorder %v3004, 1
    %vm3085 = vcmp.eq.s32.totalorder %v3005, 1
    %vm3086 = vcmp.eq.s32.totalorder %v3006, 1
    %vm3087 = vcmp.eq.s32.totalorder %v3007, 1
    %vm3088 = vcmp.eq.s32.totalorder %v3008, 1
    %vm3089 = vcmp.eq.s32.totalorder %v3009, 1
    %vm3090 = vcmp.eq.s32.totalorder %v3010, 1
    %vm3091 = vcmp.eq.s32.totalorder %v3011, 1
    %vm3092 = vcmp.eq.s32.totalorder %v3012, 1
    %vm3093 = vcmp.eq.s32.totalorder %v3013, 1
    %vm3094 = vcmp.eq.s32.totalorder %v3014, 1
    %vm3095 = vcmp.eq.s32.totalorder %v3015, 1
    %vm3096 = vcmp.eq.s32.totalorder %v3016, 1
    %vm3097 = vcmp.eq.s32.totalorder %v3017, 1
    %vm3098 = vcmp.eq.s32.totalorder %v3018, 1
    %vm3099 = vcmp.eq.s32.totalorder %v3019, 1
    %vm3100 = vcmp.eq.s32.totalorder %v3020, 1
    %vm3101 = vcmp.eq.s32.totalorder %v3021, 1
    %vm3102 = vcmp.eq.s32.totalorder %v3022, 1
    %vm3103 = vcmp.eq.s32.totalorder %v3023, 1
    %vm3104 = vcmp.eq.s32.totalorder %v3024, 1
    %vm3105 = vcmp.eq.s32.totalorder %v3025, 1
    %vm3106 = vcmp.eq.s32.totalorder %v3026, 1
    %vm3107 = vcmp.eq.s32.totalorder %v3027, 1
    %vm3108 = vcmp.eq.s32.totalorder %v3028, 1
    %vm3109 = vcmp.eq.s32.totalorder %v3029, 1
    %vm3110 = vcmp.eq.s32.totalorder %v3030, 1
    %vm3111 = vcmp.eq.s32.totalorder %v3031, 1
    %vm3112 = vcmp.eq.s32.totalorder %v3032, 1
    %vm3113 = vcmp.eq.s32.totalorder %v3033, 1
    %vm3114 = vcmp.eq.s32.totalorder %v3034, 1
    %vm3115 = vcmp.eq.s32.totalorder %v3035, 1
    %vm3116 = vcmp.eq.s32.totalorder %v3036, 1
    %vm3117 = vcmp.eq.s32.totalorder %v3037, 1
    %vm3118 = vcmp.eq.s32.totalorder %v3038, 1
    %vm3119 = vcmp.eq.s32.totalorder %v3039, 1
    %vm3120 = vcmp.eq.s32.totalorder %v3040, 1
    %vm3121 = vcmp.eq.s32.totalorder %v3041, 1
    %vm3122 = vcmp.eq.s32.totalorder %v3042, 1
    %vm3123 = vcmp.eq.s32.totalorder %v3043, 1
    %vm3124 = vcmask 1046528
    %v3125 = vrot.slane 0.0, 1
    %v3126 = vsel %vm3124, %v3125, %v3125
    %v3127 = vrot.slane %v674, 1
    %v3128 = vsel %vm3124, %v3125, %v3127
    %v3129 = vrot.slane %v675, 1
    %v3130 = vsel %vm3124, %v3127, %v3129
    %v3131 = vrot.slane %v676, 1
    %v3132 = vsel %vm3124, %v3129, %v3131
    %v3133 = vrot.slane %v677, 1
    %v3134 = vsel %vm3124, %v3131, %v3133
    %v3135 = vrot.slane %v678, 1
    %v3136 = vsel %vm3124, %v3133, %v3135
    %v3137 = vrot.slane %v679, 1
    %v3138 = vsel %vm3124, %v3135, %v3137
    %v3139 = vrot.slane %v680, 1
    %v3140 = vsel %vm3124, %v3137, %v3139
    %v3141 = vrot.slane %v681, 1
    %v3142 = vsel %vm3124, %v3139, %v3141
    %v3143 = vrot.slane %v682, 1
    %v3144 = vsel %vm3124, %v3141, %v3143
    %v3145 = vrot.slane %v683, 1
    %v3146 = vsel %vm3124, %v3143, %v3145
    %v3147 = vrot.slane %v684, 1
    %v3148 = vsel %vm3124, %v3145, %v3147
    %v3149 = vrot.slane %v685, 1
    %v3150 = vsel %vm3124, %v3147, %v3149
    %v3151 = vrot.slane %v686, 1
    %v3152 = vsel %vm3124, %v3149, %v3151
    %v3153 = vrot.slane %v687, 1
    %v3154 = vsel %vm3124, %v3151, %v3153
    %v3155 = vrot.slane %v688, 1
    %v3156 = vsel %vm3124, %v3153, %v3155
    %v3157 = vrot.slane %v689, 1
    %v3158 = vsel %vm3124, %v3155, %v3157
    %v3159 = vrot.slane %v690, 1
    %v3160 = vsel %vm3124, %v3157, %v3159
    %v3161 = vrot.slane %v691, 1
    %v3162 = vsel %vm3124, %v3159, %v3161
    %v3163 = vrot.slane %v692, 1
    %v3164 = vsel %vm3124, %v3161, %v3163
    %v3165 = vrot.slane %v693, 1
    %v3166 = vsel %vm3124, %v3163, %v3165
    %v3167 = vrot.slane %v694, 1
    %v3168 = vsel %vm3124, %v3165, %v3167
    %v3169 = vrot.slane %v695, 1
    %v3170 = vsel %vm3124, %v3167, %v3169
    %v3171 = vrot.slane %v696, 1
    %v3172 = vsel %vm3124, %v3169, %v3171
    %v3173 = vrot.slane %v697, 1
    %v3174 = vsel %vm3124, %v3171, %v3173
    %v3175 = vrot.slane %v698, 1
    %v3176 = vsel %vm3124, %v3173, %v3175
    %v3177 = vrot.slane %v699, 1
    %v3178 = vsel %vm3124, %v3175, %v3177
    %v3179 = vrot.slane %v700, 1
    %v3180 = vsel %vm3124, %v3177, %v3179
    %v3181 = vrot.slane %v701, 1
    %v3182 = vsel %vm3124, %v3179, %v3181
    %v3183 = vrot.slane %v702, 1
    %v3184 = vsel %vm3124, %v3181, %v3183
    %v3185 = vrot.slane %v703, 1
    %v3186 = vsel %vm3124, %v3183, %v3185
    %v3187 = vrot.slane %v704, 1
    %v3188 = vsel %vm3124, %v3185, %v3187
    %v3189 = vrot.slane %v705, 1
    %v3190 = vsel %vm3124, %v3187, %v3189
    %v3191 = vsel %vm3124, %v3189, %v3125
    %v3192 = vrot.slane %v706, 1
    %v3193 = vsel %vm3124, %v3125, %v3192
    %v3194 = vrot.slane %v707, 1
    %v3195 = vsel %vm3124, %v3192, %v3194
    %v3196 = vrot.slane %v708, 1
    %v3197 = vsel %vm3124, %v3194, %v3196
    %v3198 = vrot.slane %v709, 1
    %v3199 = vsel %vm3124, %v3196, %v3198
    %v3200 = vrot.slane %v710, 1
    %v3201 = vsel %vm3124, %v3198, %v3200
    %v3202 = vrot.slane %v711, 1
    %v3203 = vsel %vm3124, %v3200, %v3202
    %v3204 = vrot.slane %v712, 1
    %v3205 = vsel %vm3124, %v3202, %v3204
    %v3206 = vrot.slane %v713, 1
    %v3207 = vsel %vm3124, %v3204, %v3206
    %v3208 = vrot.slane %v714, 1
    %v3209 = vsel %vm3124, %v3206, %v3208
    %v3210 = vrot.slane %v715, 1
    %v3211 = vsel %vm3124, %v3208, %v3210
    %v3212 = vrot.slane %v716, 1
    %v3213 = vsel %vm3124, %v3210, %v3212
    %v3214 = vrot.slane %v717, 1
    %v3215 = vsel %vm3124, %v3212, %v3214
    %v3216 = vrot.slane %v718, 1
    %v3217 = vsel %vm3124, %v3214, %v3216
    %v3218 = vrot.slane %v719, 1
    %v3219 = vsel %vm3124, %v3216, %v3218
    %v3220 = vrot.slane %v720, 1
    %v3221 = vsel %vm3124, %v3218, %v3220
    %v3222 = vrot.slane %v721, 1
    %v3223 = vsel %vm3124, %v3220, %v3222
    %v3224 = vrot.slane %v722, 1
    %v3225 = vsel %vm3124, %v3222, %v3224
    %v3226 = vrot.slane %v723, 1
    %v3227 = vsel %vm3124, %v3224, %v3226
    %v3228 = vrot.slane %v724, 1
    %v3229 = vsel %vm3124, %v3226, %v3228
    %v3230 = vrot.slane %v725, 1
    %v3231 = vsel %vm3124, %v3228, %v3230
    %v3232 = vrot.slane %v726, 1
    %v3233 = vsel %vm3124, %v3230, %v3232
    %v3234 = vrot.slane %v727, 1
    %v3235 = vsel %vm3124, %v3232, %v3234
    %v3236 = vrot.slane %v728, 1
    %v3237 = vsel %vm3124, %v3234, %v3236
    %v3238 = vrot.slane %v729, 1
    %v3239 = vsel %vm3124, %v3236, %v3238
    %v3240 = vrot.slane %v730, 1
    %v3241 = vsel %vm3124, %v3238, %v3240
    %v3242 = vrot.slane %v731, 1
    %v3243 = vsel %vm3124, %v3240, %v3242
    %v3244 = vrot.slane %v732, 1
    %v3245 = vsel %vm3124, %v3242, %v3244
    %v3246 = vrot.slane %v733, 1
    %v3247 = vsel %vm3124, %v3244, %v3246
    %v3248 = vrot.slane %v734, 1
    %v3249 = vsel %vm3124, %v3246, %v3248
    %v3250 = vrot.slane %v735, 1
    %v3251 = vsel %vm3124, %v3248, %v3250
    %v3252 = vrot.slane %v736, 1
    %v3253 = vsel %vm3124, %v3250, %v3252
    %v3254 = vrot.slane %v737, 1
    %v3255 = vsel %vm3124, %v3252, %v3254
    %v3256 = vsel %vm3124, %v3254, %v3125
    %v3324 = vsel %vm3044, %v3126, 0.0
    %v3325 = vsel %vm3045, %v3126, 0.0
    %v3326 = vsel %vm3046, %v3126, 0.0
    %v3327 = vsel %vm3047, %v3128, 0.0
    %v3328 = vsel %vm3048, %v3130, 0.0
    %v3329 = vsel %vm3049, %v3132, 0.0
    %v3330 = vsel %vm3050, %v3134, 0.0
    %v3331 = vsel %vm3051, %v3136, 0.0
    %v3332 = vsel %vm3052, %v3138, 0.0
    %v3333 = vsel %vm3053, %v3140, 0.0
    %v3334 = vsel %vm3054, %v3142, 0.0
    %v3335 = vsel %vm3055, %v3144, 0.0
    %v3336 = vsel %vm3056, %v3146, 0.0
    %v3337 = vsel %vm3057, %v3148, 0.0
    %v3338 = vsel %vm3058, %v3150, 0.0
    %v3339 = vsel %vm3059, %v3152, 0.0
    %v3340 = vsel %vm3060, %v3154, 0.0
    %v3341 = vsel %vm3061, %v3156, 0.0
    %v3342 = vsel %vm3062, %v3158, 0.0
    %v3343 = vsel %vm3063, %v3160, 0.0
    %v3344 = vsel %vm3064, %v3162, 0.0
    %v3345 = vsel %vm3065, %v3164, 0.0
    %v3346 = vsel %vm3066, %v3166, 0.0
    %v3347 = vsel %vm3067, %v3168, 0.0
    %v3348 = vsel %vm3068, %v3170, 0.0
    %v3349 = vsel %vm3069, %v3172, 0.0
    %v3350 = vsel %vm3070, %v3174, 0.0
    %v3351 = vsel %vm3071, %v3176, 0.0
    %v3352 = vsel %vm3072, %v3178, 0.0
    %v3353 = vsel %vm3073, %v3180, 0.0
    %v3354 = vsel %vm3074, %v3182, 0.0
    %v3355 = vsel %vm3075, %v3184, 0.0
    %v3356 = vsel %vm3076, %v3186, 0.0
    %v3357 = vsel %vm3077, %v3188, 0.0
    %v3358 = vsel %vm3078, %v3190, 0.0
    %v3359 = vsel %vm3079, %v3191, 0.0
    %v3360 = vsel %vm3080, %v3126, 0.0
    %v3361 = vsel %vm3081, %v3126, 0.0
    %v3362 = vsel %vm3082, %v3126, 0.0
    %v3363 = vsel %vm3083, %v3126, 0.0
    %v3364 = vsel %vm3084, %v3126, 0.0
    %v3365 = vsel %vm3085, %v3126, 0.0
    %v3366 = vsel %vm3086, %v3126, 0.0
    %v3367 = vsel %vm3087, %v3193, 0.0
    %v3368 = vsel %vm3088, %v3195, 0.0
    %v3369 = vsel %vm3089, %v3197, 0.0
    %v3370 = vsel %vm3090, %v3199, 0.0
    %v3371 = vsel %vm3091, %v3201, 0.0
    %v3372 = vsel %vm3092, %v3203, 0.0
    %v3373 = vsel %vm3093, %v3205, 0.0
    %v3374 = vsel %vm3094, %v3207, 0.0
    %v3375 = vsel %vm3095, %v3209, 0.0
    %v3376 = vsel %vm3096, %v3211, 0.0
    %v3377 = vsel %vm3097, %v3213, 0.0
    %v3378 = vsel %vm3098, %v3215, 0.0
    %v3379 = vsel %vm3099, %v3217, 0.0
    %v3380 = vsel %vm3100, %v3219, 0.0
    %v3381 = vsel %vm3101, %v3221, 0.0
    %v3382 = vsel %vm3102, %v3223, 0.0
    %v3383 = vsel %vm3103, %v3225, 0.0
    %v3384 = vsel %vm3104, %v3227, 0.0
    %v3385 = vsel %vm3105, %v3229, 0.0
    %v3386 = vsel %vm3106, %v3231, 0.0
    %v3387 = vsel %vm3107, %v3233, 0.0
    %v3388 = vsel %vm3108, %v3235, 0.0
    %v3389 = vsel %vm3109, %v3237, 0.0
    %v3390 = vsel %vm3110, %v3239, 0.0
    %v3391 = vsel %vm3111, %v3241, 0.0
    %v3392 = vsel %vm3112, %v3243, 0.0
    %v3393 = vsel %vm3113, %v3245, 0.0
    %v3394 = vsel %vm3114, %v3247, 0.0
    %v3395 = vsel %vm3115, %v3249, 0.0
    %v3396 = vsel %vm3116, %v3251, 0.0
    %v3397 = vsel %vm3117, %v3253, 0.0
    %v3398 = vsel %vm3118, %v3255, 0.0
    %v3399 = vsel %vm3119, %v3256, 0.0
    %v3400 = vsel %vm3120, %v3126, 0.0
    %v3401 = vsel %vm3121, %v3126, 0.0
    %v3402 = vsel %vm3122, %v3126, 0.0
    %v3403 = vsel %vm3123, %v3126, 0.0
    %vm3404 = vcmp.lt.s32.totalorder %v1699, 14
    %vm3405 = vcmp.lt.s32.totalorder %v1700, 14
    %vm3406 = vcmp.lt.s32.totalorder %v1701, 14
    %vm3407 = vcmp.lt.s32.totalorder %v1702, 14
    %vm3408 = vcmp.lt.s32.totalorder %v1703, 14
    %vm3409 = vcmp.lt.s32.totalorder %v1704, 14
    %vm3410 = vcmp.lt.s32.totalorder %v1705, 14
    %vm3411 = vcmp.lt.s32.totalorder %v1706, 14
    %vm3412 = vcmp.lt.s32.totalorder %v1707, 14
    %vm3413 = vcmp.lt.s32.totalorder %v1708, 14
    %vm3414 = vcmp.lt.s32.totalorder %v1709, 14
    %vm3415 = vcmp.lt.s32.totalorder %v1710, 14
    %vm3416 = vcmp.lt.s32.totalorder %v1711, 14
    %vm3417 = vcmp.lt.s32.totalorder %v1712, 14
    %vm3418 = vcmp.lt.s32.totalorder %v1713, 14
    %vm3419 = vcmp.lt.s32.totalorder %v1714, 14
    %vm3420 = vcmp.lt.s32.totalorder %v1715, 14
    %vm3421 = vcmp.lt.s32.totalorder %v1716, 14
    %vm3422 = vcmp.lt.s32.totalorder %v1717, 14
    %vm3423 = vcmp.lt.s32.totalorder %v1718, 14
    %vm3424 = vcmp.lt.s32.totalorder %v1719, 14
    %vm3425 = vcmp.lt.s32.totalorder %v1720, 14
    %vm3426 = vcmp.lt.s32.totalorder %v1721, 14
    %vm3427 = vcmp.lt.s32.totalorder %v1722, 14
    %vm3428 = vcmp.lt.s32.totalorder %v1723, 14
    %vm3429 = vcmp.lt.s32.totalorder %v1724, 14
    %vm3430 = vcmp.lt.s32.totalorder %v1725, 14
    %vm3431 = vcmp.lt.s32.totalorder %v1726, 14
    %vm3432 = vcmp.lt.s32.totalorder %v1727, 14
    %vm3433 = vcmp.lt.s32.totalorder %v1728, 14
    %vm3434 = vcmp.lt.s32.totalorder %v1729, 14
    %vm3435 = vcmp.lt.s32.totalorder %v1730, 14
    %vm3436 = vcmp.lt.s32.totalorder %v1731, 14
    %vm3437 = vcmp.lt.s32.totalorder %v1732, 14
    %vm3438 = vcmp.lt.s32.totalorder %v1733, 14
    %vm3439 = vcmp.lt.s32.totalorder %v1734, 14
    %vm3440 = vcmp.lt.s32.totalorder %v1735, 14
    %vm3441 = vcmp.lt.s32.totalorder %v1736, 14
    %vm3442 = vcmp.lt.s32.totalorder %v1737, 14
    %vm3443 = vcmp.lt.s32.totalorder %v1738, 14
    %vm3444 = vcmp.lt.s32.totalorder %v1739, 14
    %vm3445 = vcmp.lt.s32.totalorder %v1740, 14
    %vm3446 = vcmp.lt.s32.totalorder %v1741, 14
    %vm3447 = vcmp.lt.s32.totalorder %v1742, 14
    %vm3448 = vcmp.lt.s32.totalorder %v1743, 14
    %vm3449 = vcmp.lt.s32.totalorder %v1744, 14
    %vm3450 = vcmp.lt.s32.totalorder %v1745, 14
    %vm3451 = vcmp.lt.s32.totalorder %v1746, 14
    %vm3452 = vcmp.lt.s32.totalorder %v1747, 14
    %vm3453 = vcmp.lt.s32.totalorder %v1748, 14
    %vm3454 = vcmp.lt.s32.totalorder %v1749, 14
    %vm3455 = vcmp.lt.s32.totalorder %v1750, 14
    %vm3456 = vcmp.lt.s32.totalorder %v1751, 14
    %vm3457 = vcmp.lt.s32.totalorder %v1752, 14
    %vm3458 = vcmp.lt.s32.totalorder %v1753, 14
    %vm3459 = vcmp.lt.s32.totalorder %v1754, 14
    %vm3460 = vcmp.lt.s32.totalorder %v1755, 14
    %vm3461 = vcmp.lt.s32.totalorder %v1756, 14
    %vm3462 = vcmp.lt.s32.totalorder %v1757, 14
    %vm3463 = vcmp.lt.s32.totalorder %v1758, 14
    %vm3464 = vcmp.lt.s32.totalorder %v1759, 14
    %vm3465 = vcmp.lt.s32.totalorder %v1760, 14
    %vm3466 = vcmp.lt.s32.totalorder %v1761, 14
    %vm3467 = vcmp.lt.s32.totalorder %v1762, 14
    %vm3468 = vcmp.lt.s32.totalorder %v1763, 14
    %vm3469 = vcmp.lt.s32.totalorder %v1764, 14
    %vm3470 = vcmp.lt.s32.totalorder %v1765, 14
    %vm3471 = vcmp.lt.s32.totalorder %v1766, 14
    %vm3472 = vcmp.lt.s32.totalorder %v1767, 14
    %vm3473 = vcmp.lt.s32.totalorder %v1768, 14
    %vm3474 = vcmp.lt.s32.totalorder %v1769, 14
    %vm3475 = vcmp.lt.s32.totalorder %v1770, 14
    %vm3476 = vcmp.lt.s32.totalorder %v1771, 14
    %vm3477 = vcmp.lt.s32.totalorder %v1772, 14
    %vm3478 = vcmp.lt.s32.totalorder %v1773, 14
    %vm3479 = vcmp.lt.s32.totalorder %v1774, 14
    %vm3480 = vcmp.lt.s32.totalorder %v1775, 14
    %vm3481 = vcmp.lt.s32.totalorder %v1776, 14
    %vm3482 = vcmp.lt.s32.totalorder %v1777, 14
    %vm3483 = vcmp.lt.s32.totalorder %v1778, 14
    %v3484 = vsel %vm3404, 1, 0
    %v3485 = vsel %vm3405, 1, 0
    %v3486 = vsel %vm3406, 1, 0
    %v3487 = vsel %vm3407, 1, 0
    %v3488 = vsel %vm3408, 1, 0
    %v3489 = vsel %vm3409, 1, 0
    %v3490 = vsel %vm3410, 1, 0
    %v3491 = vsel %vm3411, 1, 0
    %v3492 = vsel %vm3412, 1, 0
    %v3493 = vsel %vm3413, 1, 0
    %v3494 = vsel %vm3414, 1, 0
    %v3495 = vsel %vm3415, 1, 0
    %v3496 = vsel %vm3416, 1, 0
    %v3497 = vsel %vm3417, 1, 0
    %v3498 = vsel %vm3418, 1, 0
    %v3499 = vsel %vm3419, 1, 0
    %v3500 = vsel %vm3420, 1, 0
    %v3501 = vsel %vm3421, 1, 0
    %v3502 = vsel %vm3422, 1, 0
    %v3503 = vsel %vm3423, 1, 0
    %v3504 = vsel %vm3424, 1, 0
    %v3505 = vsel %vm3425, 1, 0
    %v3506 = vsel %vm3426, 1, 0
    %v3507 = vsel %vm3427, 1, 0
    %v3508 = vsel %vm3428, 1, 0
    %v3509 = vsel %vm3429, 1, 0
    %v3510 = vsel %vm3430, 1, 0
    %v3511 = vsel %vm3431, 1, 0
    %v3512 = vsel %vm3432, 1, 0
    %v3513 = vsel %vm3433, 1, 0
    %v3514 = vsel %vm3434, 1, 0
    %v3515 = vsel %vm3435, 1, 0
    %v3516 = vsel %vm3436, 1, 0
    %v3517 = vsel %vm3437, 1, 0
    %v3518 = vsel %vm3438, 1, 0
    %v3519 = vsel %vm3439, 1, 0
    %v3520 = vsel %vm3440, 1, 0
    %v3521 = vsel %vm3441, 1, 0
    %v3522 = vsel %vm3442, 1, 0
    %v3523 = vsel %vm3443, 1, 0
    %v3524 = vsel %vm3444, 1, 0
    %v3525 = vsel %vm3445, 1, 0
    %v3526 = vsel %vm3446, 1, 0
    %v3527 = vsel %vm3447, 1, 0
    %v3528 = vsel %vm3448, 1, 0
    %v3529 = vsel %vm3449, 1, 0
    %v3530 = vsel %vm3450, 1, 0
    %v3531 = vsel %vm3451, 1, 0
    %v3532 = vsel %vm3452, 1, 0
    %v3533 = vsel %vm3453, 1, 0
    %v3534 = vsel %vm3454, 1, 0
    %v3535 = vsel %vm3455, 1, 0
    %v3536 = vsel %vm3456, 1, 0
    %v3537 = vsel %vm3457, 1, 0
    %v3538 = vsel %vm3458, 1, 0
    %v3539 = vsel %vm3459, 1, 0
    %v3540 = vsel %vm3460, 1, 0
    %v3541 = vsel %vm3461, 1, 0
    %v3542 = vsel %vm3462, 1, 0
    %v3543 = vsel %vm3463, 1, 0
    %v3544 = vsel %vm3464, 1, 0
    %v3545 = vsel %vm3465, 1, 0
    %v3546 = vsel %vm3466, 1, 0
    %v3547 = vsel %vm3467, 1, 0
    %v3548 = vsel %vm3468, 1, 0
    %v3549 = vsel %vm3469, 1, 0
    %v3550 = vsel %vm3470, 1, 0
    %v3551 = vsel %vm3471, 1, 0
    %v3552 = vsel %vm3472, 1, 0
    %v3553 = vsel %vm3473, 1, 0
    %v3554 = vsel %vm3474, 1, 0
    %v3555 = vsel %vm3475, 1, 0
    %v3556 = vsel %vm3476, 1, 0
    %v3557 = vsel %vm3477, 1, 0
    %v3558 = vsel %vm3478, 1, 0
    %v3559 = vsel %vm3479, 1, 0
    %v3560 = vsel %vm3480, 1, 0
    %v3561 = vsel %vm3481, 1, 0
    %v3562 = vsel %vm3482, 1, 0
    %v3563 = vsel %vm3483, 1, 0
    %vm3564 = vcmp.eq.s32.totalorder %v3484, 1
    %vm3565 = vcmp.eq.s32.totalorder %v3485, 1
    %vm3566 = vcmp.eq.s32.totalorder %v3486, 1
    %vm3567 = vcmp.eq.s32.totalorder %v3487, 1
    %vm3568 = vcmp.eq.s32.totalorder %v3488, 1
    %vm3569 = vcmp.eq.s32.totalorder %v3489, 1
    %vm3570 = vcmp.eq.s32.totalorder %v3490, 1
    %vm3571 = vcmp.eq.s32.totalorder %v3491, 1
    %vm3572 = vcmp.eq.s32.totalorder %v3492, 1
    %vm3573 = vcmp.eq.s32.totalorder %v3493, 1
    %vm3574 = vcmp.eq.s32.totalorder %v3494, 1
    %vm3575 = vcmp.eq.s32.totalorder %v3495, 1
    %vm3576 = vcmp.eq.s32.totalorder %v3496, 1
    %vm3577 = vcmp.eq.s32.totalorder %v3497, 1
    %vm3578 = vcmp.eq.s32.totalorder %v3498, 1
    %vm3579 = vcmp.eq.s32.totalorder %v3499, 1
    %vm3580 = vcmp.eq.s32.totalorder %v3500, 1
    %vm3581 = vcmp.eq.s32.totalorder %v3501, 1
    %vm3582 = vcmp.eq.s32.totalorder %v3502, 1
    %vm3583 = vcmp.eq.s32.totalorder %v3503, 1
    %vm3584 = vcmp.eq.s32.totalorder %v3504, 1
    %vm3585 = vcmp.eq.s32.totalorder %v3505, 1
    %vm3586 = vcmp.eq.s32.totalorder %v3506, 1
    %vm3587 = vcmp.eq.s32.totalorder %v3507, 1
    %vm3588 = vcmp.eq.s32.totalorder %v3508, 1
    %vm3589 = vcmp.eq.s32.totalorder %v3509, 1
    %vm3590 = vcmp.eq.s32.totalorder %v3510, 1
    %vm3591 = vcmp.eq.s32.totalorder %v3511, 1
    %vm3592 = vcmp.eq.s32.totalorder %v3512, 1
    %vm3593 = vcmp.eq.s32.totalorder %v3513, 1
    %vm3594 = vcmp.eq.s32.totalorder %v3514, 1
    %vm3595 = vcmp.eq.s32.totalorder %v3515, 1
    %vm3596 = vcmp.eq.s32.totalorder %v3516, 1
    %vm3597 = vcmp.eq.s32.totalorder %v3517, 1
    %vm3598 = vcmp.eq.s32.totalorder %v3518, 1
    %vm3599 = vcmp.eq.s32.totalorder %v3519, 1
    %vm3600 = vcmp.eq.s32.totalorder %v3520, 1
    %vm3601 = vcmp.eq.s32.totalorder %v3521, 1
    %vm3602 = vcmp.eq.s32.totalorder %v3522, 1
    %vm3603 = vcmp.eq.s32.totalorder %v3523, 1
    %vm3604 = vcmp.eq.s32.totalorder %v3524, 1
    %vm3605 = vcmp.eq.s32.totalorder %v3525, 1
    %vm3606 = vcmp.eq.s32.totalorder %v3526, 1
    %vm3607 = vcmp.eq.s32.totalorder %v3527, 1
    %vm3608 = vcmp.eq.s32.totalorder %v3528, 1
    %vm3609 = vcmp.eq.s32.totalorder %v3529, 1
    %vm3610 = vcmp.eq.s32.totalorder %v3530, 1
    %vm3611 = vcmp.eq.s32.totalorder %v3531, 1
    %vm3612 = vcmp.eq.s32.totalorder %v3532, 1
    %vm3613 = vcmp.eq.s32.totalorder %v3533, 1
    %vm3614 = vcmp.eq.s32.totalorder %v3534, 1
    %vm3615 = vcmp.eq.s32.totalorder %v3535, 1
    %vm3616 = vcmp.eq.s32.totalorder %v3536, 1
    %vm3617 = vcmp.eq.s32.totalorder %v3537, 1
    %vm3618 = vcmp.eq.s32.totalorder %v3538, 1
    %vm3619 = vcmp.eq.s32.totalorder %v3539, 1
    %vm3620 = vcmp.eq.s32.totalorder %v3540, 1
    %vm3621 = vcmp.eq.s32.totalorder %v3541, 1
    %vm3622 = vcmp.eq.s32.totalorder %v3542, 1
    %vm3623 = vcmp.eq.s32.totalorder %v3543, 1
    %vm3624 = vcmp.eq.s32.totalorder %v3544, 1
    %vm3625 = vcmp.eq.s32.totalorder %v3545, 1
    %vm3626 = vcmp.eq.s32.totalorder %v3546, 1
    %vm3627 = vcmp.eq.s32.totalorder %v3547, 1
    %vm3628 = vcmp.eq.s32.totalorder %v3548, 1
    %vm3629 = vcmp.eq.s32.totalorder %v3549, 1
    %vm3630 = vcmp.eq.s32.totalorder %v3550, 1
    %vm3631 = vcmp.eq.s32.totalorder %v3551, 1
    %vm3632 = vcmp.eq.s32.totalorder %v3552, 1
    %vm3633 = vcmp.eq.s32.totalorder %v3553, 1
    %vm3634 = vcmp.eq.s32.totalorder %v3554, 1
    %vm3635 = vcmp.eq.s32.totalorder %v3555, 1
    %vm3636 = vcmp.eq.s32.totalorder %v3556, 1
    %vm3637 = vcmp.eq.s32.totalorder %v3557, 1
    %vm3638 = vcmp.eq.s32.totalorder %v3558, 1
    %vm3639 = vcmp.eq.s32.totalorder %v3559, 1
    %vm3640 = vcmp.eq.s32.totalorder %v3560, 1
    %vm3641 = vcmp.eq.s32.totalorder %v3561, 1
    %vm3642 = vcmp.eq.s32.totalorder %v3562, 1
    %vm3643 = vcmp.eq.s32.totalorder %v3563, 1
    %vm3644 = vcmask 1045504
    %v3645 = vrot.slane 0.0, 2
    %v3646 = vsel %vm3644, %v3645, %v3645
    %v3647 = vrot.slane %v674, 2
    %v3648 = vsel %vm3644, %v3645, %v3647
    %v3649 = vrot.slane %v675, 2
    %v3650 = vsel %vm3644, %v3647, %v3649
    %v3651 = vrot.slane %v676, 2
    %v3652 = vsel %vm3644, %v3649, %v3651
    %v3653 = vrot.slane %v677, 2
    %v3654 = vsel %vm3644, %v3651, %v3653
    %v3655 = vrot.slane %v678, 2
    %v3656 = vsel %vm3644, %v3653, %v3655
    %v3657 = vrot.slane %v679, 2
    %v3658 = vsel %vm3644, %v3655, %v3657
    %v3659 = vrot.slane %v680, 2
    %v3660 = vsel %vm3644, %v3657, %v3659
    %v3661 = vrot.slane %v681, 2
    %v3662 = vsel %vm3644, %v3659, %v3661
    %v3663 = vrot.slane %v682, 2
    %v3664 = vsel %vm3644, %v3661, %v3663
    %v3665 = vrot.slane %v683, 2
    %v3666 = vsel %vm3644, %v3663, %v3665
    %v3667 = vrot.slane %v684, 2
    %v3668 = vsel %vm3644, %v3665, %v3667
    %v3669 = vrot.slane %v685, 2
    %v3670 = vsel %vm3644, %v3667, %v3669
    %v3671 = vrot.slane %v686, 2
    %v3672 = vsel %vm3644, %v3669, %v3671
    %v3673 = vrot.slane %v687, 2
    %v3674 = vsel %vm3644, %v3671, %v3673
    %v3675 = vrot.slane %v688, 2
    %v3676 = vsel %vm3644, %v3673, %v3675
    %v3677 = vrot.slane %v689, 2
    %v3678 = vsel %vm3644, %v3675, %v3677
    %v3679 = vrot.slane %v690, 2
    %v3680 = vsel %vm3644, %v3677, %v3679
    %v3681 = vrot.slane %v691, 2
    %v3682 = vsel %vm3644, %v3679, %v3681
    %v3683 = vrot.slane %v692, 2
    %v3684 = vsel %vm3644, %v3681, %v3683
    %v3685 = vrot.slane %v693, 2
    %v3686 = vsel %vm3644, %v3683, %v3685
    %v3687 = vrot.slane %v694, 2
    %v3688 = vsel %vm3644, %v3685, %v3687
    %v3689 = vrot.slane %v695, 2
    %v3690 = vsel %vm3644, %v3687, %v3689
    %v3691 = vrot.slane %v696, 2
    %v3692 = vsel %vm3644, %v3689, %v3691
    %v3693 = vrot.slane %v697, 2
    %v3694 = vsel %vm3644, %v3691, %v3693
    %v3695 = vrot.slane %v698, 2
    %v3696 = vsel %vm3644, %v3693, %v3695
    %v3697 = vrot.slane %v699, 2
    %v3698 = vsel %vm3644, %v3695, %v3697
    %v3699 = vrot.slane %v700, 2
    %v3700 = vsel %vm3644, %v3697, %v3699
    %v3701 = vrot.slane %v701, 2
    %v3702 = vsel %vm3644, %v3699, %v3701
    %v3703 = vrot.slane %v702, 2
    %v3704 = vsel %vm3644, %v3701, %v3703
    %v3705 = vrot.slane %v703, 2
    %v3706 = vsel %vm3644, %v3703, %v3705
    %v3707 = vrot.slane %v704, 2
    %v3708 = vsel %vm3644, %v3705, %v3707
    %v3709 = vrot.slane %v705, 2
    %v3710 = vsel %vm3644, %v3707, %v3709
    %v3711 = vsel %vm3644, %v3709, %v3645
    %v3712 = vrot.slane %v706, 2
    %v3713 = vsel %vm3644, %v3645, %v3712
    %v3714 = vrot.slane %v707, 2
    %v3715 = vsel %vm3644, %v3712, %v3714
    %v3716 = vrot.slane %v708, 2
    %v3717 = vsel %vm3644, %v3714, %v3716
    %v3718 = vrot.slane %v709, 2
    %v3719 = vsel %vm3644, %v3716, %v3718
    %v3720 = vrot.slane %v710, 2
    %v3721 = vsel %vm3644, %v3718, %v3720
    %v3722 = vrot.slane %v711, 2
    %v3723 = vsel %vm3644, %v3720, %v3722
    %v3724 = vrot.slane %v712, 2
    %v3725 = vsel %vm3644, %v3722, %v3724
    %v3726 = vrot.slane %v713, 2
    %v3727 = vsel %vm3644, %v3724, %v3726
    %v3728 = vrot.slane %v714, 2
    %v3729 = vsel %vm3644, %v3726, %v3728
    %v3730 = vrot.slane %v715, 2
    %v3731 = vsel %vm3644, %v3728, %v3730
    %v3732 = vrot.slane %v716, 2
    %v3733 = vsel %vm3644, %v3730, %v3732
    %v3734 = vrot.slane %v717, 2
    %v3735 = vsel %vm3644, %v3732, %v3734
    %v3736 = vrot.slane %v718, 2
    %v3737 = vsel %vm3644, %v3734, %v3736
    %v3738 = vrot.slane %v719, 2
    %v3739 = vsel %vm3644, %v3736, %v3738
    %v3740 = vrot.slane %v720, 2
    %v3741 = vsel %vm3644, %v3738, %v3740
    %v3742 = vrot.slane %v721, 2
    %v3743 = vsel %vm3644, %v3740, %v3742
    %v3744 = vrot.slane %v722, 2
    %v3745 = vsel %vm3644, %v3742, %v3744
    %v3746 = vrot.slane %v723, 2
    %v3747 = vsel %vm3644, %v3744, %v3746
    %v3748 = vrot.slane %v724, 2
    %v3749 = vsel %vm3644, %v3746, %v3748
    %v3750 = vrot.slane %v725, 2
    %v3751 = vsel %vm3644, %v3748, %v3750
    %v3752 = vrot.slane %v726, 2
    %v3753 = vsel %vm3644, %v3750, %v3752
    %v3754 = vrot.slane %v727, 2
    %v3755 = vsel %vm3644, %v3752, %v3754
    %v3756 = vrot.slane %v728, 2
    %v3757 = vsel %vm3644, %v3754, %v3756
    %v3758 = vrot.slane %v729, 2
    %v3759 = vsel %vm3644, %v3756, %v3758
    %v3760 = vrot.slane %v730, 2
    %v3761 = vsel %vm3644, %v3758, %v3760
    %v3762 = vrot.slane %v731, 2
    %v3763 = vsel %vm3644, %v3760, %v3762
    %v3764 = vrot.slane %v732, 2
    %v3765 = vsel %vm3644, %v3762, %v3764
    %v3766 = vrot.slane %v733, 2
    %v3767 = vsel %vm3644, %v3764, %v3766
    %v3768 = vrot.slane %v734, 2
    %v3769 = vsel %vm3644, %v3766, %v3768
    %v3770 = vrot.slane %v735, 2
    %v3771 = vsel %vm3644, %v3768, %v3770
    %v3772 = vrot.slane %v736, 2
    %v3773 = vsel %vm3644, %v3770, %v3772
    %v3774 = vrot.slane %v737, 2
    %v3775 = vsel %vm3644, %v3772, %v3774
    %v3776 = vsel %vm3644, %v3774, %v3645
    %v3844 = vsel %vm3564, %v3646, 0.0
    %v3845 = vsel %vm3565, %v3646, 0.0
    %v3846 = vsel %vm3566, %v3646, 0.0
    %v3847 = vsel %vm3567, %v3648, 0.0
    %v3848 = vsel %vm3568, %v3650, 0.0
    %v3849 = vsel %vm3569, %v3652, 0.0
    %v3850 = vsel %vm3570, %v3654, 0.0
    %v3851 = vsel %vm3571, %v3656, 0.0
    %v3852 = vsel %vm3572, %v3658, 0.0
    %v3853 = vsel %vm3573, %v3660, 0.0
    %v3854 = vsel %vm3574, %v3662, 0.0
    %v3855 = vsel %vm3575, %v3664, 0.0
    %v3856 = vsel %vm3576, %v3666, 0.0
    %v3857 = vsel %vm3577, %v3668, 0.0
    %v3858 = vsel %vm3578, %v3670, 0.0
    %v3859 = vsel %vm3579, %v3672, 0.0
    %v3860 = vsel %vm3580, %v3674, 0.0
    %v3861 = vsel %vm3581, %v3676, 0.0
    %v3862 = vsel %vm3582, %v3678, 0.0
    %v3863 = vsel %vm3583, %v3680, 0.0
    %v3864 = vsel %vm3584, %v3682, 0.0
    %v3865 = vsel %vm3585, %v3684, 0.0
    %v3866 = vsel %vm3586, %v3686, 0.0
    %v3867 = vsel %vm3587, %v3688, 0.0
    %v3868 = vsel %vm3588, %v3690, 0.0
    %v3869 = vsel %vm3589, %v3692, 0.0
    %v3870 = vsel %vm3590, %v3694, 0.0
    %v3871 = vsel %vm3591, %v3696, 0.0
    %v3872 = vsel %vm3592, %v3698, 0.0
    %v3873 = vsel %vm3593, %v3700, 0.0
    %v3874 = vsel %vm3594, %v3702, 0.0
    %v3875 = vsel %vm3595, %v3704, 0.0
    %v3876 = vsel %vm3596, %v3706, 0.0
    %v3877 = vsel %vm3597, %v3708, 0.0
    %v3878 = vsel %vm3598, %v3710, 0.0
    %v3879 = vsel %vm3599, %v3711, 0.0
    %v3880 = vsel %vm3600, %v3646, 0.0
    %v3881 = vsel %vm3601, %v3646, 0.0
    %v3882 = vsel %vm3602, %v3646, 0.0
    %v3883 = vsel %vm3603, %v3646, 0.0
    %v3884 = vsel %vm3604, %v3646, 0.0
    %v3885 = vsel %vm3605, %v3646, 0.0
    %v3886 = vsel %vm3606, %v3646, 0.0
    %v3887 = vsel %vm3607, %v3713, 0.0
    %v3888 = vsel %vm3608, %v3715, 0.0
    %v3889 = vsel %vm3609, %v3717, 0.0
    %v3890 = vsel %vm3610, %v3719, 0.0
    %v3891 = vsel %vm3611, %v3721, 0.0
    %v3892 = vsel %vm3612, %v3723, 0.0
    %v3893 = vsel %vm3613, %v3725, 0.0
    %v3894 = vsel %vm3614, %v3727, 0.0
    %v3895 = vsel %vm3615, %v3729, 0.0
    %v3896 = vsel %vm3616, %v3731, 0.0
    %v3897 = vsel %vm3617, %v3733, 0.0
    %v3898 = vsel %vm3618, %v3735, 0.0
    %v3899 = vsel %vm3619, %v3737, 0.0
    %v3900 = vsel %vm3620, %v3739, 0.0
    %v3901 = vsel %vm3621, %v3741, 0.0
    %v3902 = vsel %vm3622, %v3743, 0.0
    %v3903 = vsel %vm3623, %v3745, 0.0
    %v3904 = vsel %vm3624, %v3747, 0.0
    %v3905 = vsel %vm3625, %v3749, 0.0
    %v3906 = vsel %vm3626, %v3751, 0.0
    %v3907 = vsel %vm3627, %v3753, 0.0
    %v3908 = vsel %vm3628, %v3755, 0.0
    %v3909 = vsel %vm3629, %v3757, 0.0
    %v3910 = vsel %vm3630, %v3759, 0.0
    %v3911 = vsel %vm3631, %v3761, 0.0
    %v3912 = vsel %vm3632, %v3763, 0.0
    %v3913 = vsel %vm3633, %v3765, 0.0
    %v3914 = vsel %vm3634, %v3767, 0.0
    %v3915 = vsel %vm3635, %v3769, 0.0
    %v3916 = vsel %vm3636, %v3771, 0.0
    %v3917 = vsel %vm3637, %v3773, 0.0
    %v3918 = vsel %vm3638, %v3775, 0.0
    %v3919 = vsel %vm3639, %v3776, 0.0
    %v3920 = vsel %vm3640, %v3646, 0.0
    %v3921 = vsel %vm3641, %v3646, 0.0
    %v3922 = vsel %vm3642, %v3646, 0.0
    %v3923 = vsel %vm3643, %v3646, 0.0
    %3988 = vrot.lane.b32.xlu0 %v2804, 32
    %v3989 = vpop.permute.xlu0 %3988
    %3990 = vrot.lane.b32.xlu0 %v2805, 32
    %v3991 = vpop.permute.xlu0 %3990
    %3992 = vrot.lane.b32.xlu0 %v2806, 32
    %v3993 = vpop.permute.xlu0 %3992
    %3994 = vrot.lane.b32.xlu0 %v2807, 32
    %v3995 = vpop.permute.xlu0 %3994
    %3996 = vrot.lane.b32.xlu0 %v2808, 32
    %v3997 = vpop.permute.xlu0 %3996
    %3998 = vrot.lane.b32.xlu0 %v2809, 32
    %v3999 = vpop.permute.xlu0 %3998
    %4000 = vrot.lane.b32.xlu0 %v2810, 32
    %v4001 = vpop.permute.xlu0 %4000
    %4002 = vrot.lane.b32.xlu0 %v2811, 32
    %v4003 = vpop.permute.xlu0 %4002
    %4004 = vrot.lane.b32.xlu0 %v2812, 32
    %v4005 = vpop.permute.xlu0 %4004
    %4006 = vrot.lane.b32.xlu0 %v2813, 32
    %v4007 = vpop.permute.xlu0 %4006
    %4008 = vrot.lane.b32.xlu0 %v2814, 32
    %v4009 = vpop.permute.xlu0 %4008
    %4010 = vrot.lane.b32.xlu0 %v2815, 32
    %v4011 = vpop.permute.xlu0 %4010
    %4012 = vrot.lane.b32.xlu0 %v2816, 32
    %v4013 = vpop.permute.xlu0 %4012
    %4014 = vrot.lane.b32.xlu0 %v2817, 32
    %v4015 = vpop.permute.xlu0 %4014
    %4016 = vrot.lane.b32.xlu0 %v2818, 32
    %v4017 = vpop.permute.xlu0 %4016
    %4018 = vrot.lane.b32.xlu0 %v2819, 32
    %v4019 = vpop.permute.xlu0 %4018
    %4020 = vrot.lane.b32.xlu0 %v2820, 32
    %v4021 = vpop.permute.xlu0 %4020
    %4022 = vrot.lane.b32.xlu0 %v2821, 32
    %v4023 = vpop.permute.xlu0 %4022
    %4024 = vrot.lane.b32.xlu0 %v2822, 32
    %v4025 = vpop.permute.xlu0 %4024
    %4026 = vrot.lane.b32.xlu0 %v2823, 32
    %v4027 = vpop.permute.xlu0 %4026
    %4028 = vrot.lane.b32.xlu0 %v2824, 32
    %v4029 = vpop.permute.xlu0 %4028
    %4030 = vrot.lane.b32.xlu0 %v2825, 32
    %v4031 = vpop.permute.xlu0 %4030
    %4032 = vrot.lane.b32.xlu0 %v2826, 32
    %v4033 = vpop.permute.xlu0 %4032
    %4034 = vrot.lane.b32.xlu0 %v2827, 32
    %v4035 = vpop.permute.xlu0 %4034
    %4036 = vrot.lane.b32.xlu0 %v2828, 32
    %v4037 = vpop.permute.xlu0 %4036
    %4038 = vrot.lane.b32.xlu0 %v2829, 32
    %v4039 = vpop.permute.xlu0 %4038
    %4040 = vrot.lane.b32.xlu0 %v2830, 32
    %v4041 = vpop.permute.xlu0 %4040
    %4042 = vrot.lane.b32.xlu0 %v2831, 32
    %v4043 = vpop.permute.xlu0 %4042
    %4044 = vrot.lane.b32.xlu0 %v2832, 32
    %v4045 = vpop.permute.xlu0 %4044
    %4046 = vrot.lane.b32.xlu0 %v2833, 32
    %v4047 = vpop.permute.xlu0 %4046
    %4048 = vrot.lane.b32.xlu0 %v2834, 32
    %v4049 = vpop.permute.xlu0 %4048
    %4050 = vrot.lane.b32.xlu0 %v2835, 32
    %v4051 = vpop.permute.xlu0 %4050
    %4052 = vrot.lane.b32.xlu0 %v2844, 32
    %v4053 = vpop.permute.xlu0 %4052
    %4054 = vrot.lane.b32.xlu0 %v2845, 32
    %v4055 = vpop.permute.xlu0 %4054
    %4056 = vrot.lane.b32.xlu0 %v2846, 32
    %v4057 = vpop.permute.xlu0 %4056
    %4058 = vrot.lane.b32.xlu0 %v2847, 32
    %v4059 = vpop.permute.xlu0 %4058
    %4060 = vrot.lane.b32.xlu0 %v2848, 32
    %v4061 = vpop.permute.xlu0 %4060
    %4062 = vrot.lane.b32.xlu0 %v2849, 32
    %v4063 = vpop.permute.xlu0 %4062
    %4064 = vrot.lane.b32.xlu0 %v2850, 32
    %v4065 = vpop.permute.xlu0 %4064
    %4066 = vrot.lane.b32.xlu0 %v2851, 32
    %v4067 = vpop.permute.xlu0 %4066
    %4068 = vrot.lane.b32.xlu0 %v2852, 32
    %v4069 = vpop.permute.xlu0 %4068
    %4070 = vrot.lane.b32.xlu0 %v2853, 32
    %v4071 = vpop.permute.xlu0 %4070
    %4072 = vrot.lane.b32.xlu0 %v2854, 32
    %v4073 = vpop.permute.xlu0 %4072
    %4074 = vrot.lane.b32.xlu0 %v2855, 32
    %v4075 = vpop.permute.xlu0 %4074
    %4076 = vrot.lane.b32.xlu0 %v2856, 32
    %v4077 = vpop.permute.xlu0 %4076
    %4078 = vrot.lane.b32.xlu0 %v2857, 32
    %v4079 = vpop.permute.xlu0 %4078
    %4080 = vrot.lane.b32.xlu0 %v2858, 32
    %v4081 = vpop.permute.xlu0 %4080
    %4082 = vrot.lane.b32.xlu0 %v2859, 32
    %v4083 = vpop.permute.xlu0 %4082
    %4084 = vrot.lane.b32.xlu0 %v2860, 32
    %v4085 = vpop.permute.xlu0 %4084
    %4086 = vrot.lane.b32.xlu0 %v2861, 32
    %v4087 = vpop.permute.xlu0 %4086
    %4088 = vrot.lane.b32.xlu0 %v2862, 32
    %v4089 = vpop.permute.xlu0 %4088
    %4090 = vrot.lane.b32.xlu0 %v2863, 32
    %v4091 = vpop.permute.xlu0 %4090
    %4092 = vrot.lane.b32.xlu0 %v2864, 32
    %v4093 = vpop.permute.xlu0 %4092
    %4094 = vrot.lane.b32.xlu0 %v2865, 32
    %v4095 = vpop.permute.xlu0 %4094
    %4096 = vrot.lane.b32.xlu0 %v2866, 32
    %v4097 = vpop.permute.xlu0 %4096
    %4098 = vrot.lane.b32.xlu0 %v2867, 32
    %v4099 = vpop.permute.xlu0 %4098
    %4100 = vrot.lane.b32.xlu0 %v2868, 32
    %v4101 = vpop.permute.xlu0 %4100
    %4102 = vrot.lane.b32.xlu0 %v2869, 32
    %v4103 = vpop.permute.xlu0 %4102
    %4104 = vrot.lane.b32.xlu0 %v2870, 32
    %v4105 = vpop.permute.xlu0 %4104
    %4106 = vrot.lane.b32.xlu0 %v2871, 32
    %v4107 = vpop.permute.xlu0 %4106
    %4108 = vrot.lane.b32.xlu0 %v2872, 32
    %v4109 = vpop.permute.xlu0 %4108
    %4110 = vrot.lane.b32.xlu0 %v2873, 32
    %v4111 = vpop.permute.xlu0 %4110
    %4112 = vrot.lane.b32.xlu0 %v2874, 32
    %v4113 = vpop.permute.xlu0 %4112
    %4114 = vrot.lane.b32.xlu0 %v2875, 32
    %v4115 = vpop.permute.xlu0 %4114
    %4180 = vrot.lane.b32.xlu0 0.0, 64
    %v4181 = vpop.permute.xlu0 %4180
    %4182 = vrot.lane.b32.xlu0 %v674, 64
    %v4183 = vpop.permute.xlu0 %4182
    %4184 = vrot.lane.b32.xlu0 %v675, 64
    %v4185 = vpop.permute.xlu0 %4184
    %4186 = vrot.lane.b32.xlu0 %v676, 64
    %v4187 = vpop.permute.xlu0 %4186
    %4188 = vrot.lane.b32.xlu0 %v677, 64
    %v4189 = vpop.permute.xlu0 %4188
    %4190 = vrot.lane.b32.xlu0 %v678, 64
    %v4191 = vpop.permute.xlu0 %4190
    %4192 = vrot.lane.b32.xlu0 %v679, 64
    %v4193 = vpop.permute.xlu0 %4192
    %4194 = vrot.lane.b32.xlu0 %v680, 64
    %v4195 = vpop.permute.xlu0 %4194
    %4196 = vrot.lane.b32.xlu0 %v681, 64
    %v4197 = vpop.permute.xlu0 %4196
    %4198 = vrot.lane.b32.xlu0 %v682, 64
    %v4199 = vpop.permute.xlu0 %4198
    %4200 = vrot.lane.b32.xlu0 %v683, 64
    %v4201 = vpop.permute.xlu0 %4200
    %4202 = vrot.lane.b32.xlu0 %v684, 64
    %v4203 = vpop.permute.xlu0 %4202
    %4204 = vrot.lane.b32.xlu0 %v685, 64
    %v4205 = vpop.permute.xlu0 %4204
    %4206 = vrot.lane.b32.xlu0 %v686, 64
    %v4207 = vpop.permute.xlu0 %4206
    %4208 = vrot.lane.b32.xlu0 %v687, 64
    %v4209 = vpop.permute.xlu0 %4208
    %4210 = vrot.lane.b32.xlu0 %v688, 64
    %v4211 = vpop.permute.xlu0 %4210
    %4212 = vrot.lane.b32.xlu0 %v689, 64
    %v4213 = vpop.permute.xlu0 %4212
    %4214 = vrot.lane.b32.xlu0 %v690, 64
    %v4215 = vpop.permute.xlu0 %4214
    %4216 = vrot.lane.b32.xlu0 %v691, 64
    %v4217 = vpop.permute.xlu0 %4216
    %4218 = vrot.lane.b32.xlu0 %v692, 64
    %v4219 = vpop.permute.xlu0 %4218
    %4220 = vrot.lane.b32.xlu0 %v693, 64
    %v4221 = vpop.permute.xlu0 %4220
    %4222 = vrot.lane.b32.xlu0 %v694, 64
    %v4223 = vpop.permute.xlu0 %4222
    %4224 = vrot.lane.b32.xlu0 %v695, 64
    %v4225 = vpop.permute.xlu0 %4224
    %4226 = vrot.lane.b32.xlu0 %v696, 64
    %v4227 = vpop.permute.xlu0 %4226
    %4228 = vrot.lane.b32.xlu0 %v697, 64
    %v4229 = vpop.permute.xlu0 %4228
    %4230 = vrot.lane.b32.xlu0 %v698, 64
    %v4231 = vpop.permute.xlu0 %4230
    %4232 = vrot.lane.b32.xlu0 %v699, 64
    %v4233 = vpop.permute.xlu0 %4232
    %4234 = vrot.lane.b32.xlu0 %v700, 64
    %v4235 = vpop.permute.xlu0 %4234
    %4236 = vrot.lane.b32.xlu0 %v701, 64
    %v4237 = vpop.permute.xlu0 %4236
    %4238 = vrot.lane.b32.xlu0 %v706, 64
    %v4239 = vpop.permute.xlu0 %4238
    %4240 = vrot.lane.b32.xlu0 %v707, 64
    %v4241 = vpop.permute.xlu0 %4240
    %4242 = vrot.lane.b32.xlu0 %v708, 64
    %v4243 = vpop.permute.xlu0 %4242
    %4244 = vrot.lane.b32.xlu0 %v709, 64
    %v4245 = vpop.permute.xlu0 %4244
    %4246 = vrot.lane.b32.xlu0 %v710, 64
    %v4247 = vpop.permute.xlu0 %4246
    %4248 = vrot.lane.b32.xlu0 %v711, 64
    %v4249 = vpop.permute.xlu0 %4248
    %4250 = vrot.lane.b32.xlu0 %v712, 64
    %v4251 = vpop.permute.xlu0 %4250
    %4252 = vrot.lane.b32.xlu0 %v713, 64
    %v4253 = vpop.permute.xlu0 %4252
    %4254 = vrot.lane.b32.xlu0 %v714, 64
    %v4255 = vpop.permute.xlu0 %4254
    %4256 = vrot.lane.b32.xlu0 %v715, 64
    %v4257 = vpop.permute.xlu0 %4256
    %4258 = vrot.lane.b32.xlu0 %v716, 64
    %v4259 = vpop.permute.xlu0 %4258
    %4260 = vrot.lane.b32.xlu0 %v717, 64
    %v4261 = vpop.permute.xlu0 %4260
    %4262 = vrot.lane.b32.xlu0 %v718, 64
    %v4263 = vpop.permute.xlu0 %4262
    %4264 = vrot.lane.b32.xlu0 %v719, 64
    %v4265 = vpop.permute.xlu0 %4264
    %4266 = vrot.lane.b32.xlu0 %v720, 64
    %v4267 = vpop.permute.xlu0 %4266
    %4268 = vrot.lane.b32.xlu0 %v721, 64
    %v4269 = vpop.permute.xlu0 %4268
    %4270 = vrot.lane.b32.xlu0 %v722, 64
    %v4271 = vpop.permute.xlu0 %4270
    %4272 = vrot.lane.b32.xlu0 %v723, 64
    %v4273 = vpop.permute.xlu0 %4272
    %4274 = vrot.lane.b32.xlu0 %v724, 64
    %v4275 = vpop.permute.xlu0 %4274
    %4276 = vrot.lane.b32.xlu0 %v725, 64
    %v4277 = vpop.permute.xlu0 %4276
    %4278 = vrot.lane.b32.xlu0 %v726, 64
    %v4279 = vpop.permute.xlu0 %4278
    %4280 = vrot.lane.b32.xlu0 %v727, 64
    %v4281 = vpop.permute.xlu0 %4280
    %4282 = vrot.lane.b32.xlu0 %v728, 64
    %v4283 = vpop.permute.xlu0 %4282
    %4284 = vrot.lane.b32.xlu0 %v729, 64
    %v4285 = vpop.permute.xlu0 %4284
    %4286 = vrot.lane.b32.xlu0 %v730, 64
    %v4287 = vpop.permute.xlu0 %4286
    %4288 = vrot.lane.b32.xlu0 %v731, 64
    %v4289 = vpop.permute.xlu0 %4288
    %4290 = vrot.lane.b32.xlu0 %v732, 64
    %v4291 = vpop.permute.xlu0 %4290
    %4292 = vrot.lane.b32.xlu0 %v733, 64
    %v4293 = vpop.permute.xlu0 %4292
    %4415 = vrot.lane.b32.xlu0 %v3324, 96
    %v4416 = vpop.permute.xlu0 %4415
    %4417 = vrot.lane.b32.xlu0 %v3325, 96
    %v4418 = vpop.permute.xlu0 %4417
    %4419 = vrot.lane.b32.xlu0 %v3326, 96
    %v4420 = vpop.permute.xlu0 %4419
    %4421 = vrot.lane.b32.xlu0 %v3327, 96
    %v4422 = vpop.permute.xlu0 %4421
    %4423 = vrot.lane.b32.xlu0 %v3328, 96
    %v4424 = vpop.permute.xlu0 %4423
    %4425 = vrot.lane.b32.xlu0 %v3329, 96
    %v4426 = vpop.permute.xlu0 %4425
    %4427 = vrot.lane.b32.xlu0 %v3330, 96
    %v4428 = vpop.permute.xlu0 %4427
    %4429 = vrot.lane.b32.xlu0 %v3331, 96
    %v4430 = vpop.permute.xlu0 %4429
    %4431 = vrot.lane.b32.xlu0 %v3332, 96
    %v4432 = vpop.permute.xlu0 %4431
    %4433 = vrot.lane.b32.xlu0 %v3333, 96
    %v4434 = vpop.permute.xlu0 %4433
    %4435 = vrot.lane.b32.xlu0 %v3334, 96
    %v4436 = vpop.permute.xlu0 %4435
    %4437 = vrot.lane.b32.xlu0 %v3335, 96
    %v4438 = vpop.permute.xlu0 %4437
    %4439 = vrot.lane.b32.xlu0 %v3336, 96
    %v4440 = vpop.permute.xlu0 %4439
    %4441 = vrot.lane.b32.xlu0 %v3337, 96
    %v4442 = vpop.permute.xlu0 %4441
    %4443 = vrot.lane.b32.xlu0 %v3338, 96
    %v4444 = vpop.permute.xlu0 %4443
    %4445 = vrot.lane.b32.xlu0 %v3339, 96
    %v4446 = vpop.permute.xlu0 %4445
    %4447 = vrot.lane.b32.xlu0 %v3340, 96
    %v4448 = vpop.permute.xlu0 %4447
    %4449 = vrot.lane.b32.xlu0 %v3341, 96
    %v4450 = vpop.permute.xlu0 %4449
    %4451 = vrot.lane.b32.xlu0 %v3342, 96
    %v4452 = vpop.permute.xlu0 %4451
    %4453 = vrot.lane.b32.xlu0 %v3343, 96
    %v4454 = vpop.permute.xlu0 %4453
    %4455 = vrot.lane.b32.xlu0 %v3344, 96
    %v4456 = vpop.permute.xlu0 %4455
    %4457 = vrot.lane.b32.xlu0 %v3345, 96
    %v4458 = vpop.permute.xlu0 %4457
    %4459 = vrot.lane.b32.xlu0 %v3346, 96
    %v4460 = vpop.permute.xlu0 %4459
    %4461 = vrot.lane.b32.xlu0 %v3347, 96
    %v4462 = vpop.permute.xlu0 %4461
    %4463 = vrot.lane.b32.xlu0 %v3348, 96
    %v4464 = vpop.permute.xlu0 %4463
    %4465 = vrot.lane.b32.xlu0 %v3349, 96
    %v4466 = vpop.permute.xlu0 %4465
    %4467 = vrot.lane.b32.xlu0 %v3350, 96
    %v4468 = vpop.permute.xlu0 %4467
    %4469 = vrot.lane.b32.xlu0 %v3351, 96
    %v4470 = vpop.permute.xlu0 %4469
    %4471 = vrot.lane.b32.xlu0 %v3352, 96
    %v4472 = vpop.permute.xlu0 %4471
    %4473 = vrot.lane.b32.xlu0 %v3353, 96
    %v4474 = vpop.permute.xlu0 %4473
    %4475 = vrot.lane.b32.xlu0 %v3354, 96
    %v4476 = vpop.permute.xlu0 %4475
    %4477 = vrot.lane.b32.xlu0 %v3355, 96
    %v4478 = vpop.permute.xlu0 %4477
    %4479 = vrot.lane.b32.xlu0 %v3364, 96
    %v4480 = vpop.permute.xlu0 %4479
    %4481 = vrot.lane.b32.xlu0 %v3365, 96
    %v4482 = vpop.permute.xlu0 %4481
    %4483 = vrot.lane.b32.xlu0 %v3366, 96
    %v4484 = vpop.permute.xlu0 %4483
    %4485 = vrot.lane.b32.xlu0 %v3367, 96
    %v4486 = vpop.permute.xlu0 %4485
    %4487 = vrot.lane.b32.xlu0 %v3368, 96
    %v4488 = vpop.permute.xlu0 %4487
    %4489 = vrot.lane.b32.xlu0 %v3369, 96
    %v4490 = vpop.permute.xlu0 %4489
    %4491 = vrot.lane.b32.xlu0 %v3370, 96
    %v4492 = vpop.permute.xlu0 %4491
    %4493 = vrot.lane.b32.xlu0 %v3371, 96
    %v4494 = vpop.permute.xlu0 %4493
    %4495 = vrot.lane.b32.xlu0 %v3372, 96
    %v4496 = vpop.permute.xlu0 %4495
    %4497 = vrot.lane.b32.xlu0 %v3373, 96
    %v4498 = vpop.permute.xlu0 %4497
    %4499 = vrot.lane.b32.xlu0 %v3374, 96
    %v4500 = vpop.permute.xlu0 %4499
    %4501 = vrot.lane.b32.xlu0 %v3375, 96
    %v4502 = vpop.permute.xlu0 %4501
    %4503 = vrot.lane.b32.xlu0 %v3376, 96
    %v4504 = vpop.permute.xlu0 %4503
    %4505 = vrot.lane.b32.xlu0 %v3377, 96
    %v4506 = vpop.permute.xlu0 %4505
    %4507 = vrot.lane.b32.xlu0 %v3378, 96
    %v4508 = vpop.permute.xlu0 %4507
    %4509 = vrot.lane.b32.xlu0 %v3379, 96
    %v4510 = vpop.permute.xlu0 %4509
    %4511 = vrot.lane.b32.xlu0 %v3380, 96
    %v4512 = vpop.permute.xlu0 %4511
    %4513 = vrot.lane.b32.xlu0 %v3381, 96
    %v4514 = vpop.permute.xlu0 %4513
    %4515 = vrot.lane.b32.xlu0 %v3382, 96
    %v4516 = vpop.permute.xlu0 %4515
    %4517 = vrot.lane.b32.xlu0 %v3383, 96
    %v4518 = vpop.permute.xlu0 %4517
    %4519 = vrot.lane.b32.xlu0 %v3384, 96
    %v4520 = vpop.permute.xlu0 %4519
    %4521 = vrot.lane.b32.xlu0 %v3385, 96
    %v4522 = vpop.permute.xlu0 %4521
    %4523 = vrot.lane.b32.xlu0 %v3386, 96
    %v4524 = vpop.permute.xlu0 %4523
    %4525 = vrot.lane.b32.xlu0 %v3387, 96
    %v4526 = vpop.permute.xlu0 %4525
    %4527 = vrot.lane.b32.xlu0 %v3388, 96
    %v4528 = vpop.permute.xlu0 %4527
    %4529 = vrot.lane.b32.xlu0 %v3389, 96
    %v4530 = vpop.permute.xlu0 %4529
    %4531 = vrot.lane.b32.xlu0 %v3390, 96
    %v4532 = vpop.permute.xlu0 %4531
    %4533 = vrot.lane.b32.xlu0 %v3391, 96
    %v4534 = vpop.permute.xlu0 %4533
    %4535 = vrot.lane.b32.xlu0 %v3392, 96
    %v4536 = vpop.permute.xlu0 %4535
    %4537 = vrot.lane.b32.xlu0 %v3393, 96
    %v4538 = vpop.permute.xlu0 %4537
    %4539 = vrot.lane.b32.xlu0 %v3394, 96
    %v4540 = vpop.permute.xlu0 %4539
    %4541 = vrot.lane.b32.xlu0 %v3395, 96
    %v4542 = vpop.permute.xlu0 %4541
    %v4607 = vsel %vm96, %v2284, %v3989
    %v4608 = vsel %vm96, %v2285, %v3991
    %v4609 = vsel %vm96, %v2286, %v3993
    %v4610 = vsel %vm96, %v2287, %v3995
    %v4611 = vsel %vm96, %v2288, %v3997
    %v4612 = vsel %vm96, %v2289, %v3999
    %v4613 = vsel %vm96, %v2290, %v4001
    %v4614 = vsel %vm96, %v2291, %v4003
    %v4615 = vsel %vm96, %v2292, %v4005
    %v4616 = vsel %vm96, %v2293, %v4007
    %v4617 = vsel %vm96, %v2294, %v4009
    %v4618 = vsel %vm96, %v2295, %v4011
    %v4619 = vsel %vm96, %v2296, %v4013
    %v4620 = vsel %vm96, %v2297, %v4015
    %v4621 = vsel %vm96, %v2298, %v4017
    %v4622 = vsel %vm96, %v2299, %v4019
    %v4623 = vsel %vm96, %v2300, %v4021
    %v4624 = vsel %vm96, %v2301, %v4023
    %v4625 = vsel %vm96, %v2302, %v4025
    %v4626 = vsel %vm96, %v2303, %v4027
    %v4627 = vsel %vm96, %v2304, %v4029
    %v4628 = vsel %vm96, %v2305, %v4031
    %v4629 = vsel %vm96, %v2306, %v4033
    %v4630 = vsel %vm96, %v2307, %v4035
    %v4631 = vsel %vm96, %v2308, %v4037
    %v4632 = vsel %vm96, %v2309, %v4039
    %v4633 = vsel %vm96, %v2310, %v4041
    %v4634 = vsel %vm96, %v2311, %v4043
    %v4635 = vsel %vm96, %v2312, %v4045
    %v4636 = vsel %vm96, %v2313, %v4047
    %v4637 = vsel %vm96, %v2314, %v4049
    %v4638 = vsel %vm96, %v2315, %v4051
    %v4639 = vsel %vm96, %v2324, %v4053
    %v4640 = vsel %vm96, %v2325, %v4055
    %v4641 = vsel %vm96, %v2326, %v4057
    %v4642 = vsel %vm96, %v2327, %v4059
    %v4643 = vsel %vm96, %v2328, %v4061
    %v4644 = vsel %vm96, %v2329, %v4063
    %v4645 = vsel %vm96, %v2330, %v4065
    %v4646 = vsel %vm96, %v2331, %v4067
    %v4647 = vsel %vm96, %v2332, %v4069
    %v4648 = vsel %vm96, %v2333, %v4071
    %v4649 = vsel %vm96, %v2334, %v4073
    %v4650 = vsel %vm96, %v2335, %v4075
    %v4651 = vsel %vm96, %v2336, %v4077
    %v4652 = vsel %vm96, %v2337, %v4079
    %v4653 = vsel %vm96, %v2338, %v4081
    %v4654 = vsel %vm96, %v2339, %v4083
    %v4655 = vsel %vm96, %v2340, %v4085
    %v4656 = vsel %vm96, %v2341, %v4087
    %v4657 = vsel %vm96, %v2342, %v4089
    %v4658 = vsel %vm96, %v2343, %v4091
    %v4659 = vsel %vm96, %v2344, %v4093
    %v4660 = vsel %vm96, %v2345, %v4095
    %v4661 = vsel %vm96, %v2346, %v4097
    %v4662 = vsel %vm96, %v2347, %v4099
    %v4663 = vsel %vm96, %v2348, %v4101
    %v4664 = vsel %vm96, %v2349, %v4103
    %v4665 = vsel %vm96, %v2350, %v4105
    %v4666 = vsel %vm96, %v2351, %v4107
    %v4667 = vsel %vm96, %v2352, %v4109
    %v4668 = vsel %vm96, %v2353, %v4111
    %v4669 = vsel %vm96, %v2354, %v4113
    %v4670 = vsel %vm96, %v2355, %v4115
    %vm4671 = vcmask 523264
    %v4672 = vsel %vm4671, %v4607, %v4181
    %v4673 = vsel %vm4671, %v4608, %v4181
    %v4674 = vsel %vm4671, %v4609, %v4181
    %v4675 = vsel %vm4671, %v4610, %v4181
    %v4676 = vsel %vm4671, %v4611, %v4183
    %v4677 = vsel %vm4671, %v4612, %v4185
    %v4678 = vsel %vm4671, %v4613, %v4187
    %v4679 = vsel %vm4671, %v4614, %v4189
    %v4680 = vsel %vm4671, %v4615, %v4191
    %v4681 = vsel %vm4671, %v4616, %v4193
    %v4682 = vsel %vm4671, %v4617, %v4195
    %v4683 = vsel %vm4671, %v4618, %v4197
    %v4684 = vsel %vm4671, %v4619, %v4199
    %v4685 = vsel %vm4671, %v4620, %v4201
    %v4686 = vsel %vm4671, %v4621, %v4203
    %v4687 = vsel %vm4671, %v4622, %v4205
    %v4688 = vsel %vm4671, %v4623, %v4207
    %v4689 = vsel %vm4671, %v4624, %v4209
    %v4690 = vsel %vm4671, %v4625, %v4211
    %v4691 = vsel %vm4671, %v4626, %v4213
    %v4692 = vsel %vm4671, %v4627, %v4215
    %v4693 = vsel %vm4671, %v4628, %v4217
    %v4694 = vsel %vm4671, %v4629, %v4219
    %v4695 = vsel %vm4671, %v4630, %v4221
    %v4696 = vsel %vm4671, %v4631, %v4223
    %v4697 = vsel %vm4671, %v4632, %v4225
    %v4698 = vsel %vm4671, %v4633, %v4227
    %v4699 = vsel %vm4671, %v4634, %v4229
    %v4700 = vsel %vm4671, %v4635, %v4231
    %v4701 = vsel %vm4671, %v4636, %v4233
    %v4702 = vsel %vm4671, %v4637, %v4235
    %v4703 = vsel %vm4671, %v4638, %v4237
    %v4704 = vsel %vm4671, %v4639, %v4181
    %v4705 = vsel %vm4671, %v4640, %v4181
    %v4706 = vsel %vm4671, %v4641, %v4181
    %v4707 = vsel %vm4671, %v4642, %v4181
    %v4708 = vsel %vm4671, %v4643, %v4239
    %v4709 = vsel %vm4671, %v4644, %v4241
    %v4710 = vsel %vm4671, %v4645, %v4243
    %v4711 = vsel %vm4671, %v4646, %v4245
    %v4712 = vsel %vm4671, %v4647, %v4247
    %v4713 = vsel %vm4671, %v4648, %v4249
    %v4714 = vsel %vm4671, %v4649, %v4251
    %v4715 = vsel %vm4671, %v4650, %v4253
    %v4716 = vsel %vm4671, %v4651, %v4255
    %v4717 = vsel %vm4671, %v4652, %v4257
    %v4718 = vsel %vm4671, %v4653, %v4259
    %v4719 = vsel %vm4671, %v4654, %v4261
    %v4720 = vsel %vm4671, %v4655, %v4263
    %v4721 = vsel %vm4671, %v4656, %v4265
    %v4722 = vsel %vm4671, %v4657, %v4267
    %v4723 = vsel %vm4671, %v4658, %v4269
    %v4724 = vsel %vm4671, %v4659, %v4271
    %v4725 = vsel %vm4671, %v4660, %v4273
    %v4726 = vsel %vm4671, %v4661, %v4275
    %v4727 = vsel %vm4671, %v4662, %v4277
    %v4728 = vsel %vm4671, %v4663, %v4279
    %v4729 = vsel %vm4671, %v4664, %v4281
    %v4730 = vsel %vm4671, %v4665, %v4283
    %v4731 = vsel %vm4671, %v4666, %v4285
    %v4732 = vsel %vm4671, %v4667, %v4287
    %v4733 = vsel %vm4671, %v4668, %v4289
    %v4734 = vsel %vm4671, %v4669, %v4291
    %v4735 = vsel %vm4671, %v4670, %v4293
    %vm4736 = vcmask 785408
    %v4737 = vsel %vm4736, %v4672, %v4416
    %v4738 = vsel %vm4736, %v4673, %v4418
    %v4739 = vsel %vm4736, %v4674, %v4420
    %v4740 = vsel %vm4736, %v4675, %v4422
    %v4741 = vsel %vm4736, %v4676, %v4424
    %v4742 = vsel %vm4736, %v4677, %v4426
    %v4743 = vsel %vm4736, %v4678, %v4428
    %v4744 = vsel %vm4736, %v4679, %v4430
    %v4745 = vsel %vm4736, %v4680, %v4432
    %v4746 = vsel %vm4736, %v4681, %v4434
    %v4747 = vsel %vm4736, %v4682, %v4436
    %v4748 = vsel %vm4736, %v4683, %v4438
    %v4749 = vsel %vm4736, %v4684, %v4440
    %v4750 = vsel %vm4736, %v4685, %v4442
    %v4751 = vsel %vm4736, %v4686, %v4444
    %v4752 = vsel %vm4736, %v4687, %v4446
    %v4753 = vsel %vm4736, %v4688, %v4448
    %v4754 = vsel %vm4736, %v4689, %v4450
    %v4755 = vsel %vm4736, %v4690, %v4452
    %v4756 = vsel %vm4736, %v4691, %v4454
    %v4757 = vsel %vm4736, %v4692, %v4456
    %v4758 = vsel %vm4736, %v4693, %v4458
    %v4759 = vsel %vm4736, %v4694, %v4460
    %v4760 = vsel %vm4736, %v4695, %v4462
    %v4761 = vsel %vm4736, %v4696, %v4464
    %v4762 = vsel %vm4736, %v4697, %v4466
    %v4763 = vsel %vm4736, %v4698, %v4468
    %v4764 = vsel %vm4736, %v4699, %v4470
    %v4765 = vsel %vm4736, %v4700, %v4472
    %v4766 = vsel %vm4736, %v4701, %v4474
    %v4767 = vsel %vm4736, %v4702, %v4476
    %v4768 = vsel %vm4736, %v4703, %v4478
    %v4769 = vsel %vm4736, %v4704, %v4480
    %v4770 = vsel %vm4736, %v4705, %v4482
    %v4771 = vsel %vm4736, %v4706, %v4484
    %v4772 = vsel %vm4736, %v4707, %v4486
    %v4773 = vsel %vm4736, %v4708, %v4488
    %v4774 = vsel %vm4736, %v4709, %v4490
    %v4775 = vsel %vm4736, %v4710, %v4492
    %v4776 = vsel %vm4736, %v4711, %v4494
    %v4777 = vsel %vm4736, %v4712, %v4496
    %v4778 = vsel %vm4736, %v4713, %v4498
    %v4779 = vsel %vm4736, %v4714, %v4500
    %v4780 = vsel %vm4736, %v4715, %v4502
    %v4781 = vsel %vm4736, %v4716, %v4504
    %v4782 = vsel %vm4736, %v4717, %v4506
    %v4783 = vsel %vm4736, %v4718, %v4508
    %v4784 = vsel %vm4736, %v4719, %v4510
    %v4785 = vsel %vm4736, %v4720, %v4512
    %v4786 = vsel %vm4736, %v4721, %v4514
    %v4787 = vsel %vm4736, %v4722, %v4516
    %v4788 = vsel %vm4736, %v4723, %v4518
    %v4789 = vsel %vm4736, %v4724, %v4520
    %v4790 = vsel %vm4736, %v4725, %v4522
    %v4791 = vsel %vm4736, %v4726, %v4524
    %v4792 = vsel %vm4736, %v4727, %v4526
    %v4793 = vsel %vm4736, %v4728, %v4528
    %v4794 = vsel %vm4736, %v4729, %v4530
    %v4795 = vsel %vm4736, %v4730, %v4532
    %v4796 = vsel %vm4736, %v4731, %v4534
    %v4797 = vsel %vm4736, %v4732, %v4536
    %v4798 = vsel %vm4736, %v4733, %v4538
    %v4799 = vsel %vm4736, %v4734, %v4540
    %v4800 = vsel %vm4736, %v4735, %v4542
    %4801 = vst [vmem:[#allocation2] sm:$0xff] %v4737
    %4802 = vst [vmem:[#allocation2 + $0x38] sm:$0xff] %v4738
    %4803 = vst [vmem:[#allocation2 + $0x70] sm:$0xff] %v4739
    %4804 = vst [vmem:[#allocation2 + $0xa8] sm:$0xff] %v4740
    %4805 = vst [vmem:[#allocation2 + $0xe0] sm:$0xff] %v4741
    %4806 = vst [vmem:[#allocation2 + $0x118] sm:$0xff] %v4742
    %4807 = vst [vmem:[#allocation2 + $0x150] sm:$0xff] %v4743
    %4808 = vst [vmem:[#allocation2 + $0x188] sm:$0xff] %v4744
    %4809 = vst [vmem:[#allocation2 + $0x1c0] sm:$0xff] %v4745
    %4810 = vst [vmem:[#allocation2 + $0x1f8] sm:$0xff] %v4746
    %4811 = vst [vmem:[#allocation2 + $0x230] sm:$0xff] %v4747
    %4812 = vst [vmem:[#allocation2 + $0x268] sm:$0xff] %v4748
    %4813 = vst [vmem:[#allocation2 + $0x2a0] sm:$0xff] %v4749
    %4814 = vst [vmem:[#allocation2 + $0x2d8] sm:$0xff] %v4750
    %4815 = vst [vmem:[#allocation2 + $0x310] sm:$0xff] %v4751
    %4816 = vst [vmem:[#allocation2 + $0x348] sm:$0xff] %v4752
    %4817 = vst [vmem:[#allocation2 + $0x380] sm:$0xff] %v4753
    %4818 = vst [vmem:[#allocation2 + $0x3b8] sm:$0xff] %v4754
    %4819 = vst [vmem:[#allocation2 + $0x3f0] sm:$0xff] %v4755
    %4820 = vst [vmem:[#allocation2 + $0x428] sm:$0xff] %v4756
    %4821 = vst [vmem:[#allocation2 + $0x460] sm:$0xff] %v4757
    %4822 = vst [vmem:[#allocation2 + $0x498] sm:$0xff] %v4758
    %4823 = vst [vmem:[#allocation2 + $0x4d0] sm:$0xff] %v4759
    %4824 = vst [vmem:[#allocation2 + $0x508] sm:$0xff] %v4760
    %4825 = vst [vmem:[#allocation2 + $0x540] sm:$0xff] %v4761
    %4826 = vst [vmem:[#allocation2 + $0x578] sm:$0xff] %v4762
    %4827 = vst [vmem:[#allocation2 + $0x5b0] sm:$0xff] %v4763
    %4828 = vst [vmem:[#allocation2 + $0x5e8] sm:$0xff] %v4764
    %4829 = vst [vmem:[#allocation2 + $0x620] sm:$0xff] %v4765
    %4830 = vst [vmem:[#allocation2 + $0x658] sm:$0xff] %v4766
    %4831 = vst [vmem:[#allocation2 + $0x690] sm:$0xff] %v4767
    %4832 = vst [vmem:[#allocation2 + $0x6c8] sm:$0xff] %v4768
    %4833 = vst [vmem:[#allocation2 + $0x700] sm:$0xff] %v4769
    %4834 = vst [vmem:[#allocation2 + $0x738] sm:$0xff] %v4770
    %4835 = vst [vmem:[#allocation2 + $0x770] sm:$0xff] %v4771
    %4836 = vst [vmem:[#allocation2 + $0x7a8] sm:$0xff] %v4772
    %4837 = vst [vmem:[#allocation2 + $0x7e0] sm:$0xff] %v4773
    %4838 = vst [vmem:[#allocation2 + $0x818] sm:$0xff] %v4774
    %4839 = vst [vmem:[#allocation2 + $0x850] sm:$0xff] %v4775
    %4840 = vst [vmem:[#allocation2 + $0x888] sm:$0xff] %v4776
    %4841 = vst [vmem:[#allocation2 + $0x8c0] sm:$0xff] %v4777
    %4842 = vst [vmem:[#allocation2 + $0x8f8] sm:$0xff] %v4778
    %4843 = vst [vmem:[#allocation2 + $0x930] sm:$0xff] %v4779
    %4844 = vst [vmem:[#allocation2 + $0x968] sm:$0xff] %v4780
    %4845 = vst [vmem:[#allocation2 + $0x9a0] sm:$0xff] %v4781
    %4846 = vst [vmem:[#allocation2 + $0x9d8] sm:$0xff] %v4782
    %4847 = vst [vmem:[#allocation2 + $0xa10] sm:$0xff] %v4783
    %4848 = vst [vmem:[#allocation2 + $0xa48] sm:$0xff] %v4784
    %4849 = vst [vmem:[#allocation2 + $0xa80] sm:$0xff] %v4785
    %4850 = vst [vmem:[#allocation2 + $0xab8] sm:$0xff] %v4786
    %4851 = vst [vmem:[#allocation2 + $0xaf0] sm:$0xff] %v4787
    %4852 = vst [vmem:[#allocation2 + $0xb28] sm:$0xff] %v4788
    %4853 = vst [vmem:[#allocation2 + $0xb60] sm:$0xff] %v4789
    %4854 = vst [vmem:[#allocation2 + $0xb98] sm:$0xff] %v4790
    %4855 = vst [vmem:[#allocation2 + $0xbd0] sm:$0xff] %v4791
    %4856 = vst [vmem:[#allocation2 + $0xc08] sm:$0xff] %v4792
    %4857 = vst [vmem:[#allocation2 + $0xc40] sm:$0xff] %v4793
    %4858 = vst [vmem:[#allocation2 + $0xc78] sm:$0xff] %v4794
    %4859 = vst [vmem:[#allocation2 + $0xcb0] sm:$0xff] %v4795
    %4860 = vst [vmem:[#allocation2 + $0xce8] sm:$0xff] %v4796
    %4861 = vst [vmem:[#allocation2 + $0xd20] sm:$0xff] %v4797
    %4862 = vst [vmem:[#allocation2 + $0xd58] sm:$0xff] %v4798
    %4863 = vst [vmem:[#allocation2 + $0xd90] sm:$0xff] %v4799
    %4864 = vst [vmem:[#allocation2 + $0xdc8] sm:$0xff] %v4800
    %4929 = vrot.lane.b32.xlu0 %v2286, 32
    %v4930 = vpop.permute.xlu0 %4929
    %4931 = vrot.lane.b32.xlu0 %v2287, 32
    %v4932 = vpop.permute.xlu0 %4931
    %4933 = vrot.lane.b32.xlu0 %v2288, 32
    %v4934 = vpop.permute.xlu0 %4933
    %4935 = vrot.lane.b32.xlu0 %v2289, 32
    %v4936 = vpop.permute.xlu0 %4935
    %4937 = vrot.lane.b32.xlu0 %v2290, 32
    %v4938 = vpop.permute.xlu0 %4937
    %4939 = vrot.lane.b32.xlu0 %v2291, 32
    %v4940 = vpop.permute.xlu0 %4939
    %4941 = vrot.lane.b32.xlu0 %v2292, 32
    %v4942 = vpop.permute.xlu0 %4941
    %4943 = vrot.lane.b32.xlu0 %v2293, 32
    %v4944 = vpop.permute.xlu0 %4943
    %4945 = vrot.lane.b32.xlu0 %v2294, 32
    %v4946 = vpop.permute.xlu0 %4945
    %4947 = vrot.lane.b32.xlu0 %v2295, 32
    %v4948 = vpop.permute.xlu0 %4947
    %4949 = vrot.lane.b32.xlu0 %v2296, 32
    %v4950 = vpop.permute.xlu0 %4949
    %4951 = vrot.lane.b32.xlu0 %v2297, 32
    %v4952 = vpop.permute.xlu0 %4951
    %4953 = vrot.lane.b32.xlu0 %v2298, 32
    %v4954 = vpop.permute.xlu0 %4953
    %4955 = vrot.lane.b32.xlu0 %v2299, 32
    %v4956 = vpop.permute.xlu0 %4955
    %4957 = vrot.lane.b32.xlu0 %v2300, 32
    %v4958 = vpop.permute.xlu0 %4957
    %4959 = vrot.lane.b32.xlu0 %v2301, 32
    %v4960 = vpop.permute.xlu0 %4959
    %4961 = vrot.lane.b32.xlu0 %v2302, 32
    %v4962 = vpop.permute.xlu0 %4961
    %4963 = vrot.lane.b32.xlu0 %v2303, 32
    %v4964 = vpop.permute.xlu0 %4963
    %4965 = vrot.lane.b32.xlu0 %v2304, 32
    %v4966 = vpop.permute.xlu0 %4965
    %4967 = vrot.lane.b32.xlu0 %v2305, 32
    %v4968 = vpop.permute.xlu0 %4967
    %4969 = vrot.lane.b32.xlu0 %v2306, 32
    %v4970 = vpop.permute.xlu0 %4969
    %4971 = vrot.lane.b32.xlu0 %v2307, 32
    %v4972 = vpop.permute.xlu0 %4971
    %4973 = vrot.lane.b32.xlu0 %v2308, 32
    %v4974 = vpop.permute.xlu0 %4973
    %4975 = vrot.lane.b32.xlu0 %v2309, 32
    %v4976 = vpop.permute.xlu0 %4975
    %4977 = vrot.lane.b32.xlu0 %v2310, 32
    %v4978 = vpop.permute.xlu0 %4977
    %4979 = vrot.lane.b32.xlu0 %v2311, 32
    %v4980 = vpop.permute.xlu0 %4979
    %4981 = vrot.lane.b32.xlu0 %v2312, 32
    %v4982 = vpop.permute.xlu0 %4981
    %4983 = vrot.lane.b32.xlu0 %v2313, 32
    %v4984 = vpop.permute.xlu0 %4983
    %4985 = vrot.lane.b32.xlu0 %v2314, 32
    %v4986 = vpop.permute.xlu0 %4985
    %4987 = vrot.lane.b32.xlu0 %v2315, 32
    %v4988 = vpop.permute.xlu0 %4987
    %4989 = vrot.lane.b32.xlu0 %v2316, 32
    %v4990 = vpop.permute.xlu0 %4989
    %4991 = vrot.lane.b32.xlu0 %v2317, 32
    %v4992 = vpop.permute.xlu0 %4991
    %4993 = vrot.lane.b32.xlu0 %v2326, 32
    %v4994 = vpop.permute.xlu0 %4993
    %4995 = vrot.lane.b32.xlu0 %v2327, 32
    %v4996 = vpop.permute.xlu0 %4995
    %4997 = vrot.lane.b32.xlu0 %v2328, 32
    %v4998 = vpop.permute.xlu0 %4997
    %4999 = vrot.lane.b32.xlu0 %v2329, 32
    %v5000 = vpop.permute.xlu0 %4999
    %5001 = vrot.lane.b32.xlu0 %v2330, 32
    %v5002 = vpop.permute.xlu0 %5001
    %5003 = vrot.lane.b32.xlu0 %v2331, 32
    %v5004 = vpop.permute.xlu0 %5003
    %5005 = vrot.lane.b32.xlu0 %v2332, 32
    %v5006 = vpop.permute.xlu0 %5005
    %5007 = vrot.lane.b32.xlu0 %v2333, 32
    %v5008 = vpop.permute.xlu0 %5007
    %5009 = vrot.lane.b32.xlu0 %v2334, 32
    %v5010 = vpop.permute.xlu0 %5009
    %5011 = vrot.lane.b32.xlu0 %v2335, 32
    %v5012 = vpop.permute.xlu0 %5011
    %5013 = vrot.lane.b32.xlu0 %v2336, 32
    %v5014 = vpop.permute.xlu0 %5013
    %5015 = vrot.lane.b32.xlu0 %v2337, 32
    %v5016 = vpop.permute.xlu0 %5015
    %5017 = vrot.lane.b32.xlu0 %v2338, 32
    %v5018 = vpop.permute.xlu0 %5017
    %5019 = vrot.lane.b32.xlu0 %v2339, 32
    %v5020 = vpop.permute.xlu0 %5019
    %5021 = vrot.lane.b32.xlu0 %v2340, 32
    %v5022 = vpop.permute.xlu0 %5021
    %5023 = vrot.lane.b32.xlu0 %v2341, 32
    %v5024 = vpop.permute.xlu0 %5023
    %5025 = vrot.lane.b32.xlu0 %v2342, 32
    %v5026 = vpop.permute.xlu0 %5025
    %5027 = vrot.lane.b32.xlu0 %v2343, 32
    %v5028 = vpop.permute.xlu0 %5027
    %5029 = vrot.lane.b32.xlu0 %v2344, 32
    %v5030 = vpop.permute.xlu0 %5029
    %5031 = vrot.lane.b32.xlu0 %v2345, 32
    %v5032 = vpop.permute.xlu0 %5031
    %5033 = vrot.lane.b32.xlu0 %v2346, 32
    %v5034 = vpop.permute.xlu0 %5033
    %5035 = vrot.lane.b32.xlu0 %v2347, 32
    %v5036 = vpop.permute.xlu0 %5035
    %5037 = vrot.lane.b32.xlu0 %v2348, 32
    %v5038 = vpop.permute.xlu0 %5037
    %5039 = vrot.lane.b32.xlu0 %v2349, 32
    %v5040 = vpop.permute.xlu0 %5039
    %5041 = vrot.lane.b32.xlu0 %v2350, 32
    %v5042 = vpop.permute.xlu0 %5041
    %5043 = vrot.lane.b32.xlu0 %v2351, 32
    %v5044 = vpop.permute.xlu0 %5043
    %5045 = vrot.lane.b32.xlu0 %v2352, 32
    %v5046 = vpop.permute.xlu0 %5045
    %5047 = vrot.lane.b32.xlu0 %v2353, 32
    %v5048 = vpop.permute.xlu0 %5047
    %5049 = vrot.lane.b32.xlu0 %v2354, 32
    %v5050 = vpop.permute.xlu0 %5049
    %5051 = vrot.lane.b32.xlu0 %v2355, 32
    %v5052 = vpop.permute.xlu0 %5051
    %5053 = vrot.lane.b32.xlu0 %v2356, 32
    %v5054 = vpop.permute.xlu0 %5053
    %5055 = vrot.lane.b32.xlu0 %v2357, 32
    %v5056 = vpop.permute.xlu0 %5055
    %5125 = vrot.lane.b32.xlu0 %v2806, 64
    %v5126 = vpop.permute.xlu0 %5125
    %5127 = vrot.lane.b32.xlu0 %v2807, 64
    %v5128 = vpop.permute.xlu0 %5127
    %5129 = vrot.lane.b32.xlu0 %v2808, 64
    %v5130 = vpop.permute.xlu0 %5129
    %5131 = vrot.lane.b32.xlu0 %v2809, 64
    %v5132 = vpop.permute.xlu0 %5131
    %5133 = vrot.lane.b32.xlu0 %v2810, 64
    %v5134 = vpop.permute.xlu0 %5133
    %5135 = vrot.lane.b32.xlu0 %v2811, 64
    %v5136 = vpop.permute.xlu0 %5135
    %5137 = vrot.lane.b32.xlu0 %v2812, 64
    %v5138 = vpop.permute.xlu0 %5137
    %5139 = vrot.lane.b32.xlu0 %v2813, 64
    %v5140 = vpop.permute.xlu0 %5139
    %5141 = vrot.lane.b32.xlu0 %v2814, 64
    %v5142 = vpop.permute.xlu0 %5141
    %5143 = vrot.lane.b32.xlu0 %v2815, 64
    %v5144 = vpop.permute.xlu0 %5143
    %5145 = vrot.lane.b32.xlu0 %v2816, 64
    %v5146 = vpop.permute.xlu0 %5145
    %5147 = vrot.lane.b32.xlu0 %v2817, 64
    %v5148 = vpop.permute.xlu0 %5147
    %5149 = vrot.lane.b32.xlu0 %v2818, 64
    %v5150 = vpop.permute.xlu0 %5149
    %5151 = vrot.lane.b32.xlu0 %v2819, 64
    %v5152 = vpop.permute.xlu0 %5151
    %5153 = vrot.lane.b32.xlu0 %v2820, 64
    %v5154 = vpop.permute.xlu0 %5153
    %5155 = vrot.lane.b32.xlu0 %v2821, 64
    %v5156 = vpop.permute.xlu0 %5155
    %5157 = vrot.lane.b32.xlu0 %v2822, 64
    %v5158 = vpop.permute.xlu0 %5157
    %5159 = vrot.lane.b32.xlu0 %v2823, 64
    %v5160 = vpop.permute.xlu0 %5159
    %5161 = vrot.lane.b32.xlu0 %v2824, 64
    %v5162 = vpop.permute.xlu0 %5161
    %5163 = vrot.lane.b32.xlu0 %v2825, 64
    %v5164 = vpop.permute.xlu0 %5163
    %5165 = vrot.lane.b32.xlu0 %v2826, 64
    %v5166 = vpop.permute.xlu0 %5165
    %5167 = vrot.lane.b32.xlu0 %v2827, 64
    %v5168 = vpop.permute.xlu0 %5167
    %5169 = vrot.lane.b32.xlu0 %v2828, 64
    %v5170 = vpop.permute.xlu0 %5169
    %5171 = vrot.lane.b32.xlu0 %v2829, 64
    %v5172 = vpop.permute.xlu0 %5171
    %5173 = vrot.lane.b32.xlu0 %v2830, 64
    %v5174 = vpop.permute.xlu0 %5173
    %5175 = vrot.lane.b32.xlu0 %v2831, 64
    %v5176 = vpop.permute.xlu0 %5175
    %5177 = vrot.lane.b32.xlu0 %v2832, 64
    %v5178 = vpop.permute.xlu0 %5177
    %5179 = vrot.lane.b32.xlu0 %v2833, 64
    %v5180 = vpop.permute.xlu0 %5179
    %5181 = vrot.lane.b32.xlu0 %v2834, 64
    %v5182 = vpop.permute.xlu0 %5181
    %5183 = vrot.lane.b32.xlu0 %v2835, 64
    %v5184 = vpop.permute.xlu0 %5183
    %5185 = vrot.lane.b32.xlu0 %v2836, 64
    %v5186 = vpop.permute.xlu0 %5185
    %5187 = vrot.lane.b32.xlu0 %v2837, 64
    %v5188 = vpop.permute.xlu0 %5187
    %5189 = vrot.lane.b32.xlu0 %v2846, 64
    %v5190 = vpop.permute.xlu0 %5189
    %5191 = vrot.lane.b32.xlu0 %v2847, 64
    %v5192 = vpop.permute.xlu0 %5191
    %5193 = vrot.lane.b32.xlu0 %v2848, 64
    %v5194 = vpop.permute.xlu0 %5193
    %5195 = vrot.lane.b32.xlu0 %v2849, 64
    %v5196 = vpop.permute.xlu0 %5195
    %5197 = vrot.lane.b32.xlu0 %v2850, 64
    %v5198 = vpop.permute.xlu0 %5197
    %5199 = vrot.lane.b32.xlu0 %v2851, 64
    %v5200 = vpop.permute.xlu0 %5199
    %5201 = vrot.lane.b32.xlu0 %v2852, 64
    %v5202 = vpop.permute.xlu0 %5201
    %5203 = vrot.lane.b32.xlu0 %v2853, 64
    %v5204 = vpop.permute.xlu0 %5203
    %5205 = vrot.lane.b32.xlu0 %v2854, 64
    %v5206 = vpop.permute.xlu0 %5205
    %5207 = vrot.lane.b32.xlu0 %v2855, 64
    %v5208 = vpop.permute.xlu0 %5207
    %5209 = vrot.lane.b32.xlu0 %v2856, 64
    %v5210 = vpop.permute.xlu0 %5209
    %5211 = vrot.lane.b32.xlu0 %v2857, 64
    %v5212 = vpop.permute.xlu0 %5211
    %5213 = vrot.lane.b32.xlu0 %v2858, 64
    %v5214 = vpop.permute.xlu0 %5213
    %5215 = vrot.lane.b32.xlu0 %v2859, 64
    %v5216 = vpop.permute.xlu0 %5215
    %5217 = vrot.lane.b32.xlu0 %v2860, 64
    %v5218 = vpop.permute.xlu0 %5217
    %5219 = vrot.lane.b32.xlu0 %v2861, 64
    %v5220 = vpop.permute.xlu0 %5219
    %5221 = vrot.lane.b32.xlu0 %v2862, 64
    %v5222 = vpop.permute.xlu0 %5221
    %5223 = vrot.lane.b32.xlu0 %v2863, 64
    %v5224 = vpop.permute.xlu0 %5223
    %5225 = vrot.lane.b32.xlu0 %v2864, 64
    %v5226 = vpop.permute.xlu0 %5225
    %5227 = vrot.lane.b32.xlu0 %v2865, 64
    %v5228 = vpop.permute.xlu0 %5227
    %5229 = vrot.lane.b32.xlu0 %v2866, 64
    %v5230 = vpop.permute.xlu0 %5229
    %5231 = vrot.lane.b32.xlu0 %v2867, 64
    %v5232 = vpop.permute.xlu0 %5231
    %5233 = vrot.lane.b32.xlu0 %v2868, 64
    %v5234 = vpop.permute.xlu0 %5233
    %5235 = vrot.lane.b32.xlu0 %v2869, 64
    %v5236 = vpop.permute.xlu0 %5235
    %5237 = vrot.lane.b32.xlu0 %v2870, 64
    %v5238 = vpop.permute.xlu0 %5237
    %5239 = vrot.lane.b32.xlu0 %v2871, 64
    %v5240 = vpop.permute.xlu0 %5239
    %5241 = vrot.lane.b32.xlu0 %v2872, 64
    %v5242 = vpop.permute.xlu0 %5241
    %5243 = vrot.lane.b32.xlu0 %v2873, 64
    %v5244 = vpop.permute.xlu0 %5243
    %5245 = vrot.lane.b32.xlu0 %v2874, 64
    %v5246 = vpop.permute.xlu0 %5245
    %5247 = vrot.lane.b32.xlu0 %v2875, 64
    %v5248 = vpop.permute.xlu0 %5247
    %5249 = vrot.lane.b32.xlu0 %v2876, 64
    %v5250 = vpop.permute.xlu0 %5249
    %5251 = vrot.lane.b32.xlu0 %v2877, 64
    %v5252 = vpop.permute.xlu0 %5251
    %5317 = vrot.lane.b32.xlu0 0.0, 96
    %v5318 = vpop.permute.xlu0 %5317
    %5319 = vrot.lane.b32.xlu0 %v674, 96
    %v5320 = vpop.permute.xlu0 %5319
    %5321 = vrot.lane.b32.xlu0 %v675, 96
    %v5322 = vpop.permute.xlu0 %5321
    %5323 = vrot.lane.b32.xlu0 %v676, 96
    %v5324 = vpop.permute.xlu0 %5323
    %5325 = vrot.lane.b32.xlu0 %v677, 96
    %v5326 = vpop.permute.xlu0 %5325
    %5327 = vrot.lane.b32.xlu0 %v678, 96
    %v5328 = vpop.permute.xlu0 %5327
    %5329 = vrot.lane.b32.xlu0 %v679, 96
    %v5330 = vpop.permute.xlu0 %5329
    %5331 = vrot.lane.b32.xlu0 %v680, 96
    %v5332 = vpop.permute.xlu0 %5331
    %5333 = vrot.lane.b32.xlu0 %v681, 96
    %v5334 = vpop.permute.xlu0 %5333
    %5335 = vrot.lane.b32.xlu0 %v682, 96
    %v5336 = vpop.permute.xlu0 %5335
    %5337 = vrot.lane.b32.xlu0 %v683, 96
    %v5338 = vpop.permute.xlu0 %5337
    %5339 = vrot.lane.b32.xlu0 %v684, 96
    %v5340 = vpop.permute.xlu0 %5339
    %5341 = vrot.lane.b32.xlu0 %v685, 96
    %v5342 = vpop.permute.xlu0 %5341
    %5343 = vrot.lane.b32.xlu0 %v686, 96
    %v5344 = vpop.permute.xlu0 %5343
    %5345 = vrot.lane.b32.xlu0 %v687, 96
    %v5346 = vpop.permute.xlu0 %5345
    %5347 = vrot.lane.b32.xlu0 %v688, 96
    %v5348 = vpop.permute.xlu0 %5347
    %5349 = vrot.lane.b32.xlu0 %v689, 96
    %v5350 = vpop.permute.xlu0 %5349
    %5351 = vrot.lane.b32.xlu0 %v690, 96
    %v5352 = vpop.permute.xlu0 %5351
    %5353 = vrot.lane.b32.xlu0 %v691, 96
    %v5354 = vpop.permute.xlu0 %5353
    %5355 = vrot.lane.b32.xlu0 %v692, 96
    %v5356 = vpop.permute.xlu0 %5355
    %5357 = vrot.lane.b32.xlu0 %v693, 96
    %v5358 = vpop.permute.xlu0 %5357
    %5359 = vrot.lane.b32.xlu0 %v694, 96
    %v5360 = vpop.permute.xlu0 %5359
    %5361 = vrot.lane.b32.xlu0 %v695, 96
    %v5362 = vpop.permute.xlu0 %5361
    %5363 = vrot.lane.b32.xlu0 %v696, 96
    %v5364 = vpop.permute.xlu0 %5363
    %5365 = vrot.lane.b32.xlu0 %v697, 96
    %v5366 = vpop.permute.xlu0 %5365
    %5367 = vrot.lane.b32.xlu0 %v698, 96
    %v5368 = vpop.permute.xlu0 %5367
    %5369 = vrot.lane.b32.xlu0 %v699, 96
    %v5370 = vpop.permute.xlu0 %5369
    %5371 = vrot.lane.b32.xlu0 %v700, 96
    %v5372 = vpop.permute.xlu0 %5371
    %5373 = vrot.lane.b32.xlu0 %v701, 96
    %v5374 = vpop.permute.xlu0 %5373
    %5375 = vrot.lane.b32.xlu0 %v702, 96
    %v5376 = vpop.permute.xlu0 %5375
    %5377 = vrot.lane.b32.xlu0 %v703, 96
    %v5378 = vpop.permute.xlu0 %5377
    %5379 = vrot.lane.b32.xlu0 %v706, 96
    %v5380 = vpop.permute.xlu0 %5379
    %5381 = vrot.lane.b32.xlu0 %v707, 96
    %v5382 = vpop.permute.xlu0 %5381
    %5383 = vrot.lane.b32.xlu0 %v708, 96
    %v5384 = vpop.permute.xlu0 %5383
    %5385 = vrot.lane.b32.xlu0 %v709, 96
    %v5386 = vpop.permute.xlu0 %5385
    %5387 = vrot.lane.b32.xlu0 %v710, 96
    %v5388 = vpop.permute.xlu0 %5387
    %5389 = vrot.lane.b32.xlu0 %v711, 96
    %v5390 = vpop.permute.xlu0 %5389
    %5391 = vrot.lane.b32.xlu0 %v712, 96
    %v5392 = vpop.permute.xlu0 %5391
    %5393 = vrot.lane.b32.xlu0 %v713, 96
    %v5394 = vpop.permute.xlu0 %5393
    %5395 = vrot.lane.b32.xlu0 %v714, 96
    %v5396 = vpop.permute.xlu0 %5395
    %5397 = vrot.lane.b32.xlu0 %v715, 96
    %v5398 = vpop.permute.xlu0 %5397
    %5399 = vrot.lane.b32.xlu0 %v716, 96
    %v5400 = vpop.permute.xlu0 %5399
    %5401 = vrot.lane.b32.xlu0 %v717, 96
    %v5402 = vpop.permute.xlu0 %5401
    %5403 = vrot.lane.b32.xlu0 %v718, 96
    %v5404 = vpop.permute.xlu0 %5403
    %5405 = vrot.lane.b32.xlu0 %v719, 96
    %v5406 = vpop.permute.xlu0 %5405
    %5407 = vrot.lane.b32.xlu0 %v720, 96
    %v5408 = vpop.permute.xlu0 %5407
    %5409 = vrot.lane.b32.xlu0 %v721, 96
    %v5410 = vpop.permute.xlu0 %5409
    %5411 = vrot.lane.b32.xlu0 %v722, 96
    %v5412 = vpop.permute.xlu0 %5411
    %5413 = vrot.lane.b32.xlu0 %v723, 96
    %v5414 = vpop.permute.xlu0 %5413
    %5415 = vrot.lane.b32.xlu0 %v724, 96
    %v5416 = vpop.permute.xlu0 %5415
    %5417 = vrot.lane.b32.xlu0 %v725, 96
    %v5418 = vpop.permute.xlu0 %5417
    %5419 = vrot.lane.b32.xlu0 %v726, 96
    %v5420 = vpop.permute.xlu0 %5419
    %5421 = vrot.lane.b32.xlu0 %v727, 96
    %v5422 = vpop.permute.xlu0 %5421
    %5423 = vrot.lane.b32.xlu0 %v728, 96
    %v5424 = vpop.permute.xlu0 %5423
    %5425 = vrot.lane.b32.xlu0 %v729, 96
    %v5426 = vpop.permute.xlu0 %5425
    %5427 = vrot.lane.b32.xlu0 %v730, 96
    %v5428 = vpop.permute.xlu0 %5427
    %5429 = vrot.lane.b32.xlu0 %v731, 96
    %v5430 = vpop.permute.xlu0 %5429
    %5431 = vrot.lane.b32.xlu0 %v732, 96
    %v5432 = vpop.permute.xlu0 %5431
    %5433 = vrot.lane.b32.xlu0 %v733, 96
    %v5434 = vpop.permute.xlu0 %5433
    %5435 = vrot.lane.b32.xlu0 %v734, 96
    %v5436 = vpop.permute.xlu0 %5435
    %5437 = vrot.lane.b32.xlu0 %v735, 96
    %v5438 = vpop.permute.xlu0 %5437
    %v5500 = vsel %vm96, %v3844, %v4930
    %v5501 = vsel %vm96, %v3845, %v4932
    %v5502 = vsel %vm96, %v3846, %v4934
    %v5503 = vsel %vm96, %v3847, %v4936
    %v5504 = vsel %vm96, %v3848, %v4938
    %v5505 = vsel %vm96, %v3849, %v4940
    %v5506 = vsel %vm96, %v3850, %v4942
    %v5507 = vsel %vm96, %v3851, %v4944
    %v5508 = vsel %vm96, %v3852, %v4946
    %v5509 = vsel %vm96, %v3853, %v4948
    %v5510 = vsel %vm96, %v3854, %v4950
    %v5511 = vsel %vm96, %v3855, %v4952
    %v5512 = vsel %vm96, %v3856, %v4954
    %v5513 = vsel %vm96, %v3857, %v4956
    %v5514 = vsel %vm96, %v3858, %v4958
    %v5515 = vsel %vm96, %v3859, %v4960
    %v5516 = vsel %vm96, %v3860, %v4962
    %v5517 = vsel %vm96, %v3861, %v4964
    %v5518 = vsel %vm96, %v3862, %v4966
    %v5519 = vsel %vm96, %v3863, %v4968
    %v5520 = vsel %vm96, %v3864, %v4970
    %v5521 = vsel %vm96, %v3865, %v4972
    %v5522 = vsel %vm96, %v3866, %v4974
    %v5523 = vsel %vm96, %v3867, %v4976
    %v5524 = vsel %vm96, %v3868, %v4978
    %v5525 = vsel %vm96, %v3869, %v4980
    %v5526 = vsel %vm96, %v3870, %v4982
    %v5527 = vsel %vm96, %v3871, %v4984
    %v5528 = vsel %vm96, %v3872, %v4986
    %v5529 = vsel %vm96, %v3873, %v4988
    %v5530 = vsel %vm96, %v3874, %v4990
    %v5531 = vsel %vm96, %v3875, %v4992
    %v5532 = vsel %vm96, %v3884, %v4994
    %v5533 = vsel %vm96, %v3885, %v4996
    %v5534 = vsel %vm96, %v3886, %v4998
    %v5535 = vsel %vm96, %v3887, %v5000
    %v5536 = vsel %vm96, %v3888, %v5002
    %v5537 = vsel %vm96, %v3889, %v5004
    %v5538 = vsel %vm96, %v3890, %v5006
    %v5539 = vsel %vm96, %v3891, %v5008
    %v5540 = vsel %vm96, %v3892, %v5010
    %v5541 = vsel %vm96, %v3893, %v5012
    %v5542 = vsel %vm96, %v3894, %v5014
    %v5543 = vsel %vm96, %v3895, %v5016
    %v5544 = vsel %vm96, %v3896, %v5018
    %v5545 = vsel %vm96, %v3897, %v5020
    %v5546 = vsel %vm96, %v3898, %v5022
    %v5547 = vsel %vm96, %v3899, %v5024
    %v5548 = vsel %vm96, %v3900, %v5026
    %v5549 = vsel %vm96, %v3901, %v5028
    %v5550 = vsel %vm96, %v3902, %v5030
    %v5551 = vsel %vm96, %v3903, %v5032
    %v5552 = vsel %vm96, %v3904, %v5034
    %v5553 = vsel %vm96, %v3905, %v5036
    %v5554 = vsel %vm96, %v3906, %v5038
    %v5555 = vsel %vm96, %v3907, %v5040
    %v5556 = vsel %vm96, %v3908, %v5042
    %v5557 = vsel %vm96, %v3909, %v5044
    %v5558 = vsel %vm96, %v3910, %v5046
    %v5559 = vsel %vm96, %v3911, %v5048
    %v5560 = vsel %vm96, %v3912, %v5050
    %v5561 = vsel %vm96, %v3913, %v5052
    %v5562 = vsel %vm96, %v3914, %v5054
    %v5563 = vsel %vm96, %v3915, %v5056
    %v5564 = vsel %vm4671, %v5500, %v5126
    %v5565 = vsel %vm4671, %v5501, %v5128
    %v5566 = vsel %vm4671, %v5502, %v5130
    %v5567 = vsel %vm4671, %v5503, %v5132
    %v5568 = vsel %vm4671, %v5504, %v5134
    %v5569 = vsel %vm4671, %v5505, %v5136
    %v5570 = vsel %vm4671, %v5506, %v5138
    %v5571 = vsel %vm4671, %v5507, %v5140
    %v5572 = vsel %vm4671, %v5508, %v5142
    %v5573 = vsel %vm4671, %v5509, %v5144
    %v5574 = vsel %vm4671, %v5510, %v5146
    %v5575 = vsel %vm4671, %v5511, %v5148
    %v5576 = vsel %vm4671, %v5512, %v5150
    %v5577 = vsel %vm4671, %v5513, %v5152
    %v5578 = vsel %vm4671, %v5514, %v5154
    %v5579 = vsel %vm4671, %v5515, %v5156
    %v5580 = vsel %vm4671, %v5516, %v5158
    %v5581 = vsel %vm4671, %v5517, %v5160
    %v5582 = vsel %vm4671, %v5518, %v5162
    %v5583 = vsel %vm4671, %v5519, %v5164
    %v5584 = vsel %vm4671, %v5520, %v5166
    %v5585 = vsel %vm4671, %v5521, %v5168
    %v5586 = vsel %vm4671, %v5522, %v5170
    %v5587 = vsel %vm4671, %v5523, %v5172
    %v5588 = vsel %vm4671, %v5524, %v5174
    %v5589 = vsel %vm4671, %v5525, %v5176
    %v5590 = vsel %vm4671, %v5526, %v5178
    %v5591 = vsel %vm4671, %v5527, %v5180
    %v5592 = vsel %vm4671, %v5528, %v5182
    %v5593 = vsel %vm4671, %v5529, %v5184
    %v5594 = vsel %vm4671, %v5530, %v5186
    %v5595 = vsel %vm4671, %v5531, %v5188
    %v5596 = vsel %vm4671, %v5532, %v5190
    %v5597 = vsel %vm4671, %v5533, %v5192
    %v5598 = vsel %vm4671, %v5534, %v5194
    %v5599 = vsel %vm4671, %v5535, %v5196
    %v5600 = vsel %vm4671, %v5536, %v5198
    %v5601 = vsel %vm4671, %v5537, %v5200
    %v5602 = vsel %vm4671, %v5538, %v5202
    %v5603 = vsel %vm4671, %v5539, %v5204
    %v5604 = vsel %vm4671, %v5540, %v5206
    %v5605 = vsel %vm4671, %v5541, %v5208
    %v5606 = vsel %vm4671, %v5542, %v5210
    %v5607 = vsel %vm4671, %v5543, %v5212
    %v5608 = vsel %vm4671, %v5544, %v5214
    %v5609 = vsel %vm4671, %v5545, %v5216
    %v5610 = vsel %vm4671, %v5546, %v5218
    %v5611 = vsel %vm4671, %v5547, %v5220
    %v5612 = vsel %vm4671, %v5548, %v5222
    %v5613 = vsel %vm4671, %v5549, %v5224
    %v5614 = vsel %vm4671, %v5550, %v5226
    %v5615 = vsel %vm4671, %v5551, %v5228
    %v5616 = vsel %vm4671, %v5552, %v5230
    %v5617 = vsel %vm4671, %v5553, %v5232
    %v5618 = vsel %vm4671, %v5554, %v5234
    %v5619 = vsel %vm4671, %v5555, %v5236
    %v5620 = vsel %vm4671, %v5556, %v5238
    %v5621 = vsel %vm4671, %v5557, %v5240
    %v5622 = vsel %vm4671, %v5558, %v5242
    %v5623 = vsel %vm4671, %v5559, %v5244
    %v5624 = vsel %vm4671, %v5560, %v5246
    %v5625 = vsel %vm4671, %v5561, %v5248
    %v5626 = vsel %vm4671, %v5562, %v5250
    %v5627 = vsel %vm4671, %v5563, %v5252
    %v5628 = vsel %vm4736, %v5564, %v5318
    %v5629 = vsel %vm4736, %v5565, %v5318
    %v5630 = vsel %vm4736, %v5566, %v5320
    %v5631 = vsel %vm4736, %v5567, %v5322
    %v5632 = vsel %vm4736, %v5568, %v5324
    %v5633 = vsel %vm4736, %v5569, %v5326
    %v5634 = vsel %vm4736, %v5570, %v5328
    %v5635 = vsel %vm4736, %v5571, %v5330
    %v5636 = vsel %vm4736, %v5572, %v5332
    %v5637 = vsel %vm4736, %v5573, %v5334
    %v5638 = vsel %vm4736, %v5574, %v5336
    %v5639 = vsel %vm4736, %v5575, %v5338
    %v5640 = vsel %vm4736, %v5576, %v5340
    %v5641 = vsel %vm4736, %v5577, %v5342
    %v5642 = vsel %vm4736, %v5578, %v5344
    %v5643 = vsel %vm4736, %v5579, %v5346
    %v5644 = vsel %vm4736, %v5580, %v5348
    %v5645 = vsel %vm4736, %v5581, %v5350
    %v5646 = vsel %vm4736, %v5582, %v5352
    %v5647 = vsel %vm4736, %v5583, %v5354
    %v5648 = vsel %vm4736, %v5584, %v5356
    %v5649 = vsel %vm4736, %v5585, %v5358
    %v5650 = vsel %vm4736, %v5586, %v5360
    %v5651 = vsel %vm4736, %v5587, %v5362
    %v5652 = vsel %vm4736, %v5588, %v5364
    %v5653 = vsel %vm4736, %v5589, %v5366
    %v5654 = vsel %vm4736, %v5590, %v5368
    %v5655 = vsel %vm4736, %v5591, %v5370
    %v5656 = vsel %vm4736, %v5592, %v5372
    %v5657 = vsel %vm4736, %v5593, %v5374
    %v5658 = vsel %vm4736, %v5594, %v5376
    %v5659 = vsel %vm4736, %v5595, %v5378
    %v5660 = vsel %vm4736, %v5596, %v5318
    %v5661 = vsel %vm4736, %v5597, %v5318
    %v5662 = vsel %vm4736, %v5598, %v5380
    %v5663 = vsel %vm4736, %v5599, %v5382
    %v5664 = vsel %vm4736, %v5600, %v5384
    %v5665 = vsel %vm4736, %v5601, %v5386
    %v5666 = vsel %vm4736, %v5602, %v5388
    %v5667 = vsel %vm4736, %v5603, %v5390
    %v5668 = vsel %vm4736, %v5604, %v5392
    %v5669 = vsel %vm4736, %v5605, %v5394
    %v5670 = vsel %vm4736, %v5606, %v5396
    %v5671 = vsel %vm4736, %v5607, %v5398
    %v5672 = vsel %vm4736, %v5608, %v5400
    %v5673 = vsel %vm4736, %v5609, %v5402
    %v5674 = vsel %vm4736, %v5610, %v5404
    %v5675 = vsel %vm4736, %v5611, %v5406
    %v5676 = vsel %vm4736, %v5612, %v5408
    %v5677 = vsel %vm4736, %v5613, %v5410
    %v5678 = vsel %vm4736, %v5614, %v5412
    %v5679 = vsel %vm4736, %v5615, %v5414
    %v5680 = vsel %vm4736, %v5616, %v5416
    %v5681 = vsel %vm4736, %v5617, %v5418
    %v5682 = vsel %vm4736, %v5618, %v5420
    %v5683 = vsel %vm4736, %v5619, %v5422
    %v5684 = vsel %vm4736, %v5620, %v5424
    %v5685 = vsel %vm4736, %v5621, %v5426
    %v5686 = vsel %vm4736, %v5622, %v5428
    %v5687 = vsel %vm4736, %v5623, %v5430
    %v5688 = vsel %vm4736, %v5624, %v5432
    %v5689 = vsel %vm4736, %v5625, %v5434
    %v5690 = vsel %vm4736, %v5626, %v5436
    %v5691 = vsel %vm4736, %v5627, %v5438
    %5692 = vst [vmem:[#allocation2 + $0x8] sm:$0xff] %v5628
    %5693 = vst [vmem:[#allocation2 + $0x40] sm:$0xff] %v5629
    %5694 = vst [vmem:[#allocation2 + $0x78] sm:$0xff] %v5630
    %5695 = vst [vmem:[#allocation2 + $0xb0] sm:$0xff] %v5631
    %5696 = vst [vmem:[#allocation2 + $0xe8] sm:$0xff] %v5632
    %5697 = vst [vmem:[#allocation2 + $0x120] sm:$0xff] %v5633
    %5698 = vst [vmem:[#allocation2 + $0x158] sm:$0xff] %v5634
    %5699 = vst [vmem:[#allocation2 + $0x190] sm:$0xff] %v5635
    %5700 = vst [vmem:[#allocation2 + $0x1c8] sm:$0xff] %v5636
    %5701 = vst [vmem:[#allocation2 + $0x200] sm:$0xff] %v5637
    %5702 = vst [vmem:[#allocation2 + $0x238] sm:$0xff] %v5638
    %5703 = vst [vmem:[#allocation2 + $0x270] sm:$0xff] %v5639
    %5704 = vst [vmem:[#allocation2 + $0x2a8] sm:$0xff] %v5640
    %5705 = vst [vmem:[#allocation2 + $0x2e0] sm:$0xff] %v5641
    %5706 = vst [vmem:[#allocation2 + $0x318] sm:$0xff] %v5642
    %5707 = vst [vmem:[#allocation2 + $0x350] sm:$0xff] %v5643
    %5708 = vst [vmem:[#allocation2 + $0x388] sm:$0xff] %v5644
    %5709 = vst [vmem:[#allocation2 + $0x3c0] sm:$0xff] %v5645
    %5710 = vst [vmem:[#allocation2 + $0x3f8] sm:$0xff] %v5646
    %5711 = vst [vmem:[#allocation2 + $0x430] sm:$0xff] %v5647
    %5712 = vst [vmem:[#allocation2 + $0x468] sm:$0xff] %v5648
    %5713 = vst [vmem:[#allocation2 + $0x4a0] sm:$0xff] %v5649
    %5714 = vst [vmem:[#allocation2 + $0x4d8] sm:$0xff] %v5650
    %5715 = vst [vmem:[#allocation2 + $0x510] sm:$0xff] %v5651
    %5716 = vst [vmem:[#allocation2 + $0x548] sm:$0xff] %v5652
    %5717 = vst [vmem:[#allocation2 + $0x580] sm:$0xff] %v5653
    %5718 = vst [vmem:[#allocation2 + $0x5b8] sm:$0xff] %v5654
    %5719 = vst [vmem:[#allocation2 + $0x5f0] sm:$0xff] %v5655
    %5720 = vst [vmem:[#allocation2 + $0x628] sm:$0xff] %v5656
    %5721 = vst [vmem:[#allocation2 + $0x660] sm:$0xff] %v5657
    %5722 = vst [vmem:[#allocation2 + $0x698] sm:$0xff] %v5658
    %5723 = vst [vmem:[#allocation2 + $0x6d0] sm:$0xff] %v5659
    %5724 = vst [vmem:[#allocation2 + $0x708] sm:$0xff] %v5660
    %5725 = vst [vmem:[#allocation2 + $0x740] sm:$0xff] %v5661
    %5726 = vst [vmem:[#allocation2 + $0x778] sm:$0xff] %v5662
    %5727 = vst [vmem:[#allocation2 + $0x7b0] sm:$0xff] %v5663
    %5728 = vst [vmem:[#allocation2 + $0x7e8] sm:$0xff] %v5664
    %5729 = vst [vmem:[#allocation2 + $0x820] sm:$0xff] %v5665
    %5730 = vst [vmem:[#allocation2 + $0x858] sm:$0xff] %v5666
    %5731 = vst [vmem:[#allocation2 + $0x890] sm:$0xff] %v5667
    %5732 = vst [vmem:[#allocation2 + $0x8c8] sm:$0xff] %v5668
    %5733 = vst [vmem:[#allocation2 + $0x900] sm:$0xff] %v5669
    %5734 = vst [vmem:[#allocation2 + $0x938] sm:$0xff] %v5670
    %5735 = vst [vmem:[#allocation2 + $0x970] sm:$0xff] %v5671
    %5736 = vst [vmem:[#allocation2 + $0x9a8] sm:$0xff] %v5672
    %5737 = vst [vmem:[#allocation2 + $0x9e0] sm:$0xff] %v5673
    %5738 = vst [vmem:[#allocation2 + $0xa18] sm:$0xff] %v5674
    %5739 = vst [vmem:[#allocation2 + $0xa50] sm:$0xff] %v5675
    %5740 = vst [vmem:[#allocation2 + $0xa88] sm:$0xff] %v5676
    %5741 = vst [vmem:[#allocation2 + $0xac0] sm:$0xff] %v5677
    %5742 = vst [vmem:[#allocation2 + $0xaf8] sm:$0xff] %v5678
    %5743 = vst [vmem:[#allocation2 + $0xb30] sm:$0xff] %v5679
    %5744 = vst [vmem:[#allocation2 + $0xb68] sm:$0xff] %v5680
    %5745 = vst [vmem:[#allocation2 + $0xba0] sm:$0xff] %v5681
    %5746 = vst [vmem:[#allocation2 + $0xbd8] sm:$0xff] %v5682
    %5747 = vst [vmem:[#allocation2 + $0xc10] sm:$0xff] %v5683
    %5748 = vst [vmem:[#allocation2 + $0xc48] sm:$0xff] %v5684
    %5749 = vst [vmem:[#allocation2 + $0xc80] sm:$0xff] %v5685
    %5750 = vst [vmem:[#allocation2 + $0xcb8] sm:$0xff] %v5686
    %5751 = vst [vmem:[#allocation2 + $0xcf0] sm:$0xff] %v5687
    %5752 = vst [vmem:[#allocation2 + $0xd28] sm:$0xff] %v5688
    %5753 = vst [vmem:[#allocation2 + $0xd60] sm:$0xff] %v5689
    %5754 = vst [vmem:[#allocation2 + $0xd98] sm:$0xff] %v5690
    %5755 = vst [vmem:[#allocation2 + $0xdd0] sm:$0xff] %v5691
    %5820 = vrot.lane.b32.xlu0 %v3846, 32
    %v5821 = vpop.permute.xlu0 %5820
    %5822 = vrot.lane.b32.xlu0 %v3847, 32
    %v5823 = vpop.permute.xlu0 %5822
    %5824 = vrot.lane.b32.xlu0 %v3848, 32
    %v5825 = vpop.permute.xlu0 %5824
    %5826 = vrot.lane.b32.xlu0 %v3849, 32
    %v5827 = vpop.permute.xlu0 %5826
    %5828 = vrot.lane.b32.xlu0 %v3850, 32
    %v5829 = vpop.permute.xlu0 %5828
    %5830 = vrot.lane.b32.xlu0 %v3851, 32
    %v5831 = vpop.permute.xlu0 %5830
    %5832 = vrot.lane.b32.xlu0 %v3852, 32
    %v5833 = vpop.permute.xlu0 %5832
    %5834 = vrot.lane.b32.xlu0 %v3853, 32
    %v5835 = vpop.permute.xlu0 %5834
    %5836 = vrot.lane.b32.xlu0 %v3854, 32
    %v5837 = vpop.permute.xlu0 %5836
    %5838 = vrot.lane.b32.xlu0 %v3855, 32
    %v5839 = vpop.permute.xlu0 %5838
    %5840 = vrot.lane.b32.xlu0 %v3856, 32
    %v5841 = vpop.permute.xlu0 %5840
    %5842 = vrot.lane.b32.xlu0 %v3857, 32
    %v5843 = vpop.permute.xlu0 %5842
    %5844 = vrot.lane.b32.xlu0 %v3858, 32
    %v5845 = vpop.permute.xlu0 %5844
    %5846 = vrot.lane.b32.xlu0 %v3859, 32
    %v5847 = vpop.permute.xlu0 %5846
    %5848 = vrot.lane.b32.xlu0 %v3860, 32
    %v5849 = vpop.permute.xlu0 %5848
    %5850 = vrot.lane.b32.xlu0 %v3861, 32
    %v5851 = vpop.permute.xlu0 %5850
    %5852 = vrot.lane.b32.xlu0 %v3862, 32
    %v5853 = vpop.permute.xlu0 %5852
    %5854 = vrot.lane.b32.xlu0 %v3863, 32
    %v5855 = vpop.permute.xlu0 %5854
    %5856 = vrot.lane.b32.xlu0 %v3864, 32
    %v5857 = vpop.permute.xlu0 %5856
    %5858 = vrot.lane.b32.xlu0 %v3865, 32
    %v5859 = vpop.permute.xlu0 %5858
    %5860 = vrot.lane.b32.xlu0 %v3866, 32
    %v5861 = vpop.permute.xlu0 %5860
    %5862 = vrot.lane.b32.xlu0 %v3867, 32
    %v5863 = vpop.permute.xlu0 %5862
    %5864 = vrot.lane.b32.xlu0 %v3868, 32
    %v5865 = vpop.permute.xlu0 %5864
    %5866 = vrot.lane.b32.xlu0 %v3869, 32
    %v5867 = vpop.permute.xlu0 %5866
    %5868 = vrot.lane.b32.xlu0 %v3870, 32
    %v5869 = vpop.permute.xlu0 %5868
    %5870 = vrot.lane.b32.xlu0 %v3871, 32
    %v5871 = vpop.permute.xlu0 %5870
    %5872 = vrot.lane.b32.xlu0 %v3872, 32
    %v5873 = vpop.permute.xlu0 %5872
    %5874 = vrot.lane.b32.xlu0 %v3873, 32
    %v5875 = vpop.permute.xlu0 %5874
    %5876 = vrot.lane.b32.xlu0 %v3874, 32
    %v5877 = vpop.permute.xlu0 %5876
    %5878 = vrot.lane.b32.xlu0 %v3875, 32
    %v5879 = vpop.permute.xlu0 %5878
    %5880 = vrot.lane.b32.xlu0 %v3876, 32
    %v5881 = vpop.permute.xlu0 %5880
    %5882 = vrot.lane.b32.xlu0 %v3877, 32
    %v5883 = vpop.permute.xlu0 %5882
    %5884 = vrot.lane.b32.xlu0 %v3886, 32
    %v5885 = vpop.permute.xlu0 %5884
    %5886 = vrot.lane.b32.xlu0 %v3887, 32
    %v5887 = vpop.permute.xlu0 %5886
    %5888 = vrot.lane.b32.xlu0 %v3888, 32
    %v5889 = vpop.permute.xlu0 %5888
    %5890 = vrot.lane.b32.xlu0 %v3889, 32
    %v5891 = vpop.permute.xlu0 %5890
    %5892 = vrot.lane.b32.xlu0 %v3890, 32
    %v5893 = vpop.permute.xlu0 %5892
    %5894 = vrot.lane.b32.xlu0 %v3891, 32
    %v5895 = vpop.permute.xlu0 %5894
    %5896 = vrot.lane.b32.xlu0 %v3892, 32
    %v5897 = vpop.permute.xlu0 %5896
    %5898 = vrot.lane.b32.xlu0 %v3893, 32
    %v5899 = vpop.permute.xlu0 %5898
    %5900 = vrot.lane.b32.xlu0 %v3894, 32
    %v5901 = vpop.permute.xlu0 %5900
    %5902 = vrot.lane.b32.xlu0 %v3895, 32
    %v5903 = vpop.permute.xlu0 %5902
    %5904 = vrot.lane.b32.xlu0 %v3896, 32
    %v5905 = vpop.permute.xlu0 %5904
    %5906 = vrot.lane.b32.xlu0 %v3897, 32
    %v5907 = vpop.permute.xlu0 %5906
    %5908 = vrot.lane.b32.xlu0 %v3898, 32
    %v5909 = vpop.permute.xlu0 %5908
    %5910 = vrot.lane.b32.xlu0 %v3899, 32
    %v5911 = vpop.permute.xlu0 %5910
    %5912 = vrot.lane.b32.xlu0 %v3900, 32
    %v5913 = vpop.permute.xlu0 %5912
    %5914 = vrot.lane.b32.xlu0 %v3901, 32
    %v5915 = vpop.permute.xlu0 %5914
    %5916 = vrot.lane.b32.xlu0 %v3902, 32
    %v5917 = vpop.permute.xlu0 %5916
    %5918 = vrot.lane.b32.xlu0 %v3903, 32
    %v5919 = vpop.permute.xlu0 %5918
    %5920 = vrot.lane.b32.xlu0 %v3904, 32
    %v5921 = vpop.permute.xlu0 %5920
    %5922 = vrot.lane.b32.xlu0 %v3905, 32
    %v5923 = vpop.permute.xlu0 %5922
    %5924 = vrot.lane.b32.xlu0 %v3906, 32
    %v5925 = vpop.permute.xlu0 %5924
    %5926 = vrot.lane.b32.xlu0 %v3907, 32
    %v5927 = vpop.permute.xlu0 %5926
    %5928 = vrot.lane.b32.xlu0 %v3908, 32
    %v5929 = vpop.permute.xlu0 %5928
    %5930 = vrot.lane.b32.xlu0 %v3909, 32
    %v5931 = vpop.permute.xlu0 %5930
    %5932 = vrot.lane.b32.xlu0 %v3910, 32
    %v5933 = vpop.permute.xlu0 %5932
    %5934 = vrot.lane.b32.xlu0 %v3911, 32
    %v5935 = vpop.permute.xlu0 %5934
    %5936 = vrot.lane.b32.xlu0 %v3912, 32
    %v5937 = vpop.permute.xlu0 %5936
    %5938 = vrot.lane.b32.xlu0 %v3913, 32
    %v5939 = vpop.permute.xlu0 %5938
    %5940 = vrot.lane.b32.xlu0 %v3914, 32
    %v5941 = vpop.permute.xlu0 %5940
    %5942 = vrot.lane.b32.xlu0 %v3915, 32
    %v5943 = vpop.permute.xlu0 %5942
    %5944 = vrot.lane.b32.xlu0 %v3916, 32
    %v5945 = vpop.permute.xlu0 %5944
    %5946 = vrot.lane.b32.xlu0 %v3917, 32
    %v5947 = vpop.permute.xlu0 %5946
    %6016 = vrot.lane.b32.xlu0 %v2288, 64
    %v6017 = vpop.permute.xlu0 %6016
    %6018 = vrot.lane.b32.xlu0 %v2289, 64
    %v6019 = vpop.permute.xlu0 %6018
    %6020 = vrot.lane.b32.xlu0 %v2290, 64
    %v6021 = vpop.permute.xlu0 %6020
    %6022 = vrot.lane.b32.xlu0 %v2291, 64
    %v6023 = vpop.permute.xlu0 %6022
    %6024 = vrot.lane.b32.xlu0 %v2292, 64
    %v6025 = vpop.permute.xlu0 %6024
    %6026 = vrot.lane.b32.xlu0 %v2293, 64
    %v6027 = vpop.permute.xlu0 %6026
    %6028 = vrot.lane.b32.xlu0 %v2294, 64
    %v6029 = vpop.permute.xlu0 %6028
    %6030 = vrot.lane.b32.xlu0 %v2295, 64
    %v6031 = vpop.permute.xlu0 %6030
    %6032 = vrot.lane.b32.xlu0 %v2296, 64
    %v6033 = vpop.permute.xlu0 %6032
    %6034 = vrot.lane.b32.xlu0 %v2297, 64
    %v6035 = vpop.permute.xlu0 %6034
    %6036 = vrot.lane.b32.xlu0 %v2298, 64
    %v6037 = vpop.permute.xlu0 %6036
    %6038 = vrot.lane.b32.xlu0 %v2299, 64
    %v6039 = vpop.permute.xlu0 %6038
    %6040 = vrot.lane.b32.xlu0 %v2300, 64
    %v6041 = vpop.permute.xlu0 %6040
    %6042 = vrot.lane.b32.xlu0 %v2301, 64
    %v6043 = vpop.permute.xlu0 %6042
    %6044 = vrot.lane.b32.xlu0 %v2302, 64
    %v6045 = vpop.permute.xlu0 %6044
    %6046 = vrot.lane.b32.xlu0 %v2303, 64
    %v6047 = vpop.permute.xlu0 %6046
    %6048 = vrot.lane.b32.xlu0 %v2304, 64
    %v6049 = vpop.permute.xlu0 %6048
    %6050 = vrot.lane.b32.xlu0 %v2305, 64
    %v6051 = vpop.permute.xlu0 %6050
    %6052 = vrot.lane.b32.xlu0 %v2306, 64
    %v6053 = vpop.permute.xlu0 %6052
    %6054 = vrot.lane.b32.xlu0 %v2307, 64
    %v6055 = vpop.permute.xlu0 %6054
    %6056 = vrot.lane.b32.xlu0 %v2308, 64
    %v6057 = vpop.permute.xlu0 %6056
    %6058 = vrot.lane.b32.xlu0 %v2309, 64
    %v6059 = vpop.permute.xlu0 %6058
    %6060 = vrot.lane.b32.xlu0 %v2310, 64
    %v6061 = vpop.permute.xlu0 %6060
    %6062 = vrot.lane.b32.xlu0 %v2311, 64
    %v6063 = vpop.permute.xlu0 %6062
    %6064 = vrot.lane.b32.xlu0 %v2312, 64
    %v6065 = vpop.permute.xlu0 %6064
    %6066 = vrot.lane.b32.xlu0 %v2313, 64
    %v6067 = vpop.permute.xlu0 %6066
    %6068 = vrot.lane.b32.xlu0 %v2314, 64
    %v6069 = vpop.permute.xlu0 %6068
    %6070 = vrot.lane.b32.xlu0 %v2315, 64
    %v6071 = vpop.permute.xlu0 %6070
    %6072 = vrot.lane.b32.xlu0 %v2316, 64
    %v6073 = vpop.permute.xlu0 %6072
    %6074 = vrot.lane.b32.xlu0 %v2317, 64
    %v6075 = vpop.permute.xlu0 %6074
    %6076 = vrot.lane.b32.xlu0 %v2318, 64
    %v6077 = vpop.permute.xlu0 %6076
    %6078 = vrot.lane.b32.xlu0 %v2319, 64
    %v6079 = vpop.permute.xlu0 %6078
    %6080 = vrot.lane.b32.xlu0 %v2328, 64
    %v6081 = vpop.permute.xlu0 %6080
    %6082 = vrot.lane.b32.xlu0 %v2329, 64
    %v6083 = vpop.permute.xlu0 %6082
    %6084 = vrot.lane.b32.xlu0 %v2330, 64
    %v6085 = vpop.permute.xlu0 %6084
    %6086 = vrot.lane.b32.xlu0 %v2331, 64
    %v6087 = vpop.permute.xlu0 %6086
    %6088 = vrot.lane.b32.xlu0 %v2332, 64
    %v6089 = vpop.permute.xlu0 %6088
    %6090 = vrot.lane.b32.xlu0 %v2333, 64
    %v6091 = vpop.permute.xlu0 %6090
    %6092 = vrot.lane.b32.xlu0 %v2334, 64
    %v6093 = vpop.permute.xlu0 %6092
    %6094 = vrot.lane.b32.xlu0 %v2335, 64
    %v6095 = vpop.permute.xlu0 %6094
    %6096 = vrot.lane.b32.xlu0 %v2336, 64
    %v6097 = vpop.permute.xlu0 %6096
    %6098 = vrot.lane.b32.xlu0 %v2337, 64
    %v6099 = vpop.permute.xlu0 %6098
    %6100 = vrot.lane.b32.xlu0 %v2338, 64
    %v6101 = vpop.permute.xlu0 %6100
    %6102 = vrot.lane.b32.xlu0 %v2339, 64
    %v6103 = vpop.permute.xlu0 %6102
    %6104 = vrot.lane.b32.xlu0 %v2340, 64
    %v6105 = vpop.permute.xlu0 %6104
    %6106 = vrot.lane.b32.xlu0 %v2341, 64
    %v6107 = vpop.permute.xlu0 %6106
    %6108 = vrot.lane.b32.xlu0 %v2342, 64
    %v6109 = vpop.permute.xlu0 %6108
    %6110 = vrot.lane.b32.xlu0 %v2343, 64
    %v6111 = vpop.permute.xlu0 %6110
    %6112 = vrot.lane.b32.xlu0 %v2344, 64
    %v6113 = vpop.permute.xlu0 %6112
    %6114 = vrot.lane.b32.xlu0 %v2345, 64
    %v6115 = vpop.permute.xlu0 %6114
    %6116 = vrot.lane.b32.xlu0 %v2346, 64
    %v6117 = vpop.permute.xlu0 %6116
    %6118 = vrot.lane.b32.xlu0 %v2347, 64
    %v6119 = vpop.permute.xlu0 %6118
    %6120 = vrot.lane.b32.xlu0 %v2348, 64
    %v6121 = vpop.permute.xlu0 %6120
    %6122 = vrot.lane.b32.xlu0 %v2349, 64
    %v6123 = vpop.permute.xlu0 %6122
    %6124 = vrot.lane.b32.xlu0 %v2350, 64
    %v6125 = vpop.permute.xlu0 %6124
    %6126 = vrot.lane.b32.xlu0 %v2351, 64
    %v6127 = vpop.permute.xlu0 %6126
    %6128 = vrot.lane.b32.xlu0 %v2352, 64
    %v6129 = vpop.permute.xlu0 %6128
    %6130 = vrot.lane.b32.xlu0 %v2353, 64
    %v6131 = vpop.permute.xlu0 %6130
    %6132 = vrot.lane.b32.xlu0 %v2354, 64
    %v6133 = vpop.permute.xlu0 %6132
    %6134 = vrot.lane.b32.xlu0 %v2355, 64
    %v6135 = vpop.permute.xlu0 %6134
    %6136 = vrot.lane.b32.xlu0 %v2356, 64
    %v6137 = vpop.permute.xlu0 %6136
    %6138 = vrot.lane.b32.xlu0 %v2357, 64
    %v6139 = vpop.permute.xlu0 %6138
    %6140 = vrot.lane.b32.xlu0 %v2358, 64
    %v6141 = vpop.permute.xlu0 %6140
    %6142 = vrot.lane.b32.xlu0 %v2359, 64
    %v6143 = vpop.permute.xlu0 %6142
    %6212 = vrot.lane.b32.xlu0 %v2808, 96
    %v6213 = vpop.permute.xlu0 %6212
    %6214 = vrot.lane.b32.xlu0 %v2809, 96
    %v6215 = vpop.permute.xlu0 %6214
    %6216 = vrot.lane.b32.xlu0 %v2810, 96
    %v6217 = vpop.permute.xlu0 %6216
    %6218 = vrot.lane.b32.xlu0 %v2811, 96
    %v6219 = vpop.permute.xlu0 %6218
    %6220 = vrot.lane.b32.xlu0 %v2812, 96
    %v6221 = vpop.permute.xlu0 %6220
    %6222 = vrot.lane.b32.xlu0 %v2813, 96
    %v6223 = vpop.permute.xlu0 %6222
    %6224 = vrot.lane.b32.xlu0 %v2814, 96
    %v6225 = vpop.permute.xlu0 %6224
    %6226 = vrot.lane.b32.xlu0 %v2815, 96
    %v6227 = vpop.permute.xlu0 %6226
    %6228 = vrot.lane.b32.xlu0 %v2816, 96
    %v6229 = vpop.permute.xlu0 %6228
    %6230 = vrot.lane.b32.xlu0 %v2817, 96
    %v6231 = vpop.permute.xlu0 %6230
    %6232 = vrot.lane.b32.xlu0 %v2818, 96
    %v6233 = vpop.permute.xlu0 %6232
    %6234 = vrot.lane.b32.xlu0 %v2819, 96
    %v6235 = vpop.permute.xlu0 %6234
    %6236 = vrot.lane.b32.xlu0 %v2820, 96
    %v6237 = vpop.permute.xlu0 %6236
    %6238 = vrot.lane.b32.xlu0 %v2821, 96
    %v6239 = vpop.permute.xlu0 %6238
    %6240 = vrot.lane.b32.xlu0 %v2822, 96
    %v6241 = vpop.permute.xlu0 %6240
    %6242 = vrot.lane.b32.xlu0 %v2823, 96
    %v6243 = vpop.permute.xlu0 %6242
    %6244 = vrot.lane.b32.xlu0 %v2824, 96
    %v6245 = vpop.permute.xlu0 %6244
    %6246 = vrot.lane.b32.xlu0 %v2825, 96
    %v6247 = vpop.permute.xlu0 %6246
    %6248 = vrot.lane.b32.xlu0 %v2826, 96
    %v6249 = vpop.permute.xlu0 %6248
    %6250 = vrot.lane.b32.xlu0 %v2827, 96
    %v6251 = vpop.permute.xlu0 %6250
    %6252 = vrot.lane.b32.xlu0 %v2828, 96
    %v6253 = vpop.permute.xlu0 %6252
    %6254 = vrot.lane.b32.xlu0 %v2829, 96
    %v6255 = vpop.permute.xlu0 %6254
    %6256 = vrot.lane.b32.xlu0 %v2830, 96
    %v6257 = vpop.permute.xlu0 %6256
    %6258 = vrot.lane.b32.xlu0 %v2831, 96
    %v6259 = vpop.permute.xlu0 %6258
    %6260 = vrot.lane.b32.xlu0 %v2832, 96
    %v6261 = vpop.permute.xlu0 %6260
    %6262 = vrot.lane.b32.xlu0 %v2833, 96
    %v6263 = vpop.permute.xlu0 %6262
    %6264 = vrot.lane.b32.xlu0 %v2834, 96
    %v6265 = vpop.permute.xlu0 %6264
    %6266 = vrot.lane.b32.xlu0 %v2835, 96
    %v6267 = vpop.permute.xlu0 %6266
    %6268 = vrot.lane.b32.xlu0 %v2836, 96
    %v6269 = vpop.permute.xlu0 %6268
    %6270 = vrot.lane.b32.xlu0 %v2837, 96
    %v6271 = vpop.permute.xlu0 %6270
    %6272 = vrot.lane.b32.xlu0 %v2838, 96
    %v6273 = vpop.permute.xlu0 %6272
    %6274 = vrot.lane.b32.xlu0 %v2839, 96
    %v6275 = vpop.permute.xlu0 %6274
    %6276 = vrot.lane.b32.xlu0 %v2848, 96
    %v6277 = vpop.permute.xlu0 %6276
    %6278 = vrot.lane.b32.xlu0 %v2849, 96
    %v6279 = vpop.permute.xlu0 %6278
    %6280 = vrot.lane.b32.xlu0 %v2850, 96
    %v6281 = vpop.permute.xlu0 %6280
    %6282 = vrot.lane.b32.xlu0 %v2851, 96
    %v6283 = vpop.permute.xlu0 %6282
    %6284 = vrot.lane.b32.xlu0 %v2852, 96
    %v6285 = vpop.permute.xlu0 %6284
    %6286 = vrot.lane.b32.xlu0 %v2853, 96
    %v6287 = vpop.permute.xlu0 %6286
    %6288 = vrot.lane.b32.xlu0 %v2854, 96
    %v6289 = vpop.permute.xlu0 %6288
    %6290 = vrot.lane.b32.xlu0 %v2855, 96
    %v6291 = vpop.permute.xlu0 %6290
    %6292 = vrot.lane.b32.xlu0 %v2856, 96
    %v6293 = vpop.permute.xlu0 %6292
    %6294 = vrot.lane.b32.xlu0 %v2857, 96
    %v6295 = vpop.permute.xlu0 %6294
    %6296 = vrot.lane.b32.xlu0 %v2858, 96
    %v6297 = vpop.permute.xlu0 %6296
    %6298 = vrot.lane.b32.xlu0 %v2859, 96
    %v6299 = vpop.permute.xlu0 %6298
    %6300 = vrot.lane.b32.xlu0 %v2860, 96
    %v6301 = vpop.permute.xlu0 %6300
    %6302 = vrot.lane.b32.xlu0 %v2861, 96
    %v6303 = vpop.permute.xlu0 %6302
    %6304 = vrot.lane.b32.xlu0 %v2862, 96
    %v6305 = vpop.permute.xlu0 %6304
    %6306 = vrot.lane.b32.xlu0 %v2863, 96
    %v6307 = vpop.permute.xlu0 %6306
    %6308 = vrot.lane.b32.xlu0 %v2864, 96
    %v6309 = vpop.permute.xlu0 %6308
    %6310 = vrot.lane.b32.xlu0 %v2865, 96
    %v6311 = vpop.permute.xlu0 %6310
    %6312 = vrot.lane.b32.xlu0 %v2866, 96
    %v6313 = vpop.permute.xlu0 %6312
    %6314 = vrot.lane.b32.xlu0 %v2867, 96
    %v6315 = vpop.permute.xlu0 %6314
    %6316 = vrot.lane.b32.xlu0 %v2868, 96
    %v6317 = vpop.permute.xlu0 %6316
    %6318 = vrot.lane.b32.xlu0 %v2869, 96
    %v6319 = vpop.permute.xlu0 %6318
    %6320 = vrot.lane.b32.xlu0 %v2870, 96
    %v6321 = vpop.permute.xlu0 %6320
    %6322 = vrot.lane.b32.xlu0 %v2871, 96
    %v6323 = vpop.permute.xlu0 %6322
    %6324 = vrot.lane.b32.xlu0 %v2872, 96
    %v6325 = vpop.permute.xlu0 %6324
    %6326 = vrot.lane.b32.xlu0 %v2873, 96
    %v6327 = vpop.permute.xlu0 %6326
    %6328 = vrot.lane.b32.xlu0 %v2874, 96
    %v6329 = vpop.permute.xlu0 %6328
    %6330 = vrot.lane.b32.xlu0 %v2875, 96
    %v6331 = vpop.permute.xlu0 %6330
    %6332 = vrot.lane.b32.xlu0 %v2876, 96
    %v6333 = vpop.permute.xlu0 %6332
    %6334 = vrot.lane.b32.xlu0 %v2877, 96
    %v6335 = vpop.permute.xlu0 %6334
    %6336 = vrot.lane.b32.xlu0 %v2878, 96
    %v6337 = vpop.permute.xlu0 %6336
    %6338 = vrot.lane.b32.xlu0 %v2879, 96
    %v6339 = vpop.permute.xlu0 %6338
    %v6404 = vsel %vm96, %v3326, %v5821
    %v6405 = vsel %vm96, %v3327, %v5823
    %v6406 = vsel %vm96, %v3328, %v5825
    %v6407 = vsel %vm96, %v3329, %v5827
    %v6408 = vsel %vm96, %v3330, %v5829
    %v6409 = vsel %vm96, %v3331, %v5831
    %v6410 = vsel %vm96, %v3332, %v5833
    %v6411 = vsel %vm96, %v3333, %v5835
    %v6412 = vsel %vm96, %v3334, %v5837
    %v6413 = vsel %vm96, %v3335, %v5839
    %v6414 = vsel %vm96, %v3336, %v5841
    %v6415 = vsel %vm96, %v3337, %v5843
    %v6416 = vsel %vm96, %v3338, %v5845
    %v6417 = vsel %vm96, %v3339, %v5847
    %v6418 = vsel %vm96, %v3340, %v5849
    %v6419 = vsel %vm96, %v3341, %v5851
    %v6420 = vsel %vm96, %v3342, %v5853
    %v6421 = vsel %vm96, %v3343, %v5855
    %v6422 = vsel %vm96, %v3344, %v5857
    %v6423 = vsel %vm96, %v3345, %v5859
    %v6424 = vsel %vm96, %v3346, %v5861
    %v6425 = vsel %vm96, %v3347, %v5863
    %v6426 = vsel %vm96, %v3348, %v5865
    %v6427 = vsel %vm96, %v3349, %v5867
    %v6428 = vsel %vm96, %v3350, %v5869
    %v6429 = vsel %vm96, %v3351, %v5871
    %v6430 = vsel %vm96, %v3352, %v5873
    %v6431 = vsel %vm96, %v3353, %v5875
    %v6432 = vsel %vm96, %v3354, %v5877
    %v6433 = vsel %vm96, %v3355, %v5879
    %v6434 = vsel %vm96, %v3356, %v5881
    %v6435 = vsel %vm96, %v3357, %v5883
    %v6436 = vsel %vm96, %v3366, %v5885
    %v6437 = vsel %vm96, %v3367, %v5887
    %v6438 = vsel %vm96, %v3368, %v5889
    %v6439 = vsel %vm96, %v3369, %v5891
    %v6440 = vsel %vm96, %v3370, %v5893
    %v6441 = vsel %vm96, %v3371, %v5895
    %v6442 = vsel %vm96, %v3372, %v5897
    %v6443 = vsel %vm96, %v3373, %v5899
    %v6444 = vsel %vm96, %v3374, %v5901
    %v6445 = vsel %vm96, %v3375, %v5903
    %v6446 = vsel %vm96, %v3376, %v5905
    %v6447 = vsel %vm96, %v3377, %v5907
    %v6448 = vsel %vm96, %v3378, %v5909
    %v6449 = vsel %vm96, %v3379, %v5911
    %v6450 = vsel %vm96, %v3380, %v5913
    %v6451 = vsel %vm96, %v3381, %v5915
    %v6452 = vsel %vm96, %v3382, %v5917
    %v6453 = vsel %vm96, %v3383, %v5919
    %v6454 = vsel %vm96, %v3384, %v5921
    %v6455 = vsel %vm96, %v3385, %v5923
    %v6456 = vsel %vm96, %v3386, %v5925
    %v6457 = vsel %vm96, %v3387, %v5927
    %v6458 = vsel %vm96, %v3388, %v5929
    %v6459 = vsel %vm96, %v3389, %v5931
    %v6460 = vsel %vm96, %v3390, %v5933
    %v6461 = vsel %vm96, %v3391, %v5935
    %v6462 = vsel %vm96, %v3392, %v5937
    %v6463 = vsel %vm96, %v3393, %v5939
    %v6464 = vsel %vm96, %v3394, %v5941
    %v6465 = vsel %vm96, %v3395, %v5943
    %v6466 = vsel %vm96, %v3396, %v5945
    %v6467 = vsel %vm96, %v3397, %v5947
    %v6468 = vsel %vm4671, %v6404, %v6017
    %v6469 = vsel %vm4671, %v6405, %v6019
    %v6470 = vsel %vm4671, %v6406, %v6021
    %v6471 = vsel %vm4671, %v6407, %v6023
    %v6472 = vsel %vm4671, %v6408, %v6025
    %v6473 = vsel %vm4671, %v6409, %v6027
    %v6474 = vsel %vm4671, %v6410, %v6029
    %v6475 = vsel %vm4671, %v6411, %v6031
    %v6476 = vsel %vm4671, %v6412, %v6033
    %v6477 = vsel %vm4671, %v6413, %v6035
    %v6478 = vsel %vm4671, %v6414, %v6037
    %v6479 = vsel %vm4671, %v6415, %v6039
    %v6480 = vsel %vm4671, %v6416, %v6041
    %v6481 = vsel %vm4671, %v6417, %v6043
    %v6482 = vsel %vm4671, %v6418, %v6045
    %v6483 = vsel %vm4671, %v6419, %v6047
    %v6484 = vsel %vm4671, %v6420, %v6049
    %v6485 = vsel %vm4671, %v6421, %v6051
    %v6486 = vsel %vm4671, %v6422, %v6053
    %v6487 = vsel %vm4671, %v6423, %v6055
    %v6488 = vsel %vm4671, %v6424, %v6057
    %v6489 = vsel %vm4671, %v6425, %v6059
    %v6490 = vsel %vm4671, %v6426, %v6061
    %v6491 = vsel %vm4671, %v6427, %v6063
    %v6492 = vsel %vm4671, %v6428, %v6065
    %v6493 = vsel %vm4671, %v6429, %v6067
    %v6494 = vsel %vm4671, %v6430, %v6069
    %v6495 = vsel %vm4671, %v6431, %v6071
    %v6496 = vsel %vm4671, %v6432, %v6073
    %v6497 = vsel %vm4671, %v6433, %v6075
    %v6498 = vsel %vm4671, %v6434, %v6077
    %v6499 = vsel %vm4671, %v6435, %v6079
    %v6500 = vsel %vm4671, %v6436, %v6081
    %v6501 = vsel %vm4671, %v6437, %v6083
    %v6502 = vsel %vm4671, %v6438, %v6085
    %v6503 = vsel %vm4671, %v6439, %v6087
    %v6504 = vsel %vm4671, %v6440, %v6089
    %v6505 = vsel %vm4671, %v6441, %v6091
    %v6506 = vsel %vm4671, %v6442, %v6093
    %v6507 = vsel %vm4671, %v6443, %v6095
    %v6508 = vsel %vm4671, %v6444, %v6097
    %v6509 = vsel %vm4671, %v6445, %v6099
    %v6510 = vsel %vm4671, %v6446, %v6101
    %v6511 = vsel %vm4671, %v6447, %v6103
    %v6512 = vsel %vm4671, %v6448, %v6105
    %v6513 = vsel %vm4671, %v6449, %v6107
    %v6514 = vsel %vm4671, %v6450, %v6109
    %v6515 = vsel %vm4671, %v6451, %v6111
    %v6516 = vsel %vm4671, %v6452, %v6113
    %v6517 = vsel %vm4671, %v6453, %v6115
    %v6518 = vsel %vm4671, %v6454, %v6117
    %v6519 = vsel %vm4671, %v6455, %v6119
    %v6520 = vsel %vm4671, %v6456, %v6121
    %v6521 = vsel %vm4671, %v6457, %v6123
    %v6522 = vsel %vm4671, %v6458, %v6125
    %v6523 = vsel %vm4671, %v6459, %v6127
    %v6524 = vsel %vm4671, %v6460, %v6129
    %v6525 = vsel %vm4671, %v6461, %v6131
    %v6526 = vsel %vm4671, %v6462, %v6133
    %v6527 = vsel %vm4671, %v6463, %v6135
    %v6528 = vsel %vm4671, %v6464, %v6137
    %v6529 = vsel %vm4671, %v6465, %v6139
    %v6530 = vsel %vm4671, %v6466, %v6141
    %v6531 = vsel %vm4671, %v6467, %v6143
    %v6532 = vsel %vm4736, %v6468, %v6213
    %v6533 = vsel %vm4736, %v6469, %v6215
    %v6534 = vsel %vm4736, %v6470, %v6217
    %v6535 = vsel %vm4736, %v6471, %v6219
    %v6536 = vsel %vm4736, %v6472, %v6221
    %v6537 = vsel %vm4736, %v6473, %v6223
    %v6538 = vsel %vm4736, %v6474, %v6225
    %v6539 = vsel %vm4736, %v6475, %v6227
    %v6540 = vsel %vm4736, %v6476, %v6229
    %v6541 = vsel %vm4736, %v6477, %v6231
    %v6542 = vsel %vm4736, %v6478, %v6233
    %v6543 = vsel %vm4736, %v6479, %v6235
    %v6544 = vsel %vm4736, %v6480, %v6237
    %v6545 = vsel %vm4736, %v6481, %v6239
    %v6546 = vsel %vm4736, %v6482, %v6241
    %v6547 = vsel %vm4736, %v6483, %v6243
    %v6548 = vsel %vm4736, %v6484, %v6245
    %v6549 = vsel %vm4736, %v6485, %v6247
    %v6550 = vsel %vm4736, %v6486, %v6249
    %v6551 = vsel %vm4736, %v6487, %v6251
    %v6552 = vsel %vm4736, %v6488, %v6253
    %v6553 = vsel %vm4736, %v6489, %v6255
    %v6554 = vsel %vm4736, %v6490, %v6257
    %v6555 = vsel %vm4736, %v6491, %v6259
    %v6556 = vsel %vm4736, %v6492, %v6261
    %v6557 = vsel %vm4736, %v6493, %v6263
    %v6558 = vsel %vm4736, %v6494, %v6265
    %v6559 = vsel %vm4736, %v6495, %v6267
    %v6560 = vsel %vm4736, %v6496, %v6269
    %v6561 = vsel %vm4736, %v6497, %v6271
    %v6562 = vsel %vm4736, %v6498, %v6273
    %v6563 = vsel %vm4736, %v6499, %v6275
    %v6564 = vsel %vm4736, %v6500, %v6277
    %v6565 = vsel %vm4736, %v6501, %v6279
    %v6566 = vsel %vm4736, %v6502, %v6281
    %v6567 = vsel %vm4736, %v6503, %v6283
    %v6568 = vsel %vm4736, %v6504, %v6285
    %v6569 = vsel %vm4736, %v6505, %v6287
    %v6570 = vsel %vm4736, %v6506, %v6289
    %v6571 = vsel %vm4736, %v6507, %v6291
    %v6572 = vsel %vm4736, %v6508, %v6293
    %v6573 = vsel %vm4736, %v6509, %v6295
    %v6574 = vsel %vm4736, %v6510, %v6297
    %v6575 = vsel %vm4736, %v6511, %v6299
    %v6576 = vsel %vm4736, %v6512, %v6301
    %v6577 = vsel %vm4736, %v6513, %v6303
    %v6578 = vsel %vm4736, %v6514, %v6305
    %v6579 = vsel %vm4736, %v6515, %v6307
    %v6580 = vsel %vm4736, %v6516, %v6309
    %v6581 = vsel %vm4736, %v6517, %v6311
    %v6582 = vsel %vm4736, %v6518, %v6313
    %v6583 = vsel %vm4736, %v6519, %v6315
    %v6584 = vsel %vm4736, %v6520, %v6317
    %v6585 = vsel %vm4736, %v6521, %v6319
    %v6586 = vsel %vm4736, %v6522, %v6321
    %v6587 = vsel %vm4736, %v6523, %v6323
    %v6588 = vsel %vm4736, %v6524, %v6325
    %v6589 = vsel %vm4736, %v6525, %v6327
    %v6590 = vsel %vm4736, %v6526, %v6329
    %v6591 = vsel %vm4736, %v6527, %v6331
    %v6592 = vsel %vm4736, %v6528, %v6333
    %v6593 = vsel %vm4736, %v6529, %v6335
    %v6594 = vsel %vm4736, %v6530, %v6337
    %v6595 = vsel %vm4736, %v6531, %v6339
    %6596 = vst [vmem:[#allocation2 + $0x10] sm:$0xff] %v6532
    %6597 = vst [vmem:[#allocation2 + $0x48] sm:$0xff] %v6533
    %6598 = vst [vmem:[#allocation2 + $0x80] sm:$0xff] %v6534
    %6599 = vst [vmem:[#allocation2 + $0xb8] sm:$0xff] %v6535
    %6600 = vst [vmem:[#allocation2 + $0xf0] sm:$0xff] %v6536
    %6601 = vst [vmem:[#allocation2 + $0x128] sm:$0xff] %v6537
    %6602 = vst [vmem:[#allocation2 + $0x160] sm:$0xff] %v6538
    %6603 = vst [vmem:[#allocation2 + $0x198] sm:$0xff] %v6539
    %6604 = vst [vmem:[#allocation2 + $0x1d0] sm:$0xff] %v6540
    %6605 = vst [vmem:[#allocation2 + $0x208] sm:$0xff] %v6541
    %6606 = vst [vmem:[#allocation2 + $0x240] sm:$0xff] %v6542
    %6607 = vst [vmem:[#allocation2 + $0x278] sm:$0xff] %v6543
    %6608 = vst [vmem:[#allocation2 + $0x2b0] sm:$0xff] %v6544
    %6609 = vst [vmem:[#allocation2 + $0x2e8] sm:$0xff] %v6545
    %6610 = vst [vmem:[#allocation2 + $0x320] sm:$0xff] %v6546
    %6611 = vst [vmem:[#allocation2 + $0x358] sm:$0xff] %v6547
    %6612 = vst [vmem:[#allocation2 + $0x390] sm:$0xff] %v6548
    %6613 = vst [vmem:[#allocation2 + $0x3c8] sm:$0xff] %v6549
    %6614 = vst [vmem:[#allocation2 + $0x400] sm:$0xff] %v6550
    %6615 = vst [vmem:[#allocation2 + $0x438] sm:$0xff] %v6551
    %6616 = vst [vmem:[#allocation2 + $0x470] sm:$0xff] %v6552
    %6617 = vst [vmem:[#allocation2 + $0x4a8] sm:$0xff] %v6553
    %6618 = vst [vmem:[#allocation2 + $0x4e0] sm:$0xff] %v6554
    %6619 = vst [vmem:[#allocation2 + $0x518] sm:$0xff] %v6555
    %6620 = vst [vmem:[#allocation2 + $0x550] sm:$0xff] %v6556
    %6621 = vst [vmem:[#allocation2 + $0x588] sm:$0xff] %v6557
    %6622 = vst [vmem:[#allocation2 + $0x5c0] sm:$0xff] %v6558
    %6623 = vst [vmem:[#allocation2 + $0x5f8] sm:$0xff] %v6559
    %6624 = vst [vmem:[#allocation2 + $0x630] sm:$0xff] %v6560
    %6625 = vst [vmem:[#allocation2 + $0x668] sm:$0xff] %v6561
    %6626 = vst [vmem:[#allocation2 + $0x6a0] sm:$0xff] %v6562
    %6627 = vst [vmem:[#allocation2 + $0x6d8] sm:$0xff] %v6563
    %6628 = vst [vmem:[#allocation2 + $0x710] sm:$0xff] %v6564
    %6629 = vst [vmem:[#allocation2 + $0x748] sm:$0xff] %v6565
    %6630 = vst [vmem:[#allocation2 + $0x780] sm:$0xff] %v6566
    %6631 = vst [vmem:[#allocation2 + $0x7b8] sm:$0xff] %v6567
    %6632 = vst [vmem:[#allocation2 + $0x7f0] sm:$0xff] %v6568
    %6633 = vst [vmem:[#allocation2 + $0x828] sm:$0xff] %v6569
    %6634 = vst [vmem:[#allocation2 + $0x860] sm:$0xff] %v6570
    %6635 = vst [vmem:[#allocation2 + $0x898] sm:$0xff] %v6571
    %6636 = vst [vmem:[#allocation2 + $0x8d0] sm:$0xff] %v6572
    %6637 = vst [vmem:[#allocation2 + $0x908] sm:$0xff] %v6573
    %6638 = vst [vmem:[#allocation2 + $0x940] sm:$0xff] %v6574
    %6639 = vst [vmem:[#allocation2 + $0x978] sm:$0xff] %v6575
    %6640 = vst [vmem:[#allocation2 + $0x9b0] sm:$0xff] %v6576
    %6641 = vst [vmem:[#allocation2 + $0x9e8] sm:$0xff] %v6577
    %6642 = vst [vmem:[#allocation2 + $0xa20] sm:$0xff] %v6578
    %6643 = vst [vmem:[#allocation2 + $0xa58] sm:$0xff] %v6579
    %6644 = vst [vmem:[#allocation2 + $0xa90] sm:$0xff] %v6580
    %6645 = vst [vmem:[#allocation2 + $0xac8] sm:$0xff] %v6581
    %6646 = vst [vmem:[#allocation2 + $0xb00] sm:$0xff] %v6582
    %6647 = vst [vmem:[#allocation2 + $0xb38] sm:$0xff] %v6583
    %6648 = vst [vmem:[#allocation2 + $0xb70] sm:$0xff] %v6584
    %6649 = vst [vmem:[#allocation2 + $0xba8] sm:$0xff] %v6585
    %6650 = vst [vmem:[#allocation2 + $0xbe0] sm:$0xff] %v6586
    %6651 = vst [vmem:[#allocation2 + $0xc18] sm:$0xff] %v6587
    %6652 = vst [vmem:[#allocation2 + $0xc50] sm:$0xff] %v6588
    %6653 = vst [vmem:[#allocation2 + $0xc88] sm:$0xff] %v6589
    %6654 = vst [vmem:[#allocation2 + $0xcc0] sm:$0xff] %v6590
    %6655 = vst [vmem:[#allocation2 + $0xcf8] sm:$0xff] %v6591
    %6656 = vst [vmem:[#allocation2 + $0xd30] sm:$0xff] %v6592
    %6657 = vst [vmem:[#allocation2 + $0xd68] sm:$0xff] %v6593
    %6658 = vst [vmem:[#allocation2 + $0xda0] sm:$0xff] %v6594
    %6659 = vst [vmem:[#allocation2 + $0xdd8] sm:$0xff] %v6595
    %6668 = vrot.lane.b32.xlu0 %v3328, 32
    %v6669 = vpop.permute.xlu0 %6668
    %6670 = vrot.lane.b32.xlu0 %v3329, 32
    %v6671 = vpop.permute.xlu0 %6670
    %6672 = vrot.lane.b32.xlu0 %v3330, 32
    %v6673 = vpop.permute.xlu0 %6672
    %6674 = vrot.lane.b32.xlu0 %v3331, 32
    %v6675 = vpop.permute.xlu0 %6674
    %6676 = vrot.lane.b32.xlu0 %v3332, 32
    %v6677 = vpop.permute.xlu0 %6676
    %6678 = vrot.lane.b32.xlu0 %v3333, 32
    %v6679 = vpop.permute.xlu0 %6678
    %6680 = vrot.lane.b32.xlu0 %v3334, 32
    %v6681 = vpop.permute.xlu0 %6680
    %6682 = vrot.lane.b32.xlu0 %v3335, 32
    %v6683 = vpop.permute.xlu0 %6682
    %6684 = vrot.lane.b32.xlu0 %v3336, 32
    %v6685 = vpop.permute.xlu0 %6684
    %6686 = vrot.lane.b32.xlu0 %v3337, 32
    %v6687 = vpop.permute.xlu0 %6686
    %6688 = vrot.lane.b32.xlu0 %v3338, 32
    %v6689 = vpop.permute.xlu0 %6688
    %6690 = vrot.lane.b32.xlu0 %v3339, 32
    %v6691 = vpop.permute.xlu0 %6690
    %6692 = vrot.lane.b32.xlu0 %v3340, 32
    %v6693 = vpop.permute.xlu0 %6692
    %6694 = vrot.lane.b32.xlu0 %v3341, 32
    %v6695 = vpop.permute.xlu0 %6694
    %6696 = vrot.lane.b32.xlu0 %v3342, 32
    %v6697 = vpop.permute.xlu0 %6696
    %6698 = vrot.lane.b32.xlu0 %v3343, 32
    %v6699 = vpop.permute.xlu0 %6698
    %6700 = vrot.lane.b32.xlu0 %v3344, 32
    %v6701 = vpop.permute.xlu0 %6700
    %6702 = vrot.lane.b32.xlu0 %v3345, 32
    %v6703 = vpop.permute.xlu0 %6702
    %6704 = vrot.lane.b32.xlu0 %v3346, 32
    %v6705 = vpop.permute.xlu0 %6704
    %6706 = vrot.lane.b32.xlu0 %v3347, 32
    %v6707 = vpop.permute.xlu0 %6706
    %6708 = vrot.lane.b32.xlu0 %v3348, 32
    %v6709 = vpop.permute.xlu0 %6708
    %6710 = vrot.lane.b32.xlu0 %v3349, 32
    %v6711 = vpop.permute.xlu0 %6710
    %6712 = vrot.lane.b32.xlu0 %v3350, 32
    %v6713 = vpop.permute.xlu0 %6712
    %6714 = vrot.lane.b32.xlu0 %v3351, 32
    %v6715 = vpop.permute.xlu0 %6714
    %6716 = vrot.lane.b32.xlu0 %v3352, 32
    %v6717 = vpop.permute.xlu0 %6716
    %6718 = vrot.lane.b32.xlu0 %v3353, 32
    %v6719 = vpop.permute.xlu0 %6718
    %6720 = vrot.lane.b32.xlu0 %v3354, 32
    %v6721 = vpop.permute.xlu0 %6720
    %6722 = vrot.lane.b32.xlu0 %v3355, 32
    %v6723 = vpop.permute.xlu0 %6722
    %6724 = vrot.lane.b32.xlu0 %v3356, 32
    %v6725 = vpop.permute.xlu0 %6724
    %6726 = vrot.lane.b32.xlu0 %v3357, 32
    %v6727 = vpop.permute.xlu0 %6726
    %6728 = vrot.lane.b32.xlu0 %v3358, 32
    %v6729 = vpop.permute.xlu0 %6728
    %6730 = vrot.lane.b32.xlu0 %v3359, 32
    %v6731 = vpop.permute.xlu0 %6730
    %6732 = vrot.lane.b32.xlu0 %v3368, 32
    %v6733 = vpop.permute.xlu0 %6732
    %6734 = vrot.lane.b32.xlu0 %v3369, 32
    %v6735 = vpop.permute.xlu0 %6734
    %6736 = vrot.lane.b32.xlu0 %v3370, 32
    %v6737 = vpop.permute.xlu0 %6736
    %6738 = vrot.lane.b32.xlu0 %v3371, 32
    %v6739 = vpop.permute.xlu0 %6738
    %6740 = vrot.lane.b32.xlu0 %v3372, 32
    %v6741 = vpop.permute.xlu0 %6740
    %6742 = vrot.lane.b32.xlu0 %v3373, 32
    %v6743 = vpop.permute.xlu0 %6742
    %6744 = vrot.lane.b32.xlu0 %v3374, 32
    %v6745 = vpop.permute.xlu0 %6744
    %6746 = vrot.lane.b32.xlu0 %v3375, 32
    %v6747 = vpop.permute.xlu0 %6746
    %6748 = vrot.lane.b32.xlu0 %v3376, 32
    %v6749 = vpop.permute.xlu0 %6748
    %6750 = vrot.lane.b32.xlu0 %v3377, 32
    %v6751 = vpop.permute.xlu0 %6750
    %6752 = vrot.lane.b32.xlu0 %v3378, 32
    %v6753 = vpop.permute.xlu0 %6752
    %6754 = vrot.lane.b32.xlu0 %v3379, 32
    %v6755 = vpop.permute.xlu0 %6754
    %6756 = vrot.lane.b32.xlu0 %v3380, 32
    %v6757 = vpop.permute.xlu0 %6756
    %6758 = vrot.lane.b32.xlu0 %v3381, 32
    %v6759 = vpop.permute.xlu0 %6758
    %6760 = vrot.lane.b32.xlu0 %v3382, 32
    %v6761 = vpop.permute.xlu0 %6760
    %6762 = vrot.lane.b32.xlu0 %v3383, 32
    %v6763 = vpop.permute.xlu0 %6762
    %6764 = vrot.lane.b32.xlu0 %v3384, 32
    %v6765 = vpop.permute.xlu0 %6764
    %6766 = vrot.lane.b32.xlu0 %v3385, 32
    %v6767 = vpop.permute.xlu0 %6766
    %6768 = vrot.lane.b32.xlu0 %v3386, 32
    %v6769 = vpop.permute.xlu0 %6768
    %6770 = vrot.lane.b32.xlu0 %v3387, 32
    %v6771 = vpop.permute.xlu0 %6770
    %6772 = vrot.lane.b32.xlu0 %v3388, 32
    %v6773 = vpop.permute.xlu0 %6772
    %6774 = vrot.lane.b32.xlu0 %v3389, 32
    %v6775 = vpop.permute.xlu0 %6774
    %6776 = vrot.lane.b32.xlu0 %v3390, 32
    %v6777 = vpop.permute.xlu0 %6776
    %6778 = vrot.lane.b32.xlu0 %v3391, 32
    %v6779 = vpop.permute.xlu0 %6778
    %6780 = vrot.lane.b32.xlu0 %v3392, 32
    %v6781 = vpop.permute.xlu0 %6780
    %6782 = vrot.lane.b32.xlu0 %v3393, 32
    %v6783 = vpop.permute.xlu0 %6782
    %6784 = vrot.lane.b32.xlu0 %v3394, 32
    %v6785 = vpop.permute.xlu0 %6784
    %6786 = vrot.lane.b32.xlu0 %v3395, 32
    %v6787 = vpop.permute.xlu0 %6786
    %6788 = vrot.lane.b32.xlu0 %v3396, 32
    %v6789 = vpop.permute.xlu0 %6788
    %6790 = vrot.lane.b32.xlu0 %v3397, 32
    %v6791 = vpop.permute.xlu0 %6790
    %6792 = vrot.lane.b32.xlu0 %v3398, 32
    %v6793 = vpop.permute.xlu0 %6792
    %6794 = vrot.lane.b32.xlu0 %v3399, 32
    %v6795 = vpop.permute.xlu0 %6794
    %6864 = vrot.lane.b32.xlu0 %v3848, 64
    %v6865 = vpop.permute.xlu0 %6864
    %6866 = vrot.lane.b32.xlu0 %v3849, 64
    %v6867 = vpop.permute.xlu0 %6866
    %6868 = vrot.lane.b32.xlu0 %v3850, 64
    %v6869 = vpop.permute.xlu0 %6868
    %6870 = vrot.lane.b32.xlu0 %v3851, 64
    %v6871 = vpop.permute.xlu0 %6870
    %6872 = vrot.lane.b32.xlu0 %v3852, 64
    %v6873 = vpop.permute.xlu0 %6872
    %6874 = vrot.lane.b32.xlu0 %v3853, 64
    %v6875 = vpop.permute.xlu0 %6874
    %6876 = vrot.lane.b32.xlu0 %v3854, 64
    %v6877 = vpop.permute.xlu0 %6876
    %6878 = vrot.lane.b32.xlu0 %v3855, 64
    %v6879 = vpop.permute.xlu0 %6878
    %6880 = vrot.lane.b32.xlu0 %v3856, 64
    %v6881 = vpop.permute.xlu0 %6880
    %6882 = vrot.lane.b32.xlu0 %v3857, 64
    %v6883 = vpop.permute.xlu0 %6882
    %6884 = vrot.lane.b32.xlu0 %v3858, 64
    %v6885 = vpop.permute.xlu0 %6884
    %6886 = vrot.lane.b32.xlu0 %v3859, 64
    %v6887 = vpop.permute.xlu0 %6886
    %6888 = vrot.lane.b32.xlu0 %v3860, 64
    %v6889 = vpop.permute.xlu0 %6888
    %6890 = vrot.lane.b32.xlu0 %v3861, 64
    %v6891 = vpop.permute.xlu0 %6890
    %6892 = vrot.lane.b32.xlu0 %v3862, 64
    %v6893 = vpop.permute.xlu0 %6892
    %6894 = vrot.lane.b32.xlu0 %v3863, 64
    %v6895 = vpop.permute.xlu0 %6894
    %6896 = vrot.lane.b32.xlu0 %v3864, 64
    %v6897 = vpop.permute.xlu0 %6896
    %6898 = vrot.lane.b32.xlu0 %v3865, 64
    %v6899 = vpop.permute.xlu0 %6898
    %6900 = vrot.lane.b32.xlu0 %v3866, 64
    %v6901 = vpop.permute.xlu0 %6900
    %6902 = vrot.lane.b32.xlu0 %v3867, 64
    %v6903 = vpop.permute.xlu0 %6902
    %6904 = vrot.lane.b32.xlu0 %v3868, 64
    %v6905 = vpop.permute.xlu0 %6904
    %6906 = vrot.lane.b32.xlu0 %v3869, 64
    %v6907 = vpop.permute.xlu0 %6906
    %6908 = vrot.lane.b32.xlu0 %v3870, 64
    %v6909 = vpop.permute.xlu0 %6908
    %6910 = vrot.lane.b32.xlu0 %v3871, 64
    %v6911 = vpop.permute.xlu0 %6910
    %6912 = vrot.lane.b32.xlu0 %v3872, 64
    %v6913 = vpop.permute.xlu0 %6912
    %6914 = vrot.lane.b32.xlu0 %v3873, 64
    %v6915 = vpop.permute.xlu0 %6914
    %6916 = vrot.lane.b32.xlu0 %v3874, 64
    %v6917 = vpop.permute.xlu0 %6916
    %6918 = vrot.lane.b32.xlu0 %v3875, 64
    %v6919 = vpop.permute.xlu0 %6918
    %6920 = vrot.lane.b32.xlu0 %v3876, 64
    %v6921 = vpop.permute.xlu0 %6920
    %6922 = vrot.lane.b32.xlu0 %v3877, 64
    %v6923 = vpop.permute.xlu0 %6922
    %6924 = vrot.lane.b32.xlu0 %v3878, 64
    %v6925 = vpop.permute.xlu0 %6924
    %6926 = vrot.lane.b32.xlu0 %v3879, 64
    %v6927 = vpop.permute.xlu0 %6926
    %6928 = vrot.lane.b32.xlu0 %v3888, 64
    %v6929 = vpop.permute.xlu0 %6928
    %6930 = vrot.lane.b32.xlu0 %v3889, 64
    %v6931 = vpop.permute.xlu0 %6930
    %6932 = vrot.lane.b32.xlu0 %v3890, 64
    %v6933 = vpop.permute.xlu0 %6932
    %6934 = vrot.lane.b32.xlu0 %v3891, 64
    %v6935 = vpop.permute.xlu0 %6934
    %6936 = vrot.lane.b32.xlu0 %v3892, 64
    %v6937 = vpop.permute.xlu0 %6936
    %6938 = vrot.lane.b32.xlu0 %v3893, 64
    %v6939 = vpop.permute.xlu0 %6938
    %6940 = vrot.lane.b32.xlu0 %v3894, 64
    %v6941 = vpop.permute.xlu0 %6940
    %6942 = vrot.lane.b32.xlu0 %v3895, 64
    %v6943 = vpop.permute.xlu0 %6942
    %6944 = vrot.lane.b32.xlu0 %v3896, 64
    %v6945 = vpop.permute.xlu0 %6944
    %6946 = vrot.lane.b32.xlu0 %v3897, 64
    %v6947 = vpop.permute.xlu0 %6946
    %6948 = vrot.lane.b32.xlu0 %v3898, 64
    %v6949 = vpop.permute.xlu0 %6948
    %6950 = vrot.lane.b32.xlu0 %v3899, 64
    %v6951 = vpop.permute.xlu0 %6950
    %6952 = vrot.lane.b32.xlu0 %v3900, 64
    %v6953 = vpop.permute.xlu0 %6952
    %6954 = vrot.lane.b32.xlu0 %v3901, 64
    %v6955 = vpop.permute.xlu0 %6954
    %6956 = vrot.lane.b32.xlu0 %v3902, 64
    %v6957 = vpop.permute.xlu0 %6956
    %6958 = vrot.lane.b32.xlu0 %v3903, 64
    %v6959 = vpop.permute.xlu0 %6958
    %6960 = vrot.lane.b32.xlu0 %v3904, 64
    %v6961 = vpop.permute.xlu0 %6960
    %6962 = vrot.lane.b32.xlu0 %v3905, 64
    %v6963 = vpop.permute.xlu0 %6962
    %6964 = vrot.lane.b32.xlu0 %v3906, 64
    %v6965 = vpop.permute.xlu0 %6964
    %6966 = vrot.lane.b32.xlu0 %v3907, 64
    %v6967 = vpop.permute.xlu0 %6966
    %6968 = vrot.lane.b32.xlu0 %v3908, 64
    %v6969 = vpop.permute.xlu0 %6968
    %6970 = vrot.lane.b32.xlu0 %v3909, 64
    %v6971 = vpop.permute.xlu0 %6970
    %6972 = vrot.lane.b32.xlu0 %v3910, 64
    %v6973 = vpop.permute.xlu0 %6972
    %6974 = vrot.lane.b32.xlu0 %v3911, 64
    %v6975 = vpop.permute.xlu0 %6974
    %6976 = vrot.lane.b32.xlu0 %v3912, 64
    %v6977 = vpop.permute.xlu0 %6976
    %6978 = vrot.lane.b32.xlu0 %v3913, 64
    %v6979 = vpop.permute.xlu0 %6978
    %6980 = vrot.lane.b32.xlu0 %v3914, 64
    %v6981 = vpop.permute.xlu0 %6980
    %6982 = vrot.lane.b32.xlu0 %v3915, 64
    %v6983 = vpop.permute.xlu0 %6982
    %6984 = vrot.lane.b32.xlu0 %v3916, 64
    %v6985 = vpop.permute.xlu0 %6984
    %6986 = vrot.lane.b32.xlu0 %v3917, 64
    %v6987 = vpop.permute.xlu0 %6986
    %6988 = vrot.lane.b32.xlu0 %v3918, 64
    %v6989 = vpop.permute.xlu0 %6988
    %6990 = vrot.lane.b32.xlu0 %v3919, 64
    %v6991 = vpop.permute.xlu0 %6990
    %7060 = vrot.lane.b32.xlu0 %v2290, 96
    %v7061 = vpop.permute.xlu0 %7060
    %7062 = vrot.lane.b32.xlu0 %v2291, 96
    %v7063 = vpop.permute.xlu0 %7062
    %7064 = vrot.lane.b32.xlu0 %v2292, 96
    %v7065 = vpop.permute.xlu0 %7064
    %7066 = vrot.lane.b32.xlu0 %v2293, 96
    %v7067 = vpop.permute.xlu0 %7066
    %7068 = vrot.lane.b32.xlu0 %v2294, 96
    %v7069 = vpop.permute.xlu0 %7068
    %7070 = vrot.lane.b32.xlu0 %v2295, 96
    %v7071 = vpop.permute.xlu0 %7070
    %7072 = vrot.lane.b32.xlu0 %v2296, 96
    %v7073 = vpop.permute.xlu0 %7072
    %7074 = vrot.lane.b32.xlu0 %v2297, 96
    %v7075 = vpop.permute.xlu0 %7074
    %7076 = vrot.lane.b32.xlu0 %v2298, 96
    %v7077 = vpop.permute.xlu0 %7076
    %7078 = vrot.lane.b32.xlu0 %v2299, 96
    %v7079 = vpop.permute.xlu0 %7078
    %7080 = vrot.lane.b32.xlu0 %v2300, 96
    %v7081 = vpop.permute.xlu0 %7080
    %7082 = vrot.lane.b32.xlu0 %v2301, 96
    %v7083 = vpop.permute.xlu0 %7082
    %7084 = vrot.lane.b32.xlu0 %v2302, 96
    %v7085 = vpop.permute.xlu0 %7084
    %7086 = vrot.lane.b32.xlu0 %v2303, 96
    %v7087 = vpop.permute.xlu0 %7086
    %7088 = vrot.lane.b32.xlu0 %v2304, 96
    %v7089 = vpop.permute.xlu0 %7088
    %7090 = vrot.lane.b32.xlu0 %v2305, 96
    %v7091 = vpop.permute.xlu0 %7090
    %7092 = vrot.lane.b32.xlu0 %v2306, 96
    %v7093 = vpop.permute.xlu0 %7092
    %7094 = vrot.lane.b32.xlu0 %v2307, 96
    %v7095 = vpop.permute.xlu0 %7094
    %7096 = vrot.lane.b32.xlu0 %v2308, 96
    %v7097 = vpop.permute.xlu0 %7096
    %7098 = vrot.lane.b32.xlu0 %v2309, 96
    %v7099 = vpop.permute.xlu0 %7098
    %7100 = vrot.lane.b32.xlu0 %v2310, 96
    %v7101 = vpop.permute.xlu0 %7100
    %7102 = vrot.lane.b32.xlu0 %v2311, 96
    %v7103 = vpop.permute.xlu0 %7102
    %7104 = vrot.lane.b32.xlu0 %v2312, 96
    %v7105 = vpop.permute.xlu0 %7104
    %7106 = vrot.lane.b32.xlu0 %v2313, 96
    %v7107 = vpop.permute.xlu0 %7106
    %7108 = vrot.lane.b32.xlu0 %v2314, 96
    %v7109 = vpop.permute.xlu0 %7108
    %7110 = vrot.lane.b32.xlu0 %v2315, 96
    %v7111 = vpop.permute.xlu0 %7110
    %7112 = vrot.lane.b32.xlu0 %v2316, 96
    %v7113 = vpop.permute.xlu0 %7112
    %7114 = vrot.lane.b32.xlu0 %v2317, 96
    %v7115 = vpop.permute.xlu0 %7114
    %7116 = vrot.lane.b32.xlu0 %v2318, 96
    %v7117 = vpop.permute.xlu0 %7116
    %7118 = vrot.lane.b32.xlu0 %v2319, 96
    %v7119 = vpop.permute.xlu0 %7118
    %7120 = vrot.lane.b32.xlu0 %v2320, 96
    %v7121 = vpop.permute.xlu0 %7120
    %7122 = vrot.lane.b32.xlu0 %v2321, 96
    %v7123 = vpop.permute.xlu0 %7122
    %7124 = vrot.lane.b32.xlu0 %v2330, 96
    %v7125 = vpop.permute.xlu0 %7124
    %7126 = vrot.lane.b32.xlu0 %v2331, 96
    %v7127 = vpop.permute.xlu0 %7126
    %7128 = vrot.lane.b32.xlu0 %v2332, 96
    %v7129 = vpop.permute.xlu0 %7128
    %7130 = vrot.lane.b32.xlu0 %v2333, 96
    %v7131 = vpop.permute.xlu0 %7130
    %7132 = vrot.lane.b32.xlu0 %v2334, 96
    %v7133 = vpop.permute.xlu0 %7132
    %7134 = vrot.lane.b32.xlu0 %v2335, 96
    %v7135 = vpop.permute.xlu0 %7134
    %7136 = vrot.lane.b32.xlu0 %v2336, 96
    %v7137 = vpop.permute.xlu0 %7136
    %7138 = vrot.lane.b32.xlu0 %v2337, 96
    %v7139 = vpop.permute.xlu0 %7138
    %7140 = vrot.lane.b32.xlu0 %v2338, 96
    %v7141 = vpop.permute.xlu0 %7140
    %7142 = vrot.lane.b32.xlu0 %v2339, 96
    %v7143 = vpop.permute.xlu0 %7142
    %7144 = vrot.lane.b32.xlu0 %v2340, 96
    %v7145 = vpop.permute.xlu0 %7144
    %7146 = vrot.lane.b32.xlu0 %v2341, 96
    %v7147 = vpop.permute.xlu0 %7146
    %7148 = vrot.lane.b32.xlu0 %v2342, 96
    %v7149 = vpop.permute.xlu0 %7148
    %7150 = vrot.lane.b32.xlu0 %v2343, 96
    %v7151 = vpop.permute.xlu0 %7150
    %7152 = vrot.lane.b32.xlu0 %v2344, 96
    %v7153 = vpop.permute.xlu0 %7152
    %7154 = vrot.lane.b32.xlu0 %v2345, 96
    %v7155 = vpop.permute.xlu0 %7154
    %7156 = vrot.lane.b32.xlu0 %v2346, 96
    %v7157 = vpop.permute.xlu0 %7156
    %7158 = vrot.lane.b32.xlu0 %v2347, 96
    %v7159 = vpop.permute.xlu0 %7158
    %7160 = vrot.lane.b32.xlu0 %v2348, 96
    %v7161 = vpop.permute.xlu0 %7160
    %7162 = vrot.lane.b32.xlu0 %v2349, 96
    %v7163 = vpop.permute.xlu0 %7162
    %7164 = vrot.lane.b32.xlu0 %v2350, 96
    %v7165 = vpop.permute.xlu0 %7164
    %7166 = vrot.lane.b32.xlu0 %v2351, 96
    %v7167 = vpop.permute.xlu0 %7166
    %7168 = vrot.lane.b32.xlu0 %v2352, 96
    %v7169 = vpop.permute.xlu0 %7168
    %7170 = vrot.lane.b32.xlu0 %v2353, 96
    %v7171 = vpop.permute.xlu0 %7170
    %7172 = vrot.lane.b32.xlu0 %v2354, 96
    %v7173 = vpop.permute.xlu0 %7172
    %7174 = vrot.lane.b32.xlu0 %v2355, 96
    %v7175 = vpop.permute.xlu0 %7174
    %7176 = vrot.lane.b32.xlu0 %v2356, 96
    %v7177 = vpop.permute.xlu0 %7176
    %7178 = vrot.lane.b32.xlu0 %v2357, 96
    %v7179 = vpop.permute.xlu0 %7178
    %7180 = vrot.lane.b32.xlu0 %v2358, 96
    %v7181 = vpop.permute.xlu0 %7180
    %7182 = vrot.lane.b32.xlu0 %v2359, 96
    %v7183 = vpop.permute.xlu0 %7182
    %7184 = vrot.lane.b32.xlu0 %v2360, 96
    %v7185 = vpop.permute.xlu0 %7184
    %7186 = vrot.lane.b32.xlu0 %v2361, 96
    %v7187 = vpop.permute.xlu0 %7186
    %v7252 = vsel %vm96, %v674, %v6669
    %v7253 = vsel %vm96, %v675, %v6671
    %v7254 = vsel %vm96, %v676, %v6673
    %v7255 = vsel %vm96, %v677, %v6675
    %v7256 = vsel %vm96, %v678, %v6677
    %v7257 = vsel %vm96, %v679, %v6679
    %v7258 = vsel %vm96, %v680, %v6681
    %v7259 = vsel %vm96, %v681, %v6683
    %v7260 = vsel %vm96, %v682, %v6685
    %v7261 = vsel %vm96, %v683, %v6687
    %v7262 = vsel %vm96, %v684, %v6689
    %v7263 = vsel %vm96, %v685, %v6691
    %v7264 = vsel %vm96, %v686, %v6693
    %v7265 = vsel %vm96, %v687, %v6695
    %v7266 = vsel %vm96, %v688, %v6697
    %v7267 = vsel %vm96, %v689, %v6699
    %v7268 = vsel %vm96, %v690, %v6701
    %v7269 = vsel %vm96, %v691, %v6703
    %v7270 = vsel %vm96, %v692, %v6705
    %v7271 = vsel %vm96, %v693, %v6707
    %v7272 = vsel %vm96, %v694, %v6709
    %v7273 = vsel %vm96, %v695, %v6711
    %v7274 = vsel %vm96, %v696, %v6713
    %v7275 = vsel %vm96, %v697, %v6715
    %v7276 = vsel %vm96, %v698, %v6717
    %v7277 = vsel %vm96, %v699, %v6719
    %v7278 = vsel %vm96, %v700, %v6721
    %v7279 = vsel %vm96, %v701, %v6723
    %v7280 = vsel %vm96, %v702, %v6725
    %v7281 = vsel %vm96, %v703, %v6727
    %v7282 = vsel %vm96, %v704, %v6729
    %v7283 = vsel %vm96, %v705, %v6731
    %v7284 = vsel %vm96, %v706, %v6733
    %v7285 = vsel %vm96, %v707, %v6735
    %v7286 = vsel %vm96, %v708, %v6737
    %v7287 = vsel %vm96, %v709, %v6739
    %v7288 = vsel %vm96, %v710, %v6741
    %v7289 = vsel %vm96, %v711, %v6743
    %v7290 = vsel %vm96, %v712, %v6745
    %v7291 = vsel %vm96, %v713, %v6747
    %v7292 = vsel %vm96, %v714, %v6749
    %v7293 = vsel %vm96, %v715, %v6751
    %v7294 = vsel %vm96, %v716, %v6753
    %v7295 = vsel %vm96, %v717, %v6755
    %v7296 = vsel %vm96, %v718, %v6757
    %v7297 = vsel %vm96, %v719, %v6759
    %v7298 = vsel %vm96, %v720, %v6761
    %v7299 = vsel %vm96, %v721, %v6763
    %v7300 = vsel %vm96, %v722, %v6765
    %v7301 = vsel %vm96, %v723, %v6767
    %v7302 = vsel %vm96, %v724, %v6769
    %v7303 = vsel %vm96, %v725, %v6771
    %v7304 = vsel %vm96, %v726, %v6773
    %v7305 = vsel %vm96, %v727, %v6775
    %v7306 = vsel %vm96, %v728, %v6777
    %v7307 = vsel %vm96, %v729, %v6779
    %v7308 = vsel %vm96, %v730, %v6781
    %v7309 = vsel %vm96, %v731, %v6783
    %v7310 = vsel %vm96, %v732, %v6785
    %v7311 = vsel %vm96, %v733, %v6787
    %v7312 = vsel %vm96, %v734, %v6789
    %v7313 = vsel %vm96, %v735, %v6791
    %v7314 = vsel %vm96, %v736, %v6793
    %v7315 = vsel %vm96, %v737, %v6795
    %v7316 = vsel %vm4671, %v7252, %v6865
    %v7317 = vsel %vm4671, %v7253, %v6867
    %v7318 = vsel %vm4671, %v7254, %v6869
    %v7319 = vsel %vm4671, %v7255, %v6871
    %v7320 = vsel %vm4671, %v7256, %v6873
    %v7321 = vsel %vm4671, %v7257, %v6875
    %v7322 = vsel %vm4671, %v7258, %v6877
    %v7323 = vsel %vm4671, %v7259, %v6879
    %v7324 = vsel %vm4671, %v7260, %v6881
    %v7325 = vsel %vm4671, %v7261, %v6883
    %v7326 = vsel %vm4671, %v7262, %v6885
    %v7327 = vsel %vm4671, %v7263, %v6887
    %v7328 = vsel %vm4671, %v7264, %v6889
    %v7329 = vsel %vm4671, %v7265, %v6891
    %v7330 = vsel %vm4671, %v7266, %v6893
    %v7331 = vsel %vm4671, %v7267, %v6895
    %v7332 = vsel %vm4671, %v7268, %v6897
    %v7333 = vsel %vm4671, %v7269, %v6899
    %v7334 = vsel %vm4671, %v7270, %v6901
    %v7335 = vsel %vm4671, %v7271, %v6903
    %v7336 = vsel %vm4671, %v7272, %v6905
    %v7337 = vsel %vm4671, %v7273, %v6907
    %v7338 = vsel %vm4671, %v7274, %v6909
    %v7339 = vsel %vm4671, %v7275, %v6911
    %v7340 = vsel %vm4671, %v7276, %v6913
    %v7341 = vsel %vm4671, %v7277, %v6915
    %v7342 = vsel %vm4671, %v7278, %v6917
    %v7343 = vsel %vm4671, %v7279, %v6919
    %v7344 = vsel %vm4671, %v7280, %v6921
    %v7345 = vsel %vm4671, %v7281, %v6923
    %v7346 = vsel %vm4671, %v7282, %v6925
    %v7347 = vsel %vm4671, %v7283, %v6927
    %v7348 = vsel %vm4671, %v7284, %v6929
    %v7349 = vsel %vm4671, %v7285, %v6931
    %v7350 = vsel %vm4671, %v7286, %v6933
    %v7351 = vsel %vm4671, %v7287, %v6935
    %v7352 = vsel %vm4671, %v7288, %v6937
    %v7353 = vsel %vm4671, %v7289, %v6939
    %v7354 = vsel %vm4671, %v7290, %v6941
    %v7355 = vsel %vm4671, %v7291, %v6943
    %v7356 = vsel %vm4671, %v7292, %v6945
    %v7357 = vsel %vm4671, %v7293, %v6947
    %v7358 = vsel %vm4671, %v7294, %v6949
    %v7359 = vsel %vm4671, %v7295, %v6951
    %v7360 = vsel %vm4671, %v7296, %v6953
    %v7361 = vsel %vm4671, %v7297, %v6955
    %v7362 = vsel %vm4671, %v7298, %v6957
    %v7363 = vsel %vm4671, %v7299, %v6959
    %v7364 = vsel %vm4671, %v7300, %v6961
    %v7365 = vsel %vm4671, %v7301, %v6963
    %v7366 = vsel %vm4671, %v7302, %v6965
    %v7367 = vsel %vm4671, %v7303, %v6967
    %v7368 = vsel %vm4671, %v7304, %v6969
    %v7369 = vsel %vm4671, %v7305, %v6971
    %v7370 = vsel %vm4671, %v7306, %v6973
    %v7371 = vsel %vm4671, %v7307, %v6975
    %v7372 = vsel %vm4671, %v7308, %v6977
    %v7373 = vsel %vm4671, %v7309, %v6979
    %v7374 = vsel %vm4671, %v7310, %v6981
    %v7375 = vsel %vm4671, %v7311, %v6983
    %v7376 = vsel %vm4671, %v7312, %v6985
    %v7377 = vsel %vm4671, %v7313, %v6987
    %v7378 = vsel %vm4671, %v7314, %v6989
    %v7379 = vsel %vm4671, %v7315, %v6991
    %v7380 = vsel %vm4736, %v7316, %v7061
    %v7381 = vsel %vm4736, %v7317, %v7063
    %v7382 = vsel %vm4736, %v7318, %v7065
    %v7383 = vsel %vm4736, %v7319, %v7067
    %v7384 = vsel %vm4736, %v7320, %v7069
    %v7385 = vsel %vm4736, %v7321, %v7071
    %v7386 = vsel %vm4736, %v7322, %v7073
    %v7387 = vsel %vm4736, %v7323, %v7075
    %v7388 = vsel %vm4736, %v7324, %v7077
    %v7389 = vsel %vm4736, %v7325, %v7079
    %v7390 = vsel %vm4736, %v7326, %v7081
    %v7391 = vsel %vm4736, %v7327, %v7083
    %v7392 = vsel %vm4736, %v7328, %v7085
    %v7393 = vsel %vm4736, %v7329, %v7087
    %v7394 = vsel %vm4736, %v7330, %v7089
    %v7395 = vsel %vm4736, %v7331, %v7091
    %v7396 = vsel %vm4736, %v7332, %v7093
    %v7397 = vsel %vm4736, %v7333, %v7095
    %v7398 = vsel %vm4736, %v7334, %v7097
    %v7399 = vsel %vm4736, %v7335, %v7099
    %v7400 = vsel %vm4736, %v7336, %v7101
    %v7401 = vsel %vm4736, %v7337, %v7103
    %v7402 = vsel %vm4736, %v7338, %v7105
    %v7403 = vsel %vm4736, %v7339, %v7107
    %v7404 = vsel %vm4736, %v7340, %v7109
    %v7405 = vsel %vm4736, %v7341, %v7111
    %v7406 = vsel %vm4736, %v7342, %v7113
    %v7407 = vsel %vm4736, %v7343, %v7115
    %v7408 = vsel %vm4736, %v7344, %v7117
    %v7409 = vsel %vm4736, %v7345, %v7119
    %v7410 = vsel %vm4736, %v7346, %v7121
    %v7411 = vsel %vm4736, %v7347, %v7123
    %v7412 = vsel %vm4736, %v7348, %v7125
    %v7413 = vsel %vm4736, %v7349, %v7127
    %v7414 = vsel %vm4736, %v7350, %v7129
    %v7415 = vsel %vm4736, %v7351, %v7131
    %v7416 = vsel %vm4736, %v7352, %v7133
    %v7417 = vsel %vm4736, %v7353, %v7135
    %v7418 = vsel %vm4736, %v7354, %v7137
    %v7419 = vsel %vm4736, %v7355, %v7139
    %v7420 = vsel %vm4736, %v7356, %v7141
    %v7421 = vsel %vm4736, %v7357, %v7143
    %v7422 = vsel %vm4736, %v7358, %v7145
    %v7423 = vsel %vm4736, %v7359, %v7147
    %v7424 = vsel %vm4736, %v7360, %v7149
    %v7425 = vsel %vm4736, %v7361, %v7151
    %v7426 = vsel %vm4736, %v7362, %v7153
    %v7427 = vsel %vm4736, %v7363, %v7155
    %v7428 = vsel %vm4736, %v7364, %v7157
    %v7429 = vsel %vm4736, %v7365, %v7159
    %v7430 = vsel %vm4736, %v7366, %v7161
    %v7431 = vsel %vm4736, %v7367, %v7163
    %v7432 = vsel %vm4736, %v7368, %v7165
    %v7433 = vsel %vm4736, %v7369, %v7167
    %v7434 = vsel %vm4736, %v7370, %v7169
    %v7435 = vsel %vm4736, %v7371, %v7171
    %v7436 = vsel %vm4736, %v7372, %v7173
    %v7437 = vsel %vm4736, %v7373, %v7175
    %v7438 = vsel %vm4736, %v7374, %v7177
    %v7439 = vsel %vm4736, %v7375, %v7179
    %v7440 = vsel %vm4736, %v7376, %v7181
    %v7441 = vsel %vm4736, %v7377, %v7183
    %v7442 = vsel %vm4736, %v7378, %v7185
    %v7443 = vsel %vm4736, %v7379, %v7187
    %7444 = vst [vmem:[#allocation2 + $0x18] sm:$0xff] %v7380
    %7445 = vst [vmem:[#allocation2 + $0x50] sm:$0xff] %v7381
    %7446 = vst [vmem:[#allocation2 + $0x88] sm:$0xff] %v7382
    %7447 = vst [vmem:[#allocation2 + $0xc0] sm:$0xff] %v7383
    %7448 = vst [vmem:[#allocation2 + $0xf8] sm:$0xff] %v7384
    %7449 = vst [vmem:[#allocation2 + $0x130] sm:$0xff] %v7385
    %7450 = vst [vmem:[#allocation2 + $0x168] sm:$0xff] %v7386
    %7451 = vst [vmem:[#allocation2 + $0x1a0] sm:$0xff] %v7387
    %7452 = vst [vmem:[#allocation2 + $0x1d8] sm:$0xff] %v7388
    %7453 = vst [vmem:[#allocation2 + $0x210] sm:$0xff] %v7389
    %7454 = vst [vmem:[#allocation2 + $0x248] sm:$0xff] %v7390
    %7455 = vst [vmem:[#allocation2 + $0x280] sm:$0xff] %v7391
    %7456 = vst [vmem:[#allocation2 + $0x2b8] sm:$0xff] %v7392
    %7457 = vst [vmem:[#allocation2 + $0x2f0] sm:$0xff] %v7393
    %7458 = vst [vmem:[#allocation2 + $0x328] sm:$0xff] %v7394
    %7459 = vst [vmem:[#allocation2 + $0x360] sm:$0xff] %v7395
    %7460 = vst [vmem:[#allocation2 + $0x398] sm:$0xff] %v7396
    %7461 = vst [vmem:[#allocation2 + $0x3d0] sm:$0xff] %v7397
    %7462 = vst [vmem:[#allocation2 + $0x408] sm:$0xff] %v7398
    %7463 = vst [vmem:[#allocation2 + $0x440] sm:$0xff] %v7399
    %7464 = vst [vmem:[#allocation2 + $0x478] sm:$0xff] %v7400
    %7465 = vst [vmem:[#allocation2 + $0x4b0] sm:$0xff] %v7401
    %7466 = vst [vmem:[#allocation2 + $0x4e8] sm:$0xff] %v7402
    %7467 = vst [vmem:[#allocation2 + $0x520] sm:$0xff] %v7403
    %7468 = vst [vmem:[#allocation2 + $0x558] sm:$0xff] %v7404
    %7469 = vst [vmem:[#allocation2 + $0x590] sm:$0xff] %v7405
    %7470 = vst [vmem:[#allocation2 + $0x5c8] sm:$0xff] %v7406
    %7471 = vst [vmem:[#allocation2 + $0x600] sm:$0xff] %v7407
    %7472 = vst [vmem:[#allocation2 + $0x638] sm:$0xff] %v7408
    %7473 = vst [vmem:[#allocation2 + $0x670] sm:$0xff] %v7409
    %7474 = vst [vmem:[#allocation2 + $0x6a8] sm:$0xff] %v7410
    %7475 = vst [vmem:[#allocation2 + $0x6e0] sm:$0xff] %v7411
    %7476 = vst [vmem:[#allocation2 + $0x718] sm:$0xff] %v7412
    %7477 = vst [vmem:[#allocation2 + $0x750] sm:$0xff] %v7413
    %7478 = vst [vmem:[#allocation2 + $0x788] sm:$0xff] %v7414
    %7479 = vst [vmem:[#allocation2 + $0x7c0] sm:$0xff] %v7415
    %7480 = vst [vmem:[#allocation2 + $0x7f8] sm:$0xff] %v7416
    %7481 = vst [vmem:[#allocation2 + $0x830] sm:$0xff] %v7417
    %7482 = vst [vmem:[#allocation2 + $0x868] sm:$0xff] %v7418
    %7483 = vst [vmem:[#allocation2 + $0x8a0] sm:$0xff] %v7419
    %7484 = vst [vmem:[#allocation2 + $0x8d8] sm:$0xff] %v7420
    %7485 = vst [vmem:[#allocation2 + $0x910] sm:$0xff] %v7421
    %7486 = vst [vmem:[#allocation2 + $0x948] sm:$0xff] %v7422
    %7487 = vst [vmem:[#allocation2 + $0x980] sm:$0xff] %v7423
    %7488 = vst [vmem:[#allocation2 + $0x9b8] sm:$0xff] %v7424
    %7489 = vst [vmem:[#allocation2 + $0x9f0] sm:$0xff] %v7425
    %7490 = vst [vmem:[#allocation2 + $0xa28] sm:$0xff] %v7426
    %7491 = vst [vmem:[#allocation2 + $0xa60] sm:$0xff] %v7427
    %7492 = vst [vmem:[#allocation2 + $0xa98] sm:$0xff] %v7428
    %7493 = vst [vmem:[#allocation2 + $0xad0] sm:$0xff] %v7429
    %7494 = vst [vmem:[#allocation2 + $0xb08] sm:$0xff] %v7430
    %7495 = vst [vmem:[#allocation2 + $0xb40] sm:$0xff] %v7431
    %7496 = vst [vmem:[#allocation2 + $0xb78] sm:$0xff] %v7432
    %7497 = vst [vmem:[#allocation2 + $0xbb0] sm:$0xff] %v7433
    %7498 = vst [vmem:[#allocation2 + $0xbe8] sm:$0xff] %v7434
    %7499 = vst [vmem:[#allocation2 + $0xc20] sm:$0xff] %v7435
    %7500 = vst [vmem:[#allocation2 + $0xc58] sm:$0xff] %v7436
    %7501 = vst [vmem:[#allocation2 + $0xc90] sm:$0xff] %v7437
    %7502 = vst [vmem:[#allocation2 + $0xcc8] sm:$0xff] %v7438
    %7503 = vst [vmem:[#allocation2 + $0xd00] sm:$0xff] %v7439
    %7504 = vst [vmem:[#allocation2 + $0xd38] sm:$0xff] %v7440
    %7505 = vst [vmem:[#allocation2 + $0xd70] sm:$0xff] %v7441
    %7506 = vst [vmem:[#allocation2 + $0xda8] sm:$0xff] %v7442
    %7507 = vst [vmem:[#allocation2 + $0xde0] sm:$0xff] %v7443
    %7508 = vrot.lane.b32.xlu0 %v676, 32
    %v7509 = vpop.permute.xlu0 %7508
    %7510 = vrot.lane.b32.xlu0 %v677, 32
    %v7511 = vpop.permute.xlu0 %7510
    %7512 = vrot.lane.b32.xlu0 %v678, 32
    %v7513 = vpop.permute.xlu0 %7512
    %7514 = vrot.lane.b32.xlu0 %v679, 32
    %v7515 = vpop.permute.xlu0 %7514
    %7516 = vrot.lane.b32.xlu0 %v680, 32
    %v7517 = vpop.permute.xlu0 %7516
    %7518 = vrot.lane.b32.xlu0 %v681, 32
    %v7519 = vpop.permute.xlu0 %7518
    %7520 = vrot.lane.b32.xlu0 %v682, 32
    %v7521 = vpop.permute.xlu0 %7520
    %7522 = vrot.lane.b32.xlu0 %v683, 32
    %v7523 = vpop.permute.xlu0 %7522
    %7524 = vrot.lane.b32.xlu0 %v684, 32
    %v7525 = vpop.permute.xlu0 %7524
    %7526 = vrot.lane.b32.xlu0 %v685, 32
    %v7527 = vpop.permute.xlu0 %7526
    %7528 = vrot.lane.b32.xlu0 %v686, 32
    %v7529 = vpop.permute.xlu0 %7528
    %7530 = vrot.lane.b32.xlu0 %v687, 32
    %v7531 = vpop.permute.xlu0 %7530
    %7532 = vrot.lane.b32.xlu0 %v688, 32
    %v7533 = vpop.permute.xlu0 %7532
    %7534 = vrot.lane.b32.xlu0 %v689, 32
    %v7535 = vpop.permute.xlu0 %7534
    %7536 = vrot.lane.b32.xlu0 %v690, 32
    %v7537 = vpop.permute.xlu0 %7536
    %7538 = vrot.lane.b32.xlu0 %v691, 32
    %v7539 = vpop.permute.xlu0 %7538
    %7540 = vrot.lane.b32.xlu0 %v692, 32
    %v7541 = vpop.permute.xlu0 %7540
    %7542 = vrot.lane.b32.xlu0 %v693, 32
    %v7543 = vpop.permute.xlu0 %7542
    %7544 = vrot.lane.b32.xlu0 %v694, 32
    %v7545 = vpop.permute.xlu0 %7544
    %7546 = vrot.lane.b32.xlu0 %v695, 32
    %v7547 = vpop.permute.xlu0 %7546
    %7548 = vrot.lane.b32.xlu0 %v696, 32
    %v7549 = vpop.permute.xlu0 %7548
    %7550 = vrot.lane.b32.xlu0 %v697, 32
    %v7551 = vpop.permute.xlu0 %7550
    %7552 = vrot.lane.b32.xlu0 %v698, 32
    %v7553 = vpop.permute.xlu0 %7552
    %7554 = vrot.lane.b32.xlu0 %v699, 32
    %v7555 = vpop.permute.xlu0 %7554
    %7556 = vrot.lane.b32.xlu0 %v700, 32
    %v7557 = vpop.permute.xlu0 %7556
    %7558 = vrot.lane.b32.xlu0 %v701, 32
    %v7559 = vpop.permute.xlu0 %7558
    %7560 = vrot.lane.b32.xlu0 %v702, 32
    %v7561 = vpop.permute.xlu0 %7560
    %7562 = vrot.lane.b32.xlu0 %v703, 32
    %v7563 = vpop.permute.xlu0 %7562
    %7564 = vrot.lane.b32.xlu0 %v704, 32
    %v7565 = vpop.permute.xlu0 %7564
    %7566 = vrot.lane.b32.xlu0 %v705, 32
    %v7567 = vpop.permute.xlu0 %7566
    %7568 = vrot.lane.b32.xlu0 0.0, 32
    %v7569 = vpop.permute.xlu0 %7568
    %7570 = vrot.lane.b32.xlu0 %v708, 32
    %v7571 = vpop.permute.xlu0 %7570
    %7572 = vrot.lane.b32.xlu0 %v709, 32
    %v7573 = vpop.permute.xlu0 %7572
    %7574 = vrot.lane.b32.xlu0 %v710, 32
    %v7575 = vpop.permute.xlu0 %7574
    %7576 = vrot.lane.b32.xlu0 %v711, 32
    %v7577 = vpop.permute.xlu0 %7576
    %7578 = vrot.lane.b32.xlu0 %v712, 32
    %v7579 = vpop.permute.xlu0 %7578
    %7580 = vrot.lane.b32.xlu0 %v713, 32
    %v7581 = vpop.permute.xlu0 %7580
    %7582 = vrot.lane.b32.xlu0 %v714, 32
    %v7583 = vpop.permute.xlu0 %7582
    %7584 = vrot.lane.b32.xlu0 %v715, 32
    %v7585 = vpop.permute.xlu0 %7584
    %7586 = vrot.lane.b32.xlu0 %v716, 32
    %v7587 = vpop.permute.xlu0 %7586
    %7588 = vrot.lane.b32.xlu0 %v717, 32
    %v7589 = vpop.permute.xlu0 %7588
    %7590 = vrot.lane.b32.xlu0 %v718, 32
    %v7591 = vpop.permute.xlu0 %7590
    %7592 = vrot.lane.b32.xlu0 %v719, 32
    %v7593 = vpop.permute.xlu0 %7592
    %7594 = vrot.lane.b32.xlu0 %v720, 32
    %v7595 = vpop.permute.xlu0 %7594
    %7596 = vrot.lane.b32.xlu0 %v721, 32
    %v7597 = vpop.permute.xlu0 %7596
    %7598 = vrot.lane.b32.xlu0 %v722, 32
    %v7599 = vpop.permute.xlu0 %7598
    %7600 = vrot.lane.b32.xlu0 %v723, 32
    %v7601 = vpop.permute.xlu0 %7600
    %7602 = vrot.lane.b32.xlu0 %v724, 32
    %v7603 = vpop.permute.xlu0 %7602
    %7604 = vrot.lane.b32.xlu0 %v725, 32
    %v7605 = vpop.permute.xlu0 %7604
    %7606 = vrot.lane.b32.xlu0 %v726, 32
    %v7607 = vpop.permute.xlu0 %7606
    %7608 = vrot.lane.b32.xlu0 %v727, 32
    %v7609 = vpop.permute.xlu0 %7608
    %7610 = vrot.lane.b32.xlu0 %v728, 32
    %v7611 = vpop.permute.xlu0 %7610
    %7612 = vrot.lane.b32.xlu0 %v729, 32
    %v7613 = vpop.permute.xlu0 %7612
    %7614 = vrot.lane.b32.xlu0 %v730, 32
    %v7615 = vpop.permute.xlu0 %7614
    %7616 = vrot.lane.b32.xlu0 %v731, 32
    %v7617 = vpop.permute.xlu0 %7616
    %7618 = vrot.lane.b32.xlu0 %v732, 32
    %v7619 = vpop.permute.xlu0 %7618
    %7620 = vrot.lane.b32.xlu0 %v733, 32
    %v7621 = vpop.permute.xlu0 %7620
    %7622 = vrot.lane.b32.xlu0 %v734, 32
    %v7623 = vpop.permute.xlu0 %7622
    %7624 = vrot.lane.b32.xlu0 %v735, 32
    %v7625 = vpop.permute.xlu0 %7624
    %7626 = vrot.lane.b32.xlu0 %v736, 32
    %v7627 = vpop.permute.xlu0 %7626
    %7628 = vrot.lane.b32.xlu0 %v737, 32
    %v7629 = vpop.permute.xlu0 %7628
    %7695 = vrot.lane.b32.xlu0 %v3330, 64
    %v7696 = vpop.permute.xlu0 %7695
    %7697 = vrot.lane.b32.xlu0 %v3331, 64
    %v7698 = vpop.permute.xlu0 %7697
    %7699 = vrot.lane.b32.xlu0 %v3332, 64
    %v7700 = vpop.permute.xlu0 %7699
    %7701 = vrot.lane.b32.xlu0 %v3333, 64
    %v7702 = vpop.permute.xlu0 %7701
    %7703 = vrot.lane.b32.xlu0 %v3334, 64
    %v7704 = vpop.permute.xlu0 %7703
    %7705 = vrot.lane.b32.xlu0 %v3335, 64
    %v7706 = vpop.permute.xlu0 %7705
    %7707 = vrot.lane.b32.xlu0 %v3336, 64
    %v7708 = vpop.permute.xlu0 %7707
    %7709 = vrot.lane.b32.xlu0 %v3337, 64
    %v7710 = vpop.permute.xlu0 %7709
    %7711 = vrot.lane.b32.xlu0 %v3338, 64
    %v7712 = vpop.permute.xlu0 %7711
    %7713 = vrot.lane.b32.xlu0 %v3339, 64
    %v7714 = vpop.permute.xlu0 %7713
    %7715 = vrot.lane.b32.xlu0 %v3340, 64
    %v7716 = vpop.permute.xlu0 %7715
    %7717 = vrot.lane.b32.xlu0 %v3341, 64
    %v7718 = vpop.permute.xlu0 %7717
    %7719 = vrot.lane.b32.xlu0 %v3342, 64
    %v7720 = vpop.permute.xlu0 %7719
    %7721 = vrot.lane.b32.xlu0 %v3343, 64
    %v7722 = vpop.permute.xlu0 %7721
    %7723 = vrot.lane.b32.xlu0 %v3344, 64
    %v7724 = vpop.permute.xlu0 %7723
    %7725 = vrot.lane.b32.xlu0 %v3345, 64
    %v7726 = vpop.permute.xlu0 %7725
    %7727 = vrot.lane.b32.xlu0 %v3346, 64
    %v7728 = vpop.permute.xlu0 %7727
    %7729 = vrot.lane.b32.xlu0 %v3347, 64
    %v7730 = vpop.permute.xlu0 %7729
    %7731 = vrot.lane.b32.xlu0 %v3348, 64
    %v7732 = vpop.permute.xlu0 %7731
    %7733 = vrot.lane.b32.xlu0 %v3349, 64
    %v7734 = vpop.permute.xlu0 %7733
    %7735 = vrot.lane.b32.xlu0 %v3350, 64
    %v7736 = vpop.permute.xlu0 %7735
    %7737 = vrot.lane.b32.xlu0 %v3351, 64
    %v7738 = vpop.permute.xlu0 %7737
    %7739 = vrot.lane.b32.xlu0 %v3352, 64
    %v7740 = vpop.permute.xlu0 %7739
    %7741 = vrot.lane.b32.xlu0 %v3353, 64
    %v7742 = vpop.permute.xlu0 %7741
    %7743 = vrot.lane.b32.xlu0 %v3354, 64
    %v7744 = vpop.permute.xlu0 %7743
    %7745 = vrot.lane.b32.xlu0 %v3355, 64
    %v7746 = vpop.permute.xlu0 %7745
    %7747 = vrot.lane.b32.xlu0 %v3356, 64
    %v7748 = vpop.permute.xlu0 %7747
    %7749 = vrot.lane.b32.xlu0 %v3357, 64
    %v7750 = vpop.permute.xlu0 %7749
    %7751 = vrot.lane.b32.xlu0 %v3358, 64
    %v7752 = vpop.permute.xlu0 %7751
    %7753 = vrot.lane.b32.xlu0 %v3359, 64
    %v7754 = vpop.permute.xlu0 %7753
    %7755 = vrot.lane.b32.xlu0 %v3360, 64
    %v7756 = vpop.permute.xlu0 %7755
    %7757 = vrot.lane.b32.xlu0 %v3361, 64
    %v7758 = vpop.permute.xlu0 %7757
    %7759 = vrot.lane.b32.xlu0 %v3370, 64
    %v7760 = vpop.permute.xlu0 %7759
    %7761 = vrot.lane.b32.xlu0 %v3371, 64
    %v7762 = vpop.permute.xlu0 %7761
    %7763 = vrot.lane.b32.xlu0 %v3372, 64
    %v7764 = vpop.permute.xlu0 %7763
    %7765 = vrot.lane.b32.xlu0 %v3373, 64
    %v7766 = vpop.permute.xlu0 %7765
    %7767 = vrot.lane.b32.xlu0 %v3374, 64
    %v7768 = vpop.permute.xlu0 %7767
    %7769 = vrot.lane.b32.xlu0 %v3375, 64
    %v7770 = vpop.permute.xlu0 %7769
    %7771 = vrot.lane.b32.xlu0 %v3376, 64
    %v7772 = vpop.permute.xlu0 %7771
    %7773 = vrot.lane.b32.xlu0 %v3377, 64
    %v7774 = vpop.permute.xlu0 %7773
    %7775 = vrot.lane.b32.xlu0 %v3378, 64
    %v7776 = vpop.permute.xlu0 %7775
    %7777 = vrot.lane.b32.xlu0 %v3379, 64
    %v7778 = vpop.permute.xlu0 %7777
    %7779 = vrot.lane.b32.xlu0 %v3380, 64
    %v7780 = vpop.permute.xlu0 %7779
    %7781 = vrot.lane.b32.xlu0 %v3381, 64
    %v7782 = vpop.permute.xlu0 %7781
    %7783 = vrot.lane.b32.xlu0 %v3382, 64
    %v7784 = vpop.permute.xlu0 %7783
    %7785 = vrot.lane.b32.xlu0 %v3383, 64
    %v7786 = vpop.permute.xlu0 %7785
    %7787 = vrot.lane.b32.xlu0 %v3384, 64
    %v7788 = vpop.permute.xlu0 %7787
    %7789 = vrot.lane.b32.xlu0 %v3385, 64
    %v7790 = vpop.permute.xlu0 %7789
    %7791 = vrot.lane.b32.xlu0 %v3386, 64
    %v7792 = vpop.permute.xlu0 %7791
    %7793 = vrot.lane.b32.xlu0 %v3387, 64
    %v7794 = vpop.permute.xlu0 %7793
    %7795 = vrot.lane.b32.xlu0 %v3388, 64
    %v7796 = vpop.permute.xlu0 %7795
    %7797 = vrot.lane.b32.xlu0 %v3389, 64
    %v7798 = vpop.permute.xlu0 %7797
    %7799 = vrot.lane.b32.xlu0 %v3390, 64
    %v7800 = vpop.permute.xlu0 %7799
    %7801 = vrot.lane.b32.xlu0 %v3391, 64
    %v7802 = vpop.permute.xlu0 %7801
    %7803 = vrot.lane.b32.xlu0 %v3392, 64
    %v7804 = vpop.permute.xlu0 %7803
    %7805 = vrot.lane.b32.xlu0 %v3393, 64
    %v7806 = vpop.permute.xlu0 %7805
    %7807 = vrot.lane.b32.xlu0 %v3394, 64
    %v7808 = vpop.permute.xlu0 %7807
    %7809 = vrot.lane.b32.xlu0 %v3395, 64
    %v7810 = vpop.permute.xlu0 %7809
    %7811 = vrot.lane.b32.xlu0 %v3396, 64
    %v7812 = vpop.permute.xlu0 %7811
    %7813 = vrot.lane.b32.xlu0 %v3397, 64
    %v7814 = vpop.permute.xlu0 %7813
    %7815 = vrot.lane.b32.xlu0 %v3398, 64
    %v7816 = vpop.permute.xlu0 %7815
    %7817 = vrot.lane.b32.xlu0 %v3399, 64
    %v7818 = vpop.permute.xlu0 %7817
    %7819 = vrot.lane.b32.xlu0 %v3400, 64
    %v7820 = vpop.permute.xlu0 %7819
    %7821 = vrot.lane.b32.xlu0 %v3401, 64
    %v7822 = vpop.permute.xlu0 %7821
    %7891 = vrot.lane.b32.xlu0 %v3850, 96
    %v7892 = vpop.permute.xlu0 %7891
    %7893 = vrot.lane.b32.xlu0 %v3851, 96
    %v7894 = vpop.permute.xlu0 %7893
    %7895 = vrot.lane.b32.xlu0 %v3852, 96
    %v7896 = vpop.permute.xlu0 %7895
    %7897 = vrot.lane.b32.xlu0 %v3853, 96
    %v7898 = vpop.permute.xlu0 %7897
    %7899 = vrot.lane.b32.xlu0 %v3854, 96
    %v7900 = vpop.permute.xlu0 %7899
    %7901 = vrot.lane.b32.xlu0 %v3855, 96
    %v7902 = vpop.permute.xlu0 %7901
    %7903 = vrot.lane.b32.xlu0 %v3856, 96
    %v7904 = vpop.permute.xlu0 %7903
    %7905 = vrot.lane.b32.xlu0 %v3857, 96
    %v7906 = vpop.permute.xlu0 %7905
    %7907 = vrot.lane.b32.xlu0 %v3858, 96
    %v7908 = vpop.permute.xlu0 %7907
    %7909 = vrot.lane.b32.xlu0 %v3859, 96
    %v7910 = vpop.permute.xlu0 %7909
    %7911 = vrot.lane.b32.xlu0 %v3860, 96
    %v7912 = vpop.permute.xlu0 %7911
    %7913 = vrot.lane.b32.xlu0 %v3861, 96
    %v7914 = vpop.permute.xlu0 %7913
    %7915 = vrot.lane.b32.xlu0 %v3862, 96
    %v7916 = vpop.permute.xlu0 %7915
    %7917 = vrot.lane.b32.xlu0 %v3863, 96
    %v7918 = vpop.permute.xlu0 %7917
    %7919 = vrot.lane.b32.xlu0 %v3864, 96
    %v7920 = vpop.permute.xlu0 %7919
    %7921 = vrot.lane.b32.xlu0 %v3865, 96
    %v7922 = vpop.permute.xlu0 %7921
    %7923 = vrot.lane.b32.xlu0 %v3866, 96
    %v7924 = vpop.permute.xlu0 %7923
    %7925 = vrot.lane.b32.xlu0 %v3867, 96
    %v7926 = vpop.permute.xlu0 %7925
    %7927 = vrot.lane.b32.xlu0 %v3868, 96
    %v7928 = vpop.permute.xlu0 %7927
    %7929 = vrot.lane.b32.xlu0 %v3869, 96
    %v7930 = vpop.permute.xlu0 %7929
    %7931 = vrot.lane.b32.xlu0 %v3870, 96
    %v7932 = vpop.permute.xlu0 %7931
    %7933 = vrot.lane.b32.xlu0 %v3871, 96
    %v7934 = vpop.permute.xlu0 %7933
    %7935 = vrot.lane.b32.xlu0 %v3872, 96
    %v7936 = vpop.permute.xlu0 %7935
    %7937 = vrot.lane.b32.xlu0 %v3873, 96
    %v7938 = vpop.permute.xlu0 %7937
    %7939 = vrot.lane.b32.xlu0 %v3874, 96
    %v7940 = vpop.permute.xlu0 %7939
    %7941 = vrot.lane.b32.xlu0 %v3875, 96
    %v7942 = vpop.permute.xlu0 %7941
    %7943 = vrot.lane.b32.xlu0 %v3876, 96
    %v7944 = vpop.permute.xlu0 %7943
    %7945 = vrot.lane.b32.xlu0 %v3877, 96
    %v7946 = vpop.permute.xlu0 %7945
    %7947 = vrot.lane.b32.xlu0 %v3878, 96
    %v7948 = vpop.permute.xlu0 %7947
    %7949 = vrot.lane.b32.xlu0 %v3879, 96
    %v7950 = vpop.permute.xlu0 %7949
    %7951 = vrot.lane.b32.xlu0 %v3880, 96
    %v7952 = vpop.permute.xlu0 %7951
    %7953 = vrot.lane.b32.xlu0 %v3881, 96
    %v7954 = vpop.permute.xlu0 %7953
    %7955 = vrot.lane.b32.xlu0 %v3890, 96
    %v7956 = vpop.permute.xlu0 %7955
    %7957 = vrot.lane.b32.xlu0 %v3891, 96
    %v7958 = vpop.permute.xlu0 %7957
    %7959 = vrot.lane.b32.xlu0 %v3892, 96
    %v7960 = vpop.permute.xlu0 %7959
    %7961 = vrot.lane.b32.xlu0 %v3893, 96
    %v7962 = vpop.permute.xlu0 %7961
    %7963 = vrot.lane.b32.xlu0 %v3894, 96
    %v7964 = vpop.permute.xlu0 %7963
    %7965 = vrot.lane.b32.xlu0 %v3895, 96
    %v7966 = vpop.permute.xlu0 %7965
    %7967 = vrot.lane.b32.xlu0 %v3896, 96
    %v7968 = vpop.permute.xlu0 %7967
    %7969 = vrot.lane.b32.xlu0 %v3897, 96
    %v7970 = vpop.permute.xlu0 %7969
    %7971 = vrot.lane.b32.xlu0 %v3898, 96
    %v7972 = vpop.permute.xlu0 %7971
    %7973 = vrot.lane.b32.xlu0 %v3899, 96
    %v7974 = vpop.permute.xlu0 %7973
    %7975 = vrot.lane.b32.xlu0 %v3900, 96
    %v7976 = vpop.permute.xlu0 %7975
    %7977 = vrot.lane.b32.xlu0 %v3901, 96
    %v7978 = vpop.permute.xlu0 %7977
    %7979 = vrot.lane.b32.xlu0 %v3902, 96
    %v7980 = vpop.permute.xlu0 %7979
    %7981 = vrot.lane.b32.xlu0 %v3903, 96
    %v7982 = vpop.permute.xlu0 %7981
    %7983 = vrot.lane.b32.xlu0 %v3904, 96
    %v7984 = vpop.permute.xlu0 %7983
    %7985 = vrot.lane.b32.xlu0 %v3905, 96
    %v7986 = vpop.permute.xlu0 %7985
    %7987 = vrot.lane.b32.xlu0 %v3906, 96
    %v7988 = vpop.permute.xlu0 %7987
    %7989 = vrot.lane.b32.xlu0 %v3907, 96
    %v7990 = vpop.permute.xlu0 %7989
    %7991 = vrot.lane.b32.xlu0 %v3908, 96
    %v7992 = vpop.permute.xlu0 %7991
    %7993 = vrot.lane.b32.xlu0 %v3909, 96
    %v7994 = vpop.permute.xlu0 %7993
    %7995 = vrot.lane.b32.xlu0 %v3910, 96
    %v7996 = vpop.permute.xlu0 %7995
    %7997 = vrot.lane.b32.xlu0 %v3911, 96
    %v7998 = vpop.permute.xlu0 %7997
    %7999 = vrot.lane.b32.xlu0 %v3912, 96
    %v8000 = vpop.permute.xlu0 %7999
    %8001 = vrot.lane.b32.xlu0 %v3913, 96
    %v8002 = vpop.permute.xlu0 %8001
    %8003 = vrot.lane.b32.xlu0 %v3914, 96
    %v8004 = vpop.permute.xlu0 %8003
    %8005 = vrot.lane.b32.xlu0 %v3915, 96
    %v8006 = vpop.permute.xlu0 %8005
    %8007 = vrot.lane.b32.xlu0 %v3916, 96
    %v8008 = vpop.permute.xlu0 %8007
    %8009 = vrot.lane.b32.xlu0 %v3917, 96
    %v8010 = vpop.permute.xlu0 %8009
    %8011 = vrot.lane.b32.xlu0 %v3918, 96
    %v8012 = vpop.permute.xlu0 %8011
    %8013 = vrot.lane.b32.xlu0 %v3919, 96
    %v8014 = vpop.permute.xlu0 %8013
    %8015 = vrot.lane.b32.xlu0 %v3920, 96
    %v8016 = vpop.permute.xlu0 %8015
    %8017 = vrot.lane.b32.xlu0 %v3921, 96
    %v8018 = vpop.permute.xlu0 %8017
    %v8083 = vsel %vm96, %v2810, %v7509
    %v8084 = vsel %vm96, %v2811, %v7511
    %v8085 = vsel %vm96, %v2812, %v7513
    %v8086 = vsel %vm96, %v2813, %v7515
    %v8087 = vsel %vm96, %v2814, %v7517
    %v8088 = vsel %vm96, %v2815, %v7519
    %v8089 = vsel %vm96, %v2816, %v7521
    %v8090 = vsel %vm96, %v2817, %v7523
    %v8091 = vsel %vm96, %v2818, %v7525
    %v8092 = vsel %vm96, %v2819, %v7527
    %v8093 = vsel %vm96, %v2820, %v7529
    %v8094 = vsel %vm96, %v2821, %v7531
    %v8095 = vsel %vm96, %v2822, %v7533
    %v8096 = vsel %vm96, %v2823, %v7535
    %v8097 = vsel %vm96, %v2824, %v7537
    %v8098 = vsel %vm96, %v2825, %v7539
    %v8099 = vsel %vm96, %v2826, %v7541
    %v8100 = vsel %vm96, %v2827, %v7543
    %v8101 = vsel %vm96, %v2828, %v7545
    %v8102 = vsel %vm96, %v2829, %v7547
    %v8103 = vsel %vm96, %v2830, %v7549
    %v8104 = vsel %vm96, %v2831, %v7551
    %v8105 = vsel %vm96, %v2832, %v7553
    %v8106 = vsel %vm96, %v2833, %v7555
    %v8107 = vsel %vm96, %v2834, %v7557
    %v8108 = vsel %vm96, %v2835, %v7559
    %v8109 = vsel %vm96, %v2836, %v7561
    %v8110 = vsel %vm96, %v2837, %v7563
    %v8111 = vsel %vm96, %v2838, %v7565
    %v8112 = vsel %vm96, %v2839, %v7567
    %v8113 = vsel %vm96, %v2840, %v7569
    %v8114 = vsel %vm96, %v2841, %v7569
    %v8115 = vsel %vm96, %v2850, %v7571
    %v8116 = vsel %vm96, %v2851, %v7573
    %v8117 = vsel %vm96, %v2852, %v7575
    %v8118 = vsel %vm96, %v2853, %v7577
    %v8119 = vsel %vm96, %v2854, %v7579
    %v8120 = vsel %vm96, %v2855, %v7581
    %v8121 = vsel %vm96, %v2856, %v7583
    %v8122 = vsel %vm96, %v2857, %v7585
    %v8123 = vsel %vm96, %v2858, %v7587
    %v8124 = vsel %vm96, %v2859, %v7589
    %v8125 = vsel %vm96, %v2860, %v7591
    %v8126 = vsel %vm96, %v2861, %v7593
    %v8127 = vsel %vm96, %v2862, %v7595
    %v8128 = vsel %vm96, %v2863, %v7597
    %v8129 = vsel %vm96, %v2864, %v7599
    %v8130 = vsel %vm96, %v2865, %v7601
    %v8131 = vsel %vm96, %v2866, %v7603
    %v8132 = vsel %vm96, %v2867, %v7605
    %v8133 = vsel %vm96, %v2868, %v7607
    %v8134 = vsel %vm96, %v2869, %v7609
    %v8135 = vsel %vm96, %v2870, %v7611
    %v8136 = vsel %vm96, %v2871, %v7613
    %v8137 = vsel %vm96, %v2872, %v7615
    %v8138 = vsel %vm96, %v2873, %v7617
    %v8139 = vsel %vm96, %v2874, %v7619
    %v8140 = vsel %vm96, %v2875, %v7621
    %v8141 = vsel %vm96, %v2876, %v7623
    %v8142 = vsel %vm96, %v2877, %v7625
    %v8143 = vsel %vm96, %v2878, %v7627
    %v8144 = vsel %vm96, %v2879, %v7629
    %v8145 = vsel %vm96, %v2880, %v7569
    %v8146 = vsel %vm96, %v2881, %v7569
    %v8147 = vsel %vm4671, %v8083, %v7696
    %v8148 = vsel %vm4671, %v8084, %v7698
    %v8149 = vsel %vm4671, %v8085, %v7700
    %v8150 = vsel %vm4671, %v8086, %v7702
    %v8151 = vsel %vm4671, %v8087, %v7704
    %v8152 = vsel %vm4671, %v8088, %v7706
    %v8153 = vsel %vm4671, %v8089, %v7708
    %v8154 = vsel %vm4671, %v8090, %v7710
    %v8155 = vsel %vm4671, %v8091, %v7712
    %v8156 = vsel %vm4671, %v8092, %v7714
    %v8157 = vsel %vm4671, %v8093, %v7716
    %v8158 = vsel %vm4671, %v8094, %v7718
    %v8159 = vsel %vm4671, %v8095, %v7720
    %v8160 = vsel %vm4671, %v8096, %v7722
    %v8161 = vsel %vm4671, %v8097, %v7724
    %v8162 = vsel %vm4671, %v8098, %v7726
    %v8163 = vsel %vm4671, %v8099, %v7728
    %v8164 = vsel %vm4671, %v8100, %v7730
    %v8165 = vsel %vm4671, %v8101, %v7732
    %v8166 = vsel %vm4671, %v8102, %v7734
    %v8167 = vsel %vm4671, %v8103, %v7736
    %v8168 = vsel %vm4671, %v8104, %v7738
    %v8169 = vsel %vm4671, %v8105, %v7740
    %v8170 = vsel %vm4671, %v8106, %v7742
    %v8171 = vsel %vm4671, %v8107, %v7744
    %v8172 = vsel %vm4671, %v8108, %v7746
    %v8173 = vsel %vm4671, %v8109, %v7748
    %v8174 = vsel %vm4671, %v8110, %v7750
    %v8175 = vsel %vm4671, %v8111, %v7752
    %v8176 = vsel %vm4671, %v8112, %v7754
    %v8177 = vsel %vm4671, %v8113, %v7756
    %v8178 = vsel %vm4671, %v8114, %v7758
    %v8179 = vsel %vm4671, %v8115, %v7760
    %v8180 = vsel %vm4671, %v8116, %v7762
    %v8181 = vsel %vm4671, %v8117, %v7764
    %v8182 = vsel %vm4671, %v8118, %v7766
    %v8183 = vsel %vm4671, %v8119, %v7768
    %v8184 = vsel %vm4671, %v8120, %v7770
    %v8185 = vsel %vm4671, %v8121, %v7772
    %v8186 = vsel %vm4671, %v8122, %v7774
    %v8187 = vsel %vm4671, %v8123, %v7776
    %v8188 = vsel %vm4671, %v8124, %v7778
    %v8189 = vsel %vm4671, %v8125, %v7780
    %v8190 = vsel %vm4671, %v8126, %v7782
    %v8191 = vsel %vm4671, %v8127, %v7784
    %v8192 = vsel %vm4671, %v8128, %v7786
    %v8193 = vsel %vm4671, %v8129, %v7788
    %v8194 = vsel %vm4671, %v8130, %v7790
    %v8195 = vsel %vm4671, %v8131, %v7792
    %v8196 = vsel %vm4671, %v8132, %v7794
    %v8197 = vsel %vm4671, %v8133, %v7796
    %v8198 = vsel %vm4671, %v8134, %v7798
    %v8199 = vsel %vm4671, %v8135, %v7800
    %v8200 = vsel %vm4671, %v8136, %v7802
    %v8201 = vsel %vm4671, %v8137, %v7804
    %v8202 = vsel %vm4671, %v8138, %v7806
    %v8203 = vsel %vm4671, %v8139, %v7808
    %v8204 = vsel %vm4671, %v8140, %v7810
    %v8205 = vsel %vm4671, %v8141, %v7812
    %v8206 = vsel %vm4671, %v8142, %v7814
    %v8207 = vsel %vm4671, %v8143, %v7816
    %v8208 = vsel %vm4671, %v8144, %v7818
    %v8209 = vsel %vm4671, %v8145, %v7820
    %v8210 = vsel %vm4671, %v8146, %v7822
    %v8211 = vsel %vm4736, %v8147, %v7892
    %v8212 = vsel %vm4736, %v8148, %v7894
    %v8213 = vsel %vm4736, %v8149, %v7896
    %v8214 = vsel %vm4736, %v8150, %v7898
    %v8215 = vsel %vm4736, %v8151, %v7900
    %v8216 = vsel %vm4736, %v8152, %v7902
    %v8217 = vsel %vm4736, %v8153, %v7904
    %v8218 = vsel %vm4736, %v8154, %v7906
    %v8219 = vsel %vm4736, %v8155, %v7908
    %v8220 = vsel %vm4736, %v8156, %v7910
    %v8221 = vsel %vm4736, %v8157, %v7912
    %v8222 = vsel %vm4736, %v8158, %v7914
    %v8223 = vsel %vm4736, %v8159, %v7916
    %v8224 = vsel %vm4736, %v8160, %v7918
    %v8225 = vsel %vm4736, %v8161, %v7920
    %v8226 = vsel %vm4736, %v8162, %v7922
    %v8227 = vsel %vm4736, %v8163, %v7924
    %v8228 = vsel %vm4736, %v8164, %v7926
    %v8229 = vsel %vm4736, %v8165, %v7928
    %v8230 = vsel %vm4736, %v8166, %v7930
    %v8231 = vsel %vm4736, %v8167, %v7932
    %v8232 = vsel %vm4736, %v8168, %v7934
    %v8233 = vsel %vm4736, %v8169, %v7936
    %v8234 = vsel %vm4736, %v8170, %v7938
    %v8235 = vsel %vm4736, %v8171, %v7940
    %v8236 = vsel %vm4736, %v8172, %v7942
    %v8237 = vsel %vm4736, %v8173, %v7944
    %v8238 = vsel %vm4736, %v8174, %v7946
    %v8239 = vsel %vm4736, %v8175, %v7948
    %v8240 = vsel %vm4736, %v8176, %v7950
    %v8241 = vsel %vm4736, %v8177, %v7952
    %v8242 = vsel %vm4736, %v8178, %v7954
    %v8243 = vsel %vm4736, %v8179, %v7956
    %v8244 = vsel %vm4736, %v8180, %v7958
    %v8245 = vsel %vm4736, %v8181, %v7960
    %v8246 = vsel %vm4736, %v8182, %v7962
    %v8247 = vsel %vm4736, %v8183, %v7964
    %v8248 = vsel %vm4736, %v8184, %v7966
    %v8249 = vsel %vm4736, %v8185, %v7968
    %v8250 = vsel %vm4736, %v8186, %v7970
    %v8251 = vsel %vm4736, %v8187, %v7972
    %v8252 = vsel %vm4736, %v8188, %v7974
    %v8253 = vsel %vm4736, %v8189, %v7976
    %v8254 = vsel %vm4736, %v8190, %v7978
    %v8255 = vsel %vm4736, %v8191, %v7980
    %v8256 = vsel %vm4736, %v8192, %v7982
    %v8257 = vsel %vm4736, %v8193, %v7984
    %v8258 = vsel %vm4736, %v8194, %v7986
    %v8259 = vsel %vm4736, %v8195, %v7988
    %v8260 = vsel %vm4736, %v8196, %v7990
    %v8261 = vsel %vm4736, %v8197, %v7992
    %v8262 = vsel %vm4736, %v8198, %v7994
    %v8263 = vsel %vm4736, %v8199, %v7996
    %v8264 = vsel %vm4736, %v8200, %v7998
    %v8265 = vsel %vm4736, %v8201, %v8000
    %v8266 = vsel %vm4736, %v8202, %v8002
    %v8267 = vsel %vm4736, %v8203, %v8004
    %v8268 = vsel %vm4736, %v8204, %v8006
    %v8269 = vsel %vm4736, %v8205, %v8008
    %v8270 = vsel %vm4736, %v8206, %v8010
    %v8271 = vsel %vm4736, %v8207, %v8012
    %v8272 = vsel %vm4736, %v8208, %v8014
    %v8273 = vsel %vm4736, %v8209, %v8016
    %v8274 = vsel %vm4736, %v8210, %v8018
    %8275 = vst [vmem:[#allocation2 + $0x20] sm:$0xff] %v8211
    %8276 = vst [vmem:[#allocation2 + $0x58] sm:$0xff] %v8212
    %8277 = vst [vmem:[#allocation2 + $0x90] sm:$0xff] %v8213
    %8278 = vst [vmem:[#allocation2 + $0xc8] sm:$0xff] %v8214
    %8279 = vst [vmem:[#allocation2 + $0x100] sm:$0xff] %v8215
    %8280 = vst [vmem:[#allocation2 + $0x138] sm:$0xff] %v8216
    %8281 = vst [vmem:[#allocation2 + $0x170] sm:$0xff] %v8217
    %8282 = vst [vmem:[#allocation2 + $0x1a8] sm:$0xff] %v8218
    %8283 = vst [vmem:[#allocation2 + $0x1e0] sm:$0xff] %v8219
    %8284 = vst [vmem:[#allocation2 + $0x218] sm:$0xff] %v8220
    %8285 = vst [vmem:[#allocation2 + $0x250] sm:$0xff] %v8221
    %8286 = vst [vmem:[#allocation2 + $0x288] sm:$0xff] %v8222
    %8287 = vst [vmem:[#allocation2 + $0x2c0] sm:$0xff] %v8223
    %8288 = vst [vmem:[#allocation2 + $0x2f8] sm:$0xff] %v8224
    %8289 = vst [vmem:[#allocation2 + $0x330] sm:$0xff] %v8225
    %8290 = vst [vmem:[#allocation2 + $0x368] sm:$0xff] %v8226
    %8291 = vst [vmem:[#allocation2 + $0x3a0] sm:$0xff] %v8227
    %8292 = vst [vmem:[#allocation2 + $0x3d8] sm:$0xff] %v8228
    %8293 = vst [vmem:[#allocation2 + $0x410] sm:$0xff] %v8229
    %8294 = vst [vmem:[#allocation2 + $0x448] sm:$0xff] %v8230
    %8295 = vst [vmem:[#allocation2 + $0x480] sm:$0xff] %v8231
    %8296 = vst [vmem:[#allocation2 + $0x4b8] sm:$0xff] %v8232
    %8297 = vst [vmem:[#allocation2 + $0x4f0] sm:$0xff] %v8233
    %8298 = vst [vmem:[#allocation2 + $0x528] sm:$0xff] %v8234
    %8299 = vst [vmem:[#allocation2 + $0x560] sm:$0xff] %v8235
    %8300 = vst [vmem:[#allocation2 + $0x598] sm:$0xff] %v8236
    %8301 = vst [vmem:[#allocation2 + $0x5d0] sm:$0xff] %v8237
    %8302 = vst [vmem:[#allocation2 + $0x608] sm:$0xff] %v8238
    %8303 = vst [vmem:[#allocation2 + $0x640] sm:$0xff] %v8239
    %8304 = vst [vmem:[#allocation2 + $0x678] sm:$0xff] %v8240
    %8305 = vst [vmem:[#allocation2 + $0x6b0] sm:$0xff] %v8241
    %8306 = vst [vmem:[#allocation2 + $0x6e8] sm:$0xff] %v8242
    %8307 = vst [vmem:[#allocation2 + $0x720] sm:$0xff] %v8243
    %8308 = vst [vmem:[#allocation2 + $0x758] sm:$0xff] %v8244
    %8309 = vst [vmem:[#allocation2 + $0x790] sm:$0xff] %v8245
    %8310 = vst [vmem:[#allocation2 + $0x7c8] sm:$0xff] %v8246
    %8311 = vst [vmem:[#allocation2 + $0x800] sm:$0xff] %v8247
    %8312 = vst [vmem:[#allocation2 + $0x838] sm:$0xff] %v8248
    %8313 = vst [vmem:[#allocation2 + $0x870] sm:$0xff] %v8249
    %8314 = vst [vmem:[#allocation2 + $0x8a8] sm:$0xff] %v8250
    %8315 = vst [vmem:[#allocation2 + $0x8e0] sm:$0xff] %v8251
    %8316 = vst [vmem:[#allocation2 + $0x918] sm:$0xff] %v8252
    %8317 = vst [vmem:[#allocation2 + $0x950] sm:$0xff] %v8253
    %8318 = vst [vmem:[#allocation2 + $0x988] sm:$0xff] %v8254
    %8319 = vst [vmem:[#allocation2 + $0x9c0] sm:$0xff] %v8255
    %8320 = vst [vmem:[#allocation2 + $0x9f8] sm:$0xff] %v8256
    %8321 = vst [vmem:[#allocation2 + $0xa30] sm:$0xff] %v8257
    %8322 = vst [vmem:[#allocation2 + $0xa68] sm:$0xff] %v8258
    %8323 = vst [vmem:[#allocation2 + $0xaa0] sm:$0xff] %v8259
    %8324 = vst [vmem:[#allocation2 + $0xad8] sm:$0xff] %v8260
    %8325 = vst [vmem:[#allocation2 + $0xb10] sm:$0xff] %v8261
    %8326 = vst [vmem:[#allocation2 + $0xb48] sm:$0xff] %v8262
    %8327 = vst [vmem:[#allocation2 + $0xb80] sm:$0xff] %v8263
    %8328 = vst [vmem:[#allocation2 + $0xbb8] sm:$0xff] %v8264
    %8329 = vst [vmem:[#allocation2 + $0xbf0] sm:$0xff] %v8265
    %8330 = vst [vmem:[#allocation2 + $0xc28] sm:$0xff] %v8266
    %8331 = vst [vmem:[#allocation2 + $0xc60] sm:$0xff] %v8267
    %8332 = vst [vmem:[#allocation2 + $0xc98] sm:$0xff] %v8268
    %8333 = vst [vmem:[#allocation2 + $0xcd0] sm:$0xff] %v8269
    %8334 = vst [vmem:[#allocation2 + $0xd08] sm:$0xff] %v8270
    %8335 = vst [vmem:[#allocation2 + $0xd40] sm:$0xff] %v8271
    %8336 = vst [vmem:[#allocation2 + $0xd78] sm:$0xff] %v8272
    %8337 = vst [vmem:[#allocation2 + $0xdb0] sm:$0xff] %v8273
    %8338 = vst [vmem:[#allocation2 + $0xde8] sm:$0xff] %v8274
    %8347 = vrot.lane.b32.xlu0 %v2836, 32
    %v8348 = vpop.permute.xlu0 %8347
    %8349 = vrot.lane.b32.xlu0 %v2837, 32
    %v8350 = vpop.permute.xlu0 %8349
    %8351 = vrot.lane.b32.xlu0 %v2838, 32
    %v8352 = vpop.permute.xlu0 %8351
    %8353 = vrot.lane.b32.xlu0 %v2839, 32
    %v8354 = vpop.permute.xlu0 %8353
    %8355 = vrot.lane.b32.xlu0 %v2840, 32
    %v8356 = vpop.permute.xlu0 %8355
    %8357 = vrot.lane.b32.xlu0 %v2841, 32
    %v8358 = vpop.permute.xlu0 %8357
    %8359 = vrot.lane.b32.xlu0 %v2842, 32
    %v8360 = vpop.permute.xlu0 %8359
    %8361 = vrot.lane.b32.xlu0 %v2843, 32
    %v8362 = vpop.permute.xlu0 %8361
    %8363 = vrot.lane.b32.xlu0 %v2876, 32
    %v8364 = vpop.permute.xlu0 %8363
    %8365 = vrot.lane.b32.xlu0 %v2877, 32
    %v8366 = vpop.permute.xlu0 %8365
    %8367 = vrot.lane.b32.xlu0 %v2878, 32
    %v8368 = vpop.permute.xlu0 %8367
    %8369 = vrot.lane.b32.xlu0 %v2879, 32
    %v8370 = vpop.permute.xlu0 %8369
    %8371 = vrot.lane.b32.xlu0 %v2880, 32
    %v8372 = vpop.permute.xlu0 %8371
    %8373 = vrot.lane.b32.xlu0 %v2881, 32
    %v8374 = vpop.permute.xlu0 %8373
    %8375 = vrot.lane.b32.xlu0 %v2882, 32
    %v8376 = vpop.permute.xlu0 %8375
    %8377 = vrot.lane.b32.xlu0 %v2883, 32
    %v8378 = vpop.permute.xlu0 %8377
    %8395 = vrot.lane.b32.xlu0 %v702, 64
    %v8396 = vpop.permute.xlu0 %8395
    %8397 = vrot.lane.b32.xlu0 %v703, 64
    %v8398 = vpop.permute.xlu0 %8397
    %8399 = vrot.lane.b32.xlu0 %v704, 64
    %v8400 = vpop.permute.xlu0 %8399
    %8401 = vrot.lane.b32.xlu0 %v705, 64
    %v8402 = vpop.permute.xlu0 %8401
    %8403 = vrot.lane.b32.xlu0 %v734, 64
    %v8404 = vpop.permute.xlu0 %8403
    %8405 = vrot.lane.b32.xlu0 %v735, 64
    %v8406 = vpop.permute.xlu0 %8405
    %8407 = vrot.lane.b32.xlu0 %v736, 64
    %v8408 = vpop.permute.xlu0 %8407
    %8409 = vrot.lane.b32.xlu0 %v737, 64
    %v8410 = vpop.permute.xlu0 %8409
    %8423 = vrot.lane.b32.xlu0 %v3356, 96
    %v8424 = vpop.permute.xlu0 %8423
    %8425 = vrot.lane.b32.xlu0 %v3357, 96
    %v8426 = vpop.permute.xlu0 %8425
    %8427 = vrot.lane.b32.xlu0 %v3358, 96
    %v8428 = vpop.permute.xlu0 %8427
    %8429 = vrot.lane.b32.xlu0 %v3359, 96
    %v8430 = vpop.permute.xlu0 %8429
    %8431 = vrot.lane.b32.xlu0 %v3360, 96
    %v8432 = vpop.permute.xlu0 %8431
    %8433 = vrot.lane.b32.xlu0 %v3361, 96
    %v8434 = vpop.permute.xlu0 %8433
    %8435 = vrot.lane.b32.xlu0 %v3362, 96
    %v8436 = vpop.permute.xlu0 %8435
    %8437 = vrot.lane.b32.xlu0 %v3363, 96
    %v8438 = vpop.permute.xlu0 %8437
    %8439 = vrot.lane.b32.xlu0 %v3396, 96
    %v8440 = vpop.permute.xlu0 %8439
    %8441 = vrot.lane.b32.xlu0 %v3397, 96
    %v8442 = vpop.permute.xlu0 %8441
    %8443 = vrot.lane.b32.xlu0 %v3398, 96
    %v8444 = vpop.permute.xlu0 %8443
    %8445 = vrot.lane.b32.xlu0 %v3399, 96
    %v8446 = vpop.permute.xlu0 %8445
    %8447 = vrot.lane.b32.xlu0 %v3400, 96
    %v8448 = vpop.permute.xlu0 %8447
    %8449 = vrot.lane.b32.xlu0 %v3401, 96
    %v8450 = vpop.permute.xlu0 %8449
    %8451 = vrot.lane.b32.xlu0 %v3402, 96
    %v8452 = vpop.permute.xlu0 %8451
    %8453 = vrot.lane.b32.xlu0 %v3403, 96
    %v8454 = vpop.permute.xlu0 %8453
    %v8471 = vsel %vm96, %v2316, %v8348
    %v8472 = vsel %vm96, %v2317, %v8350
    %v8473 = vsel %vm96, %v2318, %v8352
    %v8474 = vsel %vm96, %v2319, %v8354
    %v8475 = vsel %vm96, %v2320, %v8356
    %v8476 = vsel %vm96, %v2321, %v8358
    %v8477 = vsel %vm96, %v2322, %v8360
    %v8478 = vsel %vm96, %v2323, %v8362
    %v8479 = vsel %vm96, %v2356, %v8364
    %v8480 = vsel %vm96, %v2357, %v8366
    %v8481 = vsel %vm96, %v2358, %v8368
    %v8482 = vsel %vm96, %v2359, %v8370
    %v8483 = vsel %vm96, %v2360, %v8372
    %v8484 = vsel %vm96, %v2361, %v8374
    %v8485 = vsel %vm96, %v2362, %v8376
    %v8486 = vsel %vm96, %v2363, %v8378
    %v8487 = vsel %vm4671, %v8471, %v8396
    %v8488 = vsel %vm4671, %v8472, %v8398
    %v8489 = vsel %vm4671, %v8473, %v8400
    %v8490 = vsel %vm4671, %v8474, %v8402
    %v8491 = vsel %vm4671, %v8475, %v4181
    %v8492 = vsel %vm4671, %v8476, %v4181
    %v8493 = vsel %vm4671, %v8477, %v4181
    %v8494 = vsel %vm4671, %v8478, %v4181
    %v8495 = vsel %vm4671, %v8479, %v8404
    %v8496 = vsel %vm4671, %v8480, %v8406
    %v8497 = vsel %vm4671, %v8481, %v8408
    %v8498 = vsel %vm4671, %v8482, %v8410
    %v8499 = vsel %vm4671, %v8483, %v4181
    %v8500 = vsel %vm4671, %v8484, %v4181
    %v8501 = vsel %vm4671, %v8485, %v4181
    %v8502 = vsel %vm4671, %v8486, %v4181
    %v8503 = vsel %vm4736, %v8487, %v8424
    %v8504 = vsel %vm4736, %v8488, %v8426
    %v8505 = vsel %vm4736, %v8489, %v8428
    %v8506 = vsel %vm4736, %v8490, %v8430
    %v8507 = vsel %vm4736, %v8491, %v8432
    %v8508 = vsel %vm4736, %v8492, %v8434
    %v8509 = vsel %vm4736, %v8493, %v8436
    %v8510 = vsel %vm4736, %v8494, %v8438
    %v8511 = vsel %vm4736, %v8495, %v8440
    %v8512 = vsel %vm4736, %v8496, %v8442
    %v8513 = vsel %vm4736, %v8497, %v8444
    %v8514 = vsel %vm4736, %v8498, %v8446
    %v8515 = vsel %vm4736, %v8499, %v8448
    %v8516 = vsel %vm4736, %v8500, %v8450
    %v8517 = vsel %vm4736, %v8501, %v8452
    %v8518 = vsel %vm4736, %v8502, %v8454
    %8519 = vst [vmem:[#allocation2 + $0x28] sm:$0xff] %v4745
    %8520 = vst [vmem:[#allocation2 + $0x60] sm:$0xff] %v4746
    %8521 = vst [vmem:[#allocation2 + $0x98] sm:$0xff] %v4747
    %8522 = vst [vmem:[#allocation2 + $0xd0] sm:$0xff] %v4748
    %8523 = vst [vmem:[#allocation2 + $0x108] sm:$0xff] %v4749
    %8524 = vst [vmem:[#allocation2 + $0x140] sm:$0xff] %v4750
    %8525 = vst [vmem:[#allocation2 + $0x178] sm:$0xff] %v4751
    %8526 = vst [vmem:[#allocation2 + $0x1b0] sm:$0xff] %v4752
    %8527 = vst [vmem:[#allocation2 + $0x1e8] sm:$0xff] %v4753
    %8528 = vst [vmem:[#allocation2 + $0x220] sm:$0xff] %v4754
    %8529 = vst [vmem:[#allocation2 + $0x258] sm:$0xff] %v4755
    %8530 = vst [vmem:[#allocation2 + $0x290] sm:$0xff] %v4756
    %8531 = vst [vmem:[#allocation2 + $0x2c8] sm:$0xff] %v4757
    %8532 = vst [vmem:[#allocation2 + $0x300] sm:$0xff] %v4758
    %8533 = vst [vmem:[#allocation2 + $0x338] sm:$0xff] %v4759
    %8534 = vst [vmem:[#allocation2 + $0x370] sm:$0xff] %v4760
    %8535 = vst [vmem:[#allocation2 + $0x3a8] sm:$0xff] %v4761
    %8536 = vst [vmem:[#allocation2 + $0x3e0] sm:$0xff] %v4762
    %8537 = vst [vmem:[#allocation2 + $0x418] sm:$0xff] %v4763
    %8538 = vst [vmem:[#allocation2 + $0x450] sm:$0xff] %v4764
    %8539 = vst [vmem:[#allocation2 + $0x488] sm:$0xff] %v4765
    %8540 = vst [vmem:[#allocation2 + $0x4c0] sm:$0xff] %v4766
    %8541 = vst [vmem:[#allocation2 + $0x4f8] sm:$0xff] %v4767
    %8542 = vst [vmem:[#allocation2 + $0x530] sm:$0xff] %v4768
    %8543 = vst [vmem:[#allocation2 + $0x568] sm:$0xff] %v8503
    %8544 = vst [vmem:[#allocation2 + $0x5a0] sm:$0xff] %v8504
    %8545 = vst [vmem:[#allocation2 + $0x5d8] sm:$0xff] %v8505
    %8546 = vst [vmem:[#allocation2 + $0x610] sm:$0xff] %v8506
    %8547 = vst [vmem:[#allocation2 + $0x648] sm:$0xff] %v8507
    %8548 = vst [vmem:[#allocation2 + $0x680] sm:$0xff] %v8508
    %8549 = vst [vmem:[#allocation2 + $0x6b8] sm:$0xff] %v8509
    %8550 = vst [vmem:[#allocation2 + $0x6f0] sm:$0xff] %v8510
    %8551 = vst [vmem:[#allocation2 + $0x728] sm:$0xff] %v4777
    %8552 = vst [vmem:[#allocation2 + $0x760] sm:$0xff] %v4778
    %8553 = vst [vmem:[#allocation2 + $0x798] sm:$0xff] %v4779
    %8554 = vst [vmem:[#allocation2 + $0x7d0] sm:$0xff] %v4780
    %8555 = vst [vmem:[#allocation2 + $0x808] sm:$0xff] %v4781
    %8556 = vst [vmem:[#allocation2 + $0x840] sm:$0xff] %v4782
    %8557 = vst [vmem:[#allocation2 + $0x878] sm:$0xff] %v4783
    %8558 = vst [vmem:[#allocation2 + $0x8b0] sm:$0xff] %v4784
    %8559 = vst [vmem:[#allocation2 + $0x8e8] sm:$0xff] %v4785
    %8560 = vst [vmem:[#allocation2 + $0x920] sm:$0xff] %v4786
    %8561 = vst [vmem:[#allocation2 + $0x958] sm:$0xff] %v4787
    %8562 = vst [vmem:[#allocation2 + $0x990] sm:$0xff] %v4788
    %8563 = vst [vmem:[#allocation2 + $0x9c8] sm:$0xff] %v4789
    %8564 = vst [vmem:[#allocation2 + $0xa00] sm:$0xff] %v4790
    %8565 = vst [vmem:[#allocation2 + $0xa38] sm:$0xff] %v4791
    %8566 = vst [vmem:[#allocation2 + $0xa70] sm:$0xff] %v4792
    %8567 = vst [vmem:[#allocation2 + $0xaa8] sm:$0xff] %v4793
    %8568 = vst [vmem:[#allocation2 + $0xae0] sm:$0xff] %v4794
    %8569 = vst [vmem:[#allocation2 + $0xb18] sm:$0xff] %v4795
    %8570 = vst [vmem:[#allocation2 + $0xb50] sm:$0xff] %v4796
    %8571 = vst [vmem:[#allocation2 + $0xb88] sm:$0xff] %v4797
    %8572 = vst [vmem:[#allocation2 + $0xbc0] sm:$0xff] %v4798
    %8573 = vst [vmem:[#allocation2 + $0xbf8] sm:$0xff] %v4799
    %8574 = vst [vmem:[#allocation2 + $0xc30] sm:$0xff] %v4800
    %8575 = vst [vmem:[#allocation2 + $0xc68] sm:$0xff] %v8511
    %8576 = vst [vmem:[#allocation2 + $0xca0] sm:$0xff] %v8512
    %8577 = vst [vmem:[#allocation2 + $0xcd8] sm:$0xff] %v8513
    %8578 = vst [vmem:[#allocation2 + $0xd10] sm:$0xff] %v8514
    %8579 = vst [vmem:[#allocation2 + $0xd48] sm:$0xff] %v8515
    %8580 = vst [vmem:[#allocation2 + $0xd80] sm:$0xff] %v8516
    %8581 = vst [vmem:[#allocation2 + $0xdb8] sm:$0xff] %v8517
    %8582 = vst [vmem:[#allocation2 + $0xdf0] sm:$0xff] %v8518
    %v8583 = vsel %vm96, %v3852, 0.0
    %v8584 = vsel %vm96, %v3853, 0.0
    %v8585 = vsel %vm96, %v3854, 0.0
    %v8586 = vsel %vm96, %v3855, 0.0
    %v8587 = vsel %vm96, %v3856, 0.0
    %v8588 = vsel %vm96, %v3857, 0.0
    %v8589 = vsel %vm96, %v3858, 0.0
    %v8590 = vsel %vm96, %v3859, 0.0
    %v8591 = vsel %vm96, %v3860, 0.0
    %v8592 = vsel %vm96, %v3861, 0.0
    %v8593 = vsel %vm96, %v3862, 0.0
    %v8594 = vsel %vm96, %v3863, 0.0
    %v8595 = vsel %vm96, %v3864, 0.0
    %v8596 = vsel %vm96, %v3865, 0.0
    %v8597 = vsel %vm96, %v3866, 0.0
    %v8598 = vsel %vm96, %v3867, 0.0
    %v8599 = vsel %vm96, %v3868, 0.0
    %v8600 = vsel %vm96, %v3869, 0.0
    %v8601 = vsel %vm96, %v3870, 0.0
    %v8602 = vsel %vm96, %v3871, 0.0
    %v8603 = vsel %vm96, %v3872, 0.0
    %v8604 = vsel %vm96, %v3873, 0.0
    %v8605 = vsel %vm96, %v3874, 0.0
    %v8606 = vsel %vm96, %v3875, 0.0
    %v8607 = vsel %vm96, %v3876, 0.0
    %v8608 = vsel %vm96, %v3877, 0.0
    %v8609 = vsel %vm96, %v3878, 0.0
    %v8610 = vsel %vm96, %v3879, 0.0
    %v8611 = vsel %vm96, %v3880, 0.0
    %v8612 = vsel %vm96, %v3881, 0.0
    %v8613 = vsel %vm96, %v3882, 0.0
    %v8614 = vsel %vm96, %v3883, 0.0
    %v8615 = vsel %vm96, %v3892, 0.0
    %v8616 = vsel %vm96, %v3893, 0.0
    %v8617 = vsel %vm96, %v3894, 0.0
    %v8618 = vsel %vm96, %v3895, 0.0
    %v8619 = vsel %vm96, %v3896, 0.0
    %v8620 = vsel %vm96, %v3897, 0.0
    %v8621 = vsel %vm96, %v3898, 0.0
    %v8622 = vsel %vm96, %v3899, 0.0
    %v8623 = vsel %vm96, %v3900, 0.0
    %v8624 = vsel %vm96, %v3901, 0.0
    %v8625 = vsel %vm96, %v3902, 0.0
    %v8626 = vsel %vm96, %v3903, 0.0
    %v8627 = vsel %vm96, %v3904, 0.0
    %v8628 = vsel %vm96, %v3905, 0.0
    %v8629 = vsel %vm96, %v3906, 0.0
    %v8630 = vsel %vm96, %v3907, 0.0
    %v8631 = vsel %vm96, %v3908, 0.0
    %v8632 = vsel %vm96, %v3909, 0.0
    %v8633 = vsel %vm96, %v3910, 0.0
    %v8634 = vsel %vm96, %v3911, 0.0
    %v8635 = vsel %vm96, %v3912, 0.0
    %v8636 = vsel %vm96, %v3913, 0.0
    %v8637 = vsel %vm96, %v3914, 0.0
    %v8638 = vsel %vm96, %v3915, 0.0
    %v8639 = vsel %vm96, %v3916, 0.0
    %v8640 = vsel %vm96, %v3917, 0.0
    %v8641 = vsel %vm96, %v3918, 0.0
    %v8642 = vsel %vm96, %v3919, 0.0
    %v8643 = vsel %vm96, %v3920, 0.0
    %v8644 = vsel %vm96, %v3921, 0.0
    %v8645 = vsel %vm96, %v3922, 0.0
    %v8646 = vsel %vm96, %v3923, 0.0
    %v8647 = vsel %vm4671, %v8583, 0.0
    %v8648 = vsel %vm4671, %v8584, 0.0
    %v8649 = vsel %vm4671, %v8585, 0.0
    %v8650 = vsel %vm4671, %v8586, 0.0
    %v8651 = vsel %vm4671, %v8587, 0.0
    %v8652 = vsel %vm4671, %v8588, 0.0
    %v8653 = vsel %vm4671, %v8589, 0.0
    %v8654 = vsel %vm4671, %v8590, 0.0
    %v8655 = vsel %vm4671, %v8591, 0.0
    %v8656 = vsel %vm4671, %v8592, 0.0
    %v8657 = vsel %vm4671, %v8593, 0.0
    %v8658 = vsel %vm4671, %v8594, 0.0
    %v8659 = vsel %vm4671, %v8595, 0.0
    %v8660 = vsel %vm4671, %v8596, 0.0
    %v8661 = vsel %vm4671, %v8597, 0.0
    %v8662 = vsel %vm4671, %v8598, 0.0
    %v8663 = vsel %vm4671, %v8599, 0.0
    %v8664 = vsel %vm4671, %v8600, 0.0
    %v8665 = vsel %vm4671, %v8601, 0.0
    %v8666 = vsel %vm4671, %v8602, 0.0
    %v8667 = vsel %vm4671, %v8603, 0.0
    %v8668 = vsel %vm4671, %v8604, 0.0
    %v8669 = vsel %vm4671, %v8605, 0.0
    %v8670 = vsel %vm4671, %v8606, 0.0
    %v8671 = vsel %vm4671, %v8607, 0.0
    %v8672 = vsel %vm4671, %v8608, 0.0
    %v8673 = vsel %vm4671, %v8609, 0.0
    %v8674 = vsel %vm4671, %v8610, 0.0
    %v8675 = vsel %vm4671, %v8611, 0.0
    %v8676 = vsel %vm4671, %v8612, 0.0
    %v8677 = vsel %vm4671, %v8613, 0.0
    %v8678 = vsel %vm4671, %v8614, 0.0
    %v8679 = vsel %vm4671, %v8615, 0.0
    %v8680 = vsel %vm4671, %v8616, 0.0
    %v8681 = vsel %vm4671, %v8617, 0.0
    %v8682 = vsel %vm4671, %v8618, 0.0
    %v8683 = vsel %vm4671, %v8619, 0.0
    %v8684 = vsel %vm4671, %v8620, 0.0
    %v8685 = vsel %vm4671, %v8621, 0.0
    %v8686 = vsel %vm4671, %v8622, 0.0
    %v8687 = vsel %vm4671, %v8623, 0.0
    %v8688 = vsel %vm4671, %v8624, 0.0
    %v8689 = vsel %vm4671, %v8625, 0.0
    %v8690 = vsel %vm4671, %v8626, 0.0
    %v8691 = vsel %vm4671, %v8627, 0.0
    %v8692 = vsel %vm4671, %v8628, 0.0
    %v8693 = vsel %vm4671, %v8629, 0.0
    %v8694 = vsel %vm4671, %v8630, 0.0
    %v8695 = vsel %vm4671, %v8631, 0.0
    %v8696 = vsel %vm4671, %v8632, 0.0
    %v8697 = vsel %vm4671, %v8633, 0.0
    %v8698 = vsel %vm4671, %v8634, 0.0
    %v8699 = vsel %vm4671, %v8635, 0.0
    %v8700 = vsel %vm4671, %v8636, 0.0
    %v8701 = vsel %vm4671, %v8637, 0.0
    %v8702 = vsel %vm4671, %v8638, 0.0
    %v8703 = vsel %vm4671, %v8639, 0.0
    %v8704 = vsel %vm4671, %v8640, 0.0
    %v8705 = vsel %vm4671, %v8641, 0.0
    %v8706 = vsel %vm4671, %v8642, 0.0
    %v8707 = vsel %vm4671, %v8643, 0.0
    %v8708 = vsel %vm4671, %v8644, 0.0
    %v8709 = vsel %vm4671, %v8645, 0.0
    %v8710 = vsel %vm4671, %v8646, 0.0
    %v8711 = vsel %vm4736, %v8647, 0.0
    %v8712 = vsel %vm4736, %v8648, 0.0
    %v8713 = vsel %vm4736, %v8649, 0.0
    %v8714 = vsel %vm4736, %v8650, 0.0
    %v8715 = vsel %vm4736, %v8651, 0.0
    %v8716 = vsel %vm4736, %v8652, 0.0
    %v8717 = vsel %vm4736, %v8653, 0.0
    %v8718 = vsel %vm4736, %v8654, 0.0
    %v8719 = vsel %vm4736, %v8655, 0.0
    %v8720 = vsel %vm4736, %v8656, 0.0
    %v8721 = vsel %vm4736, %v8657, 0.0
    %v8722 = vsel %vm4736, %v8658, 0.0
    %v8723 = vsel %vm4736, %v8659, 0.0
    %v8724 = vsel %vm4736, %v8660, 0.0
    %v8725 = vsel %vm4736, %v8661, 0.0
    %v8726 = vsel %vm4736, %v8662, 0.0
    %v8727 = vsel %vm4736, %v8663, 0.0
    %v8728 = vsel %vm4736, %v8664, 0.0
    %v8729 = vsel %vm4736, %v8665, 0.0
    %v8730 = vsel %vm4736, %v8666, 0.0
    %v8731 = vsel %vm4736, %v8667, 0.0
    %v8732 = vsel %vm4736, %v8668, 0.0
    %v8733 = vsel %vm4736, %v8669, 0.0
    %v8734 = vsel %vm4736, %v8670, 0.0
    %v8735 = vsel %vm4736, %v8671, 0.0
    %v8736 = vsel %vm4736, %v8672, 0.0
    %v8737 = vsel %vm4736, %v8673, 0.0
    %v8738 = vsel %vm4736, %v8674, 0.0
    %v8739 = vsel %vm4736, %v8675, 0.0
    %v8740 = vsel %vm4736, %v8676, 0.0
    %v8741 = vsel %vm4736, %v8677, 0.0
    %v8742 = vsel %vm4736, %v8678, 0.0
    %v8743 = vsel %vm4736, %v8679, 0.0
    %v8744 = vsel %vm4736, %v8680, 0.0
    %v8745 = vsel %vm4736, %v8681, 0.0
    %v8746 = vsel %vm4736, %v8682, 0.0
    %v8747 = vsel %vm4736, %v8683, 0.0
    %v8748 = vsel %vm4736, %v8684, 0.0
    %v8749 = vsel %vm4736, %v8685, 0.0
    %v8750 = vsel %vm4736, %v8686, 0.0
    %v8751 = vsel %vm4736, %v8687, 0.0
    %v8752 = vsel %vm4736, %v8688, 0.0
    %v8753 = vsel %vm4736, %v8689, 0.0
    %v8754 = vsel %vm4736, %v8690, 0.0
    %v8755 = vsel %vm4736, %v8691, 0.0
    %v8756 = vsel %vm4736, %v8692, 0.0
    %v8757 = vsel %vm4736, %v8693, 0.0
    %v8758 = vsel %vm4736, %v8694, 0.0
    %v8759 = vsel %vm4736, %v8695, 0.0
    %v8760 = vsel %vm4736, %v8696, 0.0
    %v8761 = vsel %vm4736, %v8697, 0.0
    %v8762 = vsel %vm4736, %v8698, 0.0
    %v8763 = vsel %vm4736, %v8699, 0.0
    %v8764 = vsel %vm4736, %v8700, 0.0
    %v8765 = vsel %vm4736, %v8701, 0.0
    %v8766 = vsel %vm4736, %v8702, 0.0
    %v8767 = vsel %vm4736, %v8703, 0.0
    %v8768 = vsel %vm4736, %v8704, 0.0
    %v8769 = vsel %vm4736, %v8705, 0.0
    %v8770 = vsel %vm4736, %v8706, 0.0
    %v8771 = vsel %vm4736, %v8707, 0.0
    %v8772 = vsel %vm4736, %v8708, 0.0
    %v8773 = vsel %vm4736, %v8709, 0.0
    %v8774 = vsel %vm4736, %v8710, 0.0
    %8775 = vst [vmem:[#allocation2 + $0x30] sm:$0xff] %v8711
    %8776 = vst [vmem:[#allocation2 + $0x68] sm:$0xff] %v8712
    %8777 = vst [vmem:[#allocation2 + $0xa0] sm:$0xff] %v8713
    %8778 = vst [vmem:[#allocation2 + $0xd8] sm:$0xff] %v8714
    %8779 = vst [vmem:[#allocation2 + $0x110] sm:$0xff] %v8715
    %8780 = vst [vmem:[#allocation2 + $0x148] sm:$0xff] %v8716
    %8781 = vst [vmem:[#allocation2 + $0x180] sm:$0xff] %v8717
    %8782 = vst [vmem:[#allocation2 + $0x1b8] sm:$0xff] %v8718
    %8783 = vst [vmem:[#allocation2 + $0x1f0] sm:$0xff] %v8719
    %8784 = vst [vmem:[#allocation2 + $0x228] sm:$0xff] %v8720
    %8785 = vst [vmem:[#allocation2 + $0x260] sm:$0xff] %v8721
    %8786 = vst [vmem:[#allocation2 + $0x298] sm:$0xff] %v8722
    %8787 = vst [vmem:[#allocation2 + $0x2d0] sm:$0xff] %v8723
    %8788 = vst [vmem:[#allocation2 + $0x308] sm:$0xff] %v8724
    %8789 = vst [vmem:[#allocation2 + $0x340] sm:$0xff] %v8725
    %8790 = vst [vmem:[#allocation2 + $0x378] sm:$0xff] %v8726
    %8791 = vst [vmem:[#allocation2 + $0x3b0] sm:$0xff] %v8727
    %8792 = vst [vmem:[#allocation2 + $0x3e8] sm:$0xff] %v8728
    %8793 = vst [vmem:[#allocation2 + $0x420] sm:$0xff] %v8729
    %8794 = vst [vmem:[#allocation2 + $0x458] sm:$0xff] %v8730
    %8795 = vst [vmem:[#allocation2 + $0x490] sm:$0xff] %v8731
    %8796 = vst [vmem:[#allocation2 + $0x4c8] sm:$0xff] %v8732
    %8797 = vst [vmem:[#allocation2 + $0x500] sm:$0xff] %v8733
    %8798 = vst [vmem:[#allocation2 + $0x538] sm:$0xff] %v8734
    %8799 = vst [vmem:[#allocation2 + $0x570] sm:$0xff] %v8735
    %8800 = vst [vmem:[#allocation2 + $0x5a8] sm:$0xff] %v8736
    %8801 = vst [vmem:[#allocation2 + $0x5e0] sm:$0xff] %v8737
    %8802 = vst [vmem:[#allocation2 + $0x618] sm:$0xff] %v8738
    %8803 = vst [vmem:[#allocation2 + $0x650] sm:$0xff] %v8739
    %8804 = vst [vmem:[#allocation2 + $0x688] sm:$0xff] %v8740
    %8805 = vst [vmem:[#allocation2 + $0x6c0] sm:$0xff] %v8741
    %8806 = vst [vmem:[#allocation2 + $0x6f8] sm:$0xff] %v8742
    %8807 = vst [vmem:[#allocation2 + $0x730] sm:$0xff] %v8743
    %8808 = vst [vmem:[#allocation2 + $0x768] sm:$0xff] %v8744
    %8809 = vst [vmem:[#allocation2 + $0x7a0] sm:$0xff] %v8745
    %8810 = vst [vmem:[#allocation2 + $0x7d8] sm:$0xff] %v8746
    %8811 = vst [vmem:[#allocation2 + $0x810] sm:$0xff] %v8747
    %8812 = vst [vmem:[#allocation2 + $0x848] sm:$0xff] %v8748
    %8813 = vst [vmem:[#allocation2 + $0x880] sm:$0xff] %v8749
    %8814 = vst [vmem:[#allocation2 + $0x8b8] sm:$0xff] %v8750
    %8815 = vst [vmem:[#allocation2 + $0x8f0] sm:$0xff] %v8751
    %8816 = vst [vmem:[#allocation2 + $0x928] sm:$0xff] %v8752
    %8817 = vst [vmem:[#allocation2 + $0x960] sm:$0xff] %v8753
    %8818 = vst [vmem:[#allocation2 + $0x998] sm:$0xff] %v8754
    %8819 = vst [vmem:[#allocation2 + $0x9d0] sm:$0xff] %v8755
    %8820 = vst [vmem:[#allocation2 + $0xa08] sm:$0xff] %v8756
    %8821 = vst [vmem:[#allocation2 + $0xa40] sm:$0xff] %v8757
    %8822 = vst [vmem:[#allocation2 + $0xa78] sm:$0xff] %v8758
    %8823 = vst [vmem:[#allocation2 + $0xab0] sm:$0xff] %v8759
    %8824 = vst [vmem:[#allocation2 + $0xae8] sm:$0xff] %v8760
    %8825 = vst [vmem:[#allocation2 + $0xb20] sm:$0xff] %v8761
    %8826 = vst [vmem:[#allocation2 + $0xb58] sm:$0xff] %v8762
    %8827 = vst [vmem:[#allocation2 + $0xb90] sm:$0xff] %v8763
    %8828 = vst [vmem:[#allocation2 + $0xbc8] sm:$0xff] %v8764
    %8829 = vst [vmem:[#allocation2 + $0xc00] sm:$0xff] %v8765
    %8830 = vst [vmem:[#allocation2 + $0xc38] sm:$0xff] %v8766
    %8831 = vst [vmem:[#allocation2 + $0xc70] sm:$0xff] %v8767
    %8832 = vst [vmem:[#allocation2 + $0xca8] sm:$0xff] %v8768
    %8833 = vst [vmem:[#allocation2 + $0xce0] sm:$0xff] %v8769
    %8834 = vst [vmem:[#allocation2 + $0xd18] sm:$0xff] %v8770
    %8835 = vst [vmem:[#allocation2 + $0xd50] sm:$0xff] %v8771
    %8836 = vst [vmem:[#allocation2 + $0xd88] sm:$0xff] %v8772
    %8837 = vst [vmem:[#allocation2 + $0xdc0] sm:$0xff] %v8773
    %8838 = vst [vmem:[#allocation2 + $0xdf8] sm:$0xff] %v8774
    %v8839 = vld [vmem:[#allocation2] sm:$0xff]
    %v8840 = vld [vmem:[#allocation2 + $0x8] sm:$0xff]
    %v8841 = vld [vmem:[#allocation2 + $0x10] sm:$0xff]
    %v8842 = vld [vmem:[#allocation2 + $0x18] sm:$0xff]
    %v8843 = vld [vmem:[#allocation2 + $0x20] sm:$0xff]
    %v8844 = vld [vmem:[#allocation2 + $0x28] sm:$0xff]
    %v8845 = vld [vmem:[#allocation2 + $0x30] sm:$0xff]
    %v8846 = vld [vmem:[#allocation2 + $0x38] sm:$0xff]
    %v8847 = vld [vmem:[#allocation2 + $0x40] sm:$0xff]
    %v8848 = vld [vmem:[#allocation2 + $0x48] sm:$0xff]
    %v8849 = vld [vmem:[#allocation2 + $0x50] sm:$0xff]
    %v8850 = vld [vmem:[#allocation2 + $0x58] sm:$0xff]
    %v8851 = vld [vmem:[#allocation2 + $0x60] sm:$0xff]
    %v8852 = vld [vmem:[#allocation2 + $0x68] sm:$0xff]
    %v8853 = vld [vmem:[#allocation2 + $0x70] sm:$0xff]
    %v8854 = vld [vmem:[#allocation2 + $0x78] sm:$0xff]
    %v8855 = vld [vmem:[#allocation2 + $0x80] sm:$0xff]
    %v8856 = vld [vmem:[#allocation2 + $0x88] sm:$0xff]
    %v8857 = vld [vmem:[#allocation2 + $0x90] sm:$0xff]
    %v8858 = vld [vmem:[#allocation2 + $0x98] sm:$0xff]
    %v8859 = vld [vmem:[#allocation2 + $0xa0] sm:$0xff]
    %v8860 = vld [vmem:[#allocation2 + $0xa8] sm:$0xff]
    %v8861 = vld [vmem:[#allocation2 + $0xb0] sm:$0xff]
    %v8862 = vld [vmem:[#allocation2 + $0xb8] sm:$0xff]
    %v8863 = vld [vmem:[#allocation2 + $0xc0] sm:$0xff]
    %v8864 = vld [vmem:[#allocation2 + $0xc8] sm:$0xff]
    %v8865 = vld [vmem:[#allocation2 + $0xd0] sm:$0xff]
    %v8866 = vld [vmem:[#allocation2 + $0xd8] sm:$0xff]
    %v8867 = vld [vmem:[#allocation2 + $0xe0] sm:$0xff]
    %v8868 = vld [vmem:[#allocation2 + $0xe8] sm:$0xff]
    %v8869 = vld [vmem:[#allocation2 + $0xf0] sm:$0xff]
    %v8870 = vld [vmem:[#allocation2 + $0xf8] sm:$0xff]
    %v8871 = vld [vmem:[#allocation2 + $0x100] sm:$0xff]
    %v8872 = vld [vmem:[#allocation2 + $0x108] sm:$0xff]
    %v8873 = vld [vmem:[#allocation2 + $0x110] sm:$0xff]
    %v8874 = vld [vmem:[#allocation2 + $0x118] sm:$0xff]
    %v8875 = vld [vmem:[#allocation2 + $0x120] sm:$0xff]
    %v8876 = vld [vmem:[#allocation2 + $0x128] sm:$0xff]
    %v8877 = vld [vmem:[#allocation2 + $0x130] sm:$0xff]
    %v8878 = vld [vmem:[#allocation2 + $0x138] sm:$0xff]
    %v8879 = vld [vmem:[#allocation2 + $0x140] sm:$0xff]
    %v8880 = vld [vmem:[#allocation2 + $0x148] sm:$0xff]
    %v8881 = vld [vmem:[#allocation2 + $0x150] sm:$0xff]
    %v8882 = vld [vmem:[#allocation2 + $0x158] sm:$0xff]
    %v8883 = vld [vmem:[#allocation2 + $0x160] sm:$0xff]
    %v8884 = vld [vmem:[#allocation2 + $0x168] sm:$0xff]
    %v8885 = vld [vmem:[#allocation2 + $0x170] sm:$0xff]
    %v8886 = vld [vmem:[#allocation2 + $0x178] sm:$0xff]
    %v8887 = vld [vmem:[#allocation2 + $0x180] sm:$0xff]
    %v8888 = vld [vmem:[#allocation2 + $0x188] sm:$0xff]
    %v8889 = vld [vmem:[#allocation2 + $0x190] sm:$0xff]
    %v8890 = vld [vmem:[#allocation2 + $0x198] sm:$0xff]
    %v8891 = vld [vmem:[#allocation2 + $0x1a0] sm:$0xff]
    %v8892 = vld [vmem:[#allocation2 + $0x1a8] sm:$0xff]
    %v8893 = vld [vmem:[#allocation2 + $0x1b0] sm:$0xff]
    %v8894 = vld [vmem:[#allocation2 + $0x1b8] sm:$0xff]
    %v8895 = vld [vmem:[#allocation2 + $0x1c0] sm:$0xff]
    %v8896 = vld [vmem:[#allocation2 + $0x1c8] sm:$0xff]
    %v8897 = vld [vmem:[#allocation2 + $0x1d0] sm:$0xff]
    %v8898 = vld [vmem:[#allocation2 + $0x1d8] sm:$0xff]
    %v8899 = vld [vmem:[#allocation2 + $0x1e0] sm:$0xff]
    %v8900 = vld [vmem:[#allocation2 + $0x1e8] sm:$0xff]
    %v8901 = vld [vmem:[#allocation2 + $0x1f0] sm:$0xff]
    %v8902 = vld [vmem:[#allocation2 + $0x1f8] sm:$0xff]
    %v8903 = vld [vmem:[#allocation2 + $0x200] sm:$0xff]
    %v8904 = vld [vmem:[#allocation2 + $0x208] sm:$0xff]
    %v8905 = vld [vmem:[#allocation2 + $0x210] sm:$0xff]
    %v8906 = vld [vmem:[#allocation2 + $0x218] sm:$0xff]
    %v8907 = vld [vmem:[#allocation2 + $0x220] sm:$0xff]
    %v8908 = vld [vmem:[#allocation2 + $0x228] sm:$0xff]
    %v8909 = vld [vmem:[#allocation2 + $0x230] sm:$0xff]
    %v8910 = vld [vmem:[#allocation2 + $0x238] sm:$0xff]
    %v8911 = vld [vmem:[#allocation2 + $0x240] sm:$0xff]
    %v8912 = vld [vmem:[#allocation2 + $0x248] sm:$0xff]
    %v8913 = vld [vmem:[#allocation2 + $0x250] sm:$0xff]
    %v8914 = vld [vmem:[#allocation2 + $0x258] sm:$0xff]
    %v8915 = vld [vmem:[#allocation2 + $0x260] sm:$0xff]
    %v8916 = vld [vmem:[#allocation2 + $0x268] sm:$0xff]
    %v8917 = vld [vmem:[#allocation2 + $0x270] sm:$0xff]
    %v8918 = vld [vmem:[#allocation2 + $0x278] sm:$0xff]
    %v8919 = vld [vmem:[#allocation2 + $0x280] sm:$0xff]
    %v8920 = vld [vmem:[#allocation2 + $0x288] sm:$0xff]
    %v8921 = vld [vmem:[#allocation2 + $0x290] sm:$0xff]
    %v8922 = vld [vmem:[#allocation2 + $0x298] sm:$0xff]
    %v8923 = vld [vmem:[#allocation2 + $0x2a0] sm:$0xff]
    %v8924 = vld [vmem:[#allocation2 + $0x2a8] sm:$0xff]
    %v8925 = vld [vmem:[#allocation2 + $0x2b0] sm:$0xff]
    %v8926 = vld [vmem:[#allocation2 + $0x2b8] sm:$0xff]
    %v8927 = vld [vmem:[#allocation2 + $0x2c0] sm:$0xff]
    %v8928 = vld [vmem:[#allocation2 + $0x2c8] sm:$0xff]
    %v8929 = vld [vmem:[#allocation2 + $0x2d0] sm:$0xff]
    %v8930 = vld [vmem:[#allocation2 + $0x2d8] sm:$0xff]
    %v8931 = vld [vmem:[#allocation2 + $0x2e0] sm:$0xff]
    %v8932 = vld [vmem:[#allocation2 + $0x2e8] sm:$0xff]
    %v8933 = vld [vmem:[#allocation2 + $0x2f0] sm:$0xff]
    %v8934 = vld [vmem:[#allocation2 + $0x2f8] sm:$0xff]
    %v8935 = vld [vmem:[#allocation2 + $0x300] sm:$0xff]
    %v8936 = vld [vmem:[#allocation2 + $0x308] sm:$0xff]
    %v8937 = vld [vmem:[#allocation2 + $0x310] sm:$0xff]
    %v8938 = vld [vmem:[#allocation2 + $0x318] sm:$0xff]
    %v8939 = vld [vmem:[#allocation2 + $0x320] sm:$0xff]
    %v8940 = vld [vmem:[#allocation2 + $0x328] sm:$0xff]
    %v8941 = vld [vmem:[#allocation2 + $0x330] sm:$0xff]
    %v8942 = vld [vmem:[#allocation2 + $0x338] sm:$0xff]
    %v8943 = vld [vmem:[#allocation2 + $0x340] sm:$0xff]
    %v8944 = vld [vmem:[#allocation2 + $0x348] sm:$0xff]
    %v8945 = vld [vmem:[#allocation2 + $0x350] sm:$0xff]
    %v8946 = vld [vmem:[#allocation2 + $0x358] sm:$0xff]
    %v8947 = vld [vmem:[#allocation2 + $0x360] sm:$0xff]
    %v8948 = vld [vmem:[#allocation2 + $0x368] sm:$0xff]
    %v8949 = vld [vmem:[#allocation2 + $0x370] sm:$0xff]
    %v8950 = vld [vmem:[#allocation2 + $0x378] sm:$0xff]
    %v8951 = vld [vmem:[#allocation2 + $0x380] sm:$0xff]
    %v8952 = vld [vmem:[#allocation2 + $0x388] sm:$0xff]
    %v8953 = vld [vmem:[#allocation2 + $0x390] sm:$0xff]
    %v8954 = vld [vmem:[#allocation2 + $0x398] sm:$0xff]
    %v8955 = vld [vmem:[#allocation2 + $0x3a0] sm:$0xff]
    %v8956 = vld [vmem:[#allocation2 + $0x3a8] sm:$0xff]
    %v8957 = vld [vmem:[#allocation2 + $0x3b0] sm:$0xff]
    %v8958 = vld [vmem:[#allocation2 + $0x3b8] sm:$0xff]
    %v8959 = vld [vmem:[#allocation2 + $0x3c0] sm:$0xff]
    %v8960 = vld [vmem:[#allocation2 + $0x3c8] sm:$0xff]
    %v8961 = vld [vmem:[#allocation2 + $0x3d0] sm:$0xff]
    %v8962 = vld [vmem:[#allocation2 + $0x3d8] sm:$0xff]
    %v8963 = vld [vmem:[#allocation2 + $0x3e0] sm:$0xff]
    %v8964 = vld [vmem:[#allocation2 + $0x3e8] sm:$0xff]
    %v8965 = vld [vmem:[#allocation2 + $0x3f0] sm:$0xff]
    %v8966 = vld [vmem:[#allocation2 + $0x3f8] sm:$0xff]
    %v8967 = vld [vmem:[#allocation2 + $0x400] sm:$0xff]
    %v8968 = vld [vmem:[#allocation2 + $0x408] sm:$0xff]
    %v8969 = vld [vmem:[#allocation2 + $0x410] sm:$0xff]
    %v8970 = vld [vmem:[#allocation2 + $0x418] sm:$0xff]
    %v8971 = vld [vmem:[#allocation2 + $0x420] sm:$0xff]
    %v8972 = vld [vmem:[#allocation2 + $0x428] sm:$0xff]
    %v8973 = vld [vmem:[#allocation2 + $0x430] sm:$0xff]
    %v8974 = vld [vmem:[#allocation2 + $0x438] sm:$0xff]
    %v8975 = vld [vmem:[#allocation2 + $0x440] sm:$0xff]
    %v8976 = vld [vmem:[#allocation2 + $0x448] sm:$0xff]
    %v8977 = vld [vmem:[#allocation2 + $0x450] sm:$0xff]
    %v8978 = vld [vmem:[#allocation2 + $0x458] sm:$0xff]
    %v8979 = vld [vmem:[#allocation2 + $0x460] sm:$0xff]
    %v8980 = vld [vmem:[#allocation2 + $0x468] sm:$0xff]
    %v8981 = vld [vmem:[#allocation2 + $0x470] sm:$0xff]
    %v8982 = vld [vmem:[#allocation2 + $0x478] sm:$0xff]
    %v8983 = vld [vmem:[#allocation2 + $0x480] sm:$0xff]
    %v8984 = vld [vmem:[#allocation2 + $0x488] sm:$0xff]
    %v8985 = vld [vmem:[#allocation2 + $0x490] sm:$0xff]
    %v8986 = vld [vmem:[#allocation2 + $0x498] sm:$0xff]
    %v8987 = vld [vmem:[#allocation2 + $0x4a0] sm:$0xff]
    %v8988 = vld [vmem:[#allocation2 + $0x4a8] sm:$0xff]
    %v8989 = vld [vmem:[#allocation2 + $0x4b0] sm:$0xff]
    %v8990 = vld [vmem:[#allocation2 + $0x4b8] sm:$0xff]
    %v8991 = vld [vmem:[#allocation2 + $0x4c0] sm:$0xff]
    %v8992 = vld [vmem:[#allocation2 + $0x4c8] sm:$0xff]
    %v8993 = vld [vmem:[#allocation2 + $0x4d0] sm:$0xff]
    %v8994 = vld [vmem:[#allocation2 + $0x4d8] sm:$0xff]
    %v8995 = vld [vmem:[#allocation2 + $0x4e0] sm:$0xff]
    %v8996 = vld [vmem:[#allocation2 + $0x4e8] sm:$0xff]
    %v8997 = vld [vmem:[#allocation2 + $0x4f0] sm:$0xff]
    %v8998 = vld [vmem:[#allocation2 + $0x4f8] sm:$0xff]
    %v8999 = vld [vmem:[#allocation2 + $0x500] sm:$0xff]
    %v9000 = vld [vmem:[#allocation2 + $0x508] sm:$0xff]
    %v9001 = vld [vmem:[#allocation2 + $0x510] sm:$0xff]
    %v9002 = vld [vmem:[#allocation2 + $0x518] sm:$0xff]
    %v9003 = vld [vmem:[#allocation2 + $0x520] sm:$0xff]
    %v9004 = vld [vmem:[#allocation2 + $0x528] sm:$0xff]
    %v9005 = vld [vmem:[#allocation2 + $0x530] sm:$0xff]
    %v9006 = vld [vmem:[#allocation2 + $0x538] sm:$0xff]
    %v9007 = vld [vmem:[#allocation2 + $0x540] sm:$0xff]
    %v9008 = vld [vmem:[#allocation2 + $0x548] sm:$0xff]
    %v9009 = vld [vmem:[#allocation2 + $0x550] sm:$0xff]
    %v9010 = vld [vmem:[#allocation2 + $0x558] sm:$0xff]
    %v9011 = vld [vmem:[#allocation2 + $0x560] sm:$0xff]
    %v9012 = vld [vmem:[#allocation2 + $0x568] sm:$0xff]
    %v9013 = vld [vmem:[#allocation2 + $0x570] sm:$0xff]
    %v9014 = vld [vmem:[#allocation2 + $0x578] sm:$0xff]
    %v9015 = vld [vmem:[#allocation2 + $0x580] sm:$0xff]
    %v9016 = vld [vmem:[#allocation2 + $0x588] sm:$0xff]
    %v9017 = vld [vmem:[#allocation2 + $0x590] sm:$0xff]
    %v9018 = vld [vmem:[#allocation2 + $0x598] sm:$0xff]
    %v9019 = vld [vmem:[#allocation2 + $0x5a0] sm:$0xff]
    %v9020 = vld [vmem:[#allocation2 + $0x5a8] sm:$0xff]
    %v9021 = vld [vmem:[#allocation2 + $0x5b0] sm:$0xff]
    %v9022 = vld [vmem:[#allocation2 + $0x5b8] sm:$0xff]
    %v9023 = vld [vmem:[#allocation2 + $0x5c0] sm:$0xff]
    %v9024 = vld [vmem:[#allocation2 + $0x5c8] sm:$0xff]
    %v9025 = vld [vmem:[#allocation2 + $0x5d0] sm:$0xff]
    %v9026 = vld [vmem:[#allocation2 + $0x5d8] sm:$0xff]
    %v9027 = vld [vmem:[#allocation2 + $0x5e0] sm:$0xff]
    %v9028 = vld [vmem:[#allocation2 + $0x5e8] sm:$0xff]
    %v9029 = vld [vmem:[#allocation2 + $0x5f0] sm:$0xff]
    %v9030 = vld [vmem:[#allocation2 + $0x5f8] sm:$0xff]
    %v9031 = vld [vmem:[#allocation2 + $0x600] sm:$0xff]
    %v9032 = vld [vmem:[#allocation2 + $0x608] sm:$0xff]
    %v9033 = vld [vmem:[#allocation2 + $0x610] sm:$0xff]
    %v9034 = vld [vmem:[#allocation2 + $0x618] sm:$0xff]
    %v9035 = vld [vmem:[#allocation2 + $0x620] sm:$0xff]
    %v9036 = vld [vmem:[#allocation2 + $0x628] sm:$0xff]
    %v9037 = vld [vmem:[#allocation2 + $0x630] sm:$0xff]
    %v9038 = vld [vmem:[#allocation2 + $0x638] sm:$0xff]
    %v9039 = vld [vmem:[#allocation2 + $0x640] sm:$0xff]
    %v9040 = vld [vmem:[#allocation2 + $0x648] sm:$0xff]
    %v9041 = vld [vmem:[#allocation2 + $0x650] sm:$0xff]
    %v9042 = vld [vmem:[#allocation2 + $0x658] sm:$0xff]
    %v9043 = vld [vmem:[#allocation2 + $0x660] sm:$0xff]
    %v9044 = vld [vmem:[#allocation2 + $0x668] sm:$0xff]
    %v9045 = vld [vmem:[#allocation2 + $0x670] sm:$0xff]
    %v9046 = vld [vmem:[#allocation2 + $0x678] sm:$0xff]
    %v9047 = vld [vmem:[#allocation2 + $0x680] sm:$0xff]
    %v9048 = vld [vmem:[#allocation2 + $0x688] sm:$0xff]
    %v9049 = vld [vmem:[#allocation2 + $0x690] sm:$0xff]
    %v9050 = vld [vmem:[#allocation2 + $0x698] sm:$0xff]
    %v9051 = vld [vmem:[#allocation2 + $0x6a0] sm:$0xff]
    %v9052 = vld [vmem:[#allocation2 + $0x6a8] sm:$0xff]
    %v9053 = vld [vmem:[#allocation2 + $0x6b0] sm:$0xff]
    %v9054 = vld [vmem:[#allocation2 + $0x6b8] sm:$0xff]
    %v9055 = vld [vmem:[#allocation2 + $0x6c0] sm:$0xff]
    %v9056 = vld [vmem:[#allocation2 + $0x6c8] sm:$0xff]
    %v9057 = vld [vmem:[#allocation2 + $0x6d0] sm:$0xff]
    %v9058 = vld [vmem:[#allocation2 + $0x6d8] sm:$0xff]
    %v9059 = vld [vmem:[#allocation2 + $0x6e0] sm:$0xff]
    %v9060 = vld [vmem:[#allocation2 + $0x6e8] sm:$0xff]
    %v9061 = vld [vmem:[#allocation2 + $0x6f0] sm:$0xff]
    %v9062 = vld [vmem:[#allocation2 + $0x6f8] sm:$0xff]
    %v9063 = vld [vmem:[#allocation2 + $0x700] sm:$0xff]
    %v9064 = vld [vmem:[#allocation2 + $0x708] sm:$0xff]
    %v9065 = vld [vmem:[#allocation2 + $0x710] sm:$0xff]
    %v9066 = vld [vmem:[#allocation2 + $0x718] sm:$0xff]
    %v9067 = vld [vmem:[#allocation2 + $0x720] sm:$0xff]
    %v9068 = vld [vmem:[#allocation2 + $0x728] sm:$0xff]
    %v9069 = vld [vmem:[#allocation2 + $0x730] sm:$0xff]
    %v9070 = vld [vmem:[#allocation2 + $0x738] sm:$0xff]
    %v9071 = vld [vmem:[#allocation2 + $0x740] sm:$0xff]
    %v9072 = vld [vmem:[#allocation2 + $0x748] sm:$0xff]
    %v9073 = vld [vmem:[#allocation2 + $0x750] sm:$0xff]
    %v9074 = vld [vmem:[#allocation2 + $0x758] sm:$0xff]
    %v9075 = vld [vmem:[#allocation2 + $0x760] sm:$0xff]
    %v9076 = vld [vmem:[#allocation2 + $0x768] sm:$0xff]
    %v9077 = vld [vmem:[#allocation2 + $0x770] sm:$0xff]
    %v9078 = vld [vmem:[#allocation2 + $0x778] sm:$0xff]
    %v9079 = vld [vmem:[#allocation2 + $0x780] sm:$0xff]
    %v9080 = vld [vmem:[#allocation2 + $0x788] sm:$0xff]
    %v9081 = vld [vmem:[#allocation2 + $0x790] sm:$0xff]
    %v9082 = vld [vmem:[#allocation2 + $0x798] sm:$0xff]
    %v9083 = vld [vmem:[#allocation2 + $0x7a0] sm:$0xff]
    %v9084 = vld [vmem:[#allocation2 + $0x7a8] sm:$0xff]
    %v9085 = vld [vmem:[#allocation2 + $0x7b0] sm:$0xff]
    %v9086 = vld [vmem:[#allocation2 + $0x7b8] sm:$0xff]
    %v9087 = vld [vmem:[#allocation2 + $0x7c0] sm:$0xff]
    %v9088 = vld [vmem:[#allocation2 + $0x7c8] sm:$0xff]
    %v9089 = vld [vmem:[#allocation2 + $0x7d0] sm:$0xff]
    %v9090 = vld [vmem:[#allocation2 + $0x7d8] sm:$0xff]
    %v9091 = vld [vmem:[#allocation2 + $0x7e0] sm:$0xff]
    %v9092 = vld [vmem:[#allocation2 + $0x7e8] sm:$0xff]
    %v9093 = vld [vmem:[#allocation2 + $0x7f0] sm:$0xff]
    %v9094 = vld [vmem:[#allocation2 + $0x7f8] sm:$0xff]
    %v9095 = vld [vmem:[#allocation2 + $0x800] sm:$0xff]
    %v9096 = vld [vmem:[#allocation2 + $0x808] sm:$0xff]
    %v9097 = vld [vmem:[#allocation2 + $0x810] sm:$0xff]
    %v9098 = vld [vmem:[#allocation2 + $0x818] sm:$0xff]
    %v9099 = vld [vmem:[#allocation2 + $0x820] sm:$0xff]
    %v9100 = vld [vmem:[#allocation2 + $0x828] sm:$0xff]
    %v9101 = vld [vmem:[#allocation2 + $0x830] sm:$0xff]
    %v9102 = vld [vmem:[#allocation2 + $0x838] sm:$0xff]
    %v9103 = vld [vmem:[#allocation2 + $0x840] sm:$0xff]
    %v9104 = vld [vmem:[#allocation2 + $0x848] sm:$0xff]
    %v9105 = vld [vmem:[#allocation2 + $0x850] sm:$0xff]
    %v9106 = vld [vmem:[#allocation2 + $0x858] sm:$0xff]
    %v9107 = vld [vmem:[#allocation2 + $0x860] sm:$0xff]
    %v9108 = vld [vmem:[#allocation2 + $0x868] sm:$0xff]
    %v9109 = vld [vmem:[#allocation2 + $0x870] sm:$0xff]
    %v9110 = vld [vmem:[#allocation2 + $0x878] sm:$0xff]
    %v9111 = vld [vmem:[#allocation2 + $0x880] sm:$0xff]
    %v9112 = vld [vmem:[#allocation2 + $0x888] sm:$0xff]
    %v9113 = vld [vmem:[#allocation2 + $0x890] sm:$0xff]
    %v9114 = vld [vmem:[#allocation2 + $0x898] sm:$0xff]
    %v9115 = vld [vmem:[#allocation2 + $0x8a0] sm:$0xff]
    %v9116 = vld [vmem:[#allocation2 + $0x8a8] sm:$0xff]
    %v9117 = vld [vmem:[#allocation2 + $0x8b0] sm:$0xff]
    %v9118 = vld [vmem:[#allocation2 + $0x8b8] sm:$0xff]
    %v9119 = vld [vmem:[#allocation2 + $0x8c0] sm:$0xff]
    %v9120 = vld [vmem:[#allocation2 + $0x8c8] sm:$0xff]
    %v9121 = vld [vmem:[#allocation2 + $0x8d0] sm:$0xff]
    %v9122 = vld [vmem:[#allocation2 + $0x8d8] sm:$0xff]
    %v9123 = vld [vmem:[#allocation2 + $0x8e0] sm:$0xff]
    %v9124 = vld [vmem:[#allocation2 + $0x8e8] sm:$0xff]
    %v9125 = vld [vmem:[#allocation2 + $0x8f0] sm:$0xff]
    %v9126 = vld [vmem:[#allocation2 + $0x8f8] sm:$0xff]
    %v9127 = vld [vmem:[#allocation2 + $0x900] sm:$0xff]
    %v9128 = vld [vmem:[#allocation2 + $0x908] sm:$0xff]
    %v9129 = vld [vmem:[#allocation2 + $0x910] sm:$0xff]
    %v9130 = vld [vmem:[#allocation2 + $0x918] sm:$0xff]
    %v9131 = vld [vmem:[#allocation2 + $0x920] sm:$0xff]
    %v9132 = vld [vmem:[#allocation2 + $0x928] sm:$0xff]
    %v9133 = vld [vmem:[#allocation2 + $0x930] sm:$0xff]
    %v9134 = vld [vmem:[#allocation2 + $0x938] sm:$0xff]
    %v9135 = vld [vmem:[#allocation2 + $0x940] sm:$0xff]
    %v9136 = vld [vmem:[#allocation2 + $0x948] sm:$0xff]
    %v9137 = vld [vmem:[#allocation2 + $0x950] sm:$0xff]
    %v9138 = vld [vmem:[#allocation2 + $0x958] sm:$0xff]
    %v9139 = vld [vmem:[#allocation2 + $0x960] sm:$0xff]
    %v9140 = vld [vmem:[#allocation2 + $0x968] sm:$0xff]
    %v9141 = vld [vmem:[#allocation2 + $0x970] sm:$0xff]
    %v9142 = vld [vmem:[#allocation2 + $0x978] sm:$0xff]
    %v9143 = vld [vmem:[#allocation2 + $0x980] sm:$0xff]
    %v9144 = vld [vmem:[#allocation2 + $0x988] sm:$0xff]
    %v9145 = vld [vmem:[#allocation2 + $0x990] sm:$0xff]
    %v9146 = vld [vmem:[#allocation2 + $0x998] sm:$0xff]
    %v9147 = vld [vmem:[#allocation2 + $0x9a0] sm:$0xff]
    %v9148 = vld [vmem:[#allocation2 + $0x9a8] sm:$0xff]
    %v9149 = vld [vmem:[#allocation2 + $0x9b0] sm:$0xff]
    %v9150 = vld [vmem:[#allocation2 + $0x9b8] sm:$0xff]
    %v9151 = vld [vmem:[#allocation2 + $0x9c0] sm:$0xff]
    %v9152 = vld [vmem:[#allocation2 + $0x9c8] sm:$0xff]
    %v9153 = vld [vmem:[#allocation2 + $0x9d0] sm:$0xff]
    %v9154 = vld [vmem:[#allocation2 + $0x9d8] sm:$0xff]
    %v9155 = vld [vmem:[#allocation2 + $0x9e0] sm:$0xff]
    %v9156 = vld [vmem:[#allocation2 + $0x9e8] sm:$0xff]
    %v9157 = vld [vmem:[#allocation2 + $0x9f0] sm:$0xff]
    %v9158 = vld [vmem:[#allocation2 + $0x9f8] sm:$0xff]
    %v9159 = vld [vmem:[#allocation2 + $0xa00] sm:$0xff]
    %v9160 = vld [vmem:[#allocation2 + $0xa08] sm:$0xff]
    %v9161 = vld [vmem:[#allocation2 + $0xa10] sm:$0xff]
    %v9162 = vld [vmem:[#allocation2 + $0xa18] sm:$0xff]
    %v9163 = vld [vmem:[#allocation2 + $0xa20] sm:$0xff]
    %v9164 = vld [vmem:[#allocation2 + $0xa28] sm:$0xff]
    %v9165 = vld [vmem:[#allocation2 + $0xa30] sm:$0xff]
    %v9166 = vld [vmem:[#allocation2 + $0xa38] sm:$0xff]
    %v9167 = vld [vmem:[#allocation2 + $0xa40] sm:$0xff]
    %v9168 = vld [vmem:[#allocation2 + $0xa48] sm:$0xff]
    %v9169 = vld [vmem:[#allocation2 + $0xa50] sm:$0xff]
    %v9170 = vld [vmem:[#allocation2 + $0xa58] sm:$0xff]
    %v9171 = vld [vmem:[#allocation2 + $0xa60] sm:$0xff]
    %v9172 = vld [vmem:[#allocation2 + $0xa68] sm:$0xff]
    %v9173 = vld [vmem:[#allocation2 + $0xa70] sm:$0xff]
    %v9174 = vld [vmem:[#allocation2 + $0xa78] sm:$0xff]
    %v9175 = vld [vmem:[#allocation2 + $0xa80] sm:$0xff]
    %v9176 = vld [vmem:[#allocation2 + $0xa88] sm:$0xff]
    %v9177 = vld [vmem:[#allocation2 + $0xa90] sm:$0xff]
    %v9178 = vld [vmem:[#allocation2 + $0xa98] sm:$0xff]
    %v9179 = vld [vmem:[#allocation2 + $0xaa0] sm:$0xff]
    %v9180 = vld [vmem:[#allocation2 + $0xaa8] sm:$0xff]
    %v9181 = vld [vmem:[#allocation2 + $0xab0] sm:$0xff]
    %v9182 = vld [vmem:[#allocation2 + $0xab8] sm:$0xff]
    %v9183 = vld [vmem:[#allocation2 + $0xac0] sm:$0xff]
    %v9184 = vld [vmem:[#allocation2 + $0xac8] sm:$0xff]
    %v9185 = vld [vmem:[#allocation2 + $0xad0] sm:$0xff]
    %v9186 = vld [vmem:[#allocation2 + $0xad8] sm:$0xff]
    %v9187 = vld [vmem:[#allocation2 + $0xae0] sm:$0xff]
    %v9188 = vld [vmem:[#allocation2 + $0xae8] sm:$0xff]
    %v9189 = vld [vmem:[#allocation2 + $0xaf0] sm:$0xff]
    %v9190 = vld [vmem:[#allocation2 + $0xaf8] sm:$0xff]
    %v9191 = vld [vmem:[#allocation2 + $0xb00] sm:$0xff]
    %v9192 = vld [vmem:[#allocation2 + $0xb08] sm:$0xff]
    %v9193 = vld [vmem:[#allocation2 + $0xb10] sm:$0xff]
    %v9194 = vld [vmem:[#allocation2 + $0xb18] sm:$0xff]
    %v9195 = vld [vmem:[#allocation2 + $0xb20] sm:$0xff]
    %v9196 = vld [vmem:[#allocation2 + $0xb28] sm:$0xff]
    %v9197 = vld [vmem:[#allocation2 + $0xb30] sm:$0xff]
    %v9198 = vld [vmem:[#allocation2 + $0xb38] sm:$0xff]
    %v9199 = vld [vmem:[#allocation2 + $0xb40] sm:$0xff]
    %v9200 = vld [vmem:[#allocation2 + $0xb48] sm:$0xff]
    %v9201 = vld [vmem:[#allocation2 + $0xb50] sm:$0xff]
    %v9202 = vld [vmem:[#allocation2 + $0xb58] sm:$0xff]
    %v9203 = vld [vmem:[#allocation2 + $0xb60] sm:$0xff]
    %v9204 = vld [vmem:[#allocation2 + $0xb68] sm:$0xff]
    %v9205 = vld [vmem:[#allocation2 + $0xb70] sm:$0xff]
    %v9206 = vld [vmem:[#allocation2 + $0xb78] sm:$0xff]
    %v9207 = vld [vmem:[#allocation2 + $0xb80] sm:$0xff]
    %v9208 = vld [vmem:[#allocation2 + $0xb88] sm:$0xff]
    %v9209 = vld [vmem:[#allocation2 + $0xb90] sm:$0xff]
    %v9210 = vld [vmem:[#allocation2 + $0xb98] sm:$0xff]
    %v9211 = vld [vmem:[#allocation2 + $0xba0] sm:$0xff]
    %v9212 = vld [vmem:[#allocation2 + $0xba8] sm:$0xff]
    %v9213 = vld [vmem:[#allocation2 + $0xbb0] sm:$0xff]
    %v9214 = vld [vmem:[#allocation2 + $0xbb8] sm:$0xff]
    %v9215 = vld [vmem:[#allocation2 + $0xbc0] sm:$0xff]
    %v9216 = vld [vmem:[#allocation2 + $0xbc8] sm:$0xff]
    %v9217 = vld [vmem:[#allocation2 + $0xbd0] sm:$0xff]
    %v9218 = vld [vmem:[#allocation2 + $0xbd8] sm:$0xff]
    %v9219 = vld [vmem:[#allocation2 + $0xbe0] sm:$0xff]
    %v9220 = vld [vmem:[#allocation2 + $0xbe8] sm:$0xff]
    %v9221 = vld [vmem:[#allocation2 + $0xbf0] sm:$0xff]
    %v9222 = vld [vmem:[#allocation2 + $0xbf8] sm:$0xff]
    %v9223 = vld [vmem:[#allocation2 + $0xc00] sm:$0xff]
    %v9224 = vld [vmem:[#allocation2 + $0xc08] sm:$0xff]
    %v9225 = vld [vmem:[#allocation2 + $0xc10] sm:$0xff]
    %v9226 = vld [vmem:[#allocation2 + $0xc18] sm:$0xff]
    %v9227 = vld [vmem:[#allocation2 + $0xc20] sm:$0xff]
    %v9228 = vld [vmem:[#allocation2 + $0xc28] sm:$0xff]
    %v9229 = vld [vmem:[#allocation2 + $0xc30] sm:$0xff]
    %v9230 = vld [vmem:[#allocation2 + $0xc38] sm:$0xff]
    %v9231 = vld [vmem:[#allocation2 + $0xc40] sm:$0xff]
    %v9232 = vld [vmem:[#allocation2 + $0xc48] sm:$0xff]
    %v9233 = vld [vmem:[#allocation2 + $0xc50] sm:$0xff]
    %v9234 = vld [vmem:[#allocation2 + $0xc58] sm:$0xff]
    %v9235 = vld [vmem:[#allocation2 + $0xc60] sm:$0xff]
    %v9236 = vld [vmem:[#allocation2 + $0xc68] sm:$0xff]
    %v9237 = vld [vmem:[#allocation2 + $0xc70] sm:$0xff]
    %v9238 = vld [vmem:[#allocation2 + $0xc78] sm:$0xff]
    %v9239 = vld [vmem:[#allocation2 + $0xc80] sm:$0xff]
    %v9240 = vld [vmem:[#allocation2 + $0xc88] sm:$0xff]
    %v9241 = vld [vmem:[#allocation2 + $0xc90] sm:$0xff]
    %v9242 = vld [vmem:[#allocation2 + $0xc98] sm:$0xff]
    %v9243 = vld [vmem:[#allocation2 + $0xca0] sm:$0xff]
    %v9244 = vld [vmem:[#allocation2 + $0xca8] sm:$0xff]
    %v9245 = vld [vmem:[#allocation2 + $0xcb0] sm:$0xff]
    %v9246 = vld [vmem:[#allocation2 + $0xcb8] sm:$0xff]
    %v9247 = vld [vmem:[#allocation2 + $0xcc0] sm:$0xff]
    %v9248 = vld [vmem:[#allocation2 + $0xcc8] sm:$0xff]
    %v9249 = vld [vmem:[#allocation2 + $0xcd0] sm:$0xff]
    %v9250 = vld [vmem:[#allocation2 + $0xcd8] sm:$0xff]
    %v9251 = vld [vmem:[#allocation2 + $0xce0] sm:$0xff]
    %v9252 = vld [vmem:[#allocation2 + $0xce8] sm:$0xff]
    %v9253 = vld [vmem:[#allocation2 + $0xcf0] sm:$0xff]
    %v9254 = vld [vmem:[#allocation2 + $0xcf8] sm:$0xff]
    %v9255 = vld [vmem:[#allocation2 + $0xd00] sm:$0xff]
    %v9256 = vld [vmem:[#allocation2 + $0xd08] sm:$0xff]
    %v9257 = vld [vmem:[#allocation2 + $0xd10] sm:$0xff]
    %v9258 = vld [vmem:[#allocation2 + $0xd18] sm:$0xff]
    %v9259 = vld [vmem:[#allocation2 + $0xd20] sm:$0xff]
    %v9260 = vld [vmem:[#allocation2 + $0xd28] sm:$0xff]
    %v9261 = vld [vmem:[#allocation2 + $0xd30] sm:$0xff]
    %v9262 = vld [vmem:[#allocation2 + $0xd38] sm:$0xff]
    %v9263 = vld [vmem:[#allocation2 + $0xd40] sm:$0xff]
    %v9264 = vld [vmem:[#allocation2 + $0xd48] sm:$0xff]
    %v9265 = vld [vmem:[#allocation2 + $0xd50] sm:$0xff]
    %v9266 = vld [vmem:[#allocation2 + $0xd58] sm:$0xff]
    %v9267 = vld [vmem:[#allocation2 + $0xd60] sm:$0xff]
    %v9268 = vld [vmem:[#allocation2 + $0xd68] sm:$0xff]
    %v9269 = vld [vmem:[#allocation2 + $0xd70] sm:$0xff]
    %v9270 = vld [vmem:[#allocation2 + $0xd78] sm:$0xff]
    %v9271 = vld [vmem:[#allocation2 + $0xd80] sm:$0xff]
    %v9272 = vld [vmem:[#allocation2 + $0xd88] sm:$0xff]
    %v9273 = vld [vmem:[#allocation2 + $0xd90] sm:$0xff]
    %v9274 = vld [vmem:[#allocation2 + $0xd98] sm:$0xff]
    %v9275 = vld [vmem:[#allocation2 + $0xda0] sm:$0xff]
    %v9276 = vld [vmem:[#allocation2 + $0xda8] sm:$0xff]
    %v9277 = vld [vmem:[#allocation2 + $0xdb0] sm:$0xff]
    %v9278 = vld [vmem:[#allocation2 + $0xdb8] sm:$0xff]
    %v9279 = vld [vmem:[#allocation2 + $0xdc0] sm:$0xff]
    %v9280 = vld [vmem:[#allocation2 + $0xdc8] sm:$0xff]
    %v9281 = vld [vmem:[#allocation2 + $0xdd0] sm:$0xff]
    %v9282 = vld [vmem:[#allocation2 + $0xdd8] sm:$0xff]
    %v9283 = vld [vmem:[#allocation2 + $0xde0] sm:$0xff]
    %v9284 = vld [vmem:[#allocation2 + $0xde8] sm:$0xff]
    %v9285 = vld [vmem:[#allocation2 + $0xdf0] sm:$0xff]
    %v9286 = vld [vmem:[#allocation2 + $0xdf8] sm:$0xff]
    %v9287 = vld [vmem:[%s3] sm:$0xff]
    %v9288 = vld [vmem:[%s3 + $0x8] sm:$0xff]
    %v9289 = vld [vmem:[%s3 + $0x10] sm:$0xff]
    %v9290 = vld [vmem:[%s3 + $0x18] sm:$0xff]
    %v9291 = vld [vmem:[%s3 + $0x20] sm:$0xff]
    %v9292 = vld [vmem:[%s3 + $0x28] sm:$0xff]
    %v9293 = vld [vmem:[%s3 + $0x30] sm:$0xff]
    %v9294 = vld [vmem:[%s3 + $0x38] sm:$0xff]
    %v9295 = vld [vmem:[%s3 + $0x40] sm:$0xff]
    %v9296 = vld [vmem:[%s3 + $0x48] sm:$0xff]
    %v9297 = vld [vmem:[%s3 + $0x50] sm:$0xff]
    %v9298 = vld [vmem:[%s3 + $0x58] sm:$0xff]
    %v9299 = vld [vmem:[%s3 + $0x60] sm:$0xff]
    %v9300 = vld [vmem:[%s3 + $0x68] sm:$0xff]
    %v9301 = vld [vmem:[%s3 + $0x70] sm:$0xff]
    %v9302 = vld [vmem:[%s3 + $0x78] sm:$0xff]
    %v9303 = vld [vmem:[%s3 + $0x80] sm:$0xff]
    %v9304 = vld [vmem:[%s3 + $0x88] sm:$0xff]
    %v9305 = vld [vmem:[%s3 + $0x90] sm:$0xff]
    %v9306 = vld [vmem:[%s3 + $0x98] sm:$0xff]
    %v9307 = vld [vmem:[%s3 + $0xa0] sm:$0xff]
    %v9308 = vld [vmem:[%s3 + $0xa8] sm:$0xff]
    %v9309 = vld [vmem:[%s3 + $0xb0] sm:$0xff]
    %v9310 = vld [vmem:[%s3 + $0xb8] sm:$0xff]
    %v9311 = vld [vmem:[%s3 + $0xc0] sm:$0xff]
    %v9312 = vld [vmem:[%s3 + $0xc8] sm:$0xff]
    %v9313 = vld [vmem:[%s3 + $0xd0] sm:$0xff]
    %v9314 = vld [vmem:[%s3 + $0xd8] sm:$0xff]
    %v9315 = vld [vmem:[%s3 + $0xe0] sm:$0xff]
    %v9316 = vld [vmem:[%s3 + $0xe8] sm:$0xff]
    %v9317 = vld [vmem:[%s3 + $0xf0] sm:$0xff]
    %v9318 = vld [vmem:[%s3 + $0xf8] sm:$0xff]
    %v9319 = vld [vmem:[%s3 + $0x100] sm:$0xff]
    %v9320 = vld [vmem:[%s3 + $0x108] sm:$0xff]
    %v9321 = vld [vmem:[%s3 + $0x110] sm:$0xff]
    %v9322 = vld [vmem:[%s3 + $0x118] sm:$0xff]
    %v9323 = vld [vmem:[%s3 + $0x120] sm:$0xff]
    %v9324 = vld [vmem:[%s3 + $0x128] sm:$0xff]
    %v9325 = vld [vmem:[%s3 + $0x130] sm:$0xff]
    %v9326 = vld [vmem:[%s3 + $0x138] sm:$0xff]
    %v9327 = vld [vmem:[%s3 + $0x140] sm:$0xff]
    %v9328 = vld [vmem:[%s3 + $0x148] sm:$0xff]
    %v9329 = vld [vmem:[%s3 + $0x150] sm:$0xff]
    %v9330 = vld [vmem:[%s3 + $0x158] sm:$0xff]
    %v9331 = vld [vmem:[%s3 + $0x160] sm:$0xff]
    %v9332 = vld [vmem:[%s3 + $0x168] sm:$0xff]
    %v9333 = vld [vmem:[%s3 + $0x170] sm:$0xff]
    %v9334 = vld [vmem:[%s3 + $0x178] sm:$0xff]
    %v9335 = vld [vmem:[%s3 + $0x180] sm:$0xff]
    %v9336 = vld [vmem:[%s3 + $0x188] sm:$0xff]
    %v9337 = vld [vmem:[%s3 + $0x190] sm:$0xff]
    %v9338 = vld [vmem:[%s3 + $0x198] sm:$0xff]
    %v9339 = vld [vmem:[%s3 + $0x1a0] sm:$0xff]
    %v9340 = vld [vmem:[%s3 + $0x1a8] sm:$0xff]
    %v9341 = vld [vmem:[%s3 + $0x1b0] sm:$0xff]
    %v9342 = vld [vmem:[%s3 + $0x1b8] sm:$0xff]
    %v9343 = vld [vmem:[%s3 + $0x1c0] sm:$0xff]
    %v9344 = vld [vmem:[%s3 + $0x1c8] sm:$0xff]
    %v9345 = vld [vmem:[%s3 + $0x1d0] sm:$0xff]
    %v9346 = vld [vmem:[%s3 + $0x1d8] sm:$0xff]
    %v9347 = vld [vmem:[%s3 + $0x1e0] sm:$0xff]
    %v9348 = vld [vmem:[%s3 + $0x1e8] sm:$0xff]
    %v9349 = vld [vmem:[%s3 + $0x1f0] sm:$0xff]
    %v9350 = vld [vmem:[%s3 + $0x1f8] sm:$0xff]
    %v9351 = vld [vmem:[%s3 + $0x200] sm:$0xff]
    %v9352 = vld [vmem:[%s3 + $0x208] sm:$0xff]
    %v9353 = vld [vmem:[%s3 + $0x210] sm:$0xff]
    %v9354 = vld [vmem:[%s3 + $0x218] sm:$0xff]
    %v9355 = vld [vmem:[%s3 + $0x220] sm:$0xff]
    %v9356 = vld [vmem:[%s3 + $0x228] sm:$0xff]
    %v9357 = vld [vmem:[%s3 + $0x230] sm:$0xff]
    %v9358 = vld [vmem:[%s3 + $0x238] sm:$0xff]
    %v9359 = vld [vmem:[%s3 + $0x240] sm:$0xff]
    %v9360 = vld [vmem:[%s3 + $0x248] sm:$0xff]
    %v9361 = vld [vmem:[%s3 + $0x250] sm:$0xff]
    %v9362 = vld [vmem:[%s3 + $0x258] sm:$0xff]
    %v9363 = vld [vmem:[%s3 + $0x260] sm:$0xff]
    %v9364 = vld [vmem:[%s3 + $0x268] sm:$0xff]
    %v9365 = vld [vmem:[%s3 + $0x270] sm:$0xff]
    %v9366 = vld [vmem:[%s3 + $0x278] sm:$0xff]
    %v9367 = vld [vmem:[%s3 + $0x280] sm:$0xff]
    %v9368 = vld [vmem:[%s3 + $0x288] sm:$0xff]
    %v9369 = vld [vmem:[%s3 + $0x290] sm:$0xff]
    %v9370 = vld [vmem:[%s3 + $0x298] sm:$0xff]
    %v9371 = vld [vmem:[%s3 + $0x2a0] sm:$0xff]
    %v9372 = vld [vmem:[%s3 + $0x2a8] sm:$0xff]
    %v9373 = vld [vmem:[%s3 + $0x2b0] sm:$0xff]
    %v9374 = vld [vmem:[%s3 + $0x2b8] sm:$0xff]
    %v9375 = vld [vmem:[%s3 + $0x2c0] sm:$0xff]
    %v9376 = vld [vmem:[%s3 + $0x2c8] sm:$0xff]
    %v9377 = vld [vmem:[%s3 + $0x2d0] sm:$0xff]
    %v9378 = vld [vmem:[%s3 + $0x2d8] sm:$0xff]
    %v9379 = vld [vmem:[%s3 + $0x2e0] sm:$0xff]
    %v9380 = vld [vmem:[%s3 + $0x2e8] sm:$0xff]
    %v9381 = vld [vmem:[%s3 + $0x2f0] sm:$0xff]
    %v9382 = vld [vmem:[%s3 + $0x2f8] sm:$0xff]
    %v9383 = vld [vmem:[%s3 + $0x300] sm:$0xff]
    %v9384 = vld [vmem:[%s3 + $0x308] sm:$0xff]
    %v9385 = vld [vmem:[%s3 + $0x310] sm:$0xff]
    %v9386 = vld [vmem:[%s3 + $0x318] sm:$0xff]
    %v9387 = vld [vmem:[%s3 + $0x320] sm:$0xff]
    %v9388 = vld [vmem:[%s3 + $0x328] sm:$0xff]
    %v9389 = vld [vmem:[%s3 + $0x330] sm:$0xff]
    %v9390 = vld [vmem:[%s3 + $0x338] sm:$0xff]
    %v9391 = vld [vmem:[%s3 + $0x340] sm:$0xff]
    %v9392 = vld [vmem:[%s3 + $0x348] sm:$0xff]
    %v9393 = vld [vmem:[%s3 + $0x350] sm:$0xff]
    %v9394 = vld [vmem:[%s3 + $0x358] sm:$0xff]
    %v9395 = vld [vmem:[%s3 + $0x360] sm:$0xff]
    %v9396 = vld [vmem:[%s3 + $0x368] sm:$0xff]
    %v9397 = vld [vmem:[%s3 + $0x370] sm:$0xff]
    %v9398 = vld [vmem:[%s3 + $0x378] sm:$0xff]
    %v9399 = vld [vmem:[%s4] sm:$0x1]
    %v9401 = vlaneseq
    %v9402 = vshrl.u32 %v9401, 7
    %v9403 = vsub.s32 0, %v9402
    %v9404 = vrot.slane %v9399, %v9403
    %9406 = vmatprep.subr.mxu0 0.0
    %9407 = vmatpush1.msra.mxu0 %v9302
    %9408 = vmatprep.subr.mxu0 0.0
    %9409 = vmatpush1.msra.mxu0 %v9301
    %9410 = vmatprep.subr.mxu0 0.0
    %9411 = vmatpush1.msra.mxu0 %v9300
    %9412 = vmatprep.subr.mxu0 0.0
    %9413 = vmatpush1.msra.mxu0 %v9299
    %9414 = vmatprep.subr.mxu0 0.0
    %9415 = vmatpush1.msra.mxu0 %v9298
    %9416 = vmatprep.subr.mxu0 0.0
    %9417 = vmatpush1.msra.mxu0 %v9297
    %9418 = vmatprep.subr.mxu0 0.0
    %9419 = vmatpush1.msra.mxu0 %v9296
    %9420 = vmatprep.subr.mxu0 0.0
    %9421 = vmatpush1.msra.mxu0 %v9295
    %9422 = vmatprep.subr.mxu0 0.0
    %9423 = vmatpush1.msra.mxu0 %v9294
    %9424 = vmatprep.subr.mxu0 0.0
    %9425 = vmatpush1.msra.mxu0 %v9293
    %9426 = vmatprep.subr.mxu0 0.0
    %9427 = vmatpush1.msra.mxu0 %v9292
    %9428 = vmatprep.subr.mxu0 0.0
    %9429 = vmatpush1.msra.mxu0 %v9291
    %9430 = vmatprep.subr.mxu0 0.0
    %9431 = vmatpush1.msra.mxu0 %v9290
    %9432 = vmatprep.subr.mxu0 0.0
    %9433 = vmatpush1.msra.mxu0 %v9289
    %9434 = vmatprep.subr.mxu0 0.0
    %9435 = vmatpush1.msra.mxu0 %v9288
    %9436 = vmatprep.subr.mxu0 0.0
    %9437 = vmatpush1.msra.mxu0 %v9287
    %9438 = vmatprep.subr.mxu0 0.0
    %9439 = vmatpush2.msra.mxu0 %v9318
    %9440 = vmatprep.subr.mxu0 0.0
    %9441 = vmatpush2.msra.mxu0 %v9317
    %9442 = vmatprep.subr.mxu0 0.0
    %9443 = vmatpush2.msra.mxu0 %v9316
    %9444 = vmatprep.subr.mxu0 0.0
    %9445 = vmatpush2.msra.mxu0 %v9315
    %9446 = vmatprep.subr.mxu0 0.0
    %9447 = vmatpush2.msra.mxu0 %v9314
    %9448 = vmatprep.subr.mxu0 0.0
    %9449 = vmatpush2.msra.mxu0 %v9313
    %9450 = vmatprep.subr.mxu0 0.0
    %9451 = vmatpush2.msra.mxu0 %v9312
    %9452 = vmatprep.subr.mxu0 0.0
    %9453 = vmatpush2.msra.mxu0 %v9311
    %9454 = vmatprep.subr.mxu0 0.0
    %9455 = vmatpush2.msra.mxu0 %v9310
    %9456 = vmatprep.subr.mxu0 0.0
    %9457 = vmatpush2.msra.mxu0 %v9309
    %9458 = vmatprep.subr.mxu0 0.0
    %9459 = vmatpush2.msra.mxu0 %v9308
    %9460 = vmatprep.subr.mxu0 0.0
    %9461 = vmatpush2.msra.mxu0 %v9307
    %9462 = vmatprep.subr.mxu0 0.0
    %9463 = vmatpush2.msra.mxu0 %v9306
    %9464 = vmatprep.subr.mxu0 0.0
    %9465 = vmatpush2.msra.mxu0 %v9305
    %9466 = vmatprep.subr.mxu0 0.0
    %9467 = vmatpush2.msra.mxu0 %v9304
    %9468 = vmatprep.subr.mxu0 0.0
    %9469 = vmatpush2.msra.mxu0 %v9303
    %9470 = vmatprep.mubr.f32.mxu0 %v8840
    %9471 = vmatmul.mubr.f32.gmra.mxu0 %v8839
    %v9472 = vpop.f32.mrf.mxu0
    %v9473 = vadd.f32 %v9404, %v9472
    %v9474 = vpop.f32.mrf.mxu0
    %9475 = vmatprep.mubr.f32.mxu0 %v8847
    %9476 = vmatmul.mubr.f32.gmra.mxu0 %v8846
    %v9477 = vpop.f32.mrf.mxu0
    %v9478 = vadd.f32 %v9404, %v9477
    %v9479 = vpop.f32.mrf.mxu0
    %9480 = vmatprep.mubr.f32.mxu0 %v8854
    %9481 = vmatmul.mubr.f32.gmra.mxu0 %v8853
    %v9482 = vpop.f32.mrf.mxu0
    %v9483 = vadd.f32 %v9404, %v9482
    %v9484 = vpop.f32.mrf.mxu0
    %9485 = vmatprep.mubr.f32.mxu0 %v8861
    %9486 = vmatmul.mubr.f32.gmra.mxu0 %v8860
    %v9487 = vpop.f32.mrf.mxu0
    %v9488 = vadd.f32 %v9404, %v9487
    %v9489 = vpop.f32.mrf.mxu0
    %9490 = vmatprep.mubr.f32.mxu0 %v8868
    %9491 = vmatmul.mubr.f32.gmra.mxu0 %v8867
    %v9492 = vpop.f32.mrf.mxu0
    %v9493 = vadd.f32 %v9404, %v9492
    %v9494 = vpop.f32.mrf.mxu0
    %9495 = vmatprep.mubr.f32.mxu0 %v8875
    %9496 = vmatmul.mubr.f32.gmra.mxu0 %v8874
    %v9497 = vpop.f32.mrf.mxu0
    %v9498 = vadd.f32 %v9404, %v9497
    %v9499 = vpop.f32.mrf.mxu0
    %9500 = vmatprep.mubr.f32.mxu0 %v8882
    %9501 = vmatmul.mubr.f32.gmra.mxu0 %v8881
    %v9502 = vpop.f32.mrf.mxu0
    %v9503 = vadd.f32 %v9404, %v9502
    %v9504 = vpop.f32.mrf.mxu0
    %9505 = vmatprep.mubr.f32.mxu0 %v8889
    %9506 = vmatmul.mubr.f32.gmra.mxu0 %v8888
    %v9507 = vpop.f32.mrf.mxu0
    %v9508 = vadd.f32 %v9404, %v9507
    %v9509 = vpop.f32.mrf.mxu0
    %9510 = vmatprep.mubr.f32.mxu0 %v8896
    %9511 = vmatmul.mubr.f32.gmra.mxu0 %v8895
    %v9512 = vpop.f32.mrf.mxu0
    %v9513 = vadd.f32 %v9404, %v9512
    %v9514 = vpop.f32.mrf.mxu0
    %9515 = vmatprep.mubr.f32.mxu0 %v8903
    %9516 = vmatmul.mubr.f32.gmra.mxu0 %v8902
    %v9517 = vpop.f32.mrf.mxu0
    %v9518 = vadd.f32 %v9404, %v9517
    %v9519 = vpop.f32.mrf.mxu0
    %9520 = vmatprep.mubr.f32.mxu0 %v8910
    %9521 = vmatmul.mubr.f32.gmra.mxu0 %v8909
    %v9522 = vpop.f32.mrf.mxu0
    %v9523 = vadd.f32 %v9404, %v9522
    %v9524 = vpop.f32.mrf.mxu0
    %9525 = vmatprep.mubr.f32.mxu0 %v8917
    %9526 = vmatmul.mubr.f32.gmra.mxu0 %v8916
    %v9527 = vpop.f32.mrf.mxu0
    %v9528 = vadd.f32 %v9404, %v9527
    %v9529 = vpop.f32.mrf.mxu0
    %9530 = vmatprep.mubr.f32.mxu0 %v8924
    %9531 = vmatmul.mubr.f32.gmra.mxu0 %v8923
    %v9532 = vpop.f32.mrf.mxu0
    %v9533 = vadd.f32 %v9404, %v9532
    %v9534 = vpop.f32.mrf.mxu0
    %9535 = vmatprep.mubr.f32.mxu0 %v8931
    %9536 = vmatmul.mubr.f32.gmra.mxu0 %v8930
    %v9537 = vpop.f32.mrf.mxu0
    %v9538 = vadd.f32 %v9404, %v9537
    %v9539 = vpop.f32.mrf.mxu0
    %9540 = vmatprep.mubr.f32.mxu0 %v8938
    %9541 = vmatmul.mubr.f32.gmra.mxu0 %v8937
    %v9542 = vpop.f32.mrf.mxu0
    %v9543 = vadd.f32 %v9404, %v9542
    %v9544 = vpop.f32.mrf.mxu0
    %9545 = vmatprep.mubr.f32.mxu0 %v8945
    %9546 = vmatmul.mubr.f32.gmra.mxu0 %v8944
    %v9547 = vpop.f32.mrf.mxu0
    %v9548 = vadd.f32 %v9404, %v9547
    %v9549 = vpop.f32.mrf.mxu0
    %9550 = vmatprep.mubr.f32.mxu0 %v8952
    %9551 = vmatmul.mubr.f32.gmra.mxu0 %v8951
    %v9552 = vpop.f32.mrf.mxu0
    %v9553 = vadd.f32 %v9404, %v9552
    %v9554 = vpop.f32.mrf.mxu0
    %9555 = vmatprep.mubr.f32.mxu0 %v8959
    %9556 = vmatmul.mubr.f32.gmra.mxu0 %v8958
    %v9557 = vpop.f32.mrf.mxu0
    %v9558 = vadd.f32 %v9404, %v9557
    %v9559 = vpop.f32.mrf.mxu0
    %9560 = vmatprep.mubr.f32.mxu0 %v8966
    %9561 = vmatmul.mubr.f32.gmra.mxu0 %v8965
    %v9562 = vpop.f32.mrf.mxu0
    %v9563 = vadd.f32 %v9404, %v9562
    %v9564 = vpop.f32.mrf.mxu0
    %9565 = vmatprep.mubr.f32.mxu0 %v8973
    %9566 = vmatmul.mubr.f32.gmra.mxu0 %v8972
    %v9567 = vpop.f32.mrf.mxu0
    %v9568 = vadd.f32 %v9404, %v9567
    %v9569 = vpop.f32.mrf.mxu0
    %9570 = vmatprep.mubr.f32.mxu0 %v8980
    %9571 = vmatmul.mubr.f32.gmra.mxu0 %v8979
    %v9572 = vpop.f32.mrf.mxu0
    %v9573 = vadd.f32 %v9404, %v9572
    %v9574 = vpop.f32.mrf.mxu0
    %9575 = vmatprep.mubr.f32.mxu0 %v8987
    %9576 = vmatmul.mubr.f32.gmra.mxu0 %v8986
    %v9577 = vpop.f32.mrf.mxu0
    %v9578 = vadd.f32 %v9404, %v9577
    %v9579 = vpop.f32.mrf.mxu0
    %9580 = vmatprep.mubr.f32.mxu0 %v8994
    %9581 = vmatmul.mubr.f32.gmra.mxu0 %v8993
    %v9582 = vpop.f32.mrf.mxu0
    %v9583 = vadd.f32 %v9404, %v9582
    %v9584 = vpop.f32.mrf.mxu0
    %9585 = vmatprep.mubr.f32.mxu0 %v9001
    %9586 = vmatmul.mubr.f32.gmra.mxu0 %v9000
    %v9587 = vpop.f32.mrf.mxu0
    %v9588 = vadd.f32 %v9404, %v9587
    %v9589 = vpop.f32.mrf.mxu0
    %9590 = vmatprep.mubr.f32.mxu0 %v9008
    %9591 = vmatmul.mubr.f32.gmra.mxu0 %v9007
    %v9592 = vpop.f32.mrf.mxu0
    %v9593 = vadd.f32 %v9404, %v9592
    %v9594 = vpop.f32.mrf.mxu0
    %9595 = vmatprep.mubr.f32.mxu0 %v9015
    %9596 = vmatmul.mubr.f32.gmra.mxu0 %v9014
    %v9597 = vpop.f32.mrf.mxu0
    %v9598 = vadd.f32 %v9404, %v9597
    %v9599 = vpop.f32.mrf.mxu0
    %9600 = vmatprep.mubr.f32.mxu0 %v9022
    %9601 = vmatmul.mubr.f32.gmra.mxu0 %v9021
    %v9602 = vpop.f32.mrf.mxu0
    %v9603 = vadd.f32 %v9404, %v9602
    %v9604 = vpop.f32.mrf.mxu0
    %9605 = vmatprep.mubr.f32.mxu0 %v9029
    %9606 = vmatmul.mubr.f32.gmra.mxu0 %v9028
    %v9607 = vpop.f32.mrf.mxu0
    %v9608 = vadd.f32 %v9404, %v9607
    %v9609 = vpop.f32.mrf.mxu0
    %9610 = vmatprep.mubr.f32.mxu0 %v9036
    %9611 = vmatmul.mubr.f32.gmra.mxu0 %v9035
    %v9612 = vpop.f32.mrf.mxu0
    %v9613 = vadd.f32 %v9404, %v9612
    %v9614 = vpop.f32.mrf.mxu0
    %9615 = vmatprep.mubr.f32.mxu0 %v9043
    %9616 = vmatmul.mubr.f32.gmra.mxu0 %v9042
    %v9617 = vpop.f32.mrf.mxu0
    %v9618 = vadd.f32 %v9404, %v9617
    %v9619 = vpop.f32.mrf.mxu0
    %9620 = vmatprep.mubr.f32.mxu0 %v9050
    %9621 = vmatmul.mubr.f32.gmra.mxu0 %v9049
    %v9622 = vpop.f32.mrf.mxu0
    %v9623 = vadd.f32 %v9404, %v9622
    %v9624 = vpop.f32.mrf.mxu0
    %9625 = vmatprep.mubr.f32.mxu0 %v9057
    %9626 = vmatmul.mubr.f32.gmra.mxu0 %v9056
    %v9627 = vpop.f32.mrf.mxu0
    %v9628 = vadd.f32 %v9404, %v9627
    %v9629 = vpop.f32.mrf.mxu0
    %9630 = vmatprep.mubr.f32.mxu0 %v9064
    %9631 = vmatmul.mubr.f32.gmra.mxu0 %v9063
    %v9632 = vpop.f32.mrf.mxu0
    %v9633 = vadd.f32 %v9404, %v9632
    %v9634 = vpop.f32.mrf.mxu0
    %9635 = vmatprep.mubr.f32.mxu0 %v9071
    %9636 = vmatmul.mubr.f32.gmra.mxu0 %v9070
    %v9637 = vpop.f32.mrf.mxu0
    %v9638 = vadd.f32 %v9404, %v9637
    %v9639 = vpop.f32.mrf.mxu0
    %9640 = vmatprep.mubr.f32.mxu0 %v9078
    %9641 = vmatmul.mubr.f32.gmra.mxu0 %v9077
    %v9642 = vpop.f32.mrf.mxu0
    %v9643 = vadd.f32 %v9404, %v9642
    %v9644 = vpop.f32.mrf.mxu0
    %9645 = vmatprep.mubr.f32.mxu0 %v9085
    %9646 = vmatmul.mubr.f32.gmra.mxu0 %v9084
    %v9647 = vpop.f32.mrf.mxu0
    %v9648 = vadd.f32 %v9404, %v9647
    %v9649 = vpop.f32.mrf.mxu0
    %9650 = vmatprep.mubr.f32.mxu0 %v9092
    %9651 = vmatmul.mubr.f32.gmra.mxu0 %v9091
    %v9652 = vpop.f32.mrf.mxu0
    %v9653 = vadd.f32 %v9404, %v9652
    %v9654 = vpop.f32.mrf.mxu0
    %9655 = vmatprep.mubr.f32.mxu0 %v9099
    %9656 = vmatmul.mubr.f32.gmra.mxu0 %v9098
    %v9657 = vpop.f32.mrf.mxu0
    %v9658 = vadd.f32 %v9404, %v9657
    %v9659 = vpop.f32.mrf.mxu0
    %9660 = vmatprep.mubr.f32.mxu0 %v9106
    %9661 = vmatmul.mubr.f32.gmra.mxu0 %v9105
    %v9662 = vpop.f32.mrf.mxu0
    %v9663 = vadd.f32 %v9404, %v9662
    %v9664 = vpop.f32.mrf.mxu0
    %9665 = vmatprep.mubr.f32.mxu0 %v9113
    %9666 = vmatmul.mubr.f32.gmra.mxu0 %v9112
    %v9667 = vpop.f32.mrf.mxu0
    %v9668 = vadd.f32 %v9404, %v9667
    %v9669 = vpop.f32.mrf.mxu0
    %9670 = vmatprep.mubr.f32.mxu0 %v9120
    %9671 = vmatmul.mubr.f32.gmra.mxu0 %v9119
    %v9672 = vpop.f32.mrf.mxu0
    %v9673 = vadd.f32 %v9404, %v9672
    %v9674 = vpop.f32.mrf.mxu0
    %9675 = vmatprep.mubr.f32.mxu0 %v9127
    %9676 = vmatmul.mubr.f32.gmra.mxu0 %v9126
    %v9677 = vpop.f32.mrf.mxu0
    %v9678 = vadd.f32 %v9404, %v9677
    %v9679 = vpop.f32.mrf.mxu0
    %9680 = vmatprep.mubr.f32.mxu0 %v9134
    %9681 = vmatmul.mubr.f32.gmra.mxu0 %v9133
    %v9682 = vpop.f32.mrf.mxu0
    %v9683 = vadd.f32 %v9404, %v9682
    %v9684 = vpop.f32.mrf.mxu0
    %9685 = vmatprep.mubr.f32.mxu0 %v9141
    %9686 = vmatmul.mubr.f32.gmra.mxu0 %v9140
    %v9687 = vpop.f32.mrf.mxu0
    %v9688 = vadd.f32 %v9404, %v9687
    %v9689 = vpop.f32.mrf.mxu0
    %9690 = vmatprep.mubr.f32.mxu0 %v9148
    %9691 = vmatmul.mubr.f32.gmra.mxu0 %v9147
    %v9692 = vpop.f32.mrf.mxu0
    %v9693 = vadd.f32 %v9404, %v9692
    %v9694 = vpop.f32.mrf.mxu0
    %9695 = vmatprep.mubr.f32.mxu0 %v9155
    %9696 = vmatmul.mubr.f32.gmra.mxu0 %v9154
    %v9697 = vpop.f32.mrf.mxu0
    %v9698 = vadd.f32 %v9404, %v9697
    %v9699 = vpop.f32.mrf.mxu0
    %9700 = vmatprep.mubr.f32.mxu0 %v9162
    %9701 = vmatmul.mubr.f32.gmra.mxu0 %v9161
    %v9702 = vpop.f32.mrf.mxu0
    %v9703 = vadd.f32 %v9404, %v9702
    %v9704 = vpop.f32.mrf.mxu0
    %9705 = vmatprep.mubr.f32.mxu0 %v9169
    %9706 = vmatmul.mubr.f32.gmra.mxu0 %v9168
    %v9707 = vpop.f32.mrf.mxu0
    %v9708 = vadd.f32 %v9404, %v9707
    %v9709 = vpop.f32.mrf.mxu0
    %9710 = vmatprep.mubr.f32.mxu0 %v9176
    %9711 = vmatmul.mubr.f32.gmra.mxu0 %v9175
    %v9712 = vpop.f32.mrf.mxu0
    %v9713 = vadd.f32 %v9404, %v9712
    %v9714 = vpop.f32.mrf.mxu0
    %9715 = vmatprep.mubr.f32.mxu0 %v9183
    %9716 = vmatmul.mubr.f32.gmra.mxu0 %v9182
    %v9717 = vpop.f32.mrf.mxu0
    %v9718 = vadd.f32 %v9404, %v9717
    %v9719 = vpop.f32.mrf.mxu0
    %9720 = vmatprep.mubr.f32.mxu0 %v9190
    %9721 = vmatmul.mubr.f32.gmra.mxu0 %v9189
    %v9722 = vpop.f32.mrf.mxu0
    %v9723 = vadd.f32 %v9404, %v9722
    %v9724 = vpop.f32.mrf.mxu0
    %9725 = vmatprep.mubr.f32.mxu0 %v9197
    %9726 = vmatmul.mubr.f32.gmra.mxu0 %v9196
    %v9727 = vpop.f32.mrf.mxu0
    %v9728 = vadd.f32 %v9404, %v9727
    %v9729 = vpop.f32.mrf.mxu0
    %9730 = vmatprep.mubr.f32.mxu0 %v9204
    %9731 = vmatmul.mubr.f32.gmra.mxu0 %v9203
    %v9732 = vpop.f32.mrf.mxu0
    %v9733 = vadd.f32 %v9404, %v9732
    %v9734 = vpop.f32.mrf.mxu0
    %9735 = vmatprep.mubr.f32.mxu0 %v9211
    %9736 = vmatmul.mubr.f32.gmra.mxu0 %v9210
    %v9737 = vpop.f32.mrf.mxu0
    %v9738 = vadd.f32 %v9404, %v9737
    %v9739 = vpop.f32.mrf.mxu0
    %9740 = vmatprep.mubr.f32.mxu0 %v9218
    %9741 = vmatmul.mubr.f32.gmra.mxu0 %v9217
    %v9742 = vpop.f32.mrf.mxu0
    %v9743 = vadd.f32 %v9404, %v9742
    %v9744 = vpop.f32.mrf.mxu0
    %9745 = vmatprep.mubr.f32.mxu0 %v9225
    %9746 = vmatmul.mubr.f32.gmra.mxu0 %v9224
    %v9747 = vpop.f32.mrf.mxu0
    %v9748 = vadd.f32 %v9404, %v9747
    %v9749 = vpop.f32.mrf.mxu0
    %9750 = vmatprep.mubr.f32.mxu0 %v9232
    %9751 = vmatmul.mubr.f32.gmra.mxu0 %v9231
    %v9752 = vpop.f32.mrf.mxu0
    %v9753 = vadd.f32 %v9404, %v9752
    %v9754 = vpop.f32.mrf.mxu0
    %9755 = vmatprep.mubr.f32.mxu0 %v9239
    %9756 = vmatmul.mubr.f32.gmra.mxu0 %v9238
    %v9757 = vpop.f32.mrf.mxu0
    %v9758 = vadd.f32 %v9404, %v9757
    %v9759 = vpop.f32.mrf.mxu0
    %9760 = vmatprep.mubr.f32.mxu0 %v9246
    %9761 = vmatmul.mubr.f32.gmra.mxu0 %v9245
    %v9762 = vpop.f32.mrf.mxu0
    %v9763 = vadd.f32 %v9404, %v9762
    %v9764 = vpop.f32.mrf.mxu0
    %9765 = vmatprep.mubr.f32.mxu0 %v9253
    %9766 = vmatmul.mubr.f32.gmra.mxu0 %v9252
    %v9767 = vpop.f32.mrf.mxu0
    %v9768 = vadd.f32 %v9404, %v9767
    %v9769 = vpop.f32.mrf.mxu0
    %9770 = vmatprep.mubr.f32.mxu0 %v9260
    %9771 = vmatmul.mubr.f32.gmra.mxu0 %v9259
    %v9772 = vpop.f32.mrf.mxu0
    %v9773 = vadd.f32 %v9404, %v9772
    %v9774 = vpop.f32.mrf.mxu0
    %9775 = vmatprep.mubr.f32.mxu0 %v9267
    %9776 = vmatmul.mubr.f32.gmra.mxu0 %v9266
    %v9777 = vpop.f32.mrf.mxu0
    %v9778 = vadd.f32 %v9404, %v9777
    %v9779 = vpop.f32.mrf.mxu0
    %9780 = vmatprep.mubr.f32.mxu0 %v9274
    %9781 = vmatmul.mubr.f32.gmra.mxu0 %v9273
    %v9782 = vpop.f32.mrf.mxu0
    %v9783 = vadd.f32 %v9404, %v9782
    %v9784 = vpop.f32.mrf.mxu0
    %9785 = vmatprep.mubr.f32.mxu0 %v9281
    %9786 = vmatmul.mubr.f32.gmra.mxu0 %v9280
    %v9787 = vpop.f32.mrf.mxu0
    %v9788 = vadd.f32 %v9404, %v9787
    %v9789 = vpop.f32.mrf.mxu0
    %9790 = vdwg.mxu0
    %9791 = vmatprep.subr.mxu0 0.0
    %9792 = vmatpush1.msra.mxu0 %v9334
    %9793 = vmatprep.subr.mxu0 0.0
    %9794 = vmatpush1.msra.mxu0 %v9333
    %9795 = vmatprep.subr.mxu0 0.0
    %9796 = vmatpush1.msra.mxu0 %v9332
    %9797 = vmatprep.subr.mxu0 0.0
    %9798 = vmatpush1.msra.mxu0 %v9331
    %9799 = vmatprep.subr.mxu0 0.0
    %9800 = vmatpush1.msra.mxu0 %v9330
    %9801 = vmatprep.subr.mxu0 0.0
    %9802 = vmatpush1.msra.mxu0 %v9329
    %9803 = vmatprep.subr.mxu0 0.0
    %9804 = vmatpush1.msra.mxu0 %v9328
    %9805 = vmatprep.subr.mxu0 0.0
    %9806 = vmatpush1.msra.mxu0 %v9327
    %9807 = vmatprep.subr.mxu0 0.0
    %9808 = vmatpush1.msra.mxu0 %v9326
    %9809 = vmatprep.subr.mxu0 0.0
    %9810 = vmatpush1.msra.mxu0 %v9325
    %9811 = vmatprep.subr.mxu0 0.0
    %9812 = vmatpush1.msra.mxu0 %v9324
    %9813 = vmatprep.subr.mxu0 0.0
    %9814 = vmatpush1.msra.mxu0 %v9323
    %9815 = vmatprep.subr.mxu0 0.0
    %9816 = vmatpush1.msra.mxu0 %v9322
    %9817 = vmatprep.subr.mxu0 0.0
    %9818 = vmatpush1.msra.mxu0 %v9321
    %9819 = vmatprep.subr.mxu0 0.0
    %9820 = vmatpush1.msra.mxu0 %v9320
    %9821 = vmatprep.subr.mxu0 0.0
    %9822 = vmatpush1.msra.mxu0 %v9319
    %9823 = vmatprep.subr.mxu0 0.0
    %9824 = vmatpush2.msra.mxu0 %v9350
    %9825 = vmatprep.subr.mxu0 0.0
    %9826 = vmatpush2.msra.mxu0 %v9349
    %9827 = vmatprep.subr.mxu0 0.0
    %9828 = vmatpush2.msra.mxu0 %v9348
    %9829 = vmatprep.subr.mxu0 0.0
    %9830 = vmatpush2.msra.mxu0 %v9347
    %9831 = vmatprep.subr.mxu0 0.0
    %9832 = vmatpush2.msra.mxu0 %v9346
    %9833 = vmatprep.subr.mxu0 0.0
    %9834 = vmatpush2.msra.mxu0 %v9345
    %9835 = vmatprep.subr.mxu0 0.0
    %9836 = vmatpush2.msra.mxu0 %v9344
    %9837 = vmatprep.subr.mxu0 0.0
    %9838 = vmatpush2.msra.mxu0 %v9343
    %9839 = vmatprep.subr.mxu0 0.0
    %9840 = vmatpush2.msra.mxu0 %v9342
    %9841 = vmatprep.subr.mxu0 0.0
    %9842 = vmatpush2.msra.mxu0 %v9341
    %9843 = vmatprep.subr.mxu0 0.0
    %9844 = vmatpush2.msra.mxu0 %v9340
    %9845 = vmatprep.subr.mxu0 0.0
    %9846 = vmatpush2.msra.mxu0 %v9339
    %9847 = vmatprep.subr.mxu0 0.0
    %9848 = vmatpush2.msra.mxu0 %v9338
    %9849 = vmatprep.subr.mxu0 0.0
    %9850 = vmatpush2.msra.mxu0 %v9337
    %9851 = vmatprep.subr.mxu0 0.0
    %9852 = vmatpush2.msra.mxu0 %v9336
    %9853 = vmatprep.subr.mxu0 0.0
    %9854 = vmatpush2.msra.mxu0 %v9335
    %9855 = vmatprep.mubr.f32.mxu0 %v8842
    %9856 = vmatmul.mubr.f32.gmra.mxu0 %v8841
    %v9857 = vpop.f32.mrf.mxu0
    %v9858 = vadd.f32 %v9473, %v9857
    %v9859 = vpop.f32.mrf.mxu0
    %9860 = vmatprep.mubr.f32.mxu0 %v8849
    %9861 = vmatmul.mubr.f32.gmra.mxu0 %v8848
    %v9862 = vpop.f32.mrf.mxu0
    %v9863 = vadd.f32 %v9478, %v9862
    %v9864 = vpop.f32.mrf.mxu0
    %9865 = vmatprep.mubr.f32.mxu0 %v8856
    %9866 = vmatmul.mubr.f32.gmra.mxu0 %v8855
    %v9867 = vpop.f32.mrf.mxu0
    %v9868 = vadd.f32 %v9483, %v9867
    %v9869 = vpop.f32.mrf.mxu0
    %9870 = vmatprep.mubr.f32.mxu0 %v8863
    %9871 = vmatmul.mubr.f32.gmra.mxu0 %v8862
    %v9872 = vpop.f32.mrf.mxu0
    %v9873 = vadd.f32 %v9488, %v9872
    %v9874 = vpop.f32.mrf.mxu0
    %9875 = vmatprep.mubr.f32.mxu0 %v8870
    %9876 = vmatmul.mubr.f32.gmra.mxu0 %v8869
    %v9877 = vpop.f32.mrf.mxu0
    %v9878 = vadd.f32 %v9493, %v9877
    %v9879 = vpop.f32.mrf.mxu0
    %9880 = vmatprep.mubr.f32.mxu0 %v8877
    %9881 = vmatmul.mubr.f32.gmra.mxu0 %v8876
    %v9882 = vpop.f32.mrf.mxu0
    %v9883 = vadd.f32 %v9498, %v9882
    %v9884 = vpop.f32.mrf.mxu0
    %9885 = vmatprep.mubr.f32.mxu0 %v8884
    %9886 = vmatmul.mubr.f32.gmra.mxu0 %v8883
    %v9887 = vpop.f32.mrf.mxu0
    %v9888 = vadd.f32 %v9503, %v9887
    %v9889 = vpop.f32.mrf.mxu0
    %9890 = vmatprep.mubr.f32.mxu0 %v8891
    %9891 = vmatmul.mubr.f32.gmra.mxu0 %v8890
    %v9892 = vpop.f32.mrf.mxu0
    %v9893 = vadd.f32 %v9508, %v9892
    %v9894 = vpop.f32.mrf.mxu0
    %9895 = vmatprep.mubr.f32.mxu0 %v8898
    %9896 = vmatmul.mubr.f32.gmra.mxu0 %v8897
    %v9897 = vpop.f32.mrf.mxu0
    %v9898 = vadd.f32 %v9513, %v9897
    %v9899 = vpop.f32.mrf.mxu0
    %9900 = vmatprep.mubr.f32.mxu0 %v8905
    %9901 = vmatmul.mubr.f32.gmra.mxu0 %v8904
    %v9902 = vpop.f32.mrf.mxu0
    %v9903 = vadd.f32 %v9518, %v9902
    %v9904 = vpop.f32.mrf.mxu0
    %9905 = vmatprep.mubr.f32.mxu0 %v8912
    %9906 = vmatmul.mubr.f32.gmra.mxu0 %v8911
    %v9907 = vpop.f32.mrf.mxu0
    %v9908 = vadd.f32 %v9523, %v9907
    %v9909 = vpop.f32.mrf.mxu0
    %9910 = vmatprep.mubr.f32.mxu0 %v8919
    %9911 = vmatmul.mubr.f32.gmra.mxu0 %v8918
    %v9912 = vpop.f32.mrf.mxu0
    %v9913 = vadd.f32 %v9528, %v9912
    %v9914 = vpop.f32.mrf.mxu0
    %9915 = vmatprep.mubr.f32.mxu0 %v8926
    %9916 = vmatmul.mubr.f32.gmra.mxu0 %v8925
    %v9917 = vpop.f32.mrf.mxu0
    %v9918 = vadd.f32 %v9533, %v9917
    %v9919 = vpop.f32.mrf.mxu0
    %9920 = vmatprep.mubr.f32.mxu0 %v8933
    %9921 = vmatmul.mubr.f32.gmra.mxu0 %v8932
    %v9922 = vpop.f32.mrf.mxu0
    %v9923 = vadd.f32 %v9538, %v9922
    %v9924 = vpop.f32.mrf.mxu0
    %9925 = vmatprep.mubr.f32.mxu0 %v8940
    %9926 = vmatmul.mubr.f32.gmra.mxu0 %v8939
    %v9927 = vpop.f32.mrf.mxu0
    %v9928 = vadd.f32 %v9543, %v9927
    %v9929 = vpop.f32.mrf.mxu0
    %9930 = vmatprep.mubr.f32.mxu0 %v8947
    %9931 = vmatmul.mubr.f32.gmra.mxu0 %v8946
    %v9932 = vpop.f32.mrf.mxu0
    %v9933 = vadd.f32 %v9548, %v9932
    %v9934 = vpop.f32.mrf.mxu0
    %9935 = vmatprep.mubr.f32.mxu0 %v8954
    %9936 = vmatmul.mubr.f32.gmra.mxu0 %v8953
    %v9937 = vpop.f32.mrf.mxu0
    %v9938 = vadd.f32 %v9553, %v9937
    %v9939 = vpop.f32.mrf.mxu0
    %9940 = vmatprep.mubr.f32.mxu0 %v8961
    %9941 = vmatmul.mubr.f32.gmra.mxu0 %v8960
    %v9942 = vpop.f32.mrf.mxu0
    %v9943 = vadd.f32 %v9558, %v9942
    %v9944 = vpop.f32.mrf.mxu0
    %9945 = vmatprep.mubr.f32.mxu0 %v8968
    %9946 = vmatmul.mubr.f32.gmra.mxu0 %v8967
    %v9947 = vpop.f32.mrf.mxu0
    %v9948 = vadd.f32 %v9563, %v9947
    %v9949 = vpop.f32.mrf.mxu0
    %9950 = vmatprep.mubr.f32.mxu0 %v8975
    %9951 = vmatmul.mubr.f32.gmra.mxu0 %v8974
    %v9952 = vpop.f32.mrf.mxu0
    %v9953 = vadd.f32 %v9568, %v9952
    %v9954 = vpop.f32.mrf.mxu0
    %9955 = vmatprep.mubr.f32.mxu0 %v8982
    %9956 = vmatmul.mubr.f32.gmra.mxu0 %v8981
    %v9957 = vpop.f32.mrf.mxu0
    %v9958 = vadd.f32 %v9573, %v9957
    %v9959 = vpop.f32.mrf.mxu0
    %9960 = vmatprep.mubr.f32.mxu0 %v8989
    %9961 = vmatmul.mubr.f32.gmra.mxu0 %v8988
    %v9962 = vpop.f32.mrf.mxu0
    %v9963 = vadd.f32 %v9578, %v9962
    %v9964 = vpop.f32.mrf.mxu0
    %9965 = vmatprep.mubr.f32.mxu0 %v8996
    %9966 = vmatmul.mubr.f32.gmra.mxu0 %v8995
    %v9967 = vpop.f32.mrf.mxu0
    %v9968 = vadd.f32 %v9583, %v9967
    %v9969 = vpop.f32.mrf.mxu0
    %9970 = vmatprep.mubr.f32.mxu0 %v9003
    %9971 = vmatmul.mubr.f32.gmra.mxu0 %v9002
    %v9972 = vpop.f32.mrf.mxu0
    %v9973 = vadd.f32 %v9588, %v9972
    %v9974 = vpop.f32.mrf.mxu0
    %9975 = vmatprep.mubr.f32.mxu0 %v9010
    %9976 = vmatmul.mubr.f32.gmra.mxu0 %v9009
    %v9977 = vpop.f32.mrf.mxu0
    %v9978 = vadd.f32 %v9593, %v9977
    %v9979 = vpop.f32.mrf.mxu0
    %9980 = vmatprep.mubr.f32.mxu0 %v9017
    %9981 = vmatmul.mubr.f32.gmra.mxu0 %v9016
    %v9982 = vpop.f32.mrf.mxu0
    %v9983 = vadd.f32 %v9598, %v9982
    %v9984 = vpop.f32.mrf.mxu0
    %9985 = vmatprep.mubr.f32.mxu0 %v9024
    %9986 = vmatmul.mubr.f32.gmra.mxu0 %v9023
    %v9987 = vpop.f32.mrf.mxu0
    %v9988 = vadd.f32 %v9603, %v9987
    %v9989 = vpop.f32.mrf.mxu0
    %9990 = vmatprep.mubr.f32.mxu0 %v9031
    %9991 = vmatmul.mubr.f32.gmra.mxu0 %v9030
    %v9992 = vpop.f32.mrf.mxu0
    %v9993 = vadd.f32 %v9608, %v9992
    %v9994 = vpop.f32.mrf.mxu0
    %9995 = vmatprep.mubr.f32.mxu0 %v9038
    %9996 = vmatmul.mubr.f32.gmra.mxu0 %v9037
    %v9997 = vpop.f32.mrf.mxu0
    %v9998 = vadd.f32 %v9613, %v9997
    %v9999 = vpop.f32.mrf.mxu0
    %10000 = vmatprep.mubr.f32.mxu0 %v9045
    %10001 = vmatmul.mubr.f32.gmra.mxu0 %v9044
    %v10002 = vpop.f32.mrf.mxu0
    %v10003 = vadd.f32 %v9618, %v10002
    %v10004 = vpop.f32.mrf.mxu0
    %10005 = vmatprep.mubr.f32.mxu0 %v9052
    %10006 = vmatmul.mubr.f32.gmra.mxu0 %v9051
    %v10007 = vpop.f32.mrf.mxu0
    %v10008 = vadd.f32 %v9623, %v10007
    %v10009 = vpop.f32.mrf.mxu0
    %10010 = vmatprep.mubr.f32.mxu0 %v9059
    %10011 = vmatmul.mubr.f32.gmra.mxu0 %v9058
    %v10012 = vpop.f32.mrf.mxu0
    %v10013 = vadd.f32 %v9628, %v10012
    %v10014 = vpop.f32.mrf.mxu0
    %10015 = vmatprep.mubr.f32.mxu0 %v9066
    %10016 = vmatmul.mubr.f32.gmra.mxu0 %v9065
    %v10017 = vpop.f32.mrf.mxu0
    %v10018 = vadd.f32 %v9633, %v10017
    %v10019 = vpop.f32.mrf.mxu0
    %10020 = vmatprep.mubr.f32.mxu0 %v9073
    %10021 = vmatmul.mubr.f32.gmra.mxu0 %v9072
    %v10022 = vpop.f32.mrf.mxu0
    %v10023 = vadd.f32 %v9638, %v10022
    %v10024 = vpop.f32.mrf.mxu0
    %10025 = vmatprep.mubr.f32.mxu0 %v9080
    %10026 = vmatmul.mubr.f32.gmra.mxu0 %v9079
    %v10027 = vpop.f32.mrf.mxu0
    %v10028 = vadd.f32 %v9643, %v10027
    %v10029 = vpop.f32.mrf.mxu0
    %10030 = vmatprep.mubr.f32.mxu0 %v9087
    %10031 = vmatmul.mubr.f32.gmra.mxu0 %v9086
    %v10032 = vpop.f32.mrf.mxu0
    %v10033 = vadd.f32 %v9648, %v10032
    %v10034 = vpop.f32.mrf.mxu0
    %10035 = vmatprep.mubr.f32.mxu0 %v9094
    %10036 = vmatmul.mubr.f32.gmra.mxu0 %v9093
    %v10037 = vpop.f32.mrf.mxu0
    %v10038 = vadd.f32 %v9653, %v10037
    %v10039 = vpop.f32.mrf.mxu0
    %10040 = vmatprep.mubr.f32.mxu0 %v9101
    %10041 = vmatmul.mubr.f32.gmra.mxu0 %v9100
    %v10042 = vpop.f32.mrf.mxu0
    %v10043 = vadd.f32 %v9658, %v10042
    %v10044 = vpop.f32.mrf.mxu0
    %10045 = vmatprep.mubr.f32.mxu0 %v9108
    %10046 = vmatmul.mubr.f32.gmra.mxu0 %v9107
    %v10047 = vpop.f32.mrf.mxu0
    %v10048 = vadd.f32 %v9663, %v10047
    %v10049 = vpop.f32.mrf.mxu0
    %10050 = vmatprep.mubr.f32.mxu0 %v9115
    %10051 = vmatmul.mubr.f32.gmra.mxu0 %v9114
    %v10052 = vpop.f32.mrf.mxu0
    %v10053 = vadd.f32 %v9668, %v10052
    %v10054 = vpop.f32.mrf.mxu0
    %10055 = vmatprep.mubr.f32.mxu0 %v9122
    %10056 = vmatmul.mubr.f32.gmra.mxu0 %v9121
    %v10057 = vpop.f32.mrf.mxu0
    %v10058 = vadd.f32 %v9673, %v10057
    %v10059 = vpop.f32.mrf.mxu0
    %10060 = vmatprep.mubr.f32.mxu0 %v9129
    %10061 = vmatmul.mubr.f32.gmra.mxu0 %v9128
    %v10062 = vpop.f32.mrf.mxu0
    %v10063 = vadd.f32 %v9678, %v10062
    %v10064 = vpop.f32.mrf.mxu0
    %10065 = vmatprep.mubr.f32.mxu0 %v9136
    %10066 = vmatmul.mubr.f32.gmra.mxu0 %v9135
    %v10067 = vpop.f32.mrf.mxu0
    %v10068 = vadd.f32 %v9683, %v10067
    %v10069 = vpop.f32.mrf.mxu0
    %10070 = vmatprep.mubr.f32.mxu0 %v9143
    %10071 = vmatmul.mubr.f32.gmra.mxu0 %v9142
    %v10072 = vpop.f32.mrf.mxu0
    %v10073 = vadd.f32 %v9688, %v10072
    %v10074 = vpop.f32.mrf.mxu0
    %10075 = vmatprep.mubr.f32.mxu0 %v9150
    %10076 = vmatmul.mubr.f32.gmra.mxu0 %v9149
    %v10077 = vpop.f32.mrf.mxu0
    %v10078 = vadd.f32 %v9693, %v10077
    %v10079 = vpop.f32.mrf.mxu0
    %10080 = vmatprep.mubr.f32.mxu0 %v9157
    %10081 = vmatmul.mubr.f32.gmra.mxu0 %v9156
    %v10082 = vpop.f32.mrf.mxu0
    %v10083 = vadd.f32 %v9698, %v10082
    %v10084 = vpop.f32.mrf.mxu0
    %10085 = vmatprep.mubr.f32.mxu0 %v9164
    %10086 = vmatmul.mubr.f32.gmra.mxu0 %v9163
    %v10087 = vpop.f32.mrf.mxu0
    %v10088 = vadd.f32 %v9703, %v10087
    %v10089 = vpop.f32.mrf.mxu0
    %10090 = vmatprep.mubr.f32.mxu0 %v9171
    %10091 = vmatmul.mubr.f32.gmra.mxu0 %v9170
    %v10092 = vpop.f32.mrf.mxu0
    %v10093 = vadd.f32 %v9708, %v10092
    %v10094 = vpop.f32.mrf.mxu0
    %10095 = vmatprep.mubr.f32.mxu0 %v9178
    %10096 = vmatmul.mubr.f32.gmra.mxu0 %v9177
    %v10097 = vpop.f32.mrf.mxu0
    %v10098 = vadd.f32 %v9713, %v10097
    %v10099 = vpop.f32.mrf.mxu0
    %10100 = vmatprep.mubr.f32.mxu0 %v9185
    %10101 = vmatmul.mubr.f32.gmra.mxu0 %v9184
    %v10102 = vpop.f32.mrf.mxu0
    %v10103 = vadd.f32 %v9718, %v10102
    %v10104 = vpop.f32.mrf.mxu0
    %10105 = vmatprep.mubr.f32.mxu0 %v9192
    %10106 = vmatmul.mubr.f32.gmra.mxu0 %v9191
    %v10107 = vpop.f32.mrf.mxu0
    %v10108 = vadd.f32 %v9723, %v10107
    %v10109 = vpop.f32.mrf.mxu0
    %10110 = vmatprep.mubr.f32.mxu0 %v9199
    %10111 = vmatmul.mubr.f32.gmra.mxu0 %v9198
    %v10112 = vpop.f32.mrf.mxu0
    %v10113 = vadd.f32 %v9728, %v10112
    %v10114 = vpop.f32.mrf.mxu0
    %10115 = vmatprep.mubr.f32.mxu0 %v9206
    %10116 = vmatmul.mubr.f32.gmra.mxu0 %v9205
    %v10117 = vpop.f32.mrf.mxu0
    %v10118 = vadd.f32 %v9733, %v10117
    %v10119 = vpop.f32.mrf.mxu0
    %10120 = vmatprep.mubr.f32.mxu0 %v9213
    %10121 = vmatmul.mubr.f32.gmra.mxu0 %v9212
    %v10122 = vpop.f32.mrf.mxu0
    %v10123 = vadd.f32 %v9738, %v10122
    %v10124 = vpop.f32.mrf.mxu0
    %10125 = vmatprep.mubr.f32.mxu0 %v9220
    %10126 = vmatmul.mubr.f32.gmra.mxu0 %v9219
    %v10127 = vpop.f32.mrf.mxu0
    %v10128 = vadd.f32 %v9743, %v10127
    %v10129 = vpop.f32.mrf.mxu0
    %10130 = vmatprep.mubr.f32.mxu0 %v9227
    %10131 = vmatmul.mubr.f32.gmra.mxu0 %v9226
    %v10132 = vpop.f32.mrf.mxu0
    %v10133 = vadd.f32 %v9748, %v10132
    %v10134 = vpop.f32.mrf.mxu0
    %10135 = vmatprep.mubr.f32.mxu0 %v9234
    %10136 = vmatmul.mubr.f32.gmra.mxu0 %v9233
    %v10137 = vpop.f32.mrf.mxu0
    %v10138 = vadd.f32 %v9753, %v10137
    %v10139 = vpop.f32.mrf.mxu0
    %10140 = vmatprep.mubr.f32.mxu0 %v9241
    %10141 = vmatmul.mubr.f32.gmra.mxu0 %v9240
    %v10142 = vpop.f32.mrf.mxu0
    %v10143 = vadd.f32 %v9758, %v10142
    %v10144 = vpop.f32.mrf.mxu0
    %10145 = vmatprep.mubr.f32.mxu0 %v9248
    %10146 = vmatmul.mubr.f32.gmra.mxu0 %v9247
    %v10147 = vpop.f32.mrf.mxu0
    %v10148 = vadd.f32 %v9763, %v10147
    %v10149 = vpop.f32.mrf.mxu0
    %10150 = vmatprep.mubr.f32.mxu0 %v9255
    %10151 = vmatmul.mubr.f32.gmra.mxu0 %v9254
    %v10152 = vpop.f32.mrf.mxu0
    %v10153 = vadd.f32 %v9768, %v10152
    %v10154 = vpop.f32.mrf.mxu0
    %10155 = vmatprep.mubr.f32.mxu0 %v9262
    %10156 = vmatmul.mubr.f32.gmra.mxu0 %v9261
    %v10157 = vpop.f32.mrf.mxu0
    %v10158 = vadd.f32 %v9773, %v10157
    %v10159 = vpop.f32.mrf.mxu0
    %10160 = vmatprep.mubr.f32.mxu0 %v9269
    %10161 = vmatmul.mubr.f32.gmra.mxu0 %v9268
    %v10162 = vpop.f32.mrf.mxu0
    %v10163 = vadd.f32 %v9778, %v10162
    %v10164 = vpop.f32.mrf.mxu0
    %10165 = vmatprep.mubr.f32.mxu0 %v9276
    %10166 = vmatmul.mubr.f32.gmra.mxu0 %v9275
    %v10167 = vpop.f32.mrf.mxu0
    %v10168 = vadd.f32 %v9783, %v10167
    %v10169 = vpop.f32.mrf.mxu0
    %10170 = vmatprep.mubr.f32.mxu0 %v9283
    %10171 = vmatmul.mubr.f32.gmra.mxu0 %v9282
    %v10172 = vpop.f32.mrf.mxu0
    %v10173 = vadd.f32 %v9788, %v10172
    %v10174 = vpop.f32.mrf.mxu0
    %10175 = vdwg.mxu0
    %10176 = vmatprep.subr.mxu0 0.0
    %10177 = vmatpush1.msra.mxu0 %v9366
    %10178 = vmatprep.subr.mxu0 0.0
    %10179 = vmatpush1.msra.mxu0 %v9365
    %10180 = vmatprep.subr.mxu0 0.0
    %10181 = vmatpush1.msra.mxu0 %v9364
    %10182 = vmatprep.subr.mxu0 0.0
    %10183 = vmatpush1.msra.mxu0 %v9363
    %10184 = vmatprep.subr.mxu0 0.0
    %10185 = vmatpush1.msra.mxu0 %v9362
    %10186 = vmatprep.subr.mxu0 0.0
    %10187 = vmatpush1.msra.mxu0 %v9361
    %10188 = vmatprep.subr.mxu0 0.0
    %10189 = vmatpush1.msra.mxu0 %v9360
    %10190 = vmatprep.subr.mxu0 0.0
    %10191 = vmatpush1.msra.mxu0 %v9359
    %10192 = vmatprep.subr.mxu0 0.0
    %10193 = vmatpush1.msra.mxu0 %v9358
    %10194 = vmatprep.subr.mxu0 0.0
    %10195 = vmatpush1.msra.mxu0 %v9357
    %10196 = vmatprep.subr.mxu0 0.0
    %10197 = vmatpush1.msra.mxu0 %v9356
    %10198 = vmatprep.subr.mxu0 0.0
    %10199 = vmatpush1.msra.mxu0 %v9355
    %10200 = vmatprep.subr.mxu0 0.0
    %10201 = vmatpush1.msra.mxu0 %v9354
    %10202 = vmatprep.subr.mxu0 0.0
    %10203 = vmatpush1.msra.mxu0 %v9353
    %10204 = vmatprep.subr.mxu0 0.0
    %10205 = vmatpush1.msra.mxu0 %v9352
    %10206 = vmatprep.subr.mxu0 0.0
    %10207 = vmatpush1.msra.mxu0 %v9351
    %10208 = vmatprep.subr.mxu0 0.0
    %10209 = vmatpush2.msra.mxu0 %v9382
    %10210 = vmatprep.subr.mxu0 0.0
    %10211 = vmatpush2.msra.mxu0 %v9381
    %10212 = vmatprep.subr.mxu0 0.0
    %10213 = vmatpush2.msra.mxu0 %v9380
    %10214 = vmatprep.subr.mxu0 0.0
    %10215 = vmatpush2.msra.mxu0 %v9379
    %10216 = vmatprep.subr.mxu0 0.0
    %10217 = vmatpush2.msra.mxu0 %v9378
    %10218 = vmatprep.subr.mxu0 0.0
    %10219 = vmatpush2.msra.mxu0 %v9377
    %10220 = vmatprep.subr.mxu0 0.0
    %10221 = vmatpush2.msra.mxu0 %v9376
    %10222 = vmatprep.subr.mxu0 0.0
    %10223 = vmatpush2.msra.mxu0 %v9375
    %10224 = vmatprep.subr.mxu0 0.0
    %10225 = vmatpush2.msra.mxu0 %v9374
    %10226 = vmatprep.subr.mxu0 0.0
    %10227 = vmatpush2.msra.mxu0 %v9373
    %10228 = vmatprep.subr.mxu0 0.0
    %10229 = vmatpush2.msra.mxu0 %v9372
    %10230 = vmatprep.subr.mxu0 0.0
    %10231 = vmatpush2.msra.mxu0 %v9371
    %10232 = vmatprep.subr.mxu0 0.0
    %10233 = vmatpush2.msra.mxu0 %v9370
    %10234 = vmatprep.subr.mxu0 0.0
    %10235 = vmatpush2.msra.mxu0 %v9369
    %10236 = vmatprep.subr.mxu0 0.0
    %10237 = vmatpush2.msra.mxu0 %v9368
    %10238 = vmatprep.subr.mxu0 0.0
    %10239 = vmatpush2.msra.mxu0 %v9367
    %10240 = vmatprep.mubr.f32.mxu0 %v8844
    %10241 = vmatmul.mubr.f32.gmra.mxu0 %v8843
    %v10242 = vpop.f32.mrf.mxu0
    %v10243 = vadd.f32 %v9858, %v10242
    %v10244 = vpop.f32.mrf.mxu0
    %10245 = vmatprep.mubr.f32.mxu0 %v8851
    %10246 = vmatmul.mubr.f32.gmra.mxu0 %v8850
    %v10247 = vpop.f32.mrf.mxu0
    %v10248 = vadd.f32 %v9863, %v10247
    %v10249 = vpop.f32.mrf.mxu0
    %10250 = vmatprep.mubr.f32.mxu0 %v8858
    %10251 = vmatmul.mubr.f32.gmra.mxu0 %v8857
    %v10252 = vpop.f32.mrf.mxu0
    %v10253 = vadd.f32 %v9868, %v10252
    %v10254 = vpop.f32.mrf.mxu0
    %10255 = vmatprep.mubr.f32.mxu0 %v8865
    %10256 = vmatmul.mubr.f32.gmra.mxu0 %v8864
    %v10257 = vpop.f32.mrf.mxu0
    %v10258 = vadd.f32 %v9873, %v10257
    %v10259 = vpop.f32.mrf.mxu0
    %10260 = vmatprep.mubr.f32.mxu0 %v8872
    %10261 = vmatmul.mubr.f32.gmra.mxu0 %v8871
    %v10262 = vpop.f32.mrf.mxu0
    %v10263 = vadd.f32 %v9878, %v10262
    %v10264 = vpop.f32.mrf.mxu0
    %10265 = vmatprep.mubr.f32.mxu0 %v8879
    %10266 = vmatmul.mubr.f32.gmra.mxu0 %v8878
    %v10267 = vpop.f32.mrf.mxu0
    %v10268 = vadd.f32 %v9883, %v10267
    %v10269 = vpop.f32.mrf.mxu0
    %10270 = vmatprep.mubr.f32.mxu0 %v8886
    %10271 = vmatmul.mubr.f32.gmra.mxu0 %v8885
    %v10272 = vpop.f32.mrf.mxu0
    %v10273 = vadd.f32 %v9888, %v10272
    %v10274 = vpop.f32.mrf.mxu0
    %10275 = vmatprep.mubr.f32.mxu0 %v8893
    %10276 = vmatmul.mubr.f32.gmra.mxu0 %v8892
    %v10277 = vpop.f32.mrf.mxu0
    %v10278 = vadd.f32 %v9893, %v10277
    %v10279 = vpop.f32.mrf.mxu0
    %10280 = vmatprep.mubr.f32.mxu0 %v8900
    %10281 = vmatmul.mubr.f32.gmra.mxu0 %v8899
    %v10282 = vpop.f32.mrf.mxu0
    %v10283 = vadd.f32 %v9898, %v10282
    %v10284 = vpop.f32.mrf.mxu0
    %10285 = vmatprep.mubr.f32.mxu0 %v8907
    %10286 = vmatmul.mubr.f32.gmra.mxu0 %v8906
    %v10287 = vpop.f32.mrf.mxu0
    %v10288 = vadd.f32 %v9903, %v10287
    %v10289 = vpop.f32.mrf.mxu0
    %10290 = vmatprep.mubr.f32.mxu0 %v8914
    %10291 = vmatmul.mubr.f32.gmra.mxu0 %v8913
    %v10292 = vpop.f32.mrf.mxu0
    %v10293 = vadd.f32 %v9908, %v10292
    %v10294 = vpop.f32.mrf.mxu0
    %10295 = vmatprep.mubr.f32.mxu0 %v8921
    %10296 = vmatmul.mubr.f32.gmra.mxu0 %v8920
    %v10297 = vpop.f32.mrf.mxu0
    %v10298 = vadd.f32 %v9913, %v10297
    %v10299 = vpop.f32.mrf.mxu0
    %10300 = vmatprep.mubr.f32.mxu0 %v8928
    %10301 = vmatmul.mubr.f32.gmra.mxu0 %v8927
    %v10302 = vpop.f32.mrf.mxu0
    %v10303 = vadd.f32 %v9918, %v10302
    %v10304 = vpop.f32.mrf.mxu0
    %10305 = vmatprep.mubr.f32.mxu0 %v8935
    %10306 = vmatmul.mubr.f32.gmra.mxu0 %v8934
    %v10307 = vpop.f32.mrf.mxu0
    %v10308 = vadd.f32 %v9923, %v10307
    %v10309 = vpop.f32.mrf.mxu0
    %10310 = vmatprep.mubr.f32.mxu0 %v8942
    %10311 = vmatmul.mubr.f32.gmra.mxu0 %v8941
    %v10312 = vpop.f32.mrf.mxu0
    %v10313 = vadd.f32 %v9928, %v10312
    %v10314 = vpop.f32.mrf.mxu0
    %10315 = vmatprep.mubr.f32.mxu0 %v8949
    %10316 = vmatmul.mubr.f32.gmra.mxu0 %v8948
    %v10317 = vpop.f32.mrf.mxu0
    %v10318 = vadd.f32 %v9933, %v10317
    %v10319 = vpop.f32.mrf.mxu0
    %10320 = vmatprep.mubr.f32.mxu0 %v8956
    %10321 = vmatmul.mubr.f32.gmra.mxu0 %v8955
    %v10322 = vpop.f32.mrf.mxu0
    %v10323 = vadd.f32 %v9938, %v10322
    %v10324 = vpop.f32.mrf.mxu0
    %10325 = vmatprep.mubr.f32.mxu0 %v8963
    %10326 = vmatmul.mubr.f32.gmra.mxu0 %v8962
    %v10327 = vpop.f32.mrf.mxu0
    %v10328 = vadd.f32 %v9943, %v10327
    %v10329 = vpop.f32.mrf.mxu0
    %10330 = vmatprep.mubr.f32.mxu0 %v8970
    %10331 = vmatmul.mubr.f32.gmra.mxu0 %v8969
    %v10332 = vpop.f32.mrf.mxu0
    %v10333 = vadd.f32 %v9948, %v10332
    %v10334 = vpop.f32.mrf.mxu0
    %10335 = vmatprep.mubr.f32.mxu0 %v8977
    %10336 = vmatmul.mubr.f32.gmra.mxu0 %v8976
    %v10337 = vpop.f32.mrf.mxu0
    %v10338 = vadd.f32 %v9953, %v10337
    %v10339 = vpop.f32.mrf.mxu0
    %10340 = vmatprep.mubr.f32.mxu0 %v8984
    %10341 = vmatmul.mubr.f32.gmra.mxu0 %v8983
    %v10342 = vpop.f32.mrf.mxu0
    %v10343 = vadd.f32 %v9958, %v10342
    %v10344 = vpop.f32.mrf.mxu0
    %10345 = vmatprep.mubr.f32.mxu0 %v8991
    %10346 = vmatmul.mubr.f32.gmra.mxu0 %v8990
    %v10347 = vpop.f32.mrf.mxu0
    %v10348 = vadd.f32 %v9963, %v10347
    %v10349 = vpop.f32.mrf.mxu0
    %10350 = vmatprep.mubr.f32.mxu0 %v8998
    %10351 = vmatmul.mubr.f32.gmra.mxu0 %v8997
    %v10352 = vpop.f32.mrf.mxu0
    %v10353 = vadd.f32 %v9968, %v10352
    %v10354 = vpop.f32.mrf.mxu0
    %10355 = vmatprep.mubr.f32.mxu0 %v9005
    %10356 = vmatmul.mubr.f32.gmra.mxu0 %v9004
    %v10357 = vpop.f32.mrf.mxu0
    %v10358 = vadd.f32 %v9973, %v10357
    %v10359 = vpop.f32.mrf.mxu0
    %10360 = vmatprep.mubr.f32.mxu0 %v9012
    %10361 = vmatmul.mubr.f32.gmra.mxu0 %v9011
    %v10362 = vpop.f32.mrf.mxu0
    %v10363 = vadd.f32 %v9978, %v10362
    %v10364 = vpop.f32.mrf.mxu0
    %10365 = vmatprep.mubr.f32.mxu0 %v9019
    %10366 = vmatmul.mubr.f32.gmra.mxu0 %v9018
    %v10367 = vpop.f32.mrf.mxu0
    %v10368 = vadd.f32 %v9983, %v10367
    %v10369 = vpop.f32.mrf.mxu0
    %10370 = vmatprep.mubr.f32.mxu0 %v9026
    %10371 = vmatmul.mubr.f32.gmra.mxu0 %v9025
    %v10372 = vpop.f32.mrf.mxu0
    %v10373 = vadd.f32 %v9988, %v10372
    %v10374 = vpop.f32.mrf.mxu0
    %10375 = vmatprep.mubr.f32.mxu0 %v9033
    %10376 = vmatmul.mubr.f32.gmra.mxu0 %v9032
    %v10377 = vpop.f32.mrf.mxu0
    %v10378 = vadd.f32 %v9993, %v10377
    %v10379 = vpop.f32.mrf.mxu0
    %10380 = vmatprep.mubr.f32.mxu0 %v9040
    %10381 = vmatmul.mubr.f32.gmra.mxu0 %v9039
    %v10382 = vpop.f32.mrf.mxu0
    %v10383 = vadd.f32 %v9998, %v10382
    %v10384 = vpop.f32.mrf.mxu0
    %10385 = vmatprep.mubr.f32.mxu0 %v9047
    %10386 = vmatmul.mubr.f32.gmra.mxu0 %v9046
    %v10387 = vpop.f32.mrf.mxu0
    %v10388 = vadd.f32 %v10003, %v10387
    %v10389 = vpop.f32.mrf.mxu0
    %10390 = vmatprep.mubr.f32.mxu0 %v9054
    %10391 = vmatmul.mubr.f32.gmra.mxu0 %v9053
    %v10392 = vpop.f32.mrf.mxu0
    %v10393 = vadd.f32 %v10008, %v10392
    %v10394 = vpop.f32.mrf.mxu0
    %10395 = vmatprep.mubr.f32.mxu0 %v9061
    %10396 = vmatmul.mubr.f32.gmra.mxu0 %v9060
    %v10397 = vpop.f32.mrf.mxu0
    %v10398 = vadd.f32 %v10013, %v10397
    %v10399 = vpop.f32.mrf.mxu0
    %10400 = vmatprep.mubr.f32.mxu0 %v9068
    %10401 = vmatmul.mubr.f32.gmra.mxu0 %v9067
    %v10402 = vpop.f32.mrf.mxu0
    %v10403 = vadd.f32 %v10018, %v10402
    %v10404 = vpop.f32.mrf.mxu0
    %10405 = vmatprep.mubr.f32.mxu0 %v9075
    %10406 = vmatmul.mubr.f32.gmra.mxu0 %v9074
    %v10407 = vpop.f32.mrf.mxu0
    %v10408 = vadd.f32 %v10023, %v10407
    %v10409 = vpop.f32.mrf.mxu0
    %10410 = vmatprep.mubr.f32.mxu0 %v9082
    %10411 = vmatmul.mubr.f32.gmra.mxu0 %v9081
    %v10412 = vpop.f32.mrf.mxu0
    %v10413 = vadd.f32 %v10028, %v10412
    %v10414 = vpop.f32.mrf.mxu0
    %10415 = vmatprep.mubr.f32.mxu0 %v9089
    %10416 = vmatmul.mubr.f32.gmra.mxu0 %v9088
    %v10417 = vpop.f32.mrf.mxu0
    %v10418 = vadd.f32 %v10033, %v10417
    %v10419 = vpop.f32.mrf.mxu0
    %10420 = vmatprep.mubr.f32.mxu0 %v9096
    %10421 = vmatmul.mubr.f32.gmra.mxu0 %v9095
    %v10422 = vpop.f32.mrf.mxu0
    %v10423 = vadd.f32 %v10038, %v10422
    %v10424 = vpop.f32.mrf.mxu0
    %10425 = vmatprep.mubr.f32.mxu0 %v9103
    %10426 = vmatmul.mubr.f32.gmra.mxu0 %v9102
    %v10427 = vpop.f32.mrf.mxu0
    %v10428 = vadd.f32 %v10043, %v10427
    %v10429 = vpop.f32.mrf.mxu0
    %10430 = vmatprep.mubr.f32.mxu0 %v9110
    %10431 = vmatmul.mubr.f32.gmra.mxu0 %v9109
    %v10432 = vpop.f32.mrf.mxu0
    %v10433 = vadd.f32 %v10048, %v10432
    %v10434 = vpop.f32.mrf.mxu0
    %10435 = vmatprep.mubr.f32.mxu0 %v9117
    %10436 = vmatmul.mubr.f32.gmra.mxu0 %v9116
    %v10437 = vpop.f32.mrf.mxu0
    %v10438 = vadd.f32 %v10053, %v10437
    %v10439 = vpop.f32.mrf.mxu0
    %10440 = vmatprep.mubr.f32.mxu0 %v9124
    %10441 = vmatmul.mubr.f32.gmra.mxu0 %v9123
    %v10442 = vpop.f32.mrf.mxu0
    %v10443 = vadd.f32 %v10058, %v10442
    %v10444 = vpop.f32.mrf.mxu0
    %10445 = vmatprep.mubr.f32.mxu0 %v9131
    %10446 = vmatmul.mubr.f32.gmra.mxu0 %v9130
    %v10447 = vpop.f32.mrf.mxu0
    %v10448 = vadd.f32 %v10063, %v10447
    %v10449 = vpop.f32.mrf.mxu0
    %10450 = vmatprep.mubr.f32.mxu0 %v9138
    %10451 = vmatmul.mubr.f32.gmra.mxu0 %v9137
    %v10452 = vpop.f32.mrf.mxu0
    %v10453 = vadd.f32 %v10068, %v10452
    %v10454 = vpop.f32.mrf.mxu0
    %10455 = vmatprep.mubr.f32.mxu0 %v9145
    %10456 = vmatmul.mubr.f32.gmra.mxu0 %v9144
    %v10457 = vpop.f32.mrf.mxu0
    %v10458 = vadd.f32 %v10073, %v10457
    %v10459 = vpop.f32.mrf.mxu0
    %10460 = vmatprep.mubr.f32.mxu0 %v9152
    %10461 = vmatmul.mubr.f32.gmra.mxu0 %v9151
    %v10462 = vpop.f32.mrf.mxu0
    %v10463 = vadd.f32 %v10078, %v10462
    %v10464 = vpop.f32.mrf.mxu0
    %10465 = vmatprep.mubr.f32.mxu0 %v9159
    %10466 = vmatmul.mubr.f32.gmra.mxu0 %v9158
    %v10467 = vpop.f32.mrf.mxu0
    %v10468 = vadd.f32 %v10083, %v10467
    %v10469 = vpop.f32.mrf.mxu0
    %10470 = vmatprep.mubr.f32.mxu0 %v9166
    %10471 = vmatmul.mubr.f32.gmra.mxu0 %v9165
    %v10472 = vpop.f32.mrf.mxu0
    %v10473 = vadd.f32 %v10088, %v10472
    %v10474 = vpop.f32.mrf.mxu0
    %10475 = vmatprep.mubr.f32.mxu0 %v9173
    %10476 = vmatmul.mubr.f32.gmra.mxu0 %v9172
    %v10477 = vpop.f32.mrf.mxu0
    %v10478 = vadd.f32 %v10093, %v10477
    %v10479 = vpop.f32.mrf.mxu0
    %10480 = vmatprep.mubr.f32.mxu0 %v9180
    %10481 = vmatmul.mubr.f32.gmra.mxu0 %v9179
    %v10482 = vpop.f32.mrf.mxu0
    %v10483 = vadd.f32 %v10098, %v10482
    %v10484 = vpop.f32.mrf.mxu0
    %10485 = vmatprep.mubr.f32.mxu0 %v9187
    %10486 = vmatmul.mubr.f32.gmra.mxu0 %v9186
    %v10487 = vpop.f32.mrf.mxu0
    %v10488 = vadd.f32 %v10103, %v10487
    %v10489 = vpop.f32.mrf.mxu0
    %10490 = vmatprep.mubr.f32.mxu0 %v9194
    %10491 = vmatmul.mubr.f32.gmra.mxu0 %v9193
    %v10492 = vpop.f32.mrf.mxu0
    %v10493 = vadd.f32 %v10108, %v10492
    %v10494 = vpop.f32.mrf.mxu0
    %10495 = vmatprep.mubr.f32.mxu0 %v9201
    %10496 = vmatmul.mubr.f32.gmra.mxu0 %v9200
    %v10497 = vpop.f32.mrf.mxu0
    %v10498 = vadd.f32 %v10113, %v10497
    %v10499 = vpop.f32.mrf.mxu0
    %10500 = vmatprep.mubr.f32.mxu0 %v9208
    %10501 = vmatmul.mubr.f32.gmra.mxu0 %v9207
    %v10502 = vpop.f32.mrf.mxu0
    %v10503 = vadd.f32 %v10118, %v10502
    %v10504 = vpop.f32.mrf.mxu0
    %10505 = vmatprep.mubr.f32.mxu0 %v9215
    %10506 = vmatmul.mubr.f32.gmra.mxu0 %v9214
    %v10507 = vpop.f32.mrf.mxu0
    %v10508 = vadd.f32 %v10123, %v10507
    %v10509 = vpop.f32.mrf.mxu0
    %10510 = vmatprep.mubr.f32.mxu0 %v9222
    %10511 = vmatmul.mubr.f32.gmra.mxu0 %v9221
    %v10512 = vpop.f32.mrf.mxu0
    %v10513 = vadd.f32 %v10128, %v10512
    %v10514 = vpop.f32.mrf.mxu0
    %10515 = vmatprep.mubr.f32.mxu0 %v9229
    %10516 = vmatmul.mubr.f32.gmra.mxu0 %v9228
    %v10517 = vpop.f32.mrf.mxu0
    %v10518 = vadd.f32 %v10133, %v10517
    %v10519 = vpop.f32.mrf.mxu0
    %10520 = vmatprep.mubr.f32.mxu0 %v9236
    %10521 = vmatmul.mubr.f32.gmra.mxu0 %v9235
    %v10522 = vpop.f32.mrf.mxu0
    %v10523 = vadd.f32 %v10138, %v10522
    %v10524 = vpop.f32.mrf.mxu0
    %10525 = vmatprep.mubr.f32.mxu0 %v9243
    %10526 = vmatmul.mubr.f32.gmra.mxu0 %v9242
    %v10527 = vpop.f32.mrf.mxu0
    %v10528 = vadd.f32 %v10143, %v10527
    %v10529 = vpop.f32.mrf.mxu0
    %10530 = vmatprep.mubr.f32.mxu0 %v9250
    %10531 = vmatmul.mubr.f32.gmra.mxu0 %v9249
    %v10532 = vpop.f32.mrf.mxu0
    %v10533 = vadd.f32 %v10148, %v10532
    %v10534 = vpop.f32.mrf.mxu0
    %10535 = vmatprep.mubr.f32.mxu0 %v9257
    %10536 = vmatmul.mubr.f32.gmra.mxu0 %v9256
    %v10537 = vpop.f32.mrf.mxu0
    %v10538 = vadd.f32 %v10153, %v10537
    %v10539 = vpop.f32.mrf.mxu0
    %10540 = vmatprep.mubr.f32.mxu0 %v9264
    %10541 = vmatmul.mubr.f32.gmra.mxu0 %v9263
    %v10542 = vpop.f32.mrf.mxu0
    %v10543 = vadd.f32 %v10158, %v10542
    %v10544 = vpop.f32.mrf.mxu0
    %10545 = vmatprep.mubr.f32.mxu0 %v9271
    %10546 = vmatmul.mubr.f32.gmra.mxu0 %v9270
    %v10547 = vpop.f32.mrf.mxu0
    %v10548 = vadd.f32 %v10163, %v10547
    %v10549 = vpop.f32.mrf.mxu0
    %10550 = vmatprep.mubr.f32.mxu0 %v9278
    %10551 = vmatmul.mubr.f32.gmra.mxu0 %v9277
    %v10552 = vpop.f32.mrf.mxu0
    %v10553 = vadd.f32 %v10168, %v10552
    %v10554 = vpop.f32.mrf.mxu0
    %10555 = vmatprep.mubr.f32.mxu0 %v9285
    %10556 = vmatmul.mubr.f32.gmra.mxu0 %v9284
    %v10557 = vpop.f32.mrf.mxu0
    %v10558 = vadd.f32 %v10173, %v10557
    %v10559 = vpop.f32.mrf.mxu0
    %10560 = vdwg.mxu0
    %10561 = vmatprep.subr.mxu0 0.0
    %10562 = vmatpush1.msra.mxu0 %v9398
    %10563 = vmatprep.subr.mxu0 0.0
    %10564 = vmatpush1.msra.mxu0 %v9397
    %10565 = vmatprep.subr.mxu0 0.0
    %10566 = vmatpush1.msra.mxu0 %v9396
    %10567 = vmatprep.subr.mxu0 0.0
    %10568 = vmatpush1.msra.mxu0 %v9395
    %10569 = vmatprep.subr.mxu0 0.0
    %10570 = vmatpush1.msra.mxu0 %v9394
    %10571 = vmatprep.subr.mxu0 0.0
    %10572 = vmatpush1.msra.mxu0 %v9393
    %10573 = vmatprep.subr.mxu0 0.0
    %10574 = vmatpush1.msra.mxu0 %v9392
    %10575 = vmatprep.subr.mxu0 0.0
    %10576 = vmatpush1.msra.mxu0 %v9391
    %10577 = vmatprep.subr.mxu0 0.0
    %10578 = vmatpush1.msra.mxu0 %v9390
    %10579 = vmatprep.subr.mxu0 0.0
    %10580 = vmatpush1.msra.mxu0 %v9389
    %10581 = vmatprep.subr.mxu0 0.0
    %10582 = vmatpush1.msra.mxu0 %v9388
    %10583 = vmatprep.subr.mxu0 0.0
    %10584 = vmatpush1.msra.mxu0 %v9387
    %10585 = vmatprep.subr.mxu0 0.0
    %10586 = vmatpush1.msra.mxu0 %v9386
    %10587 = vmatprep.subr.mxu0 0.0
    %10588 = vmatpush1.msra.mxu0 %v9385
    %10589 = vmatprep.subr.mxu0 0.0
    %10590 = vmatpush1.msra.mxu0 %v9384
    %10591 = vmatprep.subr.mxu0 0.0
    %10592 = vmatpush1.msra.mxu0 %v9383
    %10593 = vmatprep.subr.mxu0 0.0
    %10594 = vmatpush2.msra.mxu0 0.0
    %10595 = vmatprep.subr.mxu0 0.0
    %10596 = vmatpush2.msra.mxu0 0.0
    %10597 = vmatprep.subr.mxu0 0.0
    %10598 = vmatpush2.msra.mxu0 0.0
    %10599 = vmatprep.subr.mxu0 0.0
    %10600 = vmatpush2.msra.mxu0 0.0
    %10601 = vmatprep.subr.mxu0 0.0
    %10602 = vmatpush2.msra.mxu0 0.0
    %10603 = vmatprep.subr.mxu0 0.0
    %10604 = vmatpush2.msra.mxu0 0.0
    %10605 = vmatprep.subr.mxu0 0.0
    %10606 = vmatpush2.msra.mxu0 0.0
    %10607 = vmatprep.subr.mxu0 0.0
    %10608 = vmatpush2.msra.mxu0 0.0
    %10609 = vmatprep.subr.mxu0 0.0
    %10610 = vmatpush2.msra.mxu0 0.0
    %10611 = vmatprep.subr.mxu0 0.0
    %10612 = vmatpush2.msra.mxu0 0.0
    %10613 = vmatprep.subr.mxu0 0.0
    %10614 = vmatpush2.msra.mxu0 0.0
    %10615 = vmatprep.subr.mxu0 0.0
    %10616 = vmatpush2.msra.mxu0 0.0
    %10617 = vmatprep.subr.mxu0 0.0
    %10618 = vmatpush2.msra.mxu0 0.0
    %10619 = vmatprep.subr.mxu0 0.0
    %10620 = vmatpush2.msra.mxu0 0.0
    %10621 = vmatprep.subr.mxu0 0.0
    %10622 = vmatpush2.msra.mxu0 0.0
    %10623 = vmatprep.subr.mxu0 0.0
    %10624 = vmatpush2.msra.mxu0 0.0
    %10625 = vmatprep.mubr.f32.mxu0 0.0
    %10626 = vmatmul.mubr.f32.gmra.mxu0 %v8845
    %v10627 = vpop.f32.mrf.mxu0
    %v10628 = vadd.f32 %v10243, %v10627
    %v10629 = vpop.f32.mrf.mxu0
    %10630 = vmatprep.mubr.f32.mxu0 0.0
    %10631 = vmatmul.mubr.f32.gmra.mxu0 %v8852
    %v10632 = vpop.f32.mrf.mxu0
    %v10633 = vadd.f32 %v10248, %v10632
    %v10634 = vpop.f32.mrf.mxu0
    %10635 = vmatprep.mubr.f32.mxu0 0.0
    %10636 = vmatmul.mubr.f32.gmra.mxu0 %v8859
    %v10637 = vpop.f32.mrf.mxu0
    %v10638 = vadd.f32 %v10253, %v10637
    %v10639 = vpop.f32.mrf.mxu0
    %10640 = vmatprep.mubr.f32.mxu0 0.0
    %10641 = vmatmul.mubr.f32.gmra.mxu0 %v8866
    %v10642 = vpop.f32.mrf.mxu0
    %v10643 = vadd.f32 %v10258, %v10642
    %v10644 = vpop.f32.mrf.mxu0
    %10645 = vmatprep.mubr.f32.mxu0 0.0
    %10646 = vmatmul.mubr.f32.gmra.mxu0 %v8873
    %v10647 = vpop.f32.mrf.mxu0
    %v10648 = vadd.f32 %v10263, %v10647
    %v10649 = vpop.f32.mrf.mxu0
    %10650 = vmatprep.mubr.f32.mxu0 0.0
    %10651 = vmatmul.mubr.f32.gmra.mxu0 %v8880
    %v10652 = vpop.f32.mrf.mxu0
    %v10653 = vadd.f32 %v10268, %v10652
    %v10654 = vpop.f32.mrf.mxu0
    %10655 = vmatprep.mubr.f32.mxu0 0.0
    %10656 = vmatmul.mubr.f32.gmra.mxu0 %v8887
    %v10657 = vpop.f32.mrf.mxu0
    %v10658 = vadd.f32 %v10273, %v10657
    %v10659 = vpop.f32.mrf.mxu0
    %10660 = vmatprep.mubr.f32.mxu0 0.0
    %10661 = vmatmul.mubr.f32.gmra.mxu0 %v8894
    %v10662 = vpop.f32.mrf.mxu0
    %v10663 = vadd.f32 %v10278, %v10662
    %v10664 = vpop.f32.mrf.mxu0
    %10665 = vmatprep.mubr.f32.mxu0 0.0
    %10666 = vmatmul.mubr.f32.gmra.mxu0 %v8901
    %v10667 = vpop.f32.mrf.mxu0
    %v10668 = vadd.f32 %v10283, %v10667
    %v10669 = vpop.f32.mrf.mxu0
    %10670 = vmatprep.mubr.f32.mxu0 0.0
    %10671 = vmatmul.mubr.f32.gmra.mxu0 %v8908
    %v10672 = vpop.f32.mrf.mxu0
    %v10673 = vadd.f32 %v10288, %v10672
    %v10674 = vpop.f32.mrf.mxu0
    %10675 = vmatprep.mubr.f32.mxu0 0.0
    %10676 = vmatmul.mubr.f32.gmra.mxu0 %v8915
    %v10677 = vpop.f32.mrf.mxu0
    %v10678 = vadd.f32 %v10293, %v10677
    %v10679 = vpop.f32.mrf.mxu0
    %10680 = vmatprep.mubr.f32.mxu0 0.0
    %10681 = vmatmul.mubr.f32.gmra.mxu0 %v8922
    %v10682 = vpop.f32.mrf.mxu0
    %v10683 = vadd.f32 %v10298, %v10682
    %v10684 = vpop.f32.mrf.mxu0
    %10685 = vmatprep.mubr.f32.mxu0 0.0
    %10686 = vmatmul.mubr.f32.gmra.mxu0 %v8929
    %v10687 = vpop.f32.mrf.mxu0
    %v10688 = vadd.f32 %v10303, %v10687
    %v10689 = vpop.f32.mrf.mxu0
    %10690 = vmatprep.mubr.f32.mxu0 0.0
    %10691 = vmatmul.mubr.f32.gmra.mxu0 %v8936
    %v10692 = vpop.f32.mrf.mxu0
    %v10693 = vadd.f32 %v10308, %v10692
    %v10694 = vpop.f32.mrf.mxu0
    %10695 = vmatprep.mubr.f32.mxu0 0.0
    %10696 = vmatmul.mubr.f32.gmra.mxu0 %v8943
    %v10697 = vpop.f32.mrf.mxu0
    %v10698 = vadd.f32 %v10313, %v10697
    %v10699 = vpop.f32.mrf.mxu0
    %10700 = vmatprep.mubr.f32.mxu0 0.0
    %10701 = vmatmul.mubr.f32.gmra.mxu0 %v8950
    %v10702 = vpop.f32.mrf.mxu0
    %v10703 = vadd.f32 %v10318, %v10702
    %v10704 = vpop.f32.mrf.mxu0
    %10705 = vmatprep.mubr.f32.mxu0 0.0
    %10706 = vmatmul.mubr.f32.gmra.mxu0 %v8957
    %v10707 = vpop.f32.mrf.mxu0
    %v10708 = vadd.f32 %v10323, %v10707
    %v10709 = vpop.f32.mrf.mxu0
    %10710 = vmatprep.mubr.f32.mxu0 0.0
    %10711 = vmatmul.mubr.f32.gmra.mxu0 %v8964
    %v10712 = vpop.f32.mrf.mxu0
    %v10713 = vadd.f32 %v10328, %v10712
    %v10714 = vpop.f32.mrf.mxu0
    %10715 = vmatprep.mubr.f32.mxu0 0.0
    %10716 = vmatmul.mubr.f32.gmra.mxu0 %v8971
    %v10717 = vpop.f32.mrf.mxu0
    %v10718 = vadd.f32 %v10333, %v10717
    %v10719 = vpop.f32.mrf.mxu0
    %10720 = vmatprep.mubr.f32.mxu0 0.0
    %10721 = vmatmul.mubr.f32.gmra.mxu0 %v8978
    %v10722 = vpop.f32.mrf.mxu0
    %v10723 = vadd.f32 %v10338, %v10722
    %v10724 = vpop.f32.mrf.mxu0
    %10725 = vmatprep.mubr.f32.mxu0 0.0
    %10726 = vmatmul.mubr.f32.gmra.mxu0 %v8985
    %v10727 = vpop.f32.mrf.mxu0
    %v10728 = vadd.f32 %v10343, %v10727
    %v10729 = vpop.f32.mrf.mxu0
    %10730 = vmatprep.mubr.f32.mxu0 0.0
    %10731 = vmatmul.mubr.f32.gmra.mxu0 %v8992
    %v10732 = vpop.f32.mrf.mxu0
    %v10733 = vadd.f32 %v10348, %v10732
    %v10734 = vpop.f32.mrf.mxu0
    %10735 = vmatprep.mubr.f32.mxu0 0.0
    %10736 = vmatmul.mubr.f32.gmra.mxu0 %v8999
    %v10737 = vpop.f32.mrf.mxu0
    %v10738 = vadd.f32 %v10353, %v10737
    %v10739 = vpop.f32.mrf.mxu0
    %10740 = vmatprep.mubr.f32.mxu0 0.0
    %10741 = vmatmul.mubr.f32.gmra.mxu0 %v9006
    %v10742 = vpop.f32.mrf.mxu0
    %v10743 = vadd.f32 %v10358, %v10742
    %v10744 = vpop.f32.mrf.mxu0
    %10745 = vmatprep.mubr.f32.mxu0 0.0
    %10746 = vmatmul.mubr.f32.gmra.mxu0 %v9013
    %v10747 = vpop.f32.mrf.mxu0
    %v10748 = vadd.f32 %v10363, %v10747
    %v10749 = vpop.f32.mrf.mxu0
    %10750 = vmatprep.mubr.f32.mxu0 0.0
    %10751 = vmatmul.mubr.f32.gmra.mxu0 %v9020
    %v10752 = vpop.f32.mrf.mxu0
    %v10753 = vadd.f32 %v10368, %v10752
    %v10754 = vpop.f32.mrf.mxu0
    %10755 = vmatprep.mubr.f32.mxu0 0.0
    %10756 = vmatmul.mubr.f32.gmra.mxu0 %v9027
    %v10757 = vpop.f32.mrf.mxu0
    %v10758 = vadd.f32 %v10373, %v10757
    %v10759 = vpop.f32.mrf.mxu0
    %10760 = vmatprep.mubr.f32.mxu0 0.0
    %10761 = vmatmul.mubr.f32.gmra.mxu0 %v9034
    %v10762 = vpop.f32.mrf.mxu0
    %v10763 = vadd.f32 %v10378, %v10762
    %v10764 = vpop.f32.mrf.mxu0
    %10765 = vmatprep.mubr.f32.mxu0 0.0
    %10766 = vmatmul.mubr.f32.gmra.mxu0 %v9041
    %v10767 = vpop.f32.mrf.mxu0
    %v10768 = vadd.f32 %v10383, %v10767
    %v10769 = vpop.f32.mrf.mxu0
    %10770 = vmatprep.mubr.f32.mxu0 0.0
    %10771 = vmatmul.mubr.f32.gmra.mxu0 %v9048
    %v10772 = vpop.f32.mrf.mxu0
    %v10773 = vadd.f32 %v10388, %v10772
    %v10774 = vpop.f32.mrf.mxu0
    %10775 = vmatprep.mubr.f32.mxu0 0.0
    %10776 = vmatmul.mubr.f32.gmra.mxu0 %v9055
    %v10777 = vpop.f32.mrf.mxu0
    %v10778 = vadd.f32 %v10393, %v10777
    %v10779 = vpop.f32.mrf.mxu0
    %10780 = vmatprep.mubr.f32.mxu0 0.0
    %10781 = vmatmul.mubr.f32.gmra.mxu0 %v9062
    %v10782 = vpop.f32.mrf.mxu0
    %v10783 = vadd.f32 %v10398, %v10782
    %v10784 = vpop.f32.mrf.mxu0
    %10785 = vmatprep.mubr.f32.mxu0 0.0
    %10786 = vmatmul.mubr.f32.gmra.mxu0 %v9069
    %v10787 = vpop.f32.mrf.mxu0
    %v10788 = vadd.f32 %v10403, %v10787
    %v10789 = vpop.f32.mrf.mxu0
    %10790 = vmatprep.mubr.f32.mxu0 0.0
    %10791 = vmatmul.mubr.f32.gmra.mxu0 %v9076
    %v10792 = vpop.f32.mrf.mxu0
    %v10793 = vadd.f32 %v10408, %v10792
    %v10794 = vpop.f32.mrf.mxu0
    %10795 = vmatprep.mubr.f32.mxu0 0.0
    %10796 = vmatmul.mubr.f32.gmra.mxu0 %v9083
    %v10797 = vpop.f32.mrf.mxu0
    %v10798 = vadd.f32 %v10413, %v10797
    %v10799 = vpop.f32.mrf.mxu0
    %10800 = vmatprep.mubr.f32.mxu0 0.0
    %10801 = vmatmul.mubr.f32.gmra.mxu0 %v9090
    %v10802 = vpop.f32.mrf.mxu0
    %v10803 = vadd.f32 %v10418, %v10802
    %v10804 = vpop.f32.mrf.mxu0
    %10805 = vmatprep.mubr.f32.mxu0 0.0
    %10806 = vmatmul.mubr.f32.gmra.mxu0 %v9097
    %v10807 = vpop.f32.mrf.mxu0
    %v10808 = vadd.f32 %v10423, %v10807
    %v10809 = vpop.f32.mrf.mxu0
    %10810 = vmatprep.mubr.f32.mxu0 0.0
    %10811 = vmatmul.mubr.f32.gmra.mxu0 %v9104
    %v10812 = vpop.f32.mrf.mxu0
    %v10813 = vadd.f32 %v10428, %v10812
    %v10814 = vpop.f32.mrf.mxu0
    %10815 = vmatprep.mubr.f32.mxu0 0.0
    %10816 = vmatmul.mubr.f32.gmra.mxu0 %v9111
    %v10817 = vpop.f32.mrf.mxu0
    %v10818 = vadd.f32 %v10433, %v10817
    %v10819 = vpop.f32.mrf.mxu0
    %10820 = vmatprep.mubr.f32.mxu0 0.0
    %10821 = vmatmul.mubr.f32.gmra.mxu0 %v9118
    %v10822 = vpop.f32.mrf.mxu0
    %v10823 = vadd.f32 %v10438, %v10822
    %v10824 = vpop.f32.mrf.mxu0
    %10825 = vmatprep.mubr.f32.mxu0 0.0
    %10826 = vmatmul.mubr.f32.gmra.mxu0 %v9125
    %v10827 = vpop.f32.mrf.mxu0
    %v10828 = vadd.f32 %v10443, %v10827
    %v10829 = vpop.f32.mrf.mxu0
    %10830 = vmatprep.mubr.f32.mxu0 0.0
    %10831 = vmatmul.mubr.f32.gmra.mxu0 %v9132
    %v10832 = vpop.f32.mrf.mxu0
    %v10833 = vadd.f32 %v10448, %v10832
    %v10834 = vpop.f32.mrf.mxu0
    %10835 = vmatprep.mubr.f32.mxu0 0.0
    %10836 = vmatmul.mubr.f32.gmra.mxu0 %v9139
    %v10837 = vpop.f32.mrf.mxu0
    %v10838 = vadd.f32 %v10453, %v10837
    %v10839 = vpop.f32.mrf.mxu0
    %10840 = vmatprep.mubr.f32.mxu0 0.0
    %10841 = vmatmul.mubr.f32.gmra.mxu0 %v9146
    %v10842 = vpop.f32.mrf.mxu0
    %v10843 = vadd.f32 %v10458, %v10842
    %v10844 = vpop.f32.mrf.mxu0
    %10845 = vmatprep.mubr.f32.mxu0 0.0
    %10846 = vmatmul.mubr.f32.gmra.mxu0 %v9153
    %v10847 = vpop.f32.mrf.mxu0
    %v10848 = vadd.f32 %v10463, %v10847
    %v10849 = vpop.f32.mrf.mxu0
    %10850 = vmatprep.mubr.f32.mxu0 0.0
    %10851 = vmatmul.mubr.f32.gmra.mxu0 %v9160
    %v10852 = vpop.f32.mrf.mxu0
    %v10853 = vadd.f32 %v10468, %v10852
    %v10854 = vpop.f32.mrf.mxu0
    %10855 = vmatprep.mubr.f32.mxu0 0.0
    %10856 = vmatmul.mubr.f32.gmra.mxu0 %v9167
    %v10857 = vpop.f32.mrf.mxu0
    %v10858 = vadd.f32 %v10473, %v10857
    %v10859 = vpop.f32.mrf.mxu0
    %10860 = vmatprep.mubr.f32.mxu0 0.0
    %10861 = vmatmul.mubr.f32.gmra.mxu0 %v9174
    %v10862 = vpop.f32.mrf.mxu0
    %v10863 = vadd.f32 %v10478, %v10862
    %v10864 = vpop.f32.mrf.mxu0
    %10865 = vmatprep.mubr.f32.mxu0 0.0
    %10866 = vmatmul.mubr.f32.gmra.mxu0 %v9181
    %v10867 = vpop.f32.mrf.mxu0
    %v10868 = vadd.f32 %v10483, %v10867
    %v10869 = vpop.f32.mrf.mxu0
    %10870 = vmatprep.mubr.f32.mxu0 0.0
    %10871 = vmatmul.mubr.f32.gmra.mxu0 %v9188
    %v10872 = vpop.f32.mrf.mxu0
    %v10873 = vadd.f32 %v10488, %v10872
    %v10874 = vpop.f32.mrf.mxu0
    %10875 = vmatprep.mubr.f32.mxu0 0.0
    %10876 = vmatmul.mubr.f32.gmra.mxu0 %v9195
    %v10877 = vpop.f32.mrf.mxu0
    %v10878 = vadd.f32 %v10493, %v10877
    %v10879 = vpop.f32.mrf.mxu0
    %10880 = vmatprep.mubr.f32.mxu0 0.0
    %10881 = vmatmul.mubr.f32.gmra.mxu0 %v9202
    %v10882 = vpop.f32.mrf.mxu0
    %v10883 = vadd.f32 %v10498, %v10882
    %v10884 = vpop.f32.mrf.mxu0
    %10885 = vmatprep.mubr.f32.mxu0 0.0
    %10886 = vmatmul.mubr.f32.gmra.mxu0 %v9209
    %v10887 = vpop.f32.mrf.mxu0
    %v10888 = vadd.f32 %v10503, %v10887
    %v10889 = vpop.f32.mrf.mxu0
    %10890 = vmatprep.mubr.f32.mxu0 0.0
    %10891 = vmatmul.mubr.f32.gmra.mxu0 %v9216
    %v10892 = vpop.f32.mrf.mxu0
    %v10893 = vadd.f32 %v10508, %v10892
    %v10894 = vpop.f32.mrf.mxu0
    %10895 = vmatprep.mubr.f32.mxu0 0.0
    %10896 = vmatmul.mubr.f32.gmra.mxu0 %v9223
    %v10897 = vpop.f32.mrf.mxu0
    %v10898 = vadd.f32 %v10513, %v10897
    %v10899 = vpop.f32.mrf.mxu0
    %10900 = vmatprep.mubr.f32.mxu0 0.0
    %10901 = vmatmul.mubr.f32.gmra.mxu0 %v9230
    %v10902 = vpop.f32.mrf.mxu0
    %v10903 = vadd.f32 %v10518, %v10902
    %v10904 = vpop.f32.mrf.mxu0
    %10905 = vmatprep.mubr.f32.mxu0 0.0
    %10906 = vmatmul.mubr.f32.gmra.mxu0 %v9237
    %v10907 = vpop.f32.mrf.mxu0
    %v10908 = vadd.f32 %v10523, %v10907
    %v10909 = vpop.f32.mrf.mxu0
    %10910 = vmatprep.mubr.f32.mxu0 0.0
    %10911 = vmatmul.mubr.f32.gmra.mxu0 %v9244
    %v10912 = vpop.f32.mrf.mxu0
    %v10913 = vadd.f32 %v10528, %v10912
    %v10914 = vpop.f32.mrf.mxu0
    %10915 = vmatprep.mubr.f32.mxu0 0.0
    %10916 = vmatmul.mubr.f32.gmra.mxu0 %v9251
    %v10917 = vpop.f32.mrf.mxu0
    %v10918 = vadd.f32 %v10533, %v10917
    %v10919 = vpop.f32.mrf.mxu0
    %10920 = vmatprep.mubr.f32.mxu0 0.0
    %10921 = vmatmul.mubr.f32.gmra.mxu0 %v9258
    %v10922 = vpop.f32.mrf.mxu0
    %v10923 = vadd.f32 %v10538, %v10922
    %v10924 = vpop.f32.mrf.mxu0
    %10925 = vmatprep.mubr.f32.mxu0 0.0
    %10926 = vmatmul.mubr.f32.gmra.mxu0 %v9265
    %v10927 = vpop.f32.mrf.mxu0
    %v10928 = vadd.f32 %v10543, %v10927
    %v10929 = vpop.f32.mrf.mxu0
    %10930 = vmatprep.mubr.f32.mxu0 0.0
    %10931 = vmatmul.mubr.f32.gmra.mxu0 %v9272
    %v10932 = vpop.f32.mrf.mxu0
    %v10933 = vadd.f32 %v10548, %v10932
    %v10934 = vpop.f32.mrf.mxu0
    %10935 = vmatprep.mubr.f32.mxu0 0.0
    %10936 = vmatmul.mubr.f32.gmra.mxu0 %v9279
    %v10937 = vpop.f32.mrf.mxu0
    %v10938 = vadd.f32 %v10553, %v10937
    %v10939 = vpop.f32.mrf.mxu0
    %10940 = vmatprep.mubr.f32.mxu0 0.0
    %10941 = vmatmul.mubr.f32.gmra.mxu0 %v9286
    %v10942 = vpop.f32.mrf.mxu0
    %v10943 = vadd.f32 %v10558, %v10942
    %v10944 = vpop.f32.mrf.mxu0
    %10945 = vdwg.mxu0
    %v10946 = vmax.f32 %v10628, 0.0
    %v10947 = vmax.f32 %v10633, 0.0
    %v10948 = vmax.f32 %v10638, 0.0
    %v10949 = vmax.f32 %v10643, 0.0
    %v10950 = vmax.f32 %v10648, 0.0
    %v10951 = vmax.f32 %v10653, 0.0
    %v10952 = vmax.f32 %v10658, 0.0
    %v10953 = vmax.f32 %v10663, 0.0
    %v10954 = vmax.f32 %v10668, 0.0
    %v10955 = vmax.f32 %v10673, 0.0
    %v10956 = vmax.f32 %v10678, 0.0
    %v10957 = vmax.f32 %v10683, 0.0
    %v10958 = vmax.f32 %v10688, 0.0
    %v10959 = vmax.f32 %v10693, 0.0
    %v10960 = vmax.f32 %v10698, 0.0
    %v10961 = vmax.f32 %v10703, 0.0
    %v10962 = vmax.f32 %v10708, 0.0
    %v10963 = vmax.f32 %v10713, 0.0
    %v10964 = vmax.f32 %v10718, 0.0
    %v10965 = vmax.f32 %v10723, 0.0
    %v10966 = vmax.f32 %v10728, 0.0
    %v10967 = vmax.f32 %v10733, 0.0
    %v10968 = vmax.f32 %v10738, 0.0
    %v10969 = vmax.f32 %v10743, 0.0
    %v10970 = vmax.f32 %v10748, 0.0
    %v10971 = vmax.f32 %v10753, 0.0
    %v10972 = vmax.f32 %v10758, 0.0
    %v10973 = vmax.f32 %v10763, 0.0
    %v10974 = vmax.f32 %v10768, 0.0
    %v10975 = vmax.f32 %v10773, 0.0
    %v10976 = vmax.f32 %v10778, 0.0
    %v10977 = vmax.f32 %v10783, 0.0
    %v10978 = vmax.f32 %v10788, 0.0
    %v10979 = vmax.f32 %v10793, 0.0
    %v10980 = vmax.f32 %v10798, 0.0
    %v10981 = vmax.f32 %v10803, 0.0
    %v10982 = vmax.f32 %v10808, 0.0
    %v10983 = vmax.f32 %v10813, 0.0
    %v10984 = vmax.f32 %v10818, 0.0
    %v10985 = vmax.f32 %v10823, 0.0
    %v10986 = vmax.f32 %v10828, 0.0
    %v10987 = vmax.f32 %v10833, 0.0
    %v10988 = vmax.f32 %v10838, 0.0
    %v10989 = vmax.f32 %v10843, 0.0
    %v10990 = vmax.f32 %v10848, 0.0
    %v10991 = vmax.f32 %v10853, 0.0
    %v10992 = vmax.f32 %v10858, 0.0
    %v10993 = vmax.f32 %v10863, 0.0
    %v10994 = vmax.f32 %v10868, 0.0
    %v10995 = vmax.f32 %v10873, 0.0
    %v10996 = vmax.f32 %v10878, 0.0
    %v10997 = vmax.f32 %v10883, 0.0
    %v10998 = vmax.f32 %v10888, 0.0
    %v10999 = vmax.f32 %v10893, 0.0
    %v11000 = vmax.f32 %v10898, 0.0
    %v11001 = vmax.f32 %v10903, 0.0
    %v11002 = vmax.f32 %v10908, 0.0
    %v11003 = vmax.f32 %v10913, 0.0
    %v11004 = vmax.f32 %v10918, 0.0
    %v11005 = vmax.f32 %v10923, 0.0
    %v11006 = vmax.f32 %v10928, 0.0
    %v11007 = vmax.f32 %v10933, 0.0
    %v11008 = vmax.f32 %v10938, 0.0
    %v11009 = vmax.f32 %v10943, 0.0
    %v11010 = vsel %vm96, %v10946, -inf
    %v11011 = vsel %vm96, %v10948, -inf
    %v11012 = vmax.f32 %v11010, %v11011
    %v11013 = vsel %vm96, %v10947, -inf
    %v11014 = vsel %vm96, %v10949, -inf
    %v11015 = vmax.f32 %v11013, %v11014
    %v11016 = vsel %vm96, %v10950, -inf
    %v11017 = vsel %vm96, %v10952, -inf
    %v11018 = vmax.f32 %v11016, %v11017
    %v11019 = vsel %vm96, %v10951, -inf
    %v11020 = vsel %vm96, %v10953, -inf
    %v11021 = vmax.f32 %v11019, %v11020
    %v11022 = vsel %vm96, %v10954, -inf
    %v11023 = vsel %vm96, %v10956, -inf
    %v11024 = vmax.f32 %v11022, %v11023
    %v11025 = vsel %vm96, %v10955, -inf
    %v11026 = vsel %vm96, %v10957, -inf
    %v11027 = vmax.f32 %v11025, %v11026
    %v11028 = vsel %vm96, %v10958, -inf
    %v11029 = vsel %vm96, %v10960, -inf
    %v11030 = vmax.f32 %v11028, %v11029
    %v11031 = vsel %vm96, %v10959, -inf
    %v11032 = vsel %vm96, %v10961, -inf
    %v11033 = vmax.f32 %v11031, %v11032
    %v11034 = vsel %vm96, %v10962, -inf
    %v11035 = vsel %vm96, %v10964, -inf
    %v11036 = vmax.f32 %v11034, %v11035
    %v11037 = vsel %vm96, %v10963, -inf
    %v11038 = vsel %vm96, %v10965, -inf
    %v11039 = vmax.f32 %v11037, %v11038
    %v11040 = vsel %vm96, %v10966, -inf
    %v11041 = vsel %vm96, %v10968, -inf
    %v11042 = vmax.f32 %v11040, %v11041
    %v11043 = vsel %vm96, %v10967, -inf
    %v11044 = vsel %vm96, %v10969, -inf
    %v11045 = vmax.f32 %v11043, %v11044
    %v11046 = vsel %vm96, %v10970, -inf
    %v11047 = vsel %vm96, %v10972, -inf
    %v11048 = vmax.f32 %v11046, %v11047
    %v11049 = vsel %vm96, %v10971, -inf
    %v11050 = vsel %vm96, %v10973, -inf
    %v11051 = vmax.f32 %v11049, %v11050
    %v11052 = vsel %vm96, %v10974, -inf
    %v11053 = vsel %vm96, %v10976, -inf
    %v11054 = vmax.f32 %v11052, %v11053
    %v11055 = vsel %vm96, %v10975, -inf
    %v11056 = vsel %vm96, %v10977, -inf
    %v11057 = vmax.f32 %v11055, %v11056
    %v11058 = vsel %vm96, %v10978, -inf
    %v11059 = vsel %vm96, %v10980, -inf
    %v11060 = vmax.f32 %v11058, %v11059
    %v11061 = vsel %vm96, %v10979, -inf
    %v11062 = vsel %vm96, %v10981, -inf
    %v11063 = vmax.f32 %v11061, %v11062
    %v11064 = vsel %vm96, %v10982, -inf
    %v11065 = vsel %vm96, %v10984, -inf
    %v11066 = vmax.f32 %v11064, %v11065
    %v11067 = vsel %vm96, %v10983, -inf
    %v11068 = vsel %vm96, %v10985, -inf
    %v11069 = vmax.f32 %v11067, %v11068
    %v11070 = vsel %vm96, %v10986, -inf
    %v11071 = vsel %vm96, %v10988, -inf
    %v11072 = vmax.f32 %v11070, %v11071
    %v11073 = vsel %vm96, %v10987, -inf
    %v11074 = vsel %vm96, %v10989, -inf
    %v11075 = vmax.f32 %v11073, %v11074
    %v11076 = vsel %vm96, %v10990, -inf
    %v11077 = vsel %vm96, %v10992, -inf
    %v11078 = vmax.f32 %v11076, %v11077
    %v11079 = vsel %vm96, %v10991, -inf
    %v11080 = vsel %vm96, %v10993, -inf
    %v11081 = vmax.f32 %v11079, %v11080
    %v11082 = vsel %vm96, %v10994, -inf
    %v11083 = vsel %vm96, %v10996, -inf
    %v11084 = vmax.f32 %v11082, %v11083
    %v11085 = vsel %vm96, %v10995, -inf
    %v11086 = vsel %vm96, %v10997, -inf
    %v11087 = vmax.f32 %v11085, %v11086
    %v11088 = vsel %vm96, %v10998, -inf
    %v11089 = vsel %vm96, %v11000, -inf
    %v11090 = vmax.f32 %v11088, %v11089
    %v11091 = vsel %vm96, %v10999, -inf
    %v11092 = vsel %vm96, %v11001, -inf
    %v11093 = vmax.f32 %v11091, %v11092
    %v11094 = vsel %vm96, %v11002, -inf
    %v11095 = vsel %vm96, %v11004, -inf
    %v11096 = vmax.f32 %v11094, %v11095
    %v11097 = vsel %vm96, %v11003, -inf
    %v11098 = vsel %vm96, %v11005, -inf
    %v11099 = vmax.f32 %v11097, %v11098
    %v11100 = vsel %vm96, %v11006, -inf
    %v11101 = vsel %vm96, %v11008, -inf
    %v11102 = vmax.f32 %v11100, %v11101
    %v11103 = vsel %vm96, %v11007, -inf
    %v11104 = vsel %vm96, %v11009, -inf
    %v11105 = vmax.f32 %v11103, %v11104
    %v11122 = vrot.slane %v11012, 1
    %v11123 = vrot.slane %v11018, 1
    %v11124 = vrot.slane %v11024, 1
    %v11125 = vrot.slane %v11030, 1
    %v11126 = vrot.slane %v11036, 1
    %v11127 = vrot.slane %v11042, 1
    %v11128 = vrot.slane %v11048, 1
    %v11129 = vrot.slane %v11054, 1
    %v11130 = vrot.slane %v11060, 1
    %v11131 = vrot.slane %v11066, 1
    %v11132 = vrot.slane %v11072, 1
    %v11133 = vrot.slane %v11078, 1
    %v11134 = vrot.slane %v11084, 1
    %v11135 = vrot.slane %v11090, 1
    %v11136 = vrot.slane %v11096, 1
    %v11137 = vrot.slane %v11102, 1
    %v11154 = vmax.f32 %v11012, %v11122
    %v11155 = vmax.f32 %v11018, %v11123
    %v11156 = vmax.f32 %v11024, %v11124
    %v11157 = vmax.f32 %v11030, %v11125
    %v11158 = vmax.f32 %v11036, %v11126
    %v11159 = vmax.f32 %v11042, %v11127
    %v11160 = vmax.f32 %v11048, %v11128
    %v11161 = vmax.f32 %v11054, %v11129
    %v11162 = vmax.f32 %v11060, %v11130
    %v11163 = vmax.f32 %v11066, %v11131
    %v11164 = vmax.f32 %v11072, %v11132
    %v11165 = vmax.f32 %v11078, %v11133
    %v11166 = vmax.f32 %v11084, %v11134
    %v11167 = vmax.f32 %v11090, %v11135
    %v11168 = vmax.f32 %v11096, %v11136
    %v11169 = vmax.f32 %v11102, %v11137
    %v11186 = vrot.slane %v11015, 1
    %v11187 = vrot.slane %v11021, 1
    %v11188 = vrot.slane %v11027, 1
    %v11189 = vrot.slane %v11033, 1
    %v11190 = vrot.slane %v11039, 1
    %v11191 = vrot.slane %v11045, 1
    %v11192 = vrot.slane %v11051, 1
    %v11193 = vrot.slane %v11057, 1
    %v11194 = vrot.slane %v11063, 1
    %v11195 = vrot.slane %v11069, 1
    %v11196 = vrot.slane %v11075, 1
    %v11197 = vrot.slane %v11081, 1
    %v11198 = vrot.slane %v11087, 1
    %v11199 = vrot.slane %v11093, 1
    %v11200 = vrot.slane %v11099, 1
    %v11201 = vrot.slane %v11105, 1
    %v11218 = vmax.f32 %v11015, %v11186
    %v11219 = vmax.f32 %v11021, %v11187
    %v11220 = vmax.f32 %v11027, %v11188
    %v11221 = vmax.f32 %v11033, %v11189
    %v11222 = vmax.f32 %v11039, %v11190
    %v11223 = vmax.f32 %v11045, %v11191
    %v11224 = vmax.f32 %v11051, %v11192
    %v11225 = vmax.f32 %v11057, %v11193
    %v11226 = vmax.f32 %v11063, %v11194
    %v11227 = vmax.f32 %v11069, %v11195
    %v11228 = vmax.f32 %v11075, %v11196
    %v11229 = vmax.f32 %v11081, %v11197
    %v11230 = vmax.f32 %v11087, %v11198
    %v11231 = vmax.f32 %v11093, %v11199
    %v11232 = vmax.f32 %v11099, %v11200
    %v11233 = vmax.f32 %v11105, %v11201
    %v11250 = vrot.slane %v11155, 7
    %vm11251 = vcmask 1041409
    %v11252 = vsel %vm11251, %v11250, %v11154
    %v11253 = vrot.slane %v11156, 6
    %vm11254 = vcmask 1042434
    %v11255 = vsel %vm11254, %v11253, %v11252
    %v11256 = vrot.slane %v11157, 5
    %vm11257 = vcmask 1043459
    %v11258 = vsel %vm11257, %v11256, %v11255
    %v11259 = vrot.slane %v11158, 4
    %vm11260 = vcmask 1044484
    %v11261 = vsel %vm11260, %v11259, %v11258
    %v11262 = vrot.slane %v11159, 3
    %vm11263 = vcmask 1045509
    %v11264 = vsel %vm11263, %v11262, %v11261
    %v11265 = vrot.slane %v11160, 2
    %vm11266 = vcmask 1046534
    %v11267 = vsel %vm11266, %v11265, %v11264
    %v11268 = vrot.slane %v11161, 1
    %vm11269 = vcmask 1047559
    %v11270 = vsel %vm11269, %v11268, %v11267
    %v11271 = vrot.slane %v11163, 7
    %v11272 = vsel %vm11251, %v11271, %v11162
    %v11273 = vrot.slane %v11164, 6
    %v11274 = vsel %vm11254, %v11273, %v11272
    %v11275 = vrot.slane %v11165, 5
    %v11276 = vsel %vm11257, %v11275, %v11274
    %v11277 = vrot.slane %v11166, 4
    %v11278 = vsel %vm11260, %v11277, %v11276
    %v11279 = vrot.slane %v11167, 3
    %v11280 = vsel %vm11263, %v11279, %v11278
    %v11281 = vrot.slane %v11168, 2
    %v11282 = vsel %vm11266, %v11281, %v11280
    %v11283 = vrot.slane %v11169, 1
    %v11284 = vsel %vm11269, %v11283, %v11282
    %v11287 = vrot.slane %v11154, 2
    %v11288 = vrot.slane %v11155, 1
    %v11289 = vsel %vm11251, %v11288, %v11287
    %v11290 = vsel %vm11254, %v11156, %v11289
    %v11291 = vrot.slane %v11157, 7
    %v11292 = vsel %vm11257, %v11291, %v11290
    %v11293 = vrot.slane %v11158, 6
    %v11294 = vsel %vm11260, %v11293, %v11292
    %v11295 = vrot.slane %v11159, 5
    %v11296 = vsel %vm11263, %v11295, %v11294
    %v11297 = vrot.slane %v11160, 4
    %v11298 = vsel %vm11266, %v11297, %v11296
    %v11299 = vrot.slane %v11161, 3
    %v11300 = vsel %vm11269, %v11299, %v11298
    %v11301 = vrot.slane %v11162, 2
    %v11302 = vrot.slane %v11163, 1
    %v11303 = vsel %vm11251, %v11302, %v11301
    %v11304 = vsel %vm11254, %v11164, %v11303
    %v11305 = vrot.slane %v11165, 7
    %v11306 = vsel %vm11257, %v11305, %v11304
    %v11307 = vrot.slane %v11166, 6
    %v11308 = vsel %vm11260, %v11307, %v11306
    %v11309 = vrot.slane %v11167, 5
    %v11310 = vsel %vm11263, %v11309, %v11308
    %v11311 = vrot.slane %v11168, 4
    %v11312 = vsel %vm11266, %v11311, %v11310
    %v11313 = vrot.slane %v11169, 3
    %v11314 = vsel %vm11269, %v11313, %v11312
    %11315 = vrot.lane.b32.xlu0 %v11300, 32
    %v11316 = vpop.permute.xlu0 %11315
    %11317 = vrot.lane.b32.xlu0 %v11314, 32
    %v11318 = vpop.permute.xlu0 %11317
    %v11321 = vrot.slane %v11154, 4
    %v11322 = vrot.slane %v11155, 3
    %v11323 = vsel %vm11251, %v11322, %v11321
    %v11324 = vrot.slane %v11156, 2
    %v11325 = vsel %vm11254, %v11324, %v11323
    %v11326 = vrot.slane %v11157, 1
    %v11327 = vsel %vm11257, %v11326, %v11325
    %v11328 = vsel %vm11260, %v11158, %v11327
    %v11329 = vrot.slane %v11159, 7
    %v11330 = vsel %vm11263, %v11329, %v11328
    %v11331 = vrot.slane %v11160, 6
    %v11332 = vsel %vm11266, %v11331, %v11330
    %v11333 = vrot.slane %v11161, 5
    %v11334 = vsel %vm11269, %v11333, %v11332
    %v11335 = vrot.slane %v11162, 4
    %v11336 = vrot.slane %v11163, 3
    %v11337 = vsel %vm11251, %v11336, %v11335
    %v11338 = vrot.slane %v11164, 2
    %v11339 = vsel %vm11254, %v11338, %v11337
    %v11340 = vrot.slane %v11165, 1
    %v11341 = vsel %vm11257, %v11340, %v11339
    %v11342 = vsel %vm11260, %v11166, %v11341
    %v11343 = vrot.slane %v11167, 7
    %v11344 = vsel %vm11263, %v11343, %v11342
    %v11345 = vrot.slane %v11168, 6
    %v11346 = vsel %vm11266, %v11345, %v11344
    %v11347 = vrot.slane %v11169, 5
    %v11348 = vsel %vm11269, %v11347, %v11346
    %11349 = vrot.lane.b32.xlu0 %v11334, 64
    %v11350 = vpop.permute.xlu0 %11349
    %11351 = vrot.lane.b32.xlu0 %v11348, 64
    %v11352 = vpop.permute.xlu0 %11351
    %v11355 = vrot.slane %v11154, 6
    %v11356 = vrot.slane %v11155, 5
    %v11357 = vsel %vm11251, %v11356, %v11355
    %v11358 = vrot.slane %v11156, 4
    %v11359 = vsel %vm11254, %v11358, %v11357
    %v11360 = vrot.slane %v11157, 3
    %v11361 = vsel %vm11257, %v11360, %v11359
    %v11362 = vrot.slane %v11158, 2
    %v11363 = vsel %vm11260, %v11362, %v11361
    %v11364 = vrot.slane %v11159, 1
    %v11365 = vsel %vm11263, %v11364, %v11363
    %v11366 = vsel %vm11266, %v11160, %v11365
    %v11367 = vrot.slane %v11161, 7
    %v11368 = vsel %vm11269, %v11367, %v11366
    %v11369 = vrot.slane %v11162, 6
    %v11370 = vrot.slane %v11163, 5
    %v11371 = vsel %vm11251, %v11370, %v11369
    %v11372 = vrot.slane %v11164, 4
    %v11373 = vsel %vm11254, %v11372, %v11371
    %v11374 = vrot.slane %v11165, 3
    %v11375 = vsel %vm11257, %v11374, %v11373
    %v11376 = vrot.slane %v11166, 2
    %v11377 = vsel %vm11260, %v11376, %v11375
    %v11378 = vrot.slane %v11167, 1
    %v11379 = vsel %vm11263, %v11378, %v11377
    %v11380 = vsel %vm11266, %v11168, %v11379
    %v11381 = vrot.slane %v11169, 7
    %v11382 = vsel %vm11269, %v11381, %v11380
    %11383 = vrot.lane.b32.xlu0 %v11368, 96
    %v11384 = vpop.permute.xlu0 %11383
    %11385 = vrot.lane.b32.xlu0 %v11382, 96
    %v11386 = vpop.permute.xlu0 %11385
    %v11405 = vrot.slane %v11219, 7
    %v11406 = vsel %vm11251, %v11405, %v11218
    %v11407 = vrot.slane %v11220, 6
    %v11408 = vsel %vm11254, %v11407, %v11406
    %v11409 = vrot.slane %v11221, 5
    %v11410 = vsel %vm11257, %v11409, %v11408
    %v11411 = vrot.slane %v11222, 4
    %v11412 = vsel %vm11260, %v11411, %v11410
    %v11413 = vrot.slane %v11223, 3
    %v11414 = vsel %vm11263, %v11413, %v11412
    %v11415 = vrot.slane %v11224, 2
    %v11416 = vsel %vm11266, %v11415, %v11414
    %v11417 = vrot.slane %v11225, 1
    %v11418 = vsel %vm11269, %v11417, %v11416
    %v11419 = vrot.slane %v11227, 7
    %v11420 = vsel %vm11251, %v11419, %v11226
    %v11421 = vrot.slane %v11228, 6
    %v11422 = vsel %vm11254, %v11421, %v11420
    %v11423 = vrot.slane %v11229, 5
    %v11424 = vsel %vm11257, %v11423, %v11422
    %v11425 = vrot.slane %v11230, 4
    %v11426 = vsel %vm11260, %v11425, %v11424
    %v11427 = vrot.slane %v11231, 3
    %v11428 = vsel %vm11263, %v11427, %v11426
    %v11429 = vrot.slane %v11232, 2
    %v11430 = vsel %vm11266, %v11429, %v11428
    %v11431 = vrot.slane %v11233, 1
    %v11432 = vsel %vm11269, %v11431, %v11430
    %v11435 = vrot.slane %v11218, 2
    %v11436 = vrot.slane %v11219, 1
    %v11437 = vsel %vm11251, %v11436, %v11435
    %v11438 = vsel %vm11254, %v11220, %v11437
    %v11439 = vrot.slane %v11221, 7
    %v11440 = vsel %vm11257, %v11439, %v11438
    %v11441 = vrot.slane %v11222, 6
    %v11442 = vsel %vm11260, %v11441, %v11440
    %v11443 = vrot.slane %v11223, 5
    %v11444 = vsel %vm11263, %v11443, %v11442
    %v11445 = vrot.slane %v11224, 4
    %v11446 = vsel %vm11266, %v11445, %v11444
    %v11447 = vrot.slane %v11225, 3
    %v11448 = vsel %vm11269, %v11447, %v11446
    %v11449 = vrot.slane %v11226, 2
    %v11450 = vrot.slane %v11227, 1
    %v11451 = vsel %vm11251, %v11450, %v11449
    %v11452 = vsel %vm11254, %v11228, %v11451
    %v11453 = vrot.slane %v11229, 7
    %v11454 = vsel %vm11257, %v11453, %v11452
    %v11455 = vrot.slane %v11230, 6
    %v11456 = vsel %vm11260, %v11455, %v11454
    %v11457 = vrot.slane %v11231, 5
    %v11458 = vsel %vm11263, %v11457, %v11456
    %v11459 = vrot.slane %v11232, 4
    %v11460 = vsel %vm11266, %v11459, %v11458
    %v11461 = vrot.slane %v11233, 3
    %v11462 = vsel %vm11269, %v11461, %v11460
    %11463 = vrot.lane.b32.xlu0 %v11448, 32
    %v11464 = vpop.permute.xlu0 %11463
    %11465 = vrot.lane.b32.xlu0 %v11462, 32
    %v11466 = vpop.permute.xlu0 %11465
    %v11469 = vrot.slane %v11218, 4
    %v11470 = vrot.slane %v11219, 3
    %v11471 = vsel %vm11251, %v11470, %v11469
    %v11472 = vrot.slane %v11220, 2
    %v11473 = vsel %vm11254, %v11472, %v11471
    %v11474 = vrot.slane %v11221, 1
    %v11475 = vsel %vm11257, %v11474, %v11473
    %v11476 = vsel %vm11260, %v11222, %v11475
    %v11477 = vrot.slane %v11223, 7
    %v11478 = vsel %vm11263, %v11477, %v11476
    %v11479 = vrot.slane %v11224, 6
    %v11480 = vsel %vm11266, %v11479, %v11478
    %v11481 = vrot.slane %v11225, 5
    %v11482 = vsel %vm11269, %v11481, %v11480
    %v11483 = vrot.slane %v11226, 4
    %v11484 = vrot.slane %v11227, 3
    %v11485 = vsel %vm11251, %v11484, %v11483
    %v11486 = vrot.slane %v11228, 2
    %v11487 = vsel %vm11254, %v11486, %v11485
    %v11488 = vrot.slane %v11229, 1
    %v11489 = vsel %vm11257, %v11488, %v11487
    %v11490 = vsel %vm11260, %v11230, %v11489
    %v11491 = vrot.slane %v11231, 7
    %v11492 = vsel %vm11263, %v11491, %v11490
    %v11493 = vrot.slane %v11232, 6
    %v11494 = vsel %vm11266, %v11493, %v11492
    %v11495 = vrot.slane %v11233, 5
    %v11496 = vsel %vm11269, %v11495, %v11494
    %11497 = vrot.lane.b32.xlu0 %v11482, 64
    %v11498 = vpop.permute.xlu0 %11497
    %11499 = vrot.lane.b32.xlu0 %v11496, 64
    %v11500 = vpop.permute.xlu0 %11499
    %v11503 = vrot.slane %v11218, 6
    %v11504 = vrot.slane %v11219, 5
    %v11505 = vsel %vm11251, %v11504, %v11503
    %v11506 = vrot.slane %v11220, 4
    %v11507 = vsel %vm11254, %v11506, %v11505
    %v11508 = vrot.slane %v11221, 3
    %v11509 = vsel %vm11257, %v11508, %v11507
    %v11510 = vrot.slane %v11222, 2
    %v11511 = vsel %vm11260, %v11510, %v11509
    %v11512 = vrot.slane %v11223, 1
    %v11513 = vsel %vm11263, %v11512, %v11511
    %v11514 = vsel %vm11266, %v11224, %v11513
    %v11515 = vrot.slane %v11225, 7
    %v11516 = vsel %vm11269, %v11515, %v11514
    %v11517 = vrot.slane %v11226, 6
    %v11518 = vrot.slane %v11227, 5
    %v11519 = vsel %vm11251, %v11518, %v11517
    %v11520 = vrot.slane %v11228, 4
    %v11521 = vsel %vm11254, %v11520, %v11519
    %v11522 = vrot.slane %v11229, 3
    %v11523 = vsel %vm11257, %v11522, %v11521
    %v11524 = vrot.slane %v11230, 2
    %v11525 = vsel %vm11260, %v11524, %v11523
    %v11526 = vrot.slane %v11231, 1
    %v11527 = vsel %vm11263, %v11526, %v11525
    %v11528 = vsel %vm11266, %v11232, %v11527
    %v11529 = vrot.slane %v11233, 7
    %v11530 = vsel %vm11269, %v11529, %v11528
    %11531 = vrot.lane.b32.xlu0 %v11516, 96
    %v11532 = vpop.permute.xlu0 %11531
    %11533 = vrot.lane.b32.xlu0 %v11530, 96
    %v11534 = vpop.permute.xlu0 %11533
    %v11537 = vsel %vm96, %v11270, %v11316
    %v11538 = vsel %vm96, %v11284, %v11318
    %v11539 = vsel %vm4671, %v11537, %v11350
    %v11540 = vsel %vm4671, %v11538, %v11352
    %v11541 = vsel %vm4736, %v11539, %v11384
    %v11542 = vsel %vm4736, %v11540, %v11386
    %v11543 = vsel %vm96, %v11418, %v11464
    %v11544 = vsel %vm96, %v11432, %v11466
    %v11545 = vsel %vm4671, %v11543, %v11498
    %v11546 = vsel %vm4671, %v11544, %v11500
    %v11547 = vsel %vm4736, %v11545, %v11532
    %v11548 = vsel %vm4736, %v11546, %v11534
    %11549 = vst [vmem:[#allocation3] sm:$0xff] %v11541
    %11550 = vst [vmem:[#allocation3 + $0x8] sm:$0xff] %v11547
    %11551 = vst [vmem:[#allocation3 + $0x10] sm:$0xff] %v11542
    %11552 = vst [vmem:[#allocation3 + $0x18] sm:$0xff] %v11548
    // Predicated region
    $region22: #{tpu_custom_call.1} parent=1 // pred_check
      _
    $region23: #{tpu_custom_call.1} parent=1 // pred_check_branch
      %11554 = sbr.rel (0) target = $region25
    $region24: #{tpu_custom_call.1} parent=1 // pred_region
      %s11556 = ssub.s32 512, 512
      %11557 = vsyncadd [#allocation4], %s11556
      %s11558 = sshll.u32 [#allocation3], 4
      %s11559 = int_to_ptr.vmem [resolvable:$true] %s11558
      %11564 = dma.vmem_to_hbm [thread:$0]  %s11559, 512, %s5, [#allocation4], 256, 256, 16
    $region25: #{tpu_custom_call.1} parent=1 // pred_fallthru
      _
    // Predicated region
    $region26: #{tpu_custom_call.1} parent=1 // pred_check
      _
    $region27: #{tpu_custom_call.1} parent=1 // pred_check_branch
      %11566 = sbr.rel (0) target = $region29
    $region28: #{tpu_custom_call.1} parent=1 // pred_region
      %11567 = dma.done [#allocation4], 512
    $region29: #{tpu_custom_call.1} parent=1 // pred_fallthru
      _
    %11568 = vsyncpa [#allocation4], 1

</llo_original>
